<compile_context>
chip_gen: v7x
topology: tpu7x:2x2x1
jax: 0.10.0
libtpu: 0.0.40
codegen_flags: <defaults>
</compile_context>

<pallas_src>
import functools
import math

import jax
import jax.numpy as jnp
from jax.experimental import pallas as pl
from jax.experimental.pallas import tpu as pltpu


# ----------------------------- in-kernel helpers -----------------------------

def _layer_norm(x, g, b, eps=1e-5):
    mu = jnp.mean(x, axis=-1, keepdims=True)
    var = jnp.mean((x - mu) ** 2, axis=-1, keepdims=True)
    return (x - mu) * jax.lax.rsqrt(var + eps) * g + b


def _softmax(x):
    m = jnp.max(x, axis=-1, keepdims=True)
    e = jnp.exp(x - m)
    return e * pl.reciprocal(jnp.sum(e, axis=-1, keepdims=True), approx=True)


def _gelu_exact(x):
    # torch.nn.GELU() default = exact (erf) formulation.
    return 0.5 * x * (1.0 + jax.lax.erf(x * (1.0 / math.sqrt(2.0))))


def _mm(a, w):
    """(M,K)@(K,N) with bf16 operands, f32 accumulation."""
    return jnp.dot(a.astype(jnp.bfloat16), w.astype(jnp.bfloat16),
                   preferred_element_type=jnp.float32)


def _mm_nt(a, b):
    """a @ b.T with bf16 operands, f32 accumulation (b is an f32 activation)."""
    return jnp.dot(a.astype(jnp.bfloat16), b.T.astype(jnp.bfloat16),
                   preferred_element_type=jnp.float32)


def _bmm(eq, a, w):
    """Batched (leading batch dim) matmul via einsum, bf16 in / f32 accum."""
    return jnp.einsum(eq, a.astype(jnp.bfloat16), w.astype(jnp.bfloat16),
                      preferred_element_type=jnp.float32)


# ----------------------------- fused model kernel ----------------------------

def _model_kernel(x_ref, valid_ref,
                  wq_ref, wk_ref, wv_ref, bq_ref, bk_ref, bv_ref, wo_ref, bo_ref,
                  lat_ref, wql_ref, bql_ref, wkt_ref, bkt_ref, wvt_ref, bvt_ref,
                  wqt_ref, bqt_ref, wkl_ref, bkl_ref, wvl_ref, bvl_ref,
                  w1_ref, b1_ref, w2_ref, b2_ref,
                  g1_ref, be1_ref, g2_ref, be2_ref, g3_ref, be3_ref,
                  gf_ref, bfin_ref, wh_ref,
                  o_ref, *, num_heads, latent_dim, n_layers):
    x = x_ref[0]                                    # (L, d) f32
    L, d = x.shape
    H = num_heads
    hd = d // H

    # ---- additive causal + key-padding mask, built in-kernel ----
    rows = jax.lax.broadcasted_iota(jnp.int32, (L, L), 0)
    cols = jax.lax.broadcasted_iota(jnp.int32, (L, L), 1)
    valid = valid_ref[0] > 0.5                      # (1, L) bool (True = keep key)
    allow = (cols <= rows) & valid                  # (L, L)
    add_mask = jnp.where(allow, 0.0, -1e30).astype(jnp.float32)

    sa_scale = 1.0 / math.sqrt(hd)
    lat_scale = 1.0 / math.sqrt(latent_dim)
    tok_scale = 1.0 / math.sqrt(d)

    for li in range(n_layers):                      # static unroll over layers
        # ---- self attention (nn.MultiheadAttention), heads batched ----
        xb = jnp.broadcast_to(x, (H, L, d))
        qh = _bmm('hld,hde->hle', xb, wq_ref[li]) + bq_ref[li]     # (H, L, hd)
        kh = _bmm('hld,hde->hle', xb, wk_ref[li]) + bk_ref[li]
        vh = _bmm('hld,hde->hle', xb, wv_ref[li]) + bv_ref[li]
        s = _bmm('hqe,hke->hqk', qh, kh) * sa_scale + add_mask[None]
        p = _softmax(s)                                            # (H, L, L) f32
        ctx = _bmm('hqk,hke->hqe', p, vh)                          # (H, L, hd)
        attn = jnp.sum(_bmm('hqe,hed->hqd', ctx, wo_ref[li]), axis=0) + bo_ref[li]
        x = _layer_norm(x + attn, g1_ref[li], be1_ref[li])

        # ---- latent cross attention ----
        k_t = _mm(x, wkt_ref[li]) + bkt_ref[li]                    # (L, l)
        v_t = _mm(x, wvt_ref[li]) + bvt_ref[li]                    # (L, l)
        q_lat = _mm(lat_ref[li], wql_ref[li]) + bql_ref[li]        # (n, l)
        aw = _softmax(_mm_nt(q_lat, k_t) * lat_scale)              # (n, L)
        lat_upd = _mm(aw, v_t)                                     # (n, l)
        q_tok = _mm(x, wqt_ref[li]) + bqt_ref[li]                  # (L, d)
        k_lat = _mm(lat_upd, wkl_ref[li]) + bkl_ref[li]            # (n, d)
        v_lat = _mm(lat_upd, wvl_ref[li]) + bvl_ref[li]            # (n, d)
        aw2 = _softmax(_mm_nt(q_tok, k_lat) * tok_scale)           # (L, n)
        x_lat = _mm(aw2, v_lat)                                    # (L, d)
        x = _layer_norm(x + x_lat, g2_ref[li], be2_ref[li])

        # ---- FFN ----
        h_ffn = _gelu_exact(_mm(x, w1_ref[li]) + b1_ref[li])       # (L, f)
        ffn = _mm(h_ffn, w2_ref[li]) + b2_ref[li]                  # (L, d)
        x = _layer_norm(x + ffn, g3_ref[li], be3_ref[li])

    # ---- final LayerNorm + vocab head ----
    xn = _layer_norm(x, gf_ref[...], bfin_ref[...])
    o_ref[0] = _mm(xn, wh_ref[...])


# ----------------------------- wrapper ---------------------------------------

_WEIGHT_NAMES = ('wq', 'wk', 'wv', 'bq', 'bk', 'bv', 'wo', 'bo',
                 'latents', 'wql', 'bql', 'wkt', 'bkt', 'wvt', 'bvt',
                 'wqt', 'bqt', 'wkl', 'bkl', 'wvl', 'bvl',
                 'w1', 'b1', 'w2', 'b2',
                 'g1', 'be1', 'g2', 'be2', 'g3', 'be3',
                 'ln_f_g', 'ln_f_b', 'head_w')


def _full_spec(a):
    nd = a.ndim
    return pl.BlockSpec(a.shape, lambda b, _nd=nd: (0,) * _nd)


def _cost_estimate(B, L, d, f, l, n, H, NL, V, bytes_accessed):
    per_layer = (3 * 2 * L * d * d          # q, k, v projections
                 + 2 * 2 * L * L * d        # scores + context
                 + 2 * L * d * d            # out projection
                 + 2 * 2 * L * d * l        # k_token, v_token
                 + 2 * n * l * l            # q_latent
                 + 2 * 2 * n * L * l        # latent attn weights + update
                 + 2 * L * d * d            # q_token
                 + 2 * 2 * n * l * d        # k_latent, v_latent
                 + 2 * 2 * L * n * d        # token<-latent attn + readout
                 + 2 * 2 * L * d * f)       # FFN
    flops = B * (NL * per_layer + 2 * L * d * V)
    trans = B * (NL * (H * L * L + 2 * n * L + L * f + 3 * L) + L)
    return pl.CostEstimate(flops=int(flops), transcendentals=int(trans),
                           bytes_accessed=int(bytes_accessed))


def r1_foundation_forward(packed, input_ids, attention_mask):
    B, L = input_ids.shape
    d = packed['token_emb'].shape[1]
    V = packed['head_w'].shape[1]
    NL, H = packed['wq'].shape[0], packed['wq'].shape[1]
    latent_dim = packed['wql'].shape[1]
    n_lat = packed['latents'].shape[1]
    f_dim = packed['w1'].shape[2]

    # embedding lookups stay as plain-JAX glue (gather)
    tok = jnp.take(packed['token_emb'], input_ids, axis=0)
    pos = packed['pos_emb'][:L][None, :, :]
    x = (tok + pos).astype(jnp.float32)

    # key-padding info as a tiny (B, 1, L) float stream; causal part is built in-kernel
    valid = attention_mask.astype(jnp.float32).reshape(B, 1, L)

    weights = [packed[nm] for nm in _WEIGHT_NAMES]
    in_specs = ([pl.BlockSpec((1, L, d), lambda b: (b, 0, 0)),
                 pl.BlockSpec((1, 1, L), lambda b: (b, 0, 0))]
                + [_full_spec(w) for w in weights])

    bytes_accessed = (int(x.nbytes) + int(valid.nbytes) + B * L * V * 4
                      + sum(int(w.nbytes) for w in weights))
    ce = _cost_estimate(B, L, d, f_dim, latent_dim, n_lat, H, NL, V, bytes_accessed)

    return pl.pallas_call(
        functools.partial(_model_kernel, num_heads=H,
                          latent_dim=latent_dim, n_layers=NL),
        out_shape=jax.ShapeDtypeStruct((B, L, V), jnp.float32),
        grid=(B,),
        in_specs=in_specs,
        out_specs=pl.BlockSpec((1, L, V), lambda b: (b, 0, 0)),
        compiler_params=pltpu.CompilerParams(dimension_semantics=("parallel",)),
        cost_estimate=ce,
    )(x, valid, *weights)


# ----------------------------- parameters ------------------------------------

def init_params(key, *, vocab, seq_len, d, f, l, n, n_layers):
    keys = jax.random.split(key, 4 + n_layers)

    def dense(k, fan_in, fan_out):
        kw, kb = jax.random.split(k)
        bound = 1.0 / math.sqrt(fan_in)
        w = jax.random.uniform(kw, (fan_in, fan_out), jnp.float32, -bound, bound)
        b = jax.random.uniform(kb, (1, fan_out), jnp.float32, -bound, bound)
        return w, b

    params = {
        'token_emb': jax.random.normal(keys[0], (vocab, d), jnp.float32) * 0.02,
        'pos_emb': jax.random.normal(keys[1], (seq_len, d), jnp.float32) * 0.02,
        'ln_f_g': jnp.ones((1, d), jnp.float32),
        'ln_f_b': jnp.zeros((1, d), jnp.float32),
        'head_w': dense(keys[2], d, vocab)[0],            # head has no bias
    }
    blocks = []
    for li in range(n_layers):
        bk = jax.random.split(keys[3 + li], 11)
        wqkv, bqkv = dense(bk[0], d, 3 * d)
        wo, bo = dense(bk[1], d, d)
        latents = jax.random.normal(bk[2], (n, l), jnp.float32)
        wql, bql = dense(bk[3], l, l)
        wkt, bkt = dense(bk[4], d, l)
        wvt, bvt = dense(bk[5], d, l)
        wqt, bqt = dense(bk[6], d, d)
        wkl, bkl = dense(bk[7], l, d)
        wvl, bvl = dense(bk[8], l, d)
        w1, b1 = dense(bk[9], d, f)
        w2, b2 = dense(bk[10], f, d)
        blocks.append(dict(
            wqkv=wqkv, bqkv=bqkv, wo=wo, bo=bo, latents=latents,
            wql=wql, bql=bql, wkt=wkt, bkt=bkt, wvt=wvt, bvt=bvt,
            wqt=wqt, bqt=bqt, wkl=wkl, bkl=bkl, wvl=wvl, bvl=bvl,
            w1=w1, b1=b1, w2=w2, b2=b2,
            g1=jnp.ones((1, d), jnp.float32), be1=jnp.zeros((1, d), jnp.float32),
            g2=jnp.ones((1, d), jnp.float32), be2=jnp.zeros((1, d), jnp.float32),
            g3=jnp.ones((1, d), jnp.float32), be3=jnp.zeros((1, d), jnp.float32),
        ))
    params['blocks'] = blocks
    return params


def pack_params(params, *, num_heads):
    """Stack per-layer weights on a leading layer axis, split attention heads
    onto a leading head axis, and cast matmul weights to bf16."""
    blocks = params['blocks']
    NL = len(blocks)
    d = params['token_emb'].shape[1]
    H = num_heads
    hd = d // H
    bf16 = jnp.bfloat16

    def stack(name):
        return jnp.stack([b[name] for b in blocks])

    wqkv = stack('wqkv')                        # (NL, d, 3d)
    bqkv = stack('bqkv')[:, 0, :]               # (NL, 3d)
    wo = stack('wo')                            # (NL, d, d)

    def split_heads(w):                         # (NL, d, d) -> (NL, H, d, hd)
        return w.reshape(NL, d, H, hd).transpose(0, 2, 1, 3)

    packed = dict(
        token_emb=params['token_emb'], pos_emb=params['pos_emb'],
        wq=split_heads(wqkv[:, :, :d]).astype(bf16),
        wk=split_heads(wqkv[:, :, d:2 * d]).astype(bf16),
        wv=split_heads(wqkv[:, :, 2 * d:]).astype(bf16),
        bq=bqkv[:, :d].reshape(NL, H, 1, hd),
        bk=bqkv[:, d:2 * d].reshape(NL, H, 1, hd),
        bv=bqkv[:, 2 * d:].reshape(NL, H, 1, hd),
        wo=wo.reshape(NL, H, hd, d).astype(bf16),
        bo=stack('bo'),
        latents=stack('latents'),
        wql=stack('wql').astype(bf16), bql=stack('bql'),
        wkt=stack('wkt').astype(bf16), bkt=stack('bkt'),
        wvt=stack('wvt').astype(bf16), bvt=stack('bvt'),
        wqt=stack('wqt').astype(bf16), bqt=stack('bqt'),
        wkl=stack('wkl').astype(bf16), bkl=stack('bkl'),
        wvl=stack('wvl').astype(bf16), bvl=stack('bvl'),
        w1=stack('w1').astype(bf16), b1=stack('b1'),
        w2=stack('w2').astype(bf16), b2=stack('b2'),
        g1=stack('g1'), be1=stack('be1'),
        g2=stack('g2'), be2=stack('be2'),
        g3=stack('g3'), be3=stack('be3'),
        ln_f_g=params['ln_f_g'], ln_f_b=params['ln_f_b'],
        head_w=params['head_w'].astype(bf16),
    )
    return packed


# ----------------------------- demo ------------------------------------------

if __name__ == "__main__":
    # cfg.model: hidden=32, heads=4, ffn=64, latent=16, num_latents=4, layers=2
    # cfg.data : seq_len=8 ; vocab_size=64 ; batch=2
    D, H, F, LAT, NLAT, LAYERS = 32, 4, 64, 16, 4, 2
    SEQ, VOCAB, B = 8, 64, 2

    key = jax.random.PRNGKey(0)
    pkey, ikey = jax.random.split(key)
    params = init_params(pkey, vocab=VOCAB, seq_len=SEQ, d=D, f=F, l=LAT,
                         n=NLAT, n_layers=LAYERS)
    packed = pack_params(params, num_heads=H)

    input_ids = jax.random.randint(ikey, (B, SEQ), 0, VOCAB)
    attention_mask = jnp.ones((B, SEQ), dtype=jnp.bool_)   # all tokens valid

    logits = r1_foundation_forward(packed, input_ids, attention_mask)
    logits = jax.block_until_ready(logits)
    assert logits.shape == (B, SEQ, VOCAB)
    assert bool(jnp.all(jnp.isfinite(logits)))
    print("KERNEL_OK")
</pallas_src>

<mosaic_0001>
module attributes {stable_mosaic.version = 11 : i64} {
  func.func @_model_kernel(%arg0: i32, %arg1: memref<1x8x32xf32, #tpu.memory_space<vmem>>, %arg2: memref<1x1x8xf32, #tpu.memory_space<vmem>>, %arg3: memref<2x4x32x8xbf16, #tpu.memory_space<vmem>>, %arg4: memref<2x4x32x8xbf16, #tpu.memory_space<vmem>>, %arg5: memref<2x4x32x8xbf16, #tpu.memory_space<vmem>>, %arg6: memref<2x4x1x8xf32, #tpu.memory_space<vmem>>, %arg7: memref<2x4x1x8xf32, #tpu.memory_space<vmem>>, %arg8: memref<2x4x1x8xf32, #tpu.memory_space<vmem>>, %arg9: memref<2x4x8x32xbf16, #tpu.memory_space<vmem>>, %arg10: memref<2x1x32xf32, #tpu.memory_space<vmem>>, %arg11: memref<2x4x16xf32, #tpu.memory_space<vmem>>, %arg12: memref<2x16x16xbf16, #tpu.memory_space<vmem>>, %arg13: memref<2x1x16xf32, #tpu.memory_space<vmem>>, %arg14: memref<2x32x16xbf16, #tpu.memory_space<vmem>>, %arg15: memref<2x1x16xf32, #tpu.memory_space<vmem>>, %arg16: memref<2x32x16xbf16, #tpu.memory_space<vmem>>, %arg17: memref<2x1x16xf32, #tpu.memory_space<vmem>>, %arg18: memref<2x32x32xbf16, #tpu.memory_space<vmem>>, %arg19: memref<2x1x32xf32, #tpu.memory_space<vmem>>, %arg20: memref<2x16x32xbf16, #tpu.memory_space<vmem>>, %arg21: memref<2x1x32xf32, #tpu.memory_space<vmem>>, %arg22: memref<2x16x32xbf16, #tpu.memory_space<vmem>>, %arg23: memref<2x1x32xf32, #tpu.memory_space<vmem>>, %arg24: memref<2x32x64xbf16, #tpu.memory_space<vmem>>, %arg25: memref<2x1x64xf32, #tpu.memory_space<vmem>>, %arg26: memref<2x64x32xbf16, #tpu.memory_space<vmem>>, %arg27: memref<2x1x32xf32, #tpu.memory_space<vmem>>, %arg28: memref<2x1x32xf32, #tpu.memory_space<vmem>>, %arg29: memref<2x1x32xf32, #tpu.memory_space<vmem>>, %arg30: memref<2x1x32xf32, #tpu.memory_space<vmem>>, %arg31: memref<2x1x32xf32, #tpu.memory_space<vmem>>, %arg32: memref<2x1x32xf32, #tpu.memory_space<vmem>>, %arg33: memref<2x1x32xf32, #tpu.memory_space<vmem>>, %arg34: memref<1x32xf32, #tpu.memory_space<vmem>>, %arg35: memref<1x32xf32, #tpu.memory_space<vmem>>, %arg36: memref<32x64xbf16, #tpu.memory_space<vmem>>, %arg37: memref<1x8x64xf32, #tpu.memory_space<vmem>>) attributes {dimension_semantics = [#tpu.dimension_semantics<parallel>], iteration_bounds = array<i64: 2>, scalar_prefetch = 0 : i64, scratch_operands = 0 : i64, tpu.core_type = #tpu.core_type<tc>, window_params = [{transform_indices = @transform_0, window_bounds = array<i64: 1, 8, 32>}, {transform_indices = @transform_1, window_bounds = array<i64: 1, 1, 8>}, {pipeline_mode = #tpu.pipeline_mode<synchronous>, transform_indices = @transform_2, window_bounds = array<i64: 2, 4, 32, 8>}, {pipeline_mode = #tpu.pipeline_mode<synchronous>, transform_indices = @transform_3, window_bounds = array<i64: 2, 4, 32, 8>}, {pipeline_mode = #tpu.pipeline_mode<synchronous>, transform_indices = @transform_4, window_bounds = array<i64: 2, 4, 32, 8>}, {pipeline_mode = #tpu.pipeline_mode<synchronous>, transform_indices = @transform_5, window_bounds = array<i64: 2, 4, 1, 8>}, {pipeline_mode = #tpu.pipeline_mode<synchronous>, transform_indices = @transform_6, window_bounds = array<i64: 2, 4, 1, 8>}, {pipeline_mode = #tpu.pipeline_mode<synchronous>, transform_indices = @transform_7, window_bounds = array<i64: 2, 4, 1, 8>}, {pipeline_mode = #tpu.pipeline_mode<synchronous>, transform_indices = @transform_8, window_bounds = array<i64: 2, 4, 8, 32>}, {pipeline_mode = #tpu.pipeline_mode<synchronous>, transform_indices = @transform_9, window_bounds = array<i64: 2, 1, 32>}, {pipeline_mode = #tpu.pipeline_mode<synchronous>, transform_indices = @transform_10, window_bounds = array<i64: 2, 4, 16>}, {pipeline_mode = #tpu.pipeline_mode<synchronous>, transform_indices = @transform_11, window_bounds = array<i64: 2, 16, 16>}, {pipeline_mode = #tpu.pipeline_mode<synchronous>, transform_indices = @transform_12, window_bounds = array<i64: 2, 1, 16>}, {pipeline_mode = #tpu.pipeline_mode<synchronous>, transform_indices = @transform_13, window_bounds = array<i64: 2, 32, 16>}, {pipeline_mode = #tpu.pipeline_mode<synchronous>, transform_indices = @transform_14, window_bounds = array<i64: 2, 1, 16>}, {pipeline_mode = #tpu.pipeline_mode<synchronous>, transform_indices = @transform_15, window_bounds = array<i64: 2, 32, 16>}, {pipeline_mode = #tpu.pipeline_mode<synchronous>, transform_indices = @transform_16, window_bounds = array<i64: 2, 1, 16>}, {pipeline_mode = #tpu.pipeline_mode<synchronous>, transform_indices = @transform_17, window_bounds = array<i64: 2, 32, 32>}, {pipeline_mode = #tpu.pipeline_mode<synchronous>, transform_indices = @transform_18, window_bounds = array<i64: 2, 1, 32>}, {pipeline_mode = #tpu.pipeline_mode<synchronous>, transform_indices = @transform_19, window_bounds = array<i64: 2, 16, 32>}, {pipeline_mode = #tpu.pipeline_mode<synchronous>, transform_indices = @transform_20, window_bounds = array<i64: 2, 1, 32>}, {pipeline_mode = #tpu.pipeline_mode<synchronous>, transform_indices = @transform_21, window_bounds = array<i64: 2, 16, 32>}, {pipeline_mode = #tpu.pipeline_mode<synchronous>, transform_indices = @transform_22, window_bounds = array<i64: 2, 1, 32>}, {pipeline_mode = #tpu.pipeline_mode<synchronous>, transform_indices = @transform_23, window_bounds = array<i64: 2, 32, 64>}, {pipeline_mode = #tpu.pipeline_mode<synchronous>, transform_indices = @transform_24, window_bounds = array<i64: 2, 1, 64>}, {pipeline_mode = #tpu.pipeline_mode<synchronous>, transform_indices = @transform_25, window_bounds = array<i64: 2, 64, 32>}, {pipeline_mode = #tpu.pipeline_mode<synchronous>, transform_indices = @transform_26, window_bounds = array<i64: 2, 1, 32>}, {pipeline_mode = #tpu.pipeline_mode<synchronous>, transform_indices = @transform_27, window_bounds = array<i64: 2, 1, 32>}, {pipeline_mode = #tpu.pipeline_mode<synchronous>, transform_indices = @transform_28, window_bounds = array<i64: 2, 1, 32>}, {pipeline_mode = #tpu.pipeline_mode<synchronous>, transform_indices = @transform_29, window_bounds = array<i64: 2, 1, 32>}, {pipeline_mode = #tpu.pipeline_mode<synchronous>, transform_indices = @transform_30, window_bounds = array<i64: 2, 1, 32>}, {pipeline_mode = #tpu.pipeline_mode<synchronous>, transform_indices = @transform_31, window_bounds = array<i64: 2, 1, 32>}, {pipeline_mode = #tpu.pipeline_mode<synchronous>, transform_indices = @transform_32, window_bounds = array<i64: 2, 1, 32>}, {pipeline_mode = #tpu.pipeline_mode<synchronous>, transform_indices = @transform_33, window_bounds = array<i64: 1, 32>}, {pipeline_mode = #tpu.pipeline_mode<synchronous>, transform_indices = @transform_34, window_bounds = array<i64: 1, 32>}, {pipeline_mode = #tpu.pipeline_mode<synchronous>, transform_indices = @transform_35, window_bounds = array<i64: 32, 64>}, {transform_indices = @transform_36, window_bounds = array<i64: 1, 8, 64>}]} {
    %c0 = arith.constant 0 : index
    %c0_0 = arith.constant 0 : index
    %c0_1 = arith.constant 0 : index
    %0 = vector.load %arg1[%c0, %c0_0, %c0_1] : memref<1x8x32xf32, #tpu.memory_space<vmem>>, vector<1x8x32xf32>
    %1 = vector.shape_cast %0 : vector<1x8x32xf32> to vector<8x32xf32>
    %2 = tpu.iota {dimensions = array<i32: 0>} : vector<8x8xi32>
    %3 = tpu.iota {dimensions = array<i32: 1>} : vector<8x8xi32>
    %c0_2 = arith.constant 0 : index
    %c0_3 = arith.constant 0 : index
    %c0_4 = arith.constant 0 : index
    %4 = vector.load %arg2[%c0_2, %c0_3, %c0_4] : memref<1x1x8xf32, #tpu.memory_space<vmem>>, vector<1x1x8xf32>
    %5 = vector.shape_cast %4 : vector<1x1x8xf32> to vector<1x8xf32>
    %cst = arith.constant 5.000000e-01 : f32
    %6 = vector.broadcast %cst : f32 to vector<1x8xf32>
    %7 = arith.cmpf ogt, %5, %6 : vector<1x8xf32>
    %8 = arith.cmpi sle, %3, %2 : vector<8x8xi32>
    %9 = vector.broadcast %7 : vector<1x8xi1> to vector<8x8xi1>
    %10 = arith.andi %8, %9 : vector<8x8xi1>
    %cst_5 = arith.constant 0.000000e+00 : f32
    %cst_6 = arith.constant -1.000000e+30 : f32
    %11 = vector.broadcast %cst_5 : f32 to vector<8x8xf32>
    %12 = vector.broadcast %cst_6 : f32 to vector<8x8xf32>
    %13 = arith.select %10, %11, %12 : vector<8x8xi1>, vector<8x8xf32>
    %14 = vector.shape_cast %1 : vector<8x32xf32> to vector<1x8x32xf32>
    %15 = vector.broadcast %14 : vector<1x8x32xf32> to vector<4x8x32xf32>
    %c0_7 = arith.constant 0 : index
    %c0_8 = arith.constant 0 : index
    %c0_9 = arith.constant 0 : index
    %c0_10 = arith.constant 0 : index
    %16 = vector.load %arg3[%c0_7, %c0_8, %c0_9, %c0_10] : memref<2x4x32x8xbf16, #tpu.memory_space<vmem>>, vector<1x4x32x8xbf16>
    %17 = vector.shape_cast %16 : vector<1x4x32x8xbf16> to vector<4x32x8xbf16>
    %18 = arith.truncf %15 : vector<4x8x32xf32> to vector<4x8x32xbf16>
    "tpu.trace_start"() <{level = 10 : i32, message = "hld,hde->hle"}> : () -> ()
    %cst_11 = arith.constant dense<0.000000e+00> : vector<4x8x8xf32>
    %19 = tpu.matmul %18, %17, %cst_11 {dimension_numbers = #tpu.dot_dimension_numbers<[2], [1], [1], [2], [0, 0, 0, 1, 1, 2], [0], [0]>} : vector<4x8x32xbf16>, vector<4x32x8xbf16>, vector<4x8x8xf32> -> vector<4x8x8xf32>
    "tpu.trace_stop"() : () -> ()
    %c0_12 = arith.constant 0 : index
    %c0_13 = arith.constant 0 : index
    %c0_14 = arith.constant 0 : index
    %c0_15 = arith.constant 0 : index
    %20 = vector.load %arg6[%c0_12, %c0_13, %c0_14, %c0_15] : memref<2x4x1x8xf32, #tpu.memory_space<vmem>>, vector<1x4x1x8xf32>
    %21 = vector.shape_cast %20 : vector<1x4x1x8xf32> to vector<4x1x8xf32>
    %22 = vector.broadcast %21 : vector<4x1x8xf32> to vector<4x8x8xf32>
    %23 = arith.addf %19, %22 : vector<4x8x8xf32>
    %c0_16 = arith.constant 0 : index
    %c0_17 = arith.constant 0 : index
    %c0_18 = arith.constant 0 : index
    %c0_19 = arith.constant 0 : index
    %24 = vector.load %arg4[%c0_16, %c0_17, %c0_18, %c0_19] : memref<2x4x32x8xbf16, #tpu.memory_space<vmem>>, vector<1x4x32x8xbf16>
    %25 = vector.shape_cast %24 : vector<1x4x32x8xbf16> to vector<4x32x8xbf16>
    %26 = arith.truncf %15 : vector<4x8x32xf32> to vector<4x8x32xbf16>
    "tpu.trace_start"() <{level = 10 : i32, message = "hld,hde->hle"}> : () -> ()
    %cst_20 = arith.constant dense<0.000000e+00> : vector<4x8x8xf32>
    %27 = tpu.matmul %26, %25, %cst_20 {dimension_numbers = #tpu.dot_dimension_numbers<[2], [1], [1], [2], [0, 0, 0, 1, 1, 2], [0], [0]>} : vector<4x8x32xbf16>, vector<4x32x8xbf16>, vector<4x8x8xf32> -> vector<4x8x8xf32>
    "tpu.trace_stop"() : () -> ()
    %c0_21 = arith.constant 0 : index
    %c0_22 = arith.constant 0 : index
    %c0_23 = arith.constant 0 : index
    %c0_24 = arith.constant 0 : index
    %28 = vector.load %arg7[%c0_21, %c0_22, %c0_23, %c0_24] : memref<2x4x1x8xf32, #tpu.memory_space<vmem>>, vector<1x4x1x8xf32>
    %29 = vector.shape_cast %28 : vector<1x4x1x8xf32> to vector<4x1x8xf32>
    %30 = vector.broadcast %29 : vector<4x1x8xf32> to vector<4x8x8xf32>
    %31 = arith.addf %27, %30 : vector<4x8x8xf32>
    %c0_25 = arith.constant 0 : index
    %c0_26 = arith.constant 0 : index
    %c0_27 = arith.constant 0 : index
    %c0_28 = arith.constant 0 : index
    %32 = vector.load %arg5[%c0_25, %c0_26, %c0_27, %c0_28] : memref<2x4x32x8xbf16, #tpu.memory_space<vmem>>, vector<1x4x32x8xbf16>
    %33 = vector.shape_cast %32 : vector<1x4x32x8xbf16> to vector<4x32x8xbf16>
    %34 = arith.truncf %15 : vector<4x8x32xf32> to vector<4x8x32xbf16>
    "tpu.trace_start"() <{level = 10 : i32, message = "hld,hde->hle"}> : () -> ()
    %cst_29 = arith.constant dense<0.000000e+00> : vector<4x8x8xf32>
    %35 = tpu.matmul %34, %33, %cst_29 {dimension_numbers = #tpu.dot_dimension_numbers<[2], [1], [1], [2], [0, 0, 0, 1, 1, 2], [0], [0]>} : vector<4x8x32xbf16>, vector<4x32x8xbf16>, vector<4x8x8xf32> -> vector<4x8x8xf32>
    "tpu.trace_stop"() : () -> ()
    %c0_30 = arith.constant 0 : index
    %c0_31 = arith.constant 0 : index
    %c0_32 = arith.constant 0 : index
    %c0_33 = arith.constant 0 : index
    %36 = vector.load %arg8[%c0_30, %c0_31, %c0_32, %c0_33] : memref<2x4x1x8xf32, #tpu.memory_space<vmem>>, vector<1x4x1x8xf32>
    %37 = vector.shape_cast %36 : vector<1x4x1x8xf32> to vector<4x1x8xf32>
    %38 = vector.broadcast %37 : vector<4x1x8xf32> to vector<4x8x8xf32>
    %39 = arith.addf %35, %38 : vector<4x8x8xf32>
    %40 = arith.truncf %23 : vector<4x8x8xf32> to vector<4x8x8xbf16>
    %41 = arith.truncf %31 : vector<4x8x8xf32> to vector<4x8x8xbf16>
    "tpu.trace_start"() <{level = 10 : i32, message = "hqe,hke->hqk"}> : () -> ()
    %cst_34 = arith.constant dense<0.000000e+00> : vector<4x8x8xf32>
    %42 = tpu.matmul %40, %41, %cst_34 {dimension_numbers = #tpu.dot_dimension_numbers<[2], [2], [1], [1], [0, 0, 0, 1, 1, 1], [0], [0]>} : vector<4x8x8xbf16>, vector<4x8x8xbf16>, vector<4x8x8xf32> -> vector<4x8x8xf32>
    "tpu.trace_stop"() : () -> ()
    %cst_35 = arith.constant 0.353553385 : f32
    %43 = vector.broadcast %cst_35 : f32 to vector<4x8x8xf32>
    %44 = arith.mulf %42, %43 : vector<4x8x8xf32>
    %45 = vector.shape_cast %13 : vector<8x8xf32> to vector<1x8x8xf32>
    %46 = vector.broadcast %45 : vector<1x8x8xf32> to vector<4x8x8xf32>
    %47 = arith.addf %44, %46 : vector<4x8x8xf32>
    %cst_36 = arith.constant dense<0xFF800000> : vector<4x8xf32>
    %48 = vector.multi_reduction <maximumf>, %47, %cst_36 [2] : vector<4x8x8xf32> to vector<4x8xf32>
    %49 = vector.shape_cast %48 : vector<4x8xf32> to vector<4x8x1xf32>
    %50 = vector.broadcast %49 : vector<4x8x1xf32> to vector<4x8x8xf32>
    %51 = arith.subf %47, %50 : vector<4x8x8xf32>
    %52 = math.exp %51 : vector<4x8x8xf32>
    %cst_37 = arith.constant dense<0.000000e+00> : vector<4x8xf32>
    %53 = vector.multi_reduction <add>, %52, %cst_37 [2] : vector<4x8x8xf32> to vector<4x8xf32>
    %54 = vector.shape_cast %53 : vector<4x8xf32> to vector<4x8x1xf32>
    %55 = tpu.reciprocal %54 {approx = true} : vector<4x8x1xf32> -> vector<4x8x1xf32>
    %56 = vector.broadcast %55 : vector<4x8x1xf32> to vector<4x8x8xf32>
    %57 = arith.mulf %52, %56 : vector<4x8x8xf32>
    %58 = arith.truncf %57 : vector<4x8x8xf32> to vector<4x8x8xbf16>
    %59 = arith.truncf %39 : vector<4x8x8xf32> to vector<4x8x8xbf16>
    "tpu.trace_start"() <{level = 10 : i32, message = "hqk,hke->hqe"}> : () -> ()
    %cst_38 = arith.constant dense<0.000000e+00> : vector<4x8x8xf32>
    %60 = tpu.matmul %58, %59, %cst_38 {dimension_numbers = #tpu.dot_dimension_numbers<[2], [1], [1], [2], [0, 0, 0, 1, 1, 2], [0], [0]>} : vector<4x8x8xbf16>, vector<4x8x8xbf16>, vector<4x8x8xf32> -> vector<4x8x8xf32>
    "tpu.trace_stop"() : () -> ()
    %c0_39 = arith.constant 0 : index
    %c0_40 = arith.constant 0 : index
    %c0_41 = arith.constant 0 : index
    %c0_42 = arith.constant 0 : index
    %61 = vector.load %arg9[%c0_39, %c0_40, %c0_41, %c0_42] : memref<2x4x8x32xbf16, #tpu.memory_space<vmem>>, vector<1x4x8x32xbf16>
    %62 = vector.shape_cast %61 : vector<1x4x8x32xbf16> to vector<4x8x32xbf16>
    %63 = arith.truncf %60 : vector<4x8x8xf32> to vector<4x8x8xbf16>
    "tpu.trace_start"() <{level = 10 : i32, message = "hqe,hed->hqd"}> : () -> ()
    %cst_43 = arith.constant dense<0.000000e+00> : vector<4x8x32xf32>
    %64 = tpu.matmul %63, %62, %cst_43 {dimension_numbers = #tpu.dot_dimension_numbers<[2], [1], [1], [2], [0, 0, 0, 1, 1, 2], [0], [0]>} : vector<4x8x8xbf16>, vector<4x8x32xbf16>, vector<4x8x32xf32> -> vector<4x8x32xf32>
    "tpu.trace_stop"() : () -> ()
    %cst_44 = arith.constant dense<0.000000e+00> : vector<8x32xf32>
    %65 = vector.multi_reduction <add>, %64, %cst_44 [0] : vector<4x8x32xf32> to vector<8x32xf32>
    %c0_45 = arith.constant 0 : index
    %c0_46 = arith.constant 0 : index
    %c0_47 = arith.constant 0 : index
    %66 = vector.load %arg10[%c0_45, %c0_46, %c0_47] : memref<2x1x32xf32, #tpu.memory_space<vmem>>, vector<1x1x32xf32>
    %67 = vector.shape_cast %66 : vector<1x1x32xf32> to vector<1x32xf32>
    %68 = vector.broadcast %67 : vector<1x32xf32> to vector<8x32xf32>
    %69 = arith.addf %65, %68 : vector<8x32xf32>
    %70 = arith.addf %1, %69 : vector<8x32xf32>
    %c0_48 = arith.constant 0 : index
    %c0_49 = arith.constant 0 : index
    %c0_50 = arith.constant 0 : index
    %71 = vector.load %arg28[%c0_48, %c0_49, %c0_50] : memref<2x1x32xf32, #tpu.memory_space<vmem>>, vector<1x1x32xf32>
    %72 = vector.shape_cast %71 : vector<1x1x32xf32> to vector<1x32xf32>
    %c0_51 = arith.constant 0 : index
    %c0_52 = arith.constant 0 : index
    %c0_53 = arith.constant 0 : index
    %73 = vector.load %arg29[%c0_51, %c0_52, %c0_53] : memref<2x1x32xf32, #tpu.memory_space<vmem>>, vector<1x1x32xf32>
    %74 = vector.shape_cast %73 : vector<1x1x32xf32> to vector<1x32xf32>
    %cst_54 = arith.constant dense<0.000000e+00> : vector<8xf32>
    %75 = vector.multi_reduction <add>, %70, %cst_54 [1] : vector<8x32xf32> to vector<8xf32>
    %76 = vector.shape_cast %75 : vector<8xf32> to vector<8x1xf32>
    %cst_55 = arith.constant 3.200000e+01 : f32
    %77 = vector.broadcast %cst_55 : f32 to vector<8x1xf32>
    %78 = arith.divf %76, %77 : vector<8x1xf32>
    %79 = vector.broadcast %78 : vector<8x1xf32> to vector<8x32xf32>
    %80 = arith.subf %70, %79 : vector<8x32xf32>
    %81 = arith.mulf %80, %80 : vector<8x32xf32>
    %cst_56 = arith.constant dense<0.000000e+00> : vector<8xf32>
    %82 = vector.multi_reduction <add>, %81, %cst_56 [1] : vector<8x32xf32> to vector<8xf32>
    %83 = vector.shape_cast %82 : vector<8xf32> to vector<8x1xf32>
    %cst_57 = arith.constant 3.200000e+01 : f32
    %84 = vector.broadcast %cst_57 : f32 to vector<8x1xf32>
    %85 = arith.divf %83, %84 : vector<8x1xf32>
    %86 = vector.broadcast %78 : vector<8x1xf32> to vector<8x32xf32>
    %87 = arith.subf %70, %86 : vector<8x32xf32>
    %cst_58 = arith.constant 9.99999974E-6 : f32
    %88 = vector.broadcast %cst_58 : f32 to vector<8x1xf32>
    %89 = arith.addf %85, %88 : vector<8x1xf32>
    %90 = math.rsqrt %89 : vector<8x1xf32>
    %91 = vector.broadcast %90 : vector<8x1xf32> to vector<8x32xf32>
    %92 = arith.mulf %87, %91 : vector<8x32xf32>
    %93 = vector.broadcast %72 : vector<1x32xf32> to vector<8x32xf32>
    %94 = arith.mulf %92, %93 : vector<8x32xf32>
    %95 = vector.broadcast %74 : vector<1x32xf32> to vector<8x32xf32>
    %96 = arith.addf %94, %95 : vector<8x32xf32>
    %c0_59 = arith.constant 0 : index
    %c0_60 = arith.constant 0 : index
    %c0_61 = arith.constant 0 : index
    %97 = vector.load %arg14[%c0_59, %c0_60, %c0_61] : memref<2x32x16xbf16, #tpu.memory_space<vmem>>, vector<1x32x16xbf16>
    %98 = vector.shape_cast %97 : vector<1x32x16xbf16> to vector<32x16xbf16>
    %99 = arith.truncf %96 : vector<8x32xf32> to vector<8x32xbf16>
    %cst_62 = arith.constant dense<0.000000e+00> : vector<8x16xf32>
    %100 = tpu.matmul %99, %98, %cst_62 {dimension_numbers = #tpu.dot_dimension_numbers<[1], [0], [0], [1], [0, 0, 1, 1], [], []>} : vector<8x32xbf16>, vector<32x16xbf16>, vector<8x16xf32> -> vector<8x16xf32>
    %c0_63 = arith.constant 0 : index
    %c0_64 = arith.constant 0 : index
    %c0_65 = arith.constant 0 : index
    %101 = vector.load %arg15[%c0_63, %c0_64, %c0_65] : memref<2x1x16xf32, #tpu.memory_space<vmem>>, vector<1x1x16xf32>
    %102 = vector.shape_cast %101 : vector<1x1x16xf32> to vector<1x16xf32>
    %103 = vector.broadcast %102 : vector<1x16xf32> to vector<8x16xf32>
    %104 = arith.addf %100, %103 : vector<8x16xf32>
    %c0_66 = arith.constant 0 : index
    %c0_67 = arith.constant 0 : index
    %c0_68 = arith.constant 0 : index
    %105 = vector.load %arg16[%c0_66, %c0_67, %c0_68] : memref<2x32x16xbf16, #tpu.memory_space<vmem>>, vector<1x32x16xbf16>
    %106 = vector.shape_cast %105 : vector<1x32x16xbf16> to vector<32x16xbf16>
    %107 = arith.truncf %96 : vector<8x32xf32> to vector<8x32xbf16>
    %cst_69 = arith.constant dense<0.000000e+00> : vector<8x16xf32>
    %108 = tpu.matmul %107, %106, %cst_69 {dimension_numbers = #tpu.dot_dimension_numbers<[1], [0], [0], [1], [0, 0, 1, 1], [], []>} : vector<8x32xbf16>, vector<32x16xbf16>, vector<8x16xf32> -> vector<8x16xf32>
    %c0_70 = arith.constant 0 : index
    %c0_71 = arith.constant 0 : index
    %c0_72 = arith.constant 0 : index
    %109 = vector.load %arg17[%c0_70, %c0_71, %c0_72] : memref<2x1x16xf32, #tpu.memory_space<vmem>>, vector<1x1x16xf32>
    %110 = vector.shape_cast %109 : vector<1x1x16xf32> to vector<1x16xf32>
    %111 = vector.broadcast %110 : vector<1x16xf32> to vector<8x16xf32>
    %112 = arith.addf %108, %111 : vector<8x16xf32>
    %c0_73 = arith.constant 0 : index
    %c0_74 = arith.constant 0 : index
    %c0_75 = arith.constant 0 : index
    %113 = vector.load %arg11[%c0_73, %c0_74, %c0_75] : memref<2x4x16xf32, #tpu.memory_space<vmem>>, vector<1x4x16xf32>
    %114 = vector.shape_cast %113 : vector<1x4x16xf32> to vector<4x16xf32>
    %c0_76 = arith.constant 0 : index
    %c0_77 = arith.constant 0 : index
    %c0_78 = arith.constant 0 : index
    %115 = vector.load %arg12[%c0_76, %c0_77, %c0_78] : memref<2x16x16xbf16, #tpu.memory_space<vmem>>, vector<1x16x16xbf16>
    %116 = vector.shape_cast %115 : vector<1x16x16xbf16> to vector<16x16xbf16>
    %117 = arith.truncf %114 : vector<4x16xf32> to vector<4x16xbf16>
    %cst_79 = arith.constant dense<0.000000e+00> : vector<4x16xf32>
    %118 = tpu.matmul %117, %116, %cst_79 {dimension_numbers = #tpu.dot_dimension_numbers<[1], [0], [0], [1], [0, 0, 1, 1], [], []>} : vector<4x16xbf16>, vector<16x16xbf16>, vector<4x16xf32> -> vector<4x16xf32>
    %c0_80 = arith.constant 0 : index
    %c0_81 = arith.constant 0 : index
    %c0_82 = arith.constant 0 : index
    %119 = vector.load %arg13[%c0_80, %c0_81, %c0_82] : memref<2x1x16xf32, #tpu.memory_space<vmem>>, vector<1x1x16xf32>
    %120 = vector.shape_cast %119 : vector<1x1x16xf32> to vector<1x16xf32>
    %121 = vector.broadcast %120 : vector<1x16xf32> to vector<4x16xf32>
    %122 = arith.addf %118, %121 : vector<4x16xf32>
    %123 = arith.truncf %122 : vector<4x16xf32> to vector<4x16xbf16>
    %124 = tpu.transpose %104, [1, 0] : vector<8x16xf32> -> vector<16x8xf32>
    %125 = arith.truncf %124 : vector<16x8xf32> to vector<16x8xbf16>
    %cst_83 = arith.constant dense<0.000000e+00> : vector<4x8xf32>
    %126 = tpu.matmul %123, %125, %cst_83 {dimension_numbers = #tpu.dot_dimension_numbers<[1], [0], [0], [1], [0, 0, 1, 1], [], []>} : vector<4x16xbf16>, vector<16x8xbf16>, vector<4x8xf32> -> vector<4x8xf32>
    %cst_84 = arith.constant 2.500000e-01 : f32
    %127 = vector.broadcast %cst_84 : f32 to vector<4x8xf32>
    %128 = arith.mulf %126, %127 : vector<4x8xf32>
    %cst_85 = arith.constant dense<0xFF800000> : vector<4xf32>
    %129 = vector.multi_reduction <maximumf>, %128, %cst_85 [1] : vector<4x8xf32> to vector<4xf32>
    %130 = vector.shape_cast %129 : vector<4xf32> to vector<4x1xf32>
    %131 = vector.broadcast %130 : vector<4x1xf32> to vector<4x8xf32>
    %132 = arith.subf %128, %131 : vector<4x8xf32>
    %133 = math.exp %132 : vector<4x8xf32>
    %cst_86 = arith.constant dense<0.000000e+00> : vector<4xf32>
    %134 = vector.multi_reduction <add>, %133, %cst_86 [1] : vector<4x8xf32> to vector<4xf32>
    %135 = vector.shape_cast %134 : vector<4xf32> to vector<4x1xf32>
    %136 = tpu.reciprocal %135 {approx = true} : vector<4x1xf32> -> vector<4x1xf32>
    %137 = vector.broadcast %136 : vector<4x1xf32> to vector<4x8xf32>
    %138 = arith.mulf %133, %137 : vector<4x8xf32>
    %139 = arith.truncf %138 : vector<4x8xf32> to vector<4x8xbf16>
    %140 = arith.truncf %112 : vector<8x16xf32> to vector<8x16xbf16>
    %cst_87 = arith.constant dense<0.000000e+00> : vector<4x16xf32>
    %141 = tpu.matmul %139, %140, %cst_87 {dimension_numbers = #tpu.dot_dimension_numbers<[1], [0], [0], [1], [0, 0, 1, 1], [], []>} : vector<4x8xbf16>, vector<8x16xbf16>, vector<4x16xf32> -> vector<4x16xf32>
    %c0_88 = arith.constant 0 : index
    %c0_89 = arith.constant 0 : index
    %c0_90 = arith.constant 0 : index
    %142 = vector.load %arg18[%c0_88, %c0_89, %c0_90] : memref<2x32x32xbf16, #tpu.memory_space<vmem>>, vector<1x32x32xbf16>
    %143 = vector.shape_cast %142 : vector<1x32x32xbf16> to vector<32x32xbf16>
    %144 = arith.truncf %96 : vector<8x32xf32> to vector<8x32xbf16>
    %cst_91 = arith.constant dense<0.000000e+00> : vector<8x32xf32>
    %145 = tpu.matmul %144, %143, %cst_91 {dimension_numbers = #tpu.dot_dimension_numbers<[1], [0], [0], [1], [0, 0, 1, 1], [], []>} : vector<8x32xbf16>, vector<32x32xbf16>, vector<8x32xf32> -> vector<8x32xf32>
    %c0_92 = arith.constant 0 : index
    %c0_93 = arith.constant 0 : index
    %c0_94 = arith.constant 0 : index
    %146 = vector.load %arg19[%c0_92, %c0_93, %c0_94] : memref<2x1x32xf32, #tpu.memory_space<vmem>>, vector<1x1x32xf32>
    %147 = vector.shape_cast %146 : vector<1x1x32xf32> to vector<1x32xf32>
    %148 = vector.broadcast %147 : vector<1x32xf32> to vector<8x32xf32>
    %149 = arith.addf %145, %148 : vector<8x32xf32>
    %c0_95 = arith.constant 0 : index
    %c0_96 = arith.constant 0 : index
    %c0_97 = arith.constant 0 : index
    %150 = vector.load %arg20[%c0_95, %c0_96, %c0_97] : memref<2x16x32xbf16, #tpu.memory_space<vmem>>, vector<1x16x32xbf16>
    %151 = vector.shape_cast %150 : vector<1x16x32xbf16> to vector<16x32xbf16>
    %152 = arith.truncf %141 : vector<4x16xf32> to vector<4x16xbf16>
    %cst_98 = arith.constant dense<0.000000e+00> : vector<4x32xf32>
    %153 = tpu.matmul %152, %151, %cst_98 {dimension_numbers = #tpu.dot_dimension_numbers<[1], [0], [0], [1], [0, 0, 1, 1], [], []>} : vector<4x16xbf16>, vector<16x32xbf16>, vector<4x32xf32> -> vector<4x32xf32>
    %c0_99 = arith.constant 0 : index
    %c0_100 = arith.constant 0 : index
    %c0_101 = arith.constant 0 : index
    %154 = vector.load %arg21[%c0_99, %c0_100, %c0_101] : memref<2x1x32xf32, #tpu.memory_space<vmem>>, vector<1x1x32xf32>
    %155 = vector.shape_cast %154 : vector<1x1x32xf32> to vector<1x32xf32>
    %156 = vector.broadcast %155 : vector<1x32xf32> to vector<4x32xf32>
    %157 = arith.addf %153, %156 : vector<4x32xf32>
    %c0_102 = arith.constant 0 : index
    %c0_103 = arith.constant 0 : index
    %c0_104 = arith.constant 0 : index
    %158 = vector.load %arg22[%c0_102, %c0_103, %c0_104] : memref<2x16x32xbf16, #tpu.memory_space<vmem>>, vector<1x16x32xbf16>
    %159 = vector.shape_cast %158 : vector<1x16x32xbf16> to vector<16x32xbf16>
    %160 = arith.truncf %141 : vector<4x16xf32> to vector<4x16xbf16>
    %cst_105 = arith.constant dense<0.000000e+00> : vector<4x32xf32>
    %161 = tpu.matmul %160, %159, %cst_105 {dimension_numbers = #tpu.dot_dimension_numbers<[1], [0], [0], [1], [0, 0, 1, 1], [], []>} : vector<4x16xbf16>, vector<16x32xbf16>, vector<4x32xf32> -> vector<4x32xf32>
    %c0_106 = arith.constant 0 : index
    %c0_107 = arith.constant 0 : index
    %c0_108 = arith.constant 0 : index
    %162 = vector.load %arg23[%c0_106, %c0_107, %c0_108] : memref<2x1x32xf32, #tpu.memory_space<vmem>>, vector<1x1x32xf32>
    %163 = vector.shape_cast %162 : vector<1x1x32xf32> to vector<1x32xf32>
    %164 = vector.broadcast %163 : vector<1x32xf32> to vector<4x32xf32>
    %165 = arith.addf %161, %164 : vector<4x32xf32>
    %166 = arith.truncf %149 : vector<8x32xf32> to vector<8x32xbf16>
    %167 = tpu.transpose %157, [1, 0] : vector<4x32xf32> -> vector<32x4xf32>
    %168 = arith.truncf %167 : vector<32x4xf32> to vector<32x4xbf16>
    %cst_109 = arith.constant dense<0.000000e+00> : vector<8x4xf32>
    %169 = tpu.matmul %166, %168, %cst_109 {dimension_numbers = #tpu.dot_dimension_numbers<[1], [0], [0], [1], [0, 0, 1, 1], [], []>} : vector<8x32xbf16>, vector<32x4xbf16>, vector<8x4xf32> -> vector<8x4xf32>
    %cst_110 = arith.constant 0.176776692 : f32
    %170 = vector.broadcast %cst_110 : f32 to vector<8x4xf32>
    %171 = arith.mulf %169, %170 : vector<8x4xf32>
    %cst_111 = arith.constant dense<0xFF800000> : vector<8xf32>
    %172 = vector.multi_reduction <maximumf>, %171, %cst_111 [1] : vector<8x4xf32> to vector<8xf32>
    %173 = vector.shape_cast %172 : vector<8xf32> to vector<8x1xf32>
    %174 = vector.broadcast %173 : vector<8x1xf32> to vector<8x4xf32>
    %175 = arith.subf %171, %174 : vector<8x4xf32>
    %176 = math.exp %175 : vector<8x4xf32>
    %cst_112 = arith.constant dense<0.000000e+00> : vector<8xf32>
    %177 = vector.multi_reduction <add>, %176, %cst_112 [1] : vector<8x4xf32> to vector<8xf32>
    %178 = vector.shape_cast %177 : vector<8xf32> to vector<8x1xf32>
    %179 = tpu.reciprocal %178 {approx = true} : vector<8x1xf32> -> vector<8x1xf32>
    %180 = vector.broadcast %179 : vector<8x1xf32> to vector<8x4xf32>
    %181 = arith.mulf %176, %180 : vector<8x4xf32>
    %182 = arith.truncf %181 : vector<8x4xf32> to vector<8x4xbf16>
    %183 = arith.truncf %165 : vector<4x32xf32> to vector<4x32xbf16>
    %cst_113 = arith.constant dense<0.000000e+00> : vector<8x32xf32>
    %184 = tpu.matmul %182, %183, %cst_113 {dimension_numbers = #tpu.dot_dimension_numbers<[1], [0], [0], [1], [0, 0, 1, 1], [], []>} : vector<8x4xbf16>, vector<4x32xbf16>, vector<8x32xf32> -> vector<8x32xf32>
    %185 = arith.addf %96, %184 : vector<8x32xf32>
    %c0_114 = arith.constant 0 : index
    %c0_115 = arith.constant 0 : index
    %c0_116 = arith.constant 0 : index
    %186 = vector.load %arg30[%c0_114, %c0_115, %c0_116] : memref<2x1x32xf32, #tpu.memory_space<vmem>>, vector<1x1x32xf32>
    %187 = vector.shape_cast %186 : vector<1x1x32xf32> to vector<1x32xf32>
    %c0_117 = arith.constant 0 : index
    %c0_118 = arith.constant 0 : index
    %c0_119 = arith.constant 0 : index
    %188 = vector.load %arg31[%c0_117, %c0_118, %c0_119] : memref<2x1x32xf32, #tpu.memory_space<vmem>>, vector<1x1x32xf32>
    %189 = vector.shape_cast %188 : vector<1x1x32xf32> to vector<1x32xf32>
    %cst_120 = arith.constant dense<0.000000e+00> : vector<8xf32>
    %190 = vector.multi_reduction <add>, %185, %cst_120 [1] : vector<8x32xf32> to vector<8xf32>
    %191 = vector.shape_cast %190 : vector<8xf32> to vector<8x1xf32>
    %cst_121 = arith.constant 3.200000e+01 : f32
    %192 = vector.broadcast %cst_121 : f32 to vector<8x1xf32>
    %193 = arith.divf %191, %192 : vector<8x1xf32>
    %194 = vector.broadcast %193 : vector<8x1xf32> to vector<8x32xf32>
    %195 = arith.subf %185, %194 : vector<8x32xf32>
    %196 = arith.mulf %195, %195 : vector<8x32xf32>
    %cst_122 = arith.constant dense<0.000000e+00> : vector<8xf32>
    %197 = vector.multi_reduction <add>, %196, %cst_122 [1] : vector<8x32xf32> to vector<8xf32>
    %198 = vector.shape_cast %197 : vector<8xf32> to vector<8x1xf32>
    %cst_123 = arith.constant 3.200000e+01 : f32
    %199 = vector.broadcast %cst_123 : f32 to vector<8x1xf32>
    %200 = arith.divf %198, %199 : vector<8x1xf32>
    %201 = vector.broadcast %193 : vector<8x1xf32> to vector<8x32xf32>
    %202 = arith.subf %185, %201 : vector<8x32xf32>
    %cst_124 = arith.constant 9.99999974E-6 : f32
    %203 = vector.broadcast %cst_124 : f32 to vector<8x1xf32>
    %204 = arith.addf %200, %203 : vector<8x1xf32>
    %205 = math.rsqrt %204 : vector<8x1xf32>
    %206 = vector.broadcast %205 : vector<8x1xf32> to vector<8x32xf32>
    %207 = arith.mulf %202, %206 : vector<8x32xf32>
    %208 = vector.broadcast %187 : vector<1x32xf32> to vector<8x32xf32>
    %209 = arith.mulf %207, %208 : vector<8x32xf32>
    %210 = vector.broadcast %189 : vector<1x32xf32> to vector<8x32xf32>
    %211 = arith.addf %209, %210 : vector<8x32xf32>
    %c0_125 = arith.constant 0 : index
    %c0_126 = arith.constant 0 : index
    %c0_127 = arith.constant 0 : index
    %212 = vector.load %arg24[%c0_125, %c0_126, %c0_127] : memref<2x32x64xbf16, #tpu.memory_space<vmem>>, vector<1x32x64xbf16>
    %213 = vector.shape_cast %212 : vector<1x32x64xbf16> to vector<32x64xbf16>
    %214 = arith.truncf %211 : vector<8x32xf32> to vector<8x32xbf16>
    %cst_128 = arith.constant dense<0.000000e+00> : vector<8x64xf32>
    %215 = tpu.matmul %214, %213, %cst_128 {dimension_numbers = #tpu.dot_dimension_numbers<[1], [0], [0], [1], [0, 0, 1, 1], [], []>} : vector<8x32xbf16>, vector<32x64xbf16>, vector<8x64xf32> -> vector<8x64xf32>
    %c0_129 = arith.constant 0 : index
    %c0_130 = arith.constant 0 : index
    %c0_131 = arith.constant 0 : index
    %216 = vector.load %arg25[%c0_129, %c0_130, %c0_131] : memref<2x1x64xf32, #tpu.memory_space<vmem>>, vector<1x1x64xf32>
    %217 = vector.shape_cast %216 : vector<1x1x64xf32> to vector<1x64xf32>
    %218 = vector.broadcast %217 : vector<1x64xf32> to vector<8x64xf32>
    %219 = arith.addf %215, %218 : vector<8x64xf32>
    %cst_132 = arith.constant 5.000000e-01 : f32
    %220 = vector.broadcast %cst_132 : f32 to vector<8x64xf32>
    %221 = arith.mulf %220, %219 : vector<8x64xf32>
    %cst_133 = arith.constant 0.707106769 : f32
    %222 = vector.broadcast %cst_133 : f32 to vector<8x64xf32>
    %223 = arith.mulf %219, %222 : vector<8x64xf32>
    %224 = math.erf %223 : vector<8x64xf32>
    %cst_134 = arith.constant 1.000000e+00 : f32
    %225 = vector.broadcast %cst_134 : f32 to vector<8x64xf32>
    %226 = arith.addf %225, %224 : vector<8x64xf32>
    %227 = arith.mulf %221, %226 : vector<8x64xf32>
    %c0_135 = arith.constant 0 : index
    %c0_136 = arith.constant 0 : index
    %c0_137 = arith.constant 0 : index
    %228 = vector.load %arg26[%c0_135, %c0_136, %c0_137] : memref<2x64x32xbf16, #tpu.memory_space<vmem>>, vector<1x64x32xbf16>
    %229 = vector.shape_cast %228 : vector<1x64x32xbf16> to vector<64x32xbf16>
    %230 = arith.truncf %227 : vector<8x64xf32> to vector<8x64xbf16>
    %cst_138 = arith.constant dense<0.000000e+00> : vector<8x32xf32>
    %231 = tpu.matmul %230, %229, %cst_138 {dimension_numbers = #tpu.dot_dimension_numbers<[1], [0], [0], [1], [0, 0, 1, 1], [], []>} : vector<8x64xbf16>, vector<64x32xbf16>, vector<8x32xf32> -> vector<8x32xf32>
    %c0_139 = arith.constant 0 : index
    %c0_140 = arith.constant 0 : index
    %c0_141 = arith.constant 0 : index
    %232 = vector.load %arg27[%c0_139, %c0_140, %c0_141] : memref<2x1x32xf32, #tpu.memory_space<vmem>>, vector<1x1x32xf32>
    %233 = vector.shape_cast %232 : vector<1x1x32xf32> to vector<1x32xf32>
    %234 = vector.broadcast %233 : vector<1x32xf32> to vector<8x32xf32>
    %235 = arith.addf %231, %234 : vector<8x32xf32>
    %236 = arith.addf %211, %235 : vector<8x32xf32>
    %c0_142 = arith.constant 0 : index
    %c0_143 = arith.constant 0 : index
    %c0_144 = arith.constant 0 : index
    %237 = vector.load %arg32[%c0_142, %c0_143, %c0_144] : memref<2x1x32xf32, #tpu.memory_space<vmem>>, vector<1x1x32xf32>
    %238 = vector.shape_cast %237 : vector<1x1x32xf32> to vector<1x32xf32>
    %c0_145 = arith.constant 0 : index
    %c0_146 = arith.constant 0 : index
    %c0_147 = arith.constant 0 : index
    %239 = vector.load %arg33[%c0_145, %c0_146, %c0_147] : memref<2x1x32xf32, #tpu.memory_space<vmem>>, vector<1x1x32xf32>
    %240 = vector.shape_cast %239 : vector<1x1x32xf32> to vector<1x32xf32>
    %cst_148 = arith.constant dense<0.000000e+00> : vector<8xf32>
    %241 = vector.multi_reduction <add>, %236, %cst_148 [1] : vector<8x32xf32> to vector<8xf32>
    %242 = vector.shape_cast %241 : vector<8xf32> to vector<8x1xf32>
    %cst_149 = arith.constant 3.200000e+01 : f32
    %243 = vector.broadcast %cst_149 : f32 to vector<8x1xf32>
    %244 = arith.divf %242, %243 : vector<8x1xf32>
    %245 = vector.broadcast %244 : vector<8x1xf32> to vector<8x32xf32>
    %246 = arith.subf %236, %245 : vector<8x32xf32>
    %247 = arith.mulf %246, %246 : vector<8x32xf32>
    %cst_150 = arith.constant dense<0.000000e+00> : vector<8xf32>
    %248 = vector.multi_reduction <add>, %247, %cst_150 [1] : vector<8x32xf32> to vector<8xf32>
    %249 = vector.shape_cast %248 : vector<8xf32> to vector<8x1xf32>
    %cst_151 = arith.constant 3.200000e+01 : f32
    %250 = vector.broadcast %cst_151 : f32 to vector<8x1xf32>
    %251 = arith.divf %249, %250 : vector<8x1xf32>
    %252 = vector.broadcast %244 : vector<8x1xf32> to vector<8x32xf32>
    %253 = arith.subf %236, %252 : vector<8x32xf32>
    %cst_152 = arith.constant 9.99999974E-6 : f32
    %254 = vector.broadcast %cst_152 : f32 to vector<8x1xf32>
    %255 = arith.addf %251, %254 : vector<8x1xf32>
    %256 = math.rsqrt %255 : vector<8x1xf32>
    %257 = vector.broadcast %256 : vector<8x1xf32> to vector<8x32xf32>
    %258 = arith.mulf %253, %257 : vector<8x32xf32>
    %259 = vector.broadcast %238 : vector<1x32xf32> to vector<8x32xf32>
    %260 = arith.mulf %258, %259 : vector<8x32xf32>
    %261 = vector.broadcast %240 : vector<1x32xf32> to vector<8x32xf32>
    %262 = arith.addf %260, %261 : vector<8x32xf32>
    %263 = vector.shape_cast %262 : vector<8x32xf32> to vector<1x8x32xf32>
    %264 = vector.broadcast %263 : vector<1x8x32xf32> to vector<4x8x32xf32>
    %c1 = arith.constant 1 : index
    %c0_153 = arith.constant 0 : index
    %c0_154 = arith.constant 0 : index
    %c0_155 = arith.constant 0 : index
    %265 = vector.load %arg3[%c1, %c0_153, %c0_154, %c0_155] : memref<2x4x32x8xbf16, #tpu.memory_space<vmem>>, vector<1x4x32x8xbf16>
    %266 = vector.shape_cast %265 : vector<1x4x32x8xbf16> to vector<4x32x8xbf16>
    %267 = arith.truncf %264 : vector<4x8x32xf32> to vector<4x8x32xbf16>
    "tpu.trace_start"() <{level = 10 : i32, message = "hld,hde->hle"}> : () -> ()
    %cst_156 = arith.constant dense<0.000000e+00> : vector<4x8x8xf32>
    %268 = tpu.matmul %267, %266, %cst_156 {dimension_numbers = #tpu.dot_dimension_numbers<[2], [1], [1], [2], [0, 0, 0, 1, 1, 2], [0], [0]>} : vector<4x8x32xbf16>, vector<4x32x8xbf16>, vector<4x8x8xf32> -> vector<4x8x8xf32>
    "tpu.trace_stop"() : () -> ()
    %c1_157 = arith.constant 1 : index
    %c0_158 = arith.constant 0 : index
    %c0_159 = arith.constant 0 : index
    %c0_160 = arith.constant 0 : index
    %269 = vector.load %arg6[%c1_157, %c0_158, %c0_159, %c0_160] : memref<2x4x1x8xf32, #tpu.memory_space<vmem>>, vector<1x4x1x8xf32>
    %270 = vector.shape_cast %269 : vector<1x4x1x8xf32> to vector<4x1x8xf32>
    %271 = vector.broadcast %270 : vector<4x1x8xf32> to vector<4x8x8xf32>
    %272 = arith.addf %268, %271 : vector<4x8x8xf32>
    %c1_161 = arith.constant 1 : index
    %c0_162 = arith.constant 0 : index
    %c0_163 = arith.constant 0 : index
    %c0_164 = arith.constant 0 : index
    %273 = vector.load %arg4[%c1_161, %c0_162, %c0_163, %c0_164] : memref<2x4x32x8xbf16, #tpu.memory_space<vmem>>, vector<1x4x32x8xbf16>
    %274 = vector.shape_cast %273 : vector<1x4x32x8xbf16> to vector<4x32x8xbf16>
    %275 = arith.truncf %264 : vector<4x8x32xf32> to vector<4x8x32xbf16>
    "tpu.trace_start"() <{level = 10 : i32, message = "hld,hde->hle"}> : () -> ()
    %cst_165 = arith.constant dense<0.000000e+00> : vector<4x8x8xf32>
    %276 = tpu.matmul %275, %274, %cst_165 {dimension_numbers = #tpu.dot_dimension_numbers<[2], [1], [1], [2], [0, 0, 0, 1, 1, 2], [0], [0]>} : vector<4x8x32xbf16>, vector<4x32x8xbf16>, vector<4x8x8xf32> -> vector<4x8x8xf32>
    "tpu.trace_stop"() : () -> ()
    %c1_166 = arith.constant 1 : index
    %c0_167 = arith.constant 0 : index
    %c0_168 = arith.constant 0 : index
    %c0_169 = arith.constant 0 : index
    %277 = vector.load %arg7[%c1_166, %c0_167, %c0_168, %c0_169] : memref<2x4x1x8xf32, #tpu.memory_space<vmem>>, vector<1x4x1x8xf32>
    %278 = vector.shape_cast %277 : vector<1x4x1x8xf32> to vector<4x1x8xf32>
    %279 = vector.broadcast %278 : vector<4x1x8xf32> to vector<4x8x8xf32>
    %280 = arith.addf %276, %279 : vector<4x8x8xf32>
    %c1_170 = arith.constant 1 : index
    %c0_171 = arith.constant 0 : index
    %c0_172 = arith.constant 0 : index
    %c0_173 = arith.constant 0 : index
    %281 = vector.load %arg5[%c1_170, %c0_171, %c0_172, %c0_173] : memref<2x4x32x8xbf16, #tpu.memory_space<vmem>>, vector<1x4x32x8xbf16>
    %282 = vector.shape_cast %281 : vector<1x4x32x8xbf16> to vector<4x32x8xbf16>
    %283 = arith.truncf %264 : vector<4x8x32xf32> to vector<4x8x32xbf16>
    "tpu.trace_start"() <{level = 10 : i32, message = "hld,hde->hle"}> : () -> ()
    %cst_174 = arith.constant dense<0.000000e+00> : vector<4x8x8xf32>
    %284 = tpu.matmul %283, %282, %cst_174 {dimension_numbers = #tpu.dot_dimension_numbers<[2], [1], [1], [2], [0, 0, 0, 1, 1, 2], [0], [0]>} : vector<4x8x32xbf16>, vector<4x32x8xbf16>, vector<4x8x8xf32> -> vector<4x8x8xf32>
    "tpu.trace_stop"() : () -> ()
    %c1_175 = arith.constant 1 : index
    %c0_176 = arith.constant 0 : index
    %c0_177 = arith.constant 0 : index
    %c0_178 = arith.constant 0 : index
    %285 = vector.load %arg8[%c1_175, %c0_176, %c0_177, %c0_178] : memref<2x4x1x8xf32, #tpu.memory_space<vmem>>, vector<1x4x1x8xf32>
    %286 = vector.shape_cast %285 : vector<1x4x1x8xf32> to vector<4x1x8xf32>
    %287 = vector.broadcast %286 : vector<4x1x8xf32> to vector<4x8x8xf32>
    %288 = arith.addf %284, %287 : vector<4x8x8xf32>
    %289 = arith.truncf %272 : vector<4x8x8xf32> to vector<4x8x8xbf16>
    %290 = arith.truncf %280 : vector<4x8x8xf32> to vector<4x8x8xbf16>
    "tpu.trace_start"() <{level = 10 : i32, message = "hqe,hke->hqk"}> : () -> ()
    %cst_179 = arith.constant dense<0.000000e+00> : vector<4x8x8xf32>
    %291 = tpu.matmul %289, %290, %cst_179 {dimension_numbers = #tpu.dot_dimension_numbers<[2], [2], [1], [1], [0, 0, 0, 1, 1, 1], [0], [0]>} : vector<4x8x8xbf16>, vector<4x8x8xbf16>, vector<4x8x8xf32> -> vector<4x8x8xf32>
    "tpu.trace_stop"() : () -> ()
    %cst_180 = arith.constant 0.353553385 : f32
    %292 = vector.broadcast %cst_180 : f32 to vector<4x8x8xf32>
    %293 = arith.mulf %291, %292 : vector<4x8x8xf32>
    %294 = vector.shape_cast %13 : vector<8x8xf32> to vector<1x8x8xf32>
    %295 = vector.broadcast %294 : vector<1x8x8xf32> to vector<4x8x8xf32>
    %296 = arith.addf %293, %295 : vector<4x8x8xf32>
    %cst_181 = arith.constant dense<0xFF800000> : vector<4x8xf32>
    %297 = vector.multi_reduction <maximumf>, %296, %cst_181 [2] : vector<4x8x8xf32> to vector<4x8xf32>
    %298 = vector.shape_cast %297 : vector<4x8xf32> to vector<4x8x1xf32>
    %299 = vector.broadcast %298 : vector<4x8x1xf32> to vector<4x8x8xf32>
    %300 = arith.subf %296, %299 : vector<4x8x8xf32>
    %301 = math.exp %300 : vector<4x8x8xf32>
    %cst_182 = arith.constant dense<0.000000e+00> : vector<4x8xf32>
    %302 = vector.multi_reduction <add>, %301, %cst_182 [2] : vector<4x8x8xf32> to vector<4x8xf32>
    %303 = vector.shape_cast %302 : vector<4x8xf32> to vector<4x8x1xf32>
    %304 = tpu.reciprocal %303 {approx = true} : vector<4x8x1xf32> -> vector<4x8x1xf32>
    %305 = vector.broadcast %304 : vector<4x8x1xf32> to vector<4x8x8xf32>
    %306 = arith.mulf %301, %305 : vector<4x8x8xf32>
    %307 = arith.truncf %306 : vector<4x8x8xf32> to vector<4x8x8xbf16>
    %308 = arith.truncf %288 : vector<4x8x8xf32> to vector<4x8x8xbf16>
    "tpu.trace_start"() <{level = 10 : i32, message = "hqk,hke->hqe"}> : () -> ()
    %cst_183 = arith.constant dense<0.000000e+00> : vector<4x8x8xf32>
    %309 = tpu.matmul %307, %308, %cst_183 {dimension_numbers = #tpu.dot_dimension_numbers<[2], [1], [1], [2], [0, 0, 0, 1, 1, 2], [0], [0]>} : vector<4x8x8xbf16>, vector<4x8x8xbf16>, vector<4x8x8xf32> -> vector<4x8x8xf32>
    "tpu.trace_stop"() : () -> ()
    %c1_184 = arith.constant 1 : index
    %c0_185 = arith.constant 0 : index
    %c0_186 = arith.constant 0 : index
    %c0_187 = arith.constant 0 : index
    %310 = vector.load %arg9[%c1_184, %c0_185, %c0_186, %c0_187] : memref<2x4x8x32xbf16, #tpu.memory_space<vmem>>, vector<1x4x8x32xbf16>
    %311 = vector.shape_cast %310 : vector<1x4x8x32xbf16> to vector<4x8x32xbf16>
    %312 = arith.truncf %309 : vector<4x8x8xf32> to vector<4x8x8xbf16>
    "tpu.trace_start"() <{level = 10 : i32, message = "hqe,hed->hqd"}> : () -> ()
    %cst_188 = arith.constant dense<0.000000e+00> : vector<4x8x32xf32>
    %313 = tpu.matmul %312, %311, %cst_188 {dimension_numbers = #tpu.dot_dimension_numbers<[2], [1], [1], [2], [0, 0, 0, 1, 1, 2], [0], [0]>} : vector<4x8x8xbf16>, vector<4x8x32xbf16>, vector<4x8x32xf32> -> vector<4x8x32xf32>
    "tpu.trace_stop"() : () -> ()
    %cst_189 = arith.constant dense<0.000000e+00> : vector<8x32xf32>
    %314 = vector.multi_reduction <add>, %313, %cst_189 [0] : vector<4x8x32xf32> to vector<8x32xf32>
    %c1_190 = arith.constant 1 : index
    %c0_191 = arith.constant 0 : index
    %c0_192 = arith.constant 0 : index
    %315 = vector.load %arg10[%c1_190, %c0_191, %c0_192] : memref<2x1x32xf32, #tpu.memory_space<vmem>>, vector<1x1x32xf32>
    %316 = vector.shape_cast %315 : vector<1x1x32xf32> to vector<1x32xf32>
    %317 = vector.broadcast %316 : vector<1x32xf32> to vector<8x32xf32>
    %318 = arith.addf %314, %317 : vector<8x32xf32>
    %319 = arith.addf %262, %318 : vector<8x32xf32>
    %c1_193 = arith.constant 1 : index
    %c0_194 = arith.constant 0 : index
    %c0_195 = arith.constant 0 : index
    %320 = vector.load %arg28[%c1_193, %c0_194, %c0_195] : memref<2x1x32xf32, #tpu.memory_space<vmem>>, vector<1x1x32xf32>
    %321 = vector.shape_cast %320 : vector<1x1x32xf32> to vector<1x32xf32>
    %c1_196 = arith.constant 1 : index
    %c0_197 = arith.constant 0 : index
    %c0_198 = arith.constant 0 : index
    %322 = vector.load %arg29[%c1_196, %c0_197, %c0_198] : memref<2x1x32xf32, #tpu.memory_space<vmem>>, vector<1x1x32xf32>
    %323 = vector.shape_cast %322 : vector<1x1x32xf32> to vector<1x32xf32>
    %cst_199 = arith.constant dense<0.000000e+00> : vector<8xf32>
    %324 = vector.multi_reduction <add>, %319, %cst_199 [1] : vector<8x32xf32> to vector<8xf32>
    %325 = vector.shape_cast %324 : vector<8xf32> to vector<8x1xf32>
    %cst_200 = arith.constant 3.200000e+01 : f32
    %326 = vector.broadcast %cst_200 : f32 to vector<8x1xf32>
    %327 = arith.divf %325, %326 : vector<8x1xf32>
    %328 = vector.broadcast %327 : vector<8x1xf32> to vector<8x32xf32>
    %329 = arith.subf %319, %328 : vector<8x32xf32>
    %330 = arith.mulf %329, %329 : vector<8x32xf32>
    %cst_201 = arith.constant dense<0.000000e+00> : vector<8xf32>
    %331 = vector.multi_reduction <add>, %330, %cst_201 [1] : vector<8x32xf32> to vector<8xf32>
    %332 = vector.shape_cast %331 : vector<8xf32> to vector<8x1xf32>
    %cst_202 = arith.constant 3.200000e+01 : f32
    %333 = vector.broadcast %cst_202 : f32 to vector<8x1xf32>
    %334 = arith.divf %332, %333 : vector<8x1xf32>
    %335 = vector.broadcast %327 : vector<8x1xf32> to vector<8x32xf32>
    %336 = arith.subf %319, %335 : vector<8x32xf32>
    %cst_203 = arith.constant 9.99999974E-6 : f32
    %337 = vector.broadcast %cst_203 : f32 to vector<8x1xf32>
    %338 = arith.addf %334, %337 : vector<8x1xf32>
    %339 = math.rsqrt %338 : vector<8x1xf32>
    %340 = vector.broadcast %339 : vector<8x1xf32> to vector<8x32xf32>
    %341 = arith.mulf %336, %340 : vector<8x32xf32>
    %342 = vector.broadcast %321 : vector<1x32xf32> to vector<8x32xf32>
    %343 = arith.mulf %341, %342 : vector<8x32xf32>
    %344 = vector.broadcast %323 : vector<1x32xf32> to vector<8x32xf32>
    %345 = arith.addf %343, %344 : vector<8x32xf32>
    %c1_204 = arith.constant 1 : index
    %c0_205 = arith.constant 0 : index
    %c0_206 = arith.constant 0 : index
    %346 = vector.load %arg14[%c1_204, %c0_205, %c0_206] : memref<2x32x16xbf16, #tpu.memory_space<vmem>>, vector<1x32x16xbf16>
    %347 = vector.shape_cast %346 : vector<1x32x16xbf16> to vector<32x16xbf16>
    %348 = arith.truncf %345 : vector<8x32xf32> to vector<8x32xbf16>
    %cst_207 = arith.constant dense<0.000000e+00> : vector<8x16xf32>
    %349 = tpu.matmul %348, %347, %cst_207 {dimension_numbers = #tpu.dot_dimension_numbers<[1], [0], [0], [1], [0, 0, 1, 1], [], []>} : vector<8x32xbf16>, vector<32x16xbf16>, vector<8x16xf32> -> vector<8x16xf32>
    %c1_208 = arith.constant 1 : index
    %c0_209 = arith.constant 0 : index
    %c0_210 = arith.constant 0 : index
    %350 = vector.load %arg15[%c1_208, %c0_209, %c0_210] : memref<2x1x16xf32, #tpu.memory_space<vmem>>, vector<1x1x16xf32>
    %351 = vector.shape_cast %350 : vector<1x1x16xf32> to vector<1x16xf32>
    %352 = vector.broadcast %351 : vector<1x16xf32> to vector<8x16xf32>
    %353 = arith.addf %349, %352 : vector<8x16xf32>
    %c1_211 = arith.constant 1 : index
    %c0_212 = arith.constant 0 : index
    %c0_213 = arith.constant 0 : index
    %354 = vector.load %arg16[%c1_211, %c0_212, %c0_213] : memref<2x32x16xbf16, #tpu.memory_space<vmem>>, vector<1x32x16xbf16>
    %355 = vector.shape_cast %354 : vector<1x32x16xbf16> to vector<32x16xbf16>
    %356 = arith.truncf %345 : vector<8x32xf32> to vector<8x32xbf16>
    %cst_214 = arith.constant dense<0.000000e+00> : vector<8x16xf32>
    %357 = tpu.matmul %356, %355, %cst_214 {dimension_numbers = #tpu.dot_dimension_numbers<[1], [0], [0], [1], [0, 0, 1, 1], [], []>} : vector<8x32xbf16>, vector<32x16xbf16>, vector<8x16xf32> -> vector<8x16xf32>
    %c1_215 = arith.constant 1 : index
    %c0_216 = arith.constant 0 : index
    %c0_217 = arith.constant 0 : index
    %358 = vector.load %arg17[%c1_215, %c0_216, %c0_217] : memref<2x1x16xf32, #tpu.memory_space<vmem>>, vector<1x1x16xf32>
    %359 = vector.shape_cast %358 : vector<1x1x16xf32> to vector<1x16xf32>
    %360 = vector.broadcast %359 : vector<1x16xf32> to vector<8x16xf32>
    %361 = arith.addf %357, %360 : vector<8x16xf32>
    %c1_218 = arith.constant 1 : index
    %c0_219 = arith.constant 0 : index
    %c0_220 = arith.constant 0 : index
    %362 = vector.load %arg11[%c1_218, %c0_219, %c0_220] : memref<2x4x16xf32, #tpu.memory_space<vmem>>, vector<1x4x16xf32>
    %363 = vector.shape_cast %362 : vector<1x4x16xf32> to vector<4x16xf32>
    %c1_221 = arith.constant 1 : index
    %c0_222 = arith.constant 0 : index
    %c0_223 = arith.constant 0 : index
    %364 = vector.load %arg12[%c1_221, %c0_222, %c0_223] : memref<2x16x16xbf16, #tpu.memory_space<vmem>>, vector<1x16x16xbf16>
    %365 = vector.shape_cast %364 : vector<1x16x16xbf16> to vector<16x16xbf16>
    %366 = arith.truncf %363 : vector<4x16xf32> to vector<4x16xbf16>
    %cst_224 = arith.constant dense<0.000000e+00> : vector<4x16xf32>
    %367 = tpu.matmul %366, %365, %cst_224 {dimension_numbers = #tpu.dot_dimension_numbers<[1], [0], [0], [1], [0, 0, 1, 1], [], []>} : vector<4x16xbf16>, vector<16x16xbf16>, vector<4x16xf32> -> vector<4x16xf32>
    %c1_225 = arith.constant 1 : index
    %c0_226 = arith.constant 0 : index
    %c0_227 = arith.constant 0 : index
    %368 = vector.load %arg13[%c1_225, %c0_226, %c0_227] : memref<2x1x16xf32, #tpu.memory_space<vmem>>, vector<1x1x16xf32>
    %369 = vector.shape_cast %368 : vector<1x1x16xf32> to vector<1x16xf32>
    %370 = vector.broadcast %369 : vector<1x16xf32> to vector<4x16xf32>
    %371 = arith.addf %367, %370 : vector<4x16xf32>
    %372 = arith.truncf %371 : vector<4x16xf32> to vector<4x16xbf16>
    %373 = tpu.transpose %353, [1, 0] : vector<8x16xf32> -> vector<16x8xf32>
    %374 = arith.truncf %373 : vector<16x8xf32> to vector<16x8xbf16>
    %cst_228 = arith.constant dense<0.000000e+00> : vector<4x8xf32>
    %375 = tpu.matmul %372, %374, %cst_228 {dimension_numbers = #tpu.dot_dimension_numbers<[1], [0], [0], [1], [0, 0, 1, 1], [], []>} : vector<4x16xbf16>, vector<16x8xbf16>, vector<4x8xf32> -> vector<4x8xf32>
    %cst_229 = arith.constant 2.500000e-01 : f32
    %376 = vector.broadcast %cst_229 : f32 to vector<4x8xf32>
    %377 = arith.mulf %375, %376 : vector<4x8xf32>
    %cst_230 = arith.constant dense<0xFF800000> : vector<4xf32>
    %378 = vector.multi_reduction <maximumf>, %377, %cst_230 [1] : vector<4x8xf32> to vector<4xf32>
    %379 = vector.shape_cast %378 : vector<4xf32> to vector<4x1xf32>
    %380 = vector.broadcast %379 : vector<4x1xf32> to vector<4x8xf32>
    %381 = arith.subf %377, %380 : vector<4x8xf32>
    %382 = math.exp %381 : vector<4x8xf32>
    %cst_231 = arith.constant dense<0.000000e+00> : vector<4xf32>
    %383 = vector.multi_reduction <add>, %382, %cst_231 [1] : vector<4x8xf32> to vector<4xf32>
    %384 = vector.shape_cast %383 : vector<4xf32> to vector<4x1xf32>
    %385 = tpu.reciprocal %384 {approx = true} : vector<4x1xf32> -> vector<4x1xf32>
    %386 = vector.broadcast %385 : vector<4x1xf32> to vector<4x8xf32>
    %387 = arith.mulf %382, %386 : vector<4x8xf32>
    %388 = arith.truncf %387 : vector<4x8xf32> to vector<4x8xbf16>
    %389 = arith.truncf %361 : vector<8x16xf32> to vector<8x16xbf16>
    %cst_232 = arith.constant dense<0.000000e+00> : vector<4x16xf32>
    %390 = tpu.matmul %388, %389, %cst_232 {dimension_numbers = #tpu.dot_dimension_numbers<[1], [0], [0], [1], [0, 0, 1, 1], [], []>} : vector<4x8xbf16>, vector<8x16xbf16>, vector<4x16xf32> -> vector<4x16xf32>
    %c1_233 = arith.constant 1 : index
    %c0_234 = arith.constant 0 : index
    %c0_235 = arith.constant 0 : index
    %391 = vector.load %arg18[%c1_233, %c0_234, %c0_235] : memref<2x32x32xbf16, #tpu.memory_space<vmem>>, vector<1x32x32xbf16>
    %392 = vector.shape_cast %391 : vector<1x32x32xbf16> to vector<32x32xbf16>
    %393 = arith.truncf %345 : vector<8x32xf32> to vector<8x32xbf16>
    %cst_236 = arith.constant dense<0.000000e+00> : vector<8x32xf32>
    %394 = tpu.matmul %393, %392, %cst_236 {dimension_numbers = #tpu.dot_dimension_numbers<[1], [0], [0], [1], [0, 0, 1, 1], [], []>} : vector<8x32xbf16>, vector<32x32xbf16>, vector<8x32xf32> -> vector<8x32xf32>
    %c1_237 = arith.constant 1 : index
    %c0_238 = arith.constant 0 : index
    %c0_239 = arith.constant 0 : index
    %395 = vector.load %arg19[%c1_237, %c0_238, %c0_239] : memref<2x1x32xf32, #tpu.memory_space<vmem>>, vector<1x1x32xf32>
    %396 = vector.shape_cast %395 : vector<1x1x32xf32> to vector<1x32xf32>
    %397 = vector.broadcast %396 : vector<1x32xf32> to vector<8x32xf32>
    %398 = arith.addf %394, %397 : vector<8x32xf32>
    %c1_240 = arith.constant 1 : index
    %c0_241 = arith.constant 0 : index
    %c0_242 = arith.constant 0 : index
    %399 = vector.load %arg20[%c1_240, %c0_241, %c0_242] : memref<2x16x32xbf16, #tpu.memory_space<vmem>>, vector<1x16x32xbf16>
    %400 = vector.shape_cast %399 : vector<1x16x32xbf16> to vector<16x32xbf16>
    %401 = arith.truncf %390 : vector<4x16xf32> to vector<4x16xbf16>
    %cst_243 = arith.constant dense<0.000000e+00> : vector<4x32xf32>
    %402 = tpu.matmul %401, %400, %cst_243 {dimension_numbers = #tpu.dot_dimension_numbers<[1], [0], [0], [1], [0, 0, 1, 1], [], []>} : vector<4x16xbf16>, vector<16x32xbf16>, vector<4x32xf32> -> vector<4x32xf32>
    %c1_244 = arith.constant 1 : index
    %c0_245 = arith.constant 0 : index
    %c0_246 = arith.constant 0 : index
    %403 = vector.load %arg21[%c1_244, %c0_245, %c0_246] : memref<2x1x32xf32, #tpu.memory_space<vmem>>, vector<1x1x32xf32>
    %404 = vector.shape_cast %403 : vector<1x1x32xf32> to vector<1x32xf32>
    %405 = vector.broadcast %404 : vector<1x32xf32> to vector<4x32xf32>
    %406 = arith.addf %402, %405 : vector<4x32xf32>
    %c1_247 = arith.constant 1 : index
    %c0_248 = arith.constant 0 : index
    %c0_249 = arith.constant 0 : index
    %407 = vector.load %arg22[%c1_247, %c0_248, %c0_249] : memref<2x16x32xbf16, #tpu.memory_space<vmem>>, vector<1x16x32xbf16>
    %408 = vector.shape_cast %407 : vector<1x16x32xbf16> to vector<16x32xbf16>
    %409 = arith.truncf %390 : vector<4x16xf32> to vector<4x16xbf16>
    %cst_250 = arith.constant dense<0.000000e+00> : vector<4x32xf32>
    %410 = tpu.matmul %409, %408, %cst_250 {dimension_numbers = #tpu.dot_dimension_numbers<[1], [0], [0], [1], [0, 0, 1, 1], [], []>} : vector<4x16xbf16>, vector<16x32xbf16>, vector<4x32xf32> -> vector<4x32xf32>
    %c1_251 = arith.constant 1 : index
    %c0_252 = arith.constant 0 : index
    %c0_253 = arith.constant 0 : index
    %411 = vector.load %arg23[%c1_251, %c0_252, %c0_253] : memref<2x1x32xf32, #tpu.memory_space<vmem>>, vector<1x1x32xf32>
    %412 = vector.shape_cast %411 : vector<1x1x32xf32> to vector<1x32xf32>
    %413 = vector.broadcast %412 : vector<1x32xf32> to vector<4x32xf32>
    %414 = arith.addf %410, %413 : vector<4x32xf32>
    %415 = arith.truncf %398 : vector<8x32xf32> to vector<8x32xbf16>
    %416 = tpu.transpose %406, [1, 0] : vector<4x32xf32> -> vector<32x4xf32>
    %417 = arith.truncf %416 : vector<32x4xf32> to vector<32x4xbf16>
    %cst_254 = arith.constant dense<0.000000e+00> : vector<8x4xf32>
    %418 = tpu.matmul %415, %417, %cst_254 {dimension_numbers = #tpu.dot_dimension_numbers<[1], [0], [0], [1], [0, 0, 1, 1], [], []>} : vector<8x32xbf16>, vector<32x4xbf16>, vector<8x4xf32> -> vector<8x4xf32>
    %cst_255 = arith.constant 0.176776692 : f32
    %419 = vector.broadcast %cst_255 : f32 to vector<8x4xf32>
    %420 = arith.mulf %418, %419 : vector<8x4xf32>
    %cst_256 = arith.constant dense<0xFF800000> : vector<8xf32>
    %421 = vector.multi_reduction <maximumf>, %420, %cst_256 [1] : vector<8x4xf32> to vector<8xf32>
    %422 = vector.shape_cast %421 : vector<8xf32> to vector<8x1xf32>
    %423 = vector.broadcast %422 : vector<8x1xf32> to vector<8x4xf32>
    %424 = arith.subf %420, %423 : vector<8x4xf32>
    %425 = math.exp %424 : vector<8x4xf32>
    %cst_257 = arith.constant dense<0.000000e+00> : vector<8xf32>
    %426 = vector.multi_reduction <add>, %425, %cst_257 [1] : vector<8x4xf32> to vector<8xf32>
    %427 = vector.shape_cast %426 : vector<8xf32> to vector<8x1xf32>
    %428 = tpu.reciprocal %427 {approx = true} : vector<8x1xf32> -> vector<8x1xf32>
    %429 = vector.broadcast %428 : vector<8x1xf32> to vector<8x4xf32>
    %430 = arith.mulf %425, %429 : vector<8x4xf32>
    %431 = arith.truncf %430 : vector<8x4xf32> to vector<8x4xbf16>
    %432 = arith.truncf %414 : vector<4x32xf32> to vector<4x32xbf16>
    %cst_258 = arith.constant dense<0.000000e+00> : vector<8x32xf32>
    %433 = tpu.matmul %431, %432, %cst_258 {dimension_numbers = #tpu.dot_dimension_numbers<[1], [0], [0], [1], [0, 0, 1, 1], [], []>} : vector<8x4xbf16>, vector<4x32xbf16>, vector<8x32xf32> -> vector<8x32xf32>
    %434 = arith.addf %345, %433 : vector<8x32xf32>
    %c1_259 = arith.constant 1 : index
    %c0_260 = arith.constant 0 : index
    %c0_261 = arith.constant 0 : index
    %435 = vector.load %arg30[%c1_259, %c0_260, %c0_261] : memref<2x1x32xf32, #tpu.memory_space<vmem>>, vector<1x1x32xf32>
    %436 = vector.shape_cast %435 : vector<1x1x32xf32> to vector<1x32xf32>
    %c1_262 = arith.constant 1 : index
    %c0_263 = arith.constant 0 : index
    %c0_264 = arith.constant 0 : index
    %437 = vector.load %arg31[%c1_262, %c0_263, %c0_264] : memref<2x1x32xf32, #tpu.memory_space<vmem>>, vector<1x1x32xf32>
    %438 = vector.shape_cast %437 : vector<1x1x32xf32> to vector<1x32xf32>
    %cst_265 = arith.constant dense<0.000000e+00> : vector<8xf32>
    %439 = vector.multi_reduction <add>, %434, %cst_265 [1] : vector<8x32xf32> to vector<8xf32>
    %440 = vector.shape_cast %439 : vector<8xf32> to vector<8x1xf32>
    %cst_266 = arith.constant 3.200000e+01 : f32
    %441 = vector.broadcast %cst_266 : f32 to vector<8x1xf32>
    %442 = arith.divf %440, %441 : vector<8x1xf32>
    %443 = vector.broadcast %442 : vector<8x1xf32> to vector<8x32xf32>
    %444 = arith.subf %434, %443 : vector<8x32xf32>
    %445 = arith.mulf %444, %444 : vector<8x32xf32>
    %cst_267 = arith.constant dense<0.000000e+00> : vector<8xf32>
    %446 = vector.multi_reduction <add>, %445, %cst_267 [1] : vector<8x32xf32> to vector<8xf32>
    %447 = vector.shape_cast %446 : vector<8xf32> to vector<8x1xf32>
    %cst_268 = arith.constant 3.200000e+01 : f32
    %448 = vector.broadcast %cst_268 : f32 to vector<8x1xf32>
    %449 = arith.divf %447, %448 : vector<8x1xf32>
    %450 = vector.broadcast %442 : vector<8x1xf32> to vector<8x32xf32>
    %451 = arith.subf %434, %450 : vector<8x32xf32>
    %cst_269 = arith.constant 9.99999974E-6 : f32
    %452 = vector.broadcast %cst_269 : f32 to vector<8x1xf32>
    %453 = arith.addf %449, %452 : vector<8x1xf32>
    %454 = math.rsqrt %453 : vector<8x1xf32>
    %455 = vector.broadcast %454 : vector<8x1xf32> to vector<8x32xf32>
    %456 = arith.mulf %451, %455 : vector<8x32xf32>
    %457 = vector.broadcast %436 : vector<1x32xf32> to vector<8x32xf32>
    %458 = arith.mulf %456, %457 : vector<8x32xf32>
    %459 = vector.broadcast %438 : vector<1x32xf32> to vector<8x32xf32>
    %460 = arith.addf %458, %459 : vector<8x32xf32>
    %c1_270 = arith.constant 1 : index
    %c0_271 = arith.constant 0 : index
    %c0_272 = arith.constant 0 : index
    %461 = vector.load %arg24[%c1_270, %c0_271, %c0_272] : memref<2x32x64xbf16, #tpu.memory_space<vmem>>, vector<1x32x64xbf16>
    %462 = vector.shape_cast %461 : vector<1x32x64xbf16> to vector<32x64xbf16>
    %463 = arith.truncf %460 : vector<8x32xf32> to vector<8x32xbf16>
    %cst_273 = arith.constant dense<0.000000e+00> : vector<8x64xf32>
    %464 = tpu.matmul %463, %462, %cst_273 {dimension_numbers = #tpu.dot_dimension_numbers<[1], [0], [0], [1], [0, 0, 1, 1], [], []>} : vector<8x32xbf16>, vector<32x64xbf16>, vector<8x64xf32> -> vector<8x64xf32>
    %c1_274 = arith.constant 1 : index
    %c0_275 = arith.constant 0 : index
    %c0_276 = arith.constant 0 : index
    %465 = vector.load %arg25[%c1_274, %c0_275, %c0_276] : memref<2x1x64xf32, #tpu.memory_space<vmem>>, vector<1x1x64xf32>
    %466 = vector.shape_cast %465 : vector<1x1x64xf32> to vector<1x64xf32>
    %467 = vector.broadcast %466 : vector<1x64xf32> to vector<8x64xf32>
    %468 = arith.addf %464, %467 : vector<8x64xf32>
    %cst_277 = arith.constant 5.000000e-01 : f32
    %469 = vector.broadcast %cst_277 : f32 to vector<8x64xf32>
    %470 = arith.mulf %469, %468 : vector<8x64xf32>
    %cst_278 = arith.constant 0.707106769 : f32
    %471 = vector.broadcast %cst_278 : f32 to vector<8x64xf32>
    %472 = arith.mulf %468, %471 : vector<8x64xf32>
    %473 = math.erf %472 : vector<8x64xf32>
    %cst_279 = arith.constant 1.000000e+00 : f32
    %474 = vector.broadcast %cst_279 : f32 to vector<8x64xf32>
    %475 = arith.addf %474, %473 : vector<8x64xf32>
    %476 = arith.mulf %470, %475 : vector<8x64xf32>
    %c1_280 = arith.constant 1 : index
    %c0_281 = arith.constant 0 : index
    %c0_282 = arith.constant 0 : index
    %477 = vector.load %arg26[%c1_280, %c0_281, %c0_282] : memref<2x64x32xbf16, #tpu.memory_space<vmem>>, vector<1x64x32xbf16>
    %478 = vector.shape_cast %477 : vector<1x64x32xbf16> to vector<64x32xbf16>
    %479 = arith.truncf %476 : vector<8x64xf32> to vector<8x64xbf16>
    %cst_283 = arith.constant dense<0.000000e+00> : vector<8x32xf32>
    %480 = tpu.matmul %479, %478, %cst_283 {dimension_numbers = #tpu.dot_dimension_numbers<[1], [0], [0], [1], [0, 0, 1, 1], [], []>} : vector<8x64xbf16>, vector<64x32xbf16>, vector<8x32xf32> -> vector<8x32xf32>
    %c1_284 = arith.constant 1 : index
    %c0_285 = arith.constant 0 : index
    %c0_286 = arith.constant 0 : index
    %481 = vector.load %arg27[%c1_284, %c0_285, %c0_286] : memref<2x1x32xf32, #tpu.memory_space<vmem>>, vector<1x1x32xf32>
    %482 = vector.shape_cast %481 : vector<1x1x32xf32> to vector<1x32xf32>
    %483 = vector.broadcast %482 : vector<1x32xf32> to vector<8x32xf32>
    %484 = arith.addf %480, %483 : vector<8x32xf32>
    %485 = arith.addf %460, %484 : vector<8x32xf32>
    %c1_287 = arith.constant 1 : index
    %c0_288 = arith.constant 0 : index
    %c0_289 = arith.constant 0 : index
    %486 = vector.load %arg32[%c1_287, %c0_288, %c0_289] : memref<2x1x32xf32, #tpu.memory_space<vmem>>, vector<1x1x32xf32>
    %487 = vector.shape_cast %486 : vector<1x1x32xf32> to vector<1x32xf32>
    %c1_290 = arith.constant 1 : index
    %c0_291 = arith.constant 0 : index
    %c0_292 = arith.constant 0 : index
    %488 = vector.load %arg33[%c1_290, %c0_291, %c0_292] : memref<2x1x32xf32, #tpu.memory_space<vmem>>, vector<1x1x32xf32>
    %489 = vector.shape_cast %488 : vector<1x1x32xf32> to vector<1x32xf32>
    %cst_293 = arith.constant dense<0.000000e+00> : vector<8xf32>
    %490 = vector.multi_reduction <add>, %485, %cst_293 [1] : vector<8x32xf32> to vector<8xf32>
    %491 = vector.shape_cast %490 : vector<8xf32> to vector<8x1xf32>
    %cst_294 = arith.constant 3.200000e+01 : f32
    %492 = vector.broadcast %cst_294 : f32 to vector<8x1xf32>
    %493 = arith.divf %491, %492 : vector<8x1xf32>
    %494 = vector.broadcast %493 : vector<8x1xf32> to vector<8x32xf32>
    %495 = arith.subf %485, %494 : vector<8x32xf32>
    %496 = arith.mulf %495, %495 : vector<8x32xf32>
    %cst_295 = arith.constant dense<0.000000e+00> : vector<8xf32>
    %497 = vector.multi_reduction <add>, %496, %cst_295 [1] : vector<8x32xf32> to vector<8xf32>
    %498 = vector.shape_cast %497 : vector<8xf32> to vector<8x1xf32>
    %cst_296 = arith.constant 3.200000e+01 : f32
    %499 = vector.broadcast %cst_296 : f32 to vector<8x1xf32>
    %500 = arith.divf %498, %499 : vector<8x1xf32>
    %501 = vector.broadcast %493 : vector<8x1xf32> to vector<8x32xf32>
    %502 = arith.subf %485, %501 : vector<8x32xf32>
    %cst_297 = arith.constant 9.99999974E-6 : f32
    %503 = vector.broadcast %cst_297 : f32 to vector<8x1xf32>
    %504 = arith.addf %500, %503 : vector<8x1xf32>
    %505 = math.rsqrt %504 : vector<8x1xf32>
    %506 = vector.broadcast %505 : vector<8x1xf32> to vector<8x32xf32>
    %507 = arith.mulf %502, %506 : vector<8x32xf32>
    %508 = vector.broadcast %487 : vector<1x32xf32> to vector<8x32xf32>
    %509 = arith.mulf %507, %508 : vector<8x32xf32>
    %510 = vector.broadcast %489 : vector<1x32xf32> to vector<8x32xf32>
    %511 = arith.addf %509, %510 : vector<8x32xf32>
    %c0_298 = arith.constant 0 : index
    %c0_299 = arith.constant 0 : index
    %512 = vector.load %arg34[%c0_298, %c0_299] : memref<1x32xf32, #tpu.memory_space<vmem>>, vector<1x32xf32>
    %c0_300 = arith.constant 0 : index
    %c0_301 = arith.constant 0 : index
    %513 = vector.load %arg35[%c0_300, %c0_301] : memref<1x32xf32, #tpu.memory_space<vmem>>, vector<1x32xf32>
    %cst_302 = arith.constant dense<0.000000e+00> : vector<8xf32>
    %514 = vector.multi_reduction <add>, %511, %cst_302 [1] : vector<8x32xf32> to vector<8xf32>
    %515 = vector.shape_cast %514 : vector<8xf32> to vector<8x1xf32>
    %cst_303 = arith.constant 3.200000e+01 : f32
    %516 = vector.broadcast %cst_303 : f32 to vector<8x1xf32>
    %517 = arith.divf %515, %516 : vector<8x1xf32>
    %518 = vector.broadcast %517 : vector<8x1xf32> to vector<8x32xf32>
    %519 = arith.subf %511, %518 : vector<8x32xf32>
    %520 = arith.mulf %519, %519 : vector<8x32xf32>
    %cst_304 = arith.constant dense<0.000000e+00> : vector<8xf32>
    %521 = vector.multi_reduction <add>, %520, %cst_304 [1] : vector<8x32xf32> to vector<8xf32>
    %522 = vector.shape_cast %521 : vector<8xf32> to vector<8x1xf32>
    %cst_305 = arith.constant 3.200000e+01 : f32
    %523 = vector.broadcast %cst_305 : f32 to vector<8x1xf32>
    %524 = arith.divf %522, %523 : vector<8x1xf32>
    %525 = vector.broadcast %517 : vector<8x1xf32> to vector<8x32xf32>
    %526 = arith.subf %511, %525 : vector<8x32xf32>
    %cst_306 = arith.constant 9.99999974E-6 : f32
    %527 = vector.broadcast %cst_306 : f32 to vector<8x1xf32>
    %528 = arith.addf %524, %527 : vector<8x1xf32>
    %529 = math.rsqrt %528 : vector<8x1xf32>
    %530 = vector.broadcast %529 : vector<8x1xf32> to vector<8x32xf32>
    %531 = arith.mulf %526, %530 : vector<8x32xf32>
    %532 = vector.broadcast %512 : vector<1x32xf32> to vector<8x32xf32>
    %533 = arith.mulf %531, %532 : vector<8x32xf32>
    %534 = vector.broadcast %513 : vector<1x32xf32> to vector<8x32xf32>
    %535 = arith.addf %533, %534 : vector<8x32xf32>
    %c0_307 = arith.constant 0 : index
    %c0_308 = arith.constant 0 : index
    %536 = vector.load %arg36[%c0_307, %c0_308] : memref<32x64xbf16, #tpu.memory_space<vmem>>, vector<32x64xbf16>
    %537 = arith.truncf %535 : vector<8x32xf32> to vector<8x32xbf16>
    %cst_309 = arith.constant dense<0.000000e+00> : vector<8x64xf32>
    %538 = tpu.matmul %537, %536, %cst_309 {dimension_numbers = #tpu.dot_dimension_numbers<[1], [0], [0], [1], [0, 0, 1, 1], [], []>} : vector<8x32xbf16>, vector<32x64xbf16>, vector<8x64xf32> -> vector<8x64xf32>
    %c0_310 = arith.constant 0 : index
    %c0_311 = arith.constant 0 : index
    %c0_312 = arith.constant 0 : index
    %539 = vector.load %arg37[%c0_310, %c0_311, %c0_312] : memref<1x8x64xf32, #tpu.memory_space<vmem>>, vector<1x8x64xf32>
    %540 = vector.shape_cast %539 : vector<1x8x64xf32> to vector<8x64xf32>
    %541 = vector.shape_cast %538 : vector<8x64xf32> to vector<1x8x64xf32>
    tpu.vector_store %arg37[%c0_310, %c0_311, %c0_312], %541 {strides = array<i32>} : memref<1x8x64xf32, #tpu.memory_space<vmem>>, vector<1x8x64xf32>,
    return
  }
  func.func @transform_0(%arg0: i32) -> (i32, i32, i32) {
    %c0_i32 = arith.constant 0 : i32
    %c0_i32_0 = arith.constant 0 : i32
    %c0_i32_1 = arith.constant 0 : i32
    return %arg0, %c0_i32, %c0_i32_0 : i32, i32, i32
  }
  func.func @transform_1(%arg0: i32) -> (i32, i32, i32) {
    %c0_i32 = arith.constant 0 : i32
    %c0_i32_0 = arith.constant 0 : i32
    %c0_i32_1 = arith.constant 0 : i32
    return %arg0, %c0_i32, %c0_i32_0 : i32, i32, i32
  }
  func.func @transform_2(%arg0: i32) -> (i32, i32, i32, i32) {
    %c0_i32 = arith.constant 0 : i32
    %c0_i32_0 = arith.constant 0 : i32
    %c0_i32_1 = arith.constant 0 : i32
    %c0_i32_2 = arith.constant 0 : i32
    %c0_i32_3 = arith.constant 0 : i32
    return %c0_i32, %c0_i32_0, %c0_i32_1, %c0_i32_2 : i32, i32, i32, i32
  }
  func.func @transform_3(%arg0: i32) -> (i32, i32, i32, i32) {
    %c0_i32 = arith.constant 0 : i32
    %c0_i32_0 = arith.constant 0 : i32
    %c0_i32_1 = arith.constant 0 : i32
    %c0_i32_2 = arith.constant 0 : i32
    %c0_i32_3 = arith.constant 0 : i32
    return %c0_i32, %c0_i32_0, %c0_i32_1, %c0_i32_2 : i32, i32, i32, i32
  }
  func.func @transform_4(%arg0: i32) -> (i32, i32, i32, i32) {
    %c0_i32 = arith.constant 0 : i32
    %c0_i32_0 = arith.constant 0 : i32
    %c0_i32_1 = arith.constant 0 : i32
    %c0_i32_2 = arith.constant 0 : i32
    %c0_i32_3 = arith.constant 0 : i32
    return %c0_i32, %c0_i32_0, %c0_i32_1, %c0_i32_2 : i32, i32, i32, i32
  }
  func.func @transform_5(%arg0: i32) -> (i32, i32, i32, i32) {
    %c0_i32 = arith.constant 0 : i32
    %c0_i32_0 = arith.constant 0 : i32
    %c0_i32_1 = arith.constant 0 : i32
    %c0_i32_2 = arith.constant 0 : i32
    %c0_i32_3 = arith.constant 0 : i32
    return %c0_i32, %c0_i32_0, %c0_i32_1, %c0_i32_2 : i32, i32, i32, i32
  }
  func.func @transform_6(%arg0: i32) -> (i32, i32, i32, i32) {
    %c0_i32 = arith.constant 0 : i32
    %c0_i32_0 = arith.constant 0 : i32
    %c0_i32_1 = arith.constant 0 : i32
    %c0_i32_2 = arith.constant 0 : i32
    %c0_i32_3 = arith.constant 0 : i32
    return %c0_i32, %c0_i32_0, %c0_i32_1, %c0_i32_2 : i32, i32, i32, i32
  }
  func.func @transform_7(%arg0: i32) -> (i32, i32, i32, i32) {
    %c0_i32 = arith.constant 0 : i32
    %c0_i32_0 = arith.constant 0 : i32
    %c0_i32_1 = arith.constant 0 : i32
    %c0_i32_2 = arith.constant 0 : i32
    %c0_i32_3 = arith.constant 0 : i32
    return %c0_i32, %c0_i32_0, %c0_i32_1, %c0_i32_2 : i32, i32, i32, i32
  }
  func.func @transform_8(%arg0: i32) -> (i32, i32, i32, i32) {
    %c0_i32 = arith.constant 0 : i32
    %c0_i32_0 = arith.constant 0 : i32
    %c0_i32_1 = arith.constant 0 : i32
    %c0_i32_2 = arith.constant 0 : i32
    %c0_i32_3 = arith.constant 0 : i32
    return %c0_i32, %c0_i32_0, %c0_i32_1, %c0_i32_2 : i32, i32, i32, i32
  }
  func.func @transform_9(%arg0: i32) -> (i32, i32, i32) {
    %c0_i32 = arith.constant 0 : i32
    %c0_i32_0 = arith.constant 0 : i32
    %c0_i32_1 = arith.constant 0 : i32
    %c0_i32_2 = arith.constant 0 : i32
    return %c0_i32, %c0_i32_0, %c0_i32_1 : i32, i32, i32
  }
  func.func @transform_10(%arg0: i32) -> (i32, i32, i32) {
    %c0_i32 = arith.constant 0 : i32
    %c0_i32_0 = arith.constant 0 : i32
    %c0_i32_1 = arith.constant 0 : i32
    %c0_i32_2 = arith.constant 0 : i32
    return %c0_i32, %c0_i32_0, %c0_i32_1 : i32, i32, i32
  }
  func.func @transform_11(%arg0: i32) -> (i32, i32, i32) {
    %c0_i32 = arith.constant 0 : i32
    %c0_i32_0 = arith.constant 0 : i32
    %c0_i32_1 = arith.constant 0 : i32
    %c0_i32_2 = arith.constant 0 : i32
    return %c0_i32, %c0_i32_0, %c0_i32_1 : i32, i32, i32
  }
  func.func @transform_12(%arg0: i32) -> (i32, i32, i32) {
    %c0_i32 = arith.constant 0 : i32
    %c0_i32_0 = arith.constant 0 : i32
    %c0_i32_1 = arith.constant 0 : i32
    %c0_i32_2 = arith.constant 0 : i32
    return %c0_i32, %c0_i32_0, %c0_i32_1 : i32, i32, i32
  }
  func.func @transform_13(%arg0: i32) -> (i32, i32, i32) {
    %c0_i32 = arith.constant 0 : i32
    %c0_i32_0 = arith.constant 0 : i32
    %c0_i32_1 = arith.constant 0 : i32
    %c0_i32_2 = arith.constant 0 : i32
    return %c0_i32, %c0_i32_0, %c0_i32_1 : i32, i32, i32
  }
  func.func @transform_14(%arg0: i32) -> (i32, i32, i32) {
    %c0_i32 = arith.constant 0 : i32
    %c0_i32_0 = arith.constant 0 : i32
    %c0_i32_1 = arith.constant 0 : i32
    %c0_i32_2 = arith.constant 0 : i32
    return %c0_i32, %c0_i32_0, %c0_i32_1 : i32, i32, i32
  }
  func.func @transform_15(%arg0: i32) -> (i32, i32, i32) {
    %c0_i32 = arith.constant 0 : i32
    %c0_i32_0 = arith.constant 0 : i32
    %c0_i32_1 = arith.constant 0 : i32
    %c0_i32_2 = arith.constant 0 : i32
    return %c0_i32, %c0_i32_0, %c0_i32_1 : i32, i32, i32
  }
  func.func @transform_16(%arg0: i32) -> (i32, i32, i32) {
    %c0_i32 = arith.constant 0 : i32
    %c0_i32_0 = arith.constant 0 : i32
    %c0_i32_1 = arith.constant 0 : i32
    %c0_i32_2 = arith.constant 0 : i32
    return %c0_i32, %c0_i32_0, %c0_i32_1 : i32, i32, i32
  }
  func.func @transform_17(%arg0: i32) -> (i32, i32, i32) {
    %c0_i32 = arith.constant 0 : i32
    %c0_i32_0 = arith.constant 0 : i32
    %c0_i32_1 = arith.constant 0 : i32
    %c0_i32_2 = arith.constant 0 : i32
    return %c0_i32, %c0_i32_0, %c0_i32_1 : i32, i32, i32
  }
  func.func @transform_18(%arg0: i32) -> (i32, i32, i32) {
    %c0_i32 = arith.constant 0 : i32
    %c0_i32_0 = arith.constant 0 : i32
    %c0_i32_1 = arith.constant 0 : i32
    %c0_i32_2 = arith.constant 0 : i32
    return %c0_i32, %c0_i32_0, %c0_i32_1 : i32, i32, i32
  }
  func.func @transform_19(%arg0: i32) -> (i32, i32, i32) {
    %c0_i32 = arith.constant 0 : i32
    %c0_i32_0 = arith.constant 0 : i32
    %c0_i32_1 = arith.constant 0 : i32
    %c0_i32_2 = arith.constant 0 : i32
    return %c0_i32, %c0_i32_0, %c0_i32_1 : i32, i32, i32
  }
  func.func @transform_20(%arg0: i32) -> (i32, i32, i32) {
    %c0_i32 = arith.constant 0 : i32
    %c0_i32_0 = arith.constant 0 : i32
    %c0_i32_1 = arith.constant 0 : i32
    %c0_i32_2 = arith.constant 0 : i32
    return %c0_i32, %c0_i32_0, %c0_i32_1 : i32, i32, i32
  }
  func.func @transform_21(%arg0: i32) -> (i32, i32, i32) {
    %c0_i32 = arith.constant 0 : i32
    %c0_i32_0 = arith.constant 0 : i32
    %c0_i32_1 = arith.constant 0 : i32
    %c0_i32_2 = arith.constant 0 : i32
    return %c0_i32, %c0_i32_0, %c0_i32_1 : i32, i32, i32
  }
  func.func @transform_22(%arg0: i32) -> (i32, i32, i32) {
    %c0_i32 = arith.constant 0 : i32
    %c0_i32_0 = arith.constant 0 : i32
    %c0_i32_1 = arith.constant 0 : i32
    %c0_i32_2 = arith.constant 0 : i32
    return %c0_i32, %c0_i32_0, %c0_i32_1 : i32, i32, i32
  }
  func.func @transform_23(%arg0: i32) -> (i32, i32, i32) {
    %c0_i32 = arith.constant 0 : i32
    %c0_i32_0 = arith.constant 0 : i32
    %c0_i32_1 = arith.constant 0 : i32
    %c0_i32_2 = arith.constant 0 : i32
    return %c0_i32, %c0_i32_0, %c0_i32_1 : i32, i32, i32
  }
  func.func @transform_24(%arg0: i32) -> (i32, i32, i32) {
    %c0_i32 = arith.constant 0 : i32
    %c0_i32_0 = arith.constant 0 : i32
    %c0_i32_1 = arith.constant 0 : i32
    %c0_i32_2 = arith.constant 0 : i32
    return %c0_i32, %c0_i32_0, %c0_i32_1 : i32, i32, i32
  }
  func.func @transform_25(%arg0: i32) -> (i32, i32, i32) {
    %c0_i32 = arith.constant 0 : i32
    %c0_i32_0 = arith.constant 0 : i32
    %c0_i32_1 = arith.constant 0 : i32
    %c0_i32_2 = arith.constant 0 : i32
    return %c0_i32, %c0_i32_0, %c0_i32_1 : i32, i32, i32
  }
  func.func @transform_26(%arg0: i32) -> (i32, i32, i32) {
    %c0_i32 = arith.constant 0 : i32
    %c0_i32_0 = arith.constant 0 : i32
    %c0_i32_1 = arith.constant 0 : i32
    %c0_i32_2 = arith.constant 0 : i32
    return %c0_i32, %c0_i32_0, %c0_i32_1 : i32, i32, i32
  }
  func.func @transform_27(%arg0: i32) -> (i32, i32, i32) {
    %c0_i32 = arith.constant 0 : i32
    %c0_i32_0 = arith.constant 0 : i32
    %c0_i32_1 = arith.constant 0 : i32
    %c0_i32_2 = arith.constant 0 : i32
    return %c0_i32, %c0_i32_0, %c0_i32_1 : i32, i32, i32
  }
  func.func @transform_28(%arg0: i32) -> (i32, i32, i32) {
    %c0_i32 = arith.constant 0 : i32
    %c0_i32_0 = arith.constant 0 : i32
    %c0_i32_1 = arith.constant 0 : i32
    %c0_i32_2 = arith.constant 0 : i32
    return %c0_i32, %c0_i32_0, %c0_i32_1 : i32, i32, i32
  }
  func.func @transform_29(%arg0: i32) -> (i32, i32, i32) {
    %c0_i32 = arith.constant 0 : i32
    %c0_i32_0 = arith.constant 0 : i32
    %c0_i32_1 = arith.constant 0 : i32
    %c0_i32_2 = arith.constant 0 : i32
    return %c0_i32, %c0_i32_0, %c0_i32_1 : i32, i32, i32
  }
  func.func @transform_30(%arg0: i32) -> (i32, i32, i32) {
    %c0_i32 = arith.constant 0 : i32
    %c0_i32_0 = arith.constant 0 : i32
    %c0_i32_1 = arith.constant 0 : i32
    %c0_i32_2 = arith.constant 0 : i32
    return %c0_i32, %c0_i32_0, %c0_i32_1 : i32, i32, i32
  }
  func.func @transform_31(%arg0: i32) -> (i32, i32, i32) {
    %c0_i32 = arith.constant 0 : i32
    %c0_i32_0 = arith.constant 0 : i32
    %c0_i32_1 = arith.constant 0 : i32
    %c0_i32_2 = arith.constant 0 : i32
    return %c0_i32, %c0_i32_0, %c0_i32_1 : i32, i32, i32
  }
  func.func @transform_32(%arg0: i32) -> (i32, i32, i32) {
    %c0_i32 = arith.constant 0 : i32
    %c0_i32_0 = arith.constant 0 : i32
    %c0_i32_1 = arith.constant 0 : i32
    %c0_i32_2 = arith.constant 0 : i32
    return %c0_i32, %c0_i32_0, %c0_i32_1 : i32, i32, i32
  }
  func.func @transform_33(%arg0: i32) -> (i32, i32) {
    %c0_i32 = arith.constant 0 : i32
    %c0_i32_0 = arith.constant 0 : i32
    %c0_i32_1 = arith.constant 0 : i32
    return %c0_i32, %c0_i32_0 : i32, i32
  }
  func.func @transform_34(%arg0: i32) -> (i32, i32) {
    %c0_i32 = arith.constant 0 : i32
    %c0_i32_0 = arith.constant 0 : i32
    %c0_i32_1 = arith.constant 0 : i32
    return %c0_i32, %c0_i32_0 : i32, i32
  }
  func.func @transform_35(%arg0: i32) -> (i32, i32) {
    %c0_i32 = arith.constant 0 : i32
    %c0_i32_0 = arith.constant 0 : i32
    %c0_i32_1 = arith.constant 0 : i32
    return %c0_i32, %c0_i32_0 : i32, i32
  }
  func.func @transform_36(%arg0: i32) -> (i32, i32, i32) {
    %c0_i32 = arith.constant 0 : i32
    %c0_i32_0 = arith.constant 0 : i32
    %c0_i32_1 = arith.constant 0 : i32
    return %arg0, %c0_i32, %c0_i32_0 : i32, i32, i32
  }
}

</mosaic_0001>

<llo_original>
// kernel: tpu_custom_call.1
$region0: #{tpu_custom_call.1}
  #allocation0 [shape = 'u32[]', space=smem, size = 0x4, offset = 0x4, fixed_abs, tag = 'smem constant byte address 0x4 - core index']
  #allocation1 [shape = 'u32[144,128]{1,0:T(1,128)}', space=vmem, size = 0x12000, scoped, tag = 'internal scratch']
  %s0 = inlined_call_operand.smem [shape: u32[37], index: -1, kind: input, shape index: {}]
  %s1 = sld [smem:[%s0]]
  %s2 = scalar_lea.smem %s0, 1
  %s3 = sld [smem:[%s2]]
  %s4 = scalar_lea.smem %s0, 2
  %s5 = sld [smem:[%s4]]
  %s6 = scalar_lea.smem %s0, 3
  %s7 = sld [smem:[%s6]]
  %s8 = scalar_lea.smem %s0, 4
  %s9 = sld [smem:[%s8]]
  %s10 = scalar_lea.smem %s0, 5
  %s11 = sld [smem:[%s10]]
  %s12 = scalar_lea.smem %s0, 6
  %s13 = sld [smem:[%s12]]
  %s14 = scalar_lea.smem %s0, 7
  %s15 = sld [smem:[%s14]]
  %s16 = scalar_lea.smem %s0, 8
  %s17 = sld [smem:[%s16]]
  %s18 = scalar_lea.smem %s0, 9
  %s19 = sld [smem:[%s18]]
  %s20 = scalar_lea.smem %s0, 10
  %s21 = sld [smem:[%s20]]
  %s22 = scalar_lea.smem %s0, 11
  %s23 = sld [smem:[%s22]]
  %s24 = scalar_lea.smem %s0, 12
  %s25 = sld [smem:[%s24]]
  %s26 = scalar_lea.smem %s0, 13
  %s27 = sld [smem:[%s26]]
  %s28 = scalar_lea.smem %s0, 14
  %s29 = sld [smem:[%s28]]
  %s30 = scalar_lea.smem %s0, 15
  %s31 = sld [smem:[%s30]]
  %s32 = scalar_lea.smem %s0, 16
  %s33 = sld [smem:[%s32]]
  %s34 = scalar_lea.smem %s0, 17
  %s35 = sld [smem:[%s34]]
  %s36 = scalar_lea.smem %s0, 18
  %s37 = sld [smem:[%s36]]
  %s38 = scalar_lea.smem %s0, 19
  %s39 = sld [smem:[%s38]]
  %s40 = scalar_lea.smem %s0, 20
  %s41 = sld [smem:[%s40]]
  %s42 = scalar_lea.smem %s0, 21
  %s43 = sld [smem:[%s42]]
  %s44 = scalar_lea.smem %s0, 22
  %s45 = sld [smem:[%s44]]
  %s46 = scalar_lea.smem %s0, 23
  %s47 = sld [smem:[%s46]]
  %s48 = scalar_lea.smem %s0, 24
  %s49 = sld [smem:[%s48]]
  %s50 = scalar_lea.smem %s0, 25
  %s51 = sld [smem:[%s50]]
  %s52 = scalar_lea.smem %s0, 26
  %s53 = sld [smem:[%s52]]
  %s54 = scalar_lea.smem %s0, 27
  %s55 = sld [smem:[%s54]]
  %s56 = scalar_lea.smem %s0, 28
  %s57 = sld [smem:[%s56]]
  %s58 = scalar_lea.smem %s0, 29
  %s59 = sld [smem:[%s58]]
  %s60 = scalar_lea.smem %s0, 30
  %s61 = sld [smem:[%s60]]
  %s62 = scalar_lea.smem %s0, 31
  %s63 = sld [smem:[%s62]]
  %s64 = scalar_lea.smem %s0, 32
  %s65 = sld [smem:[%s64]]
  %s66 = scalar_lea.smem %s0, 33
  %s67 = sld [smem:[%s66]]
  %s68 = scalar_lea.smem %s0, 34
  %s69 = sld [smem:[%s68]]
  %s70 = scalar_lea.smem %s0, 35
  %s71 = sld [smem:[%s70]]
  %s72 = scalar_lea.smem %s0, 36
  %s73 = sld [smem:[%s72]]
  %s74 = sld [smem:[#allocation0]]
  $region177: #{tpu_custom_call.1} parent=0
    _
  %s76 = ssub.s32 1, %s74
  %s77 = scalar_select 0, %s76, %s74
  $region1: #{tpu_custom_call.1} parent=0
    #allocation2 [shape = 'u8[8192]{0}', space=vmem, size = 0x2000, scoped, tag = 'output window, operand 0']
    #allocation3 [shape = 's32[2]{0}', space=sflag, size = 0x8, scoped, tag = 'scoped memory for tpu_custom_call.1']
    %78 = vsyncpa [#allocation3], 0
    %s79 = scalar_lea.sflag [#allocation3], 1
    %80 = vsyncpa %s79, 0
    loop: start=0, step=1, limit=4
    $region2: #{tpu_custom_call.1} parent=1 // loop_pre_header
      _
    $region3: #{tpu_custom_call.1} parent=1 // loop_header
      %s82 = sphi 0, %s86
      %p83 = scmp.ge.s32.totalorder %s82, 4
      %s92 = sphi 0, %s94
      %s95 = sphi 0, %s92
      %s96 = sphi 0, %s95
      %s112 = sphi 0, %s96
      %s118 = sphi 0, %s120
      %s121 = sphi 0, %s118
      %s122 = sphi 0, %s121
      %s138 = sphi 0, %s122
      %s142 = sphi 0, %s142
      %s144 = sphi 0, %s142
      %s145 = sphi 0, %s144
      %s159 = sphi 0, %s145
      %s163 = sphi 0, %s163
      %s165 = sphi 0, %s163
      %s166 = sphi 0, %s165
      %s180 = sphi 0, %s166
      %s184 = sphi 0, %s184
      %s186 = sphi 0, %s184
      %s187 = sphi 0, %s186
      %s201 = sphi 0, %s187
      %s205 = sphi 0, %s205
      %s207 = sphi 0, %s205
      %s208 = sphi 0, %s207
      %s222 = sphi 0, %s208
      %s226 = sphi 0, %s226
      %s228 = sphi 0, %s226
      %s229 = sphi 0, %s228
      %s243 = sphi 0, %s229
      %s247 = sphi 0, %s247
      %s249 = sphi 0, %s247
      %s250 = sphi 0, %s249
      %s264 = sphi 0, %s250
      %s268 = sphi 0, %s268
      %s270 = sphi 0, %s268
      %s271 = sphi 0, %s270
      %s285 = sphi 0, %s271
      %s289 = sphi 0, %s289
      %s291 = sphi 0, %s289
      %s292 = sphi 0, %s291
      %s306 = sphi 0, %s292
      %s310 = sphi 0, %s310
      %s312 = sphi 0, %s310
      %s313 = sphi 0, %s312
      %s327 = sphi 0, %s313
      %s331 = sphi 0, %s331
      %s333 = sphi 0, %s331
      %s334 = sphi 0, %s333
      %s348 = sphi 0, %s334
      %s352 = sphi 0, %s352
      %s354 = sphi 0, %s352
      %s355 = sphi 0, %s354
      %s369 = sphi 0, %s355
      %s373 = sphi 0, %s373
      %s375 = sphi 0, %s373
      %s376 = sphi 0, %s375
      %s390 = sphi 0, %s376
      %s394 = sphi 0, %s394
      %s396 = sphi 0, %s394
      %s397 = sphi 0, %s396
      %s411 = sphi 0, %s397
      %s415 = sphi 0, %s415
      %s417 = sphi 0, %s415
      %s418 = sphi 0, %s417
      %s432 = sphi 0, %s418
      %s436 = sphi 0, %s436
      %s438 = sphi 0, %s436
      %s439 = sphi 0, %s438
      %s453 = sphi 0, %s439
      %s457 = sphi 0, %s457
      %s459 = sphi 0, %s457
      %s460 = sphi 0, %s459
      %s474 = sphi 0, %s460
      %s478 = sphi 0, %s478
      %s480 = sphi 0, %s478
      %s481 = sphi 0, %s480
      %s495 = sphi 0, %s481
      %s499 = sphi 0, %s499
      %s501 = sphi 0, %s499
      %s502 = sphi 0, %s501
      %s516 = sphi 0, %s502
      %s520 = sphi 0, %s520
      %s522 = sphi 0, %s520
      %s523 = sphi 0, %s522
      %s537 = sphi 0, %s523
      %s541 = sphi 0, %s541
      %s543 = sphi 0, %s541
      %s544 = sphi 0, %s543
      %s558 = sphi 0, %s544
      %s562 = sphi 0, %s562
      %s564 = sphi 0, %s562
      %s565 = sphi 0, %s564
      %s579 = sphi 0, %s565
      %s583 = sphi 0, %s583
      %s585 = sphi 0, %s583
      %s586 = sphi 0, %s585
      %s600 = sphi 0, %s586
      %s604 = sphi 0, %s604
      %s606 = sphi 0, %s604
      %s607 = sphi 0, %s606
      %s621 = sphi 0, %s607
      %s625 = sphi 0, %s625
      %s627 = sphi 0, %s625
      %s628 = sphi 0, %s627
      %s642 = sphi 0, %s628
      %s646 = sphi 0, %s646
      %s648 = sphi 0, %s646
      %s649 = sphi 0, %s648
      %s663 = sphi 0, %s649
      %s667 = sphi 0, %s667
      %s669 = sphi 0, %s667
      %s670 = sphi 0, %s669
      %s684 = sphi 0, %s670
      %s688 = sphi 0, %s688
      %s690 = sphi 0, %s688
      %s691 = sphi 0, %s690
      %s705 = sphi 0, %s691
      %s709 = sphi 0, %s709
      %s711 = sphi 0, %s709
      %s712 = sphi 0, %s711
      %s726 = sphi 0, %s712
      %s730 = sphi 0, %s730
      %s732 = sphi 0, %s730
      %s733 = sphi 0, %s732
      %s747 = sphi 0, %s733
      %s751 = sphi 0, %s751
      %s753 = sphi 0, %s751
      %s754 = sphi 0, %s753
      %s768 = sphi 0, %s754
      %s772 = sphi 0, %s772
      %s774 = sphi 0, %s772
      %s775 = sphi 0, %s774
      %s789 = sphi 0, %s775
      %s793 = sphi 0, %s793
      %s795 = sphi 0, %s793
      %s796 = sphi 0, %s795
      %s810 = sphi 0, %s796
      %s814 = sphi 0, %s814
      %s816 = sphi 0, %s814
      %s817 = sphi 0, %s816
      %s831 = sphi 0, %s817
      %s835 = sphi 0, %s835
      %s837 = sphi 0, %s835
      %s838 = sphi 0, %s837
      %s852 = sphi 0, %s838
      %s858 = sphi 0, %s860
      %s861 = sphi 0, %s858
      %s862 = sphi 0, %s861
      %s878 = sphi 0, %s862
    $region4: #{tpu_custom_call.1} parent=1 // loop_header_branch
      %85 = sbr.rel (%p83) target = $region8
    $region5: #{tpu_custom_call.1} parent=1 // loop_body
      %s87 = ssub.s32 %s82, 1
      %s88 = ssub.s32 %s82, 2
      %s89 = sadd.s32 %s82, 1
      %s90 = ssub.s32 %s82, %s89
      %p91 = scmp.eq.s32.totalorder %s90, 0
      %s93 = sadd.s32 %s92, 1
      %s94 = scalar_select %p91, %s92, %s93
      %p97 = pneg %p91
      %p98 = scmp.eq.s32.totalorder %s82, 1
      %p99 = por %p97, %p98
      %p100 = scmp.ne.s32.totalorder %s92, %s95
      %p101 = scmp.eq.s32.totalorder %s82, 0
      %p102 = por %p100, %p101
      %p103 = scmp.ne.s32.totalorder %s92, %s95
      %p104 = scmp.eq.s32.totalorder %s87, 1
      %p105 = por %p103, %p104
      %p106 = scmp.ne.s32.totalorder %s95, %s96
      %p107 = scmp.eq.s32.totalorder %s87, 0
      %p108 = por %p106, %p107
      %p109 = scmp.ne.s32.totalorder %s95, %s96
      %p110 = scmp.eq.s32.totalorder %s88, 1
      %p111 = por %p109, %p110
      %p113 = scmp.ne.s32.totalorder %s96, %s112
      %p114 = scmp.eq.s32.totalorder %s88, 0
      %p115 = por %p113, %p114
      %s116 = ssub.s32 %s82, %s89
      %p117 = scmp.eq.s32.totalorder %s116, 0
      %s119 = sadd.s32 %s118, 1
      %s120 = scalar_select %p117, %s118, %s119
      %p123 = pneg %p117
      %p124 = scmp.eq.s32.totalorder %s82, 1
      %p125 = por %p123, %p124
      %p126 = scmp.ne.s32.totalorder %s118, %s121
      %p127 = scmp.eq.s32.totalorder %s82, 0
      %p128 = por %p126, %p127
      %p129 = scmp.ne.s32.totalorder %s118, %s121
      %p130 = scmp.eq.s32.totalorder %s87, 1
      %p131 = por %p129, %p130
      %p132 = scmp.ne.s32.totalorder %s121, %s122
      %p133 = scmp.eq.s32.totalorder %s87, 0
      %p134 = por %p132, %p133
      %p135 = scmp.ne.s32.totalorder %s121, %s122
      %p136 = scmp.eq.s32.totalorder %s88, 1
      %p137 = por %p135, %p136
      %p139 = scmp.ne.s32.totalorder %s122, %s138
      %p140 = scmp.eq.s32.totalorder %s88, 0
      %p141 = por %p139, %p140
      %s143 = sadd.s32 %s142, 1
      %p146 = scmp.eq.s32.totalorder %s82, 1
      %p147 = scmp.ne.s32.totalorder %s142, %s144
      %p148 = scmp.eq.s32.totalorder %s82, 0
      %p149 = por %p147, %p148
      %p150 = scmp.ne.s32.totalorder %s142, %s144
      %p151 = scmp.eq.s32.totalorder %s87, 1
      %p152 = por %p150, %p151
      %p153 = scmp.ne.s32.totalorder %s144, %s145
      %p154 = scmp.eq.s32.totalorder %s87, 0
      %p155 = por %p153, %p154
      %p156 = scmp.ne.s32.totalorder %s144, %s145
      %p157 = scmp.eq.s32.totalorder %s88, 1
      %p158 = por %p156, %p157
      %p160 = scmp.ne.s32.totalorder %s145, %s159
      %p161 = scmp.eq.s32.totalorder %s88, 0
      %p162 = por %p160, %p161
      %s164 = sadd.s32 %s163, 1
      %p167 = scmp.eq.s32.totalorder %s82, 1
      %p168 = scmp.ne.s32.totalorder %s163, %s165
      %p169 = scmp.eq.s32.totalorder %s82, 0
      %p170 = por %p168, %p169
      %p171 = scmp.ne.s32.totalorder %s163, %s165
      %p172 = scmp.eq.s32.totalorder %s87, 1
      %p173 = por %p171, %p172
      %p174 = scmp.ne.s32.totalorder %s165, %s166
      %p175 = scmp.eq.s32.totalorder %s87, 0
      %p176 = por %p174, %p175
      %p177 = scmp.ne.s32.totalorder %s165, %s166
      %p178 = scmp.eq.s32.totalorder %s88, 1
      %p179 = por %p177, %p178
      %p181 = scmp.ne.s32.totalorder %s166, %s180
      %p182 = scmp.eq.s32.totalorder %s88, 0
      %p183 = por %p181, %p182
      %s185 = sadd.s32 %s184, 1
      %p188 = scmp.eq.s32.totalorder %s82, 1
      %p189 = scmp.ne.s32.totalorder %s184, %s186
      %p190 = scmp.eq.s32.totalorder %s82, 0
      %p191 = por %p189, %p190
      %p192 = scmp.ne.s32.totalorder %s184, %s186
      %p193 = scmp.eq.s32.totalorder %s87, 1
      %p194 = por %p192, %p193
      %p195 = scmp.ne.s32.totalorder %s186, %s187
      %p196 = scmp.eq.s32.totalorder %s87, 0
      %p197 = por %p195, %p196
      %p198 = scmp.ne.s32.totalorder %s186, %s187
      %p199 = scmp.eq.s32.totalorder %s88, 1
      %p200 = por %p198, %p199
      %p202 = scmp.ne.s32.totalorder %s187, %s201
      %p203 = scmp.eq.s32.totalorder %s88, 0
      %p204 = por %p202, %p203
      %s206 = sadd.s32 %s205, 1
      %p209 = scmp.eq.s32.totalorder %s82, 1
      %p210 = scmp.ne.s32.totalorder %s205, %s207
      %p211 = scmp.eq.s32.totalorder %s82, 0
      %p212 = por %p210, %p211
      %p213 = scmp.ne.s32.totalorder %s205, %s207
      %p214 = scmp.eq.s32.totalorder %s87, 1
      %p215 = por %p213, %p214
      %p216 = scmp.ne.s32.totalorder %s207, %s208
      %p217 = scmp.eq.s32.totalorder %s87, 0
      %p218 = por %p216, %p217
      %p219 = scmp.ne.s32.totalorder %s207, %s208
      %p220 = scmp.eq.s32.totalorder %s88, 1
      %p221 = por %p219, %p220
      %p223 = scmp.ne.s32.totalorder %s208, %s222
      %p224 = scmp.eq.s32.totalorder %s88, 0
      %p225 = por %p223, %p224
      %s227 = sadd.s32 %s226, 1
      %p230 = scmp.eq.s32.totalorder %s82, 1
      %p231 = scmp.ne.s32.totalorder %s226, %s228
      %p232 = scmp.eq.s32.totalorder %s82, 0
      %p233 = por %p231, %p232
      %p234 = scmp.ne.s32.totalorder %s226, %s228
      %p235 = scmp.eq.s32.totalorder %s87, 1
      %p236 = por %p234, %p235
      %p237 = scmp.ne.s32.totalorder %s228, %s229
      %p238 = scmp.eq.s32.totalorder %s87, 0
      %p239 = por %p237, %p238
      %p240 = scmp.ne.s32.totalorder %s228, %s229
      %p241 = scmp.eq.s32.totalorder %s88, 1
      %p242 = por %p240, %p241
      %p244 = scmp.ne.s32.totalorder %s229, %s243
      %p245 = scmp.eq.s32.totalorder %s88, 0
      %p246 = por %p244, %p245
      %s248 = sadd.s32 %s247, 1
      %p251 = scmp.eq.s32.totalorder %s82, 1
      %p252 = scmp.ne.s32.totalorder %s247, %s249
      %p253 = scmp.eq.s32.totalorder %s82, 0
      %p254 = por %p252, %p253
      %p255 = scmp.ne.s32.totalorder %s247, %s249
      %p256 = scmp.eq.s32.totalorder %s87, 1
      %p257 = por %p255, %p256
      %p258 = scmp.ne.s32.totalorder %s249, %s250
      %p259 = scmp.eq.s32.totalorder %s87, 0
      %p260 = por %p258, %p259
      %p261 = scmp.ne.s32.totalorder %s249, %s250
      %p262 = scmp.eq.s32.totalorder %s88, 1
      %p263 = por %p261, %p262
      %p265 = scmp.ne.s32.totalorder %s250, %s264
      %p266 = scmp.eq.s32.totalorder %s88, 0
      %p267 = por %p265, %p266
      %s269 = sadd.s32 %s268, 1
      %p272 = scmp.eq.s32.totalorder %s82, 1
      %p273 = scmp.ne.s32.totalorder %s268, %s270
      %p274 = scmp.eq.s32.totalorder %s82, 0
      %p275 = por %p273, %p274
      %p276 = scmp.ne.s32.totalorder %s268, %s270
      %p277 = scmp.eq.s32.totalorder %s87, 1
      %p278 = por %p276, %p277
      %p279 = scmp.ne.s32.totalorder %s270, %s271
      %p280 = scmp.eq.s32.totalorder %s87, 0
      %p281 = por %p279, %p280
      %p282 = scmp.ne.s32.totalorder %s270, %s271
      %p283 = scmp.eq.s32.totalorder %s88, 1
      %p284 = por %p282, %p283
      %p286 = scmp.ne.s32.totalorder %s271, %s285
      %p287 = scmp.eq.s32.totalorder %s88, 0
      %p288 = por %p286, %p287
      %s290 = sadd.s32 %s289, 1
      %p293 = scmp.eq.s32.totalorder %s82, 1
      %p294 = scmp.ne.s32.totalorder %s289, %s291
      %p295 = scmp.eq.s32.totalorder %s82, 0
      %p296 = por %p294, %p295
      %p297 = scmp.ne.s32.totalorder %s289, %s291
      %p298 = scmp.eq.s32.totalorder %s87, 1
      %p299 = por %p297, %p298
      %p300 = scmp.ne.s32.totalorder %s291, %s292
      %p301 = scmp.eq.s32.totalorder %s87, 0
      %p302 = por %p300, %p301
      %p303 = scmp.ne.s32.totalorder %s291, %s292
      %p304 = scmp.eq.s32.totalorder %s88, 1
      %p305 = por %p303, %p304
      %p307 = scmp.ne.s32.totalorder %s292, %s306
      %p308 = scmp.eq.s32.totalorder %s88, 0
      %p309 = por %p307, %p308
      %s311 = sadd.s32 %s310, 1
      %p314 = scmp.eq.s32.totalorder %s82, 1
      %p315 = scmp.ne.s32.totalorder %s310, %s312
      %p316 = scmp.eq.s32.totalorder %s82, 0
      %p317 = por %p315, %p316
      %p318 = scmp.ne.s32.totalorder %s310, %s312
      %p319 = scmp.eq.s32.totalorder %s87, 1
      %p320 = por %p318, %p319
      %p321 = scmp.ne.s32.totalorder %s312, %s313
      %p322 = scmp.eq.s32.totalorder %s87, 0
      %p323 = por %p321, %p322
      %p324 = scmp.ne.s32.totalorder %s312, %s313
      %p325 = scmp.eq.s32.totalorder %s88, 1
      %p326 = por %p324, %p325
      %p328 = scmp.ne.s32.totalorder %s313, %s327
      %p329 = scmp.eq.s32.totalorder %s88, 0
      %p330 = por %p328, %p329
      %s332 = sadd.s32 %s331, 1
      %p335 = scmp.eq.s32.totalorder %s82, 1
      %p336 = scmp.ne.s32.totalorder %s331, %s333
      %p337 = scmp.eq.s32.totalorder %s82, 0
      %p338 = por %p336, %p337
      %p339 = scmp.ne.s32.totalorder %s331, %s333
      %p340 = scmp.eq.s32.totalorder %s87, 1
      %p341 = por %p339, %p340
      %p342 = scmp.ne.s32.totalorder %s333, %s334
      %p343 = scmp.eq.s32.totalorder %s87, 0
      %p344 = por %p342, %p343
      %p345 = scmp.ne.s32.totalorder %s333, %s334
      %p346 = scmp.eq.s32.totalorder %s88, 1
      %p347 = por %p345, %p346
      %p349 = scmp.ne.s32.totalorder %s334, %s348
      %p350 = scmp.eq.s32.totalorder %s88, 0
      %p351 = por %p349, %p350
      %s353 = sadd.s32 %s352, 1
      %p356 = scmp.eq.s32.totalorder %s82, 1
      %p357 = scmp.ne.s32.totalorder %s352, %s354
      %p358 = scmp.eq.s32.totalorder %s82, 0
      %p359 = por %p357, %p358
      %p360 = scmp.ne.s32.totalorder %s352, %s354
      %p361 = scmp.eq.s32.totalorder %s87, 1
      %p362 = por %p360, %p361
      %p363 = scmp.ne.s32.totalorder %s354, %s355
      %p364 = scmp.eq.s32.totalorder %s87, 0
      %p365 = por %p363, %p364
      %p366 = scmp.ne.s32.totalorder %s354, %s355
      %p367 = scmp.eq.s32.totalorder %s88, 1
      %p368 = por %p366, %p367
      %p370 = scmp.ne.s32.totalorder %s355, %s369
      %p371 = scmp.eq.s32.totalorder %s88, 0
      %p372 = por %p370, %p371
      %s374 = sadd.s32 %s373, 1
      %p377 = scmp.eq.s32.totalorder %s82, 1
      %p378 = scmp.ne.s32.totalorder %s373, %s375
      %p379 = scmp.eq.s32.totalorder %s82, 0
      %p380 = por %p378, %p379
      %p381 = scmp.ne.s32.totalorder %s373, %s375
      %p382 = scmp.eq.s32.totalorder %s87, 1
      %p383 = por %p381, %p382
      %p384 = scmp.ne.s32.totalorder %s375, %s376
      %p385 = scmp.eq.s32.totalorder %s87, 0
      %p386 = por %p384, %p385
      %p387 = scmp.ne.s32.totalorder %s375, %s376
      %p388 = scmp.eq.s32.totalorder %s88, 1
      %p389 = por %p387, %p388
      %p391 = scmp.ne.s32.totalorder %s376, %s390
      %p392 = scmp.eq.s32.totalorder %s88, 0
      %p393 = por %p391, %p392
      %s395 = sadd.s32 %s394, 1
      %p398 = scmp.eq.s32.totalorder %s82, 1
      %p399 = scmp.ne.s32.totalorder %s394, %s396
      %p400 = scmp.eq.s32.totalorder %s82, 0
      %p401 = por %p399, %p400
      %p402 = scmp.ne.s32.totalorder %s394, %s396
      %p403 = scmp.eq.s32.totalorder %s87, 1
      %p404 = por %p402, %p403
      %p405 = scmp.ne.s32.totalorder %s396, %s397
      %p406 = scmp.eq.s32.totalorder %s87, 0
      %p407 = por %p405, %p406
      %p408 = scmp.ne.s32.totalorder %s396, %s397
      %p409 = scmp.eq.s32.totalorder %s88, 1
      %p410 = por %p408, %p409
      %p412 = scmp.ne.s32.totalorder %s397, %s411
      %p413 = scmp.eq.s32.totalorder %s88, 0
      %p414 = por %p412, %p413
      %s416 = sadd.s32 %s415, 1
      %p419 = scmp.eq.s32.totalorder %s82, 1
      %p420 = scmp.ne.s32.totalorder %s415, %s417
      %p421 = scmp.eq.s32.totalorder %s82, 0
      %p422 = por %p420, %p421
      %p423 = scmp.ne.s32.totalorder %s415, %s417
      %p424 = scmp.eq.s32.totalorder %s87, 1
      %p425 = por %p423, %p424
      %p426 = scmp.ne.s32.totalorder %s417, %s418
      %p427 = scmp.eq.s32.totalorder %s87, 0
      %p428 = por %p426, %p427
      %p429 = scmp.ne.s32.totalorder %s417, %s418
      %p430 = scmp.eq.s32.totalorder %s88, 1
      %p431 = por %p429, %p430
      %p433 = scmp.ne.s32.totalorder %s418, %s432
      %p434 = scmp.eq.s32.totalorder %s88, 0
      %p435 = por %p433, %p434
      %s437 = sadd.s32 %s436, 1
      %p440 = scmp.eq.s32.totalorder %s82, 1
      %p441 = scmp.ne.s32.totalorder %s436, %s438
      %p442 = scmp.eq.s32.totalorder %s82, 0
      %p443 = por %p441, %p442
      %p444 = scmp.ne.s32.totalorder %s436, %s438
      %p445 = scmp.eq.s32.totalorder %s87, 1
      %p446 = por %p444, %p445
      %p447 = scmp.ne.s32.totalorder %s438, %s439
      %p448 = scmp.eq.s32.totalorder %s87, 0
      %p449 = por %p447, %p448
      %p450 = scmp.ne.s32.totalorder %s438, %s439
      %p451 = scmp.eq.s32.totalorder %s88, 1
      %p452 = por %p450, %p451
      %p454 = scmp.ne.s32.totalorder %s439, %s453
      %p455 = scmp.eq.s32.totalorder %s88, 0
      %p456 = por %p454, %p455
      %s458 = sadd.s32 %s457, 1
      %p461 = scmp.eq.s32.totalorder %s82, 1
      %p462 = scmp.ne.s32.totalorder %s457, %s459
      %p463 = scmp.eq.s32.totalorder %s82, 0
      %p464 = por %p462, %p463
      %p465 = scmp.ne.s32.totalorder %s457, %s459
      %p466 = scmp.eq.s32.totalorder %s87, 1
      %p467 = por %p465, %p466
      %p468 = scmp.ne.s32.totalorder %s459, %s460
      %p469 = scmp.eq.s32.totalorder %s87, 0
      %p470 = por %p468, %p469
      %p471 = scmp.ne.s32.totalorder %s459, %s460
      %p472 = scmp.eq.s32.totalorder %s88, 1
      %p473 = por %p471, %p472
      %p475 = scmp.ne.s32.totalorder %s460, %s474
      %p476 = scmp.eq.s32.totalorder %s88, 0
      %p477 = por %p475, %p476
      %s479 = sadd.s32 %s478, 1
      %p482 = scmp.eq.s32.totalorder %s82, 1
      %p483 = scmp.ne.s32.totalorder %s478, %s480
      %p484 = scmp.eq.s32.totalorder %s82, 0
      %p485 = por %p483, %p484
      %p486 = scmp.ne.s32.totalorder %s478, %s480
      %p487 = scmp.eq.s32.totalorder %s87, 1
      %p488 = por %p486, %p487
      %p489 = scmp.ne.s32.totalorder %s480, %s481
      %p490 = scmp.eq.s32.totalorder %s87, 0
      %p491 = por %p489, %p490
      %p492 = scmp.ne.s32.totalorder %s480, %s481
      %p493 = scmp.eq.s32.totalorder %s88, 1
      %p494 = por %p492, %p493
      %p496 = scmp.ne.s32.totalorder %s481, %s495
      %p497 = scmp.eq.s32.totalorder %s88, 0
      %p498 = por %p496, %p497
      %s500 = sadd.s32 %s499, 1
      %p503 = scmp.eq.s32.totalorder %s82, 1
      %p504 = scmp.ne.s32.totalorder %s499, %s501
      %p505 = scmp.eq.s32.totalorder %s82, 0
      %p506 = por %p504, %p505
      %p507 = scmp.ne.s32.totalorder %s499, %s501
      %p508 = scmp.eq.s32.totalorder %s87, 1
      %p509 = por %p507, %p508
      %p510 = scmp.ne.s32.totalorder %s501, %s502
      %p511 = scmp.eq.s32.totalorder %s87, 0
      %p512 = por %p510, %p511
      %p513 = scmp.ne.s32.totalorder %s501, %s502
      %p514 = scmp.eq.s32.totalorder %s88, 1
      %p515 = por %p513, %p514
      %p517 = scmp.ne.s32.totalorder %s502, %s516
      %p518 = scmp.eq.s32.totalorder %s88, 0
      %p519 = por %p517, %p518
      %s521 = sadd.s32 %s520, 1
      %p524 = scmp.eq.s32.totalorder %s82, 1
      %p525 = scmp.ne.s32.totalorder %s520, %s522
      %p526 = scmp.eq.s32.totalorder %s82, 0
      %p527 = por %p525, %p526
      %p528 = scmp.ne.s32.totalorder %s520, %s522
      %p529 = scmp.eq.s32.totalorder %s87, 1
      %p530 = por %p528, %p529
      %p531 = scmp.ne.s32.totalorder %s522, %s523
      %p532 = scmp.eq.s32.totalorder %s87, 0
      %p533 = por %p531, %p532
      %p534 = scmp.ne.s32.totalorder %s522, %s523
      %p535 = scmp.eq.s32.totalorder %s88, 1
      %p536 = por %p534, %p535
      %p538 = scmp.ne.s32.totalorder %s523, %s537
      %p539 = scmp.eq.s32.totalorder %s88, 0
      %p540 = por %p538, %p539
      %s542 = sadd.s32 %s541, 1
      %p545 = scmp.eq.s32.totalorder %s82, 1
      %p546 = scmp.ne.s32.totalorder %s541, %s543
      %p547 = scmp.eq.s32.totalorder %s82, 0
      %p548 = por %p546, %p547
      %p549 = scmp.ne.s32.totalorder %s541, %s543
      %p550 = scmp.eq.s32.totalorder %s87, 1
      %p551 = por %p549, %p550
      %p552 = scmp.ne.s32.totalorder %s543, %s544
      %p553 = scmp.eq.s32.totalorder %s87, 0
      %p554 = por %p552, %p553
      %p555 = scmp.ne.s32.totalorder %s543, %s544
      %p556 = scmp.eq.s32.totalorder %s88, 1
      %p557 = por %p555, %p556
      %p559 = scmp.ne.s32.totalorder %s544, %s558
      %p560 = scmp.eq.s32.totalorder %s88, 0
      %p561 = por %p559, %p560
      %s563 = sadd.s32 %s562, 1
      %p566 = scmp.eq.s32.totalorder %s82, 1
      %p567 = scmp.ne.s32.totalorder %s562, %s564
      %p568 = scmp.eq.s32.totalorder %s82, 0
      %p569 = por %p567, %p568
      %p570 = scmp.ne.s32.totalorder %s562, %s564
      %p571 = scmp.eq.s32.totalorder %s87, 1
      %p572 = por %p570, %p571
      %p573 = scmp.ne.s32.totalorder %s564, %s565
      %p574 = scmp.eq.s32.totalorder %s87, 0
      %p575 = por %p573, %p574
      %p576 = scmp.ne.s32.totalorder %s564, %s565
      %p577 = scmp.eq.s32.totalorder %s88, 1
      %p578 = por %p576, %p577
      %p580 = scmp.ne.s32.totalorder %s565, %s579
      %p581 = scmp.eq.s32.totalorder %s88, 0
      %p582 = por %p580, %p581
      %s584 = sadd.s32 %s583, 1
      %p587 = scmp.eq.s32.totalorder %s82, 1
      %p588 = scmp.ne.s32.totalorder %s583, %s585
      %p589 = scmp.eq.s32.totalorder %s82, 0
      %p590 = por %p588, %p589
      %p591 = scmp.ne.s32.totalorder %s583, %s585
      %p592 = scmp.eq.s32.totalorder %s87, 1
      %p593 = por %p591, %p592
      %p594 = scmp.ne.s32.totalorder %s585, %s586
      %p595 = scmp.eq.s32.totalorder %s87, 0
      %p596 = por %p594, %p595
      %p597 = scmp.ne.s32.totalorder %s585, %s586
      %p598 = scmp.eq.s32.totalorder %s88, 1
      %p599 = por %p597, %p598
      %p601 = scmp.ne.s32.totalorder %s586, %s600
      %p602 = scmp.eq.s32.totalorder %s88, 0
      %p603 = por %p601, %p602
      %s605 = sadd.s32 %s604, 1
      %p608 = scmp.eq.s32.totalorder %s82, 1
      %p609 = scmp.ne.s32.totalorder %s604, %s606
      %p610 = scmp.eq.s32.totalorder %s82, 0
      %p611 = por %p609, %p610
      %p612 = scmp.ne.s32.totalorder %s604, %s606
      %p613 = scmp.eq.s32.totalorder %s87, 1
      %p614 = por %p612, %p613
      %p615 = scmp.ne.s32.totalorder %s606, %s607
      %p616 = scmp.eq.s32.totalorder %s87, 0
      %p617 = por %p615, %p616
      %p618 = scmp.ne.s32.totalorder %s606, %s607
      %p619 = scmp.eq.s32.totalorder %s88, 1
      %p620 = por %p618, %p619
      %p622 = scmp.ne.s32.totalorder %s607, %s621
      %p623 = scmp.eq.s32.totalorder %s88, 0
      %p624 = por %p622, %p623
      %s626 = sadd.s32 %s625, 1
      %p629 = scmp.eq.s32.totalorder %s82, 1
      %p630 = scmp.ne.s32.totalorder %s625, %s627
      %p631 = scmp.eq.s32.totalorder %s82, 0
      %p632 = por %p630, %p631
      %p633 = scmp.ne.s32.totalorder %s625, %s627
      %p634 = scmp.eq.s32.totalorder %s87, 1
      %p635 = por %p633, %p634
      %p636 = scmp.ne.s32.totalorder %s627, %s628
      %p637 = scmp.eq.s32.totalorder %s87, 0
      %p638 = por %p636, %p637
      %p639 = scmp.ne.s32.totalorder %s627, %s628
      %p640 = scmp.eq.s32.totalorder %s88, 1
      %p641 = por %p639, %p640
      %p643 = scmp.ne.s32.totalorder %s628, %s642
      %p644 = scmp.eq.s32.totalorder %s88, 0
      %p645 = por %p643, %p644
      %s647 = sadd.s32 %s646, 1
      %p650 = scmp.eq.s32.totalorder %s82, 1
      %p651 = scmp.ne.s32.totalorder %s646, %s648
      %p652 = scmp.eq.s32.totalorder %s82, 0
      %p653 = por %p651, %p652
      %p654 = scmp.ne.s32.totalorder %s646, %s648
      %p655 = scmp.eq.s32.totalorder %s87, 1
      %p656 = por %p654, %p655
      %p657 = scmp.ne.s32.totalorder %s648, %s649
      %p658 = scmp.eq.s32.totalorder %s87, 0
      %p659 = por %p657, %p658
      %p660 = scmp.ne.s32.totalorder %s648, %s649
      %p661 = scmp.eq.s32.totalorder %s88, 1
      %p662 = por %p660, %p661
      %p664 = scmp.ne.s32.totalorder %s649, %s663
      %p665 = scmp.eq.s32.totalorder %s88, 0
      %p666 = por %p664, %p665
      %s668 = sadd.s32 %s667, 1
      %p671 = scmp.eq.s32.totalorder %s82, 1
      %p672 = scmp.ne.s32.totalorder %s667, %s669
      %p673 = scmp.eq.s32.totalorder %s82, 0
      %p674 = por %p672, %p673
      %p675 = scmp.ne.s32.totalorder %s667, %s669
      %p676 = scmp.eq.s32.totalorder %s87, 1
      %p677 = por %p675, %p676
      %p678 = scmp.ne.s32.totalorder %s669, %s670
      %p679 = scmp.eq.s32.totalorder %s87, 0
      %p680 = por %p678, %p679
      %p681 = scmp.ne.s32.totalorder %s669, %s670
      %p682 = scmp.eq.s32.totalorder %s88, 1
      %p683 = por %p681, %p682
      %p685 = scmp.ne.s32.totalorder %s670, %s684
      %p686 = scmp.eq.s32.totalorder %s88, 0
      %p687 = por %p685, %p686
      %s689 = sadd.s32 %s688, 1
      %p692 = scmp.eq.s32.totalorder %s82, 1
      %p693 = scmp.ne.s32.totalorder %s688, %s690
      %p694 = scmp.eq.s32.totalorder %s82, 0
      %p695 = por %p693, %p694
      %p696 = scmp.ne.s32.totalorder %s688, %s690
      %p697 = scmp.eq.s32.totalorder %s87, 1
      %p698 = por %p696, %p697
      %p699 = scmp.ne.s32.totalorder %s690, %s691
      %p700 = scmp.eq.s32.totalorder %s87, 0
      %p701 = por %p699, %p700
      %p702 = scmp.ne.s32.totalorder %s690, %s691
      %p703 = scmp.eq.s32.totalorder %s88, 1
      %p704 = por %p702, %p703
      %p706 = scmp.ne.s32.totalorder %s691, %s705
      %p707 = scmp.eq.s32.totalorder %s88, 0
      %p708 = por %p706, %p707
      %s710 = sadd.s32 %s709, 1
      %p713 = scmp.eq.s32.totalorder %s82, 1
      %p714 = scmp.ne.s32.totalorder %s709, %s711
      %p715 = scmp.eq.s32.totalorder %s82, 0
      %p716 = por %p714, %p715
      %p717 = scmp.ne.s32.totalorder %s709, %s711
      %p718 = scmp.eq.s32.totalorder %s87, 1
      %p719 = por %p717, %p718
      %p720 = scmp.ne.s32.totalorder %s711, %s712
      %p721 = scmp.eq.s32.totalorder %s87, 0
      %p722 = por %p720, %p721
      %p723 = scmp.ne.s32.totalorder %s711, %s712
      %p724 = scmp.eq.s32.totalorder %s88, 1
      %p725 = por %p723, %p724
      %p727 = scmp.ne.s32.totalorder %s712, %s726
      %p728 = scmp.eq.s32.totalorder %s88, 0
      %p729 = por %p727, %p728
      %s731 = sadd.s32 %s730, 1
      %p734 = scmp.eq.s32.totalorder %s82, 1
      %p735 = scmp.ne.s32.totalorder %s730, %s732
      %p736 = scmp.eq.s32.totalorder %s82, 0
      %p737 = por %p735, %p736
      %p738 = scmp.ne.s32.totalorder %s730, %s732
      %p739 = scmp.eq.s32.totalorder %s87, 1
      %p740 = por %p738, %p739
      %p741 = scmp.ne.s32.totalorder %s732, %s733
      %p742 = scmp.eq.s32.totalorder %s87, 0
      %p743 = por %p741, %p742
      %p744 = scmp.ne.s32.totalorder %s732, %s733
      %p745 = scmp.eq.s32.totalorder %s88, 1
      %p746 = por %p744, %p745
      %p748 = scmp.ne.s32.totalorder %s733, %s747
      %p749 = scmp.eq.s32.totalorder %s88, 0
      %p750 = por %p748, %p749
      %s752 = sadd.s32 %s751, 1
      %p755 = scmp.eq.s32.totalorder %s82, 1
      %p756 = scmp.ne.s32.totalorder %s751, %s753
      %p757 = scmp.eq.s32.totalorder %s82, 0
      %p758 = por %p756, %p757
      %p759 = scmp.ne.s32.totalorder %s751, %s753
      %p760 = scmp.eq.s32.totalorder %s87, 1
      %p761 = por %p759, %p760
      %p762 = scmp.ne.s32.totalorder %s753, %s754
      %p763 = scmp.eq.s32.totalorder %s87, 0
      %p764 = por %p762, %p763
      %p765 = scmp.ne.s32.totalorder %s753, %s754
      %p766 = scmp.eq.s32.totalorder %s88, 1
      %p767 = por %p765, %p766
      %p769 = scmp.ne.s32.totalorder %s754, %s768
      %p770 = scmp.eq.s32.totalorder %s88, 0
      %p771 = por %p769, %p770
      %s773 = sadd.s32 %s772, 1
      %p776 = scmp.eq.s32.totalorder %s82, 1
      %p777 = scmp.ne.s32.totalorder %s772, %s774
      %p778 = scmp.eq.s32.totalorder %s82, 0
      %p779 = por %p777, %p778
      %p780 = scmp.ne.s32.totalorder %s772, %s774
      %p781 = scmp.eq.s32.totalorder %s87, 1
      %p782 = por %p780, %p781
      %p783 = scmp.ne.s32.totalorder %s774, %s775
      %p784 = scmp.eq.s32.totalorder %s87, 0
      %p785 = por %p783, %p784
      %p786 = scmp.ne.s32.totalorder %s774, %s775
      %p787 = scmp.eq.s32.totalorder %s88, 1
      %p788 = por %p786, %p787
      %p790 = scmp.ne.s32.totalorder %s775, %s789
      %p791 = scmp.eq.s32.totalorder %s88, 0
      %p792 = por %p790, %p791
      %s794 = sadd.s32 %s793, 1
      %p797 = scmp.eq.s32.totalorder %s82, 1
      %p798 = scmp.ne.s32.totalorder %s793, %s795
      %p799 = scmp.eq.s32.totalorder %s82, 0
      %p800 = por %p798, %p799
      %p801 = scmp.ne.s32.totalorder %s793, %s795
      %p802 = scmp.eq.s32.totalorder %s87, 1
      %p803 = por %p801, %p802
      %p804 = scmp.ne.s32.totalorder %s795, %s796
      %p805 = scmp.eq.s32.totalorder %s87, 0
      %p806 = por %p804, %p805
      %p807 = scmp.ne.s32.totalorder %s795, %s796
      %p808 = scmp.eq.s32.totalorder %s88, 1
      %p809 = por %p807, %p808
      %p811 = scmp.ne.s32.totalorder %s796, %s810
      %p812 = scmp.eq.s32.totalorder %s88, 0
      %p813 = por %p811, %p812
      %s815 = sadd.s32 %s814, 1
      %p818 = scmp.eq.s32.totalorder %s82, 1
      %p819 = scmp.ne.s32.totalorder %s814, %s816
      %p820 = scmp.eq.s32.totalorder %s82, 0
      %p821 = por %p819, %p820
      %p822 = scmp.ne.s32.totalorder %s814, %s816
      %p823 = scmp.eq.s32.totalorder %s87, 1
      %p824 = por %p822, %p823
      %p825 = scmp.ne.s32.totalorder %s816, %s817
      %p826 = scmp.eq.s32.totalorder %s87, 0
      %p827 = por %p825, %p826
      %p828 = scmp.ne.s32.totalorder %s816, %s817
      %p829 = scmp.eq.s32.totalorder %s88, 1
      %p830 = por %p828, %p829
      %p832 = scmp.ne.s32.totalorder %s817, %s831
      %p833 = scmp.eq.s32.totalorder %s88, 0
      %p834 = por %p832, %p833
      %s836 = sadd.s32 %s835, 1
      %p839 = scmp.eq.s32.totalorder %s82, 1
      %p840 = scmp.ne.s32.totalorder %s835, %s837
      %p841 = scmp.eq.s32.totalorder %s82, 0
      %p842 = por %p840, %p841
      %p843 = scmp.ne.s32.totalorder %s835, %s837
      %p844 = scmp.eq.s32.totalorder %s87, 1
      %p845 = por %p843, %p844
      %p846 = scmp.ne.s32.totalorder %s837, %s838
      %p847 = scmp.eq.s32.totalorder %s87, 0
      %p848 = por %p846, %p847
      %p849 = scmp.ne.s32.totalorder %s837, %s838
      %p850 = scmp.eq.s32.totalorder %s88, 1
      %p851 = por %p849, %p850
      %p853 = scmp.ne.s32.totalorder %s838, %s852
      %p854 = scmp.eq.s32.totalorder %s88, 0
      %p855 = por %p853, %p854
      %s856 = ssub.s32 %s82, %s89
      %p857 = scmp.eq.s32.totalorder %s856, 0
      %s859 = sadd.s32 %s858, 1
      %s860 = scalar_select %p857, %s858, %s859
      %p863 = pneg %p857
      %p864 = scmp.eq.s32.totalorder %s82, 1
      %p865 = por %p863, %p864
      %p866 = scmp.ne.s32.totalorder %s858, %s861
      %p867 = scmp.eq.s32.totalorder %s82, 0
      %p868 = por %p866, %p867
      %p869 = scmp.ne.s32.totalorder %s858, %s861
      %p870 = scmp.eq.s32.totalorder %s87, 1
      %p871 = por %p869, %p870
      %p872 = scmp.ne.s32.totalorder %s861, %s862
      %p873 = scmp.eq.s32.totalorder %s87, 0
      %p874 = por %p872, %p873
      %p875 = scmp.ne.s32.totalorder %s861, %s862
      %p876 = scmp.eq.s32.totalorder %s88, 1
      %p877 = por %p875, %p876
      %p879 = scmp.ne.s32.totalorder %s862, %s878
      %p880 = scmp.eq.s32.totalorder %s88, 0
      %p881 = por %p879, %p880
      %p882 = scmp.le.s32.totalorder 1, %s82
      %p883 = scmp.lt.s32.totalorder %s82, 3
      %p884 = pnand %p882, %p883
      %p885 = pneg %p884
      // Predicated region
      $region9: #{tpu_custom_call.1} parent=5 // pred_check
        _
      $region10: #{tpu_custom_call.1} parent=5 // pred_check_branch
        %887 = sbr.rel (%p884) target = $region12
      $region11: #{tpu_custom_call.1} parent=5 // pred_region
        %s888 = ssub.s32 %s82, 1
        // Predicated region
        $region13: #{tpu_custom_call.1} parent=11 // pred_check
          %p889 = pneg %p155
        $region14: #{tpu_custom_call.1} parent=11 // pred_check_branch
          %891 = sbr.rel (%p889) target = $region16
        $region15: #{tpu_custom_call.1} parent=11 // pred_region
          _
        $region16: #{tpu_custom_call.1} parent=11 // pred_fallthru
          _
        // Predicated region
        $region17: #{tpu_custom_call.1} parent=11 // pred_check
          %p892 = pneg %p176
        $region18: #{tpu_custom_call.1} parent=11 // pred_check_branch
          %894 = sbr.rel (%p892) target = $region20
        $region19: #{tpu_custom_call.1} parent=11 // pred_region
          _
        $region20: #{tpu_custom_call.1} parent=11 // pred_fallthru
          _
        // Predicated region
        $region21: #{tpu_custom_call.1} parent=11 // pred_check
          %p895 = pneg %p197
        $region22: #{tpu_custom_call.1} parent=11 // pred_check_branch
          %897 = sbr.rel (%p895) target = $region24
        $region23: #{tpu_custom_call.1} parent=11 // pred_region
          _
        $region24: #{tpu_custom_call.1} parent=11 // pred_fallthru
          _
        // Predicated region
        $region25: #{tpu_custom_call.1} parent=11 // pred_check
          %p898 = pneg %p218
        $region26: #{tpu_custom_call.1} parent=11 // pred_check_branch
          %900 = sbr.rel (%p898) target = $region28
        $region27: #{tpu_custom_call.1} parent=11 // pred_region
          _
        $region28: #{tpu_custom_call.1} parent=11 // pred_fallthru
          _
        // Predicated region
        $region29: #{tpu_custom_call.1} parent=11 // pred_check
          %p901 = pneg %p239
        $region30: #{tpu_custom_call.1} parent=11 // pred_check_branch
          %903 = sbr.rel (%p901) target = $region32
        $region31: #{tpu_custom_call.1} parent=11 // pred_region
          _
        $region32: #{tpu_custom_call.1} parent=11 // pred_fallthru
          _
        // Predicated region
        $region33: #{tpu_custom_call.1} parent=11 // pred_check
          %p904 = pneg %p260
        $region34: #{tpu_custom_call.1} parent=11 // pred_check_branch
          %906 = sbr.rel (%p904) target = $region36
        $region35: #{tpu_custom_call.1} parent=11 // pred_region
          _
        $region36: #{tpu_custom_call.1} parent=11 // pred_fallthru
          _
        // Predicated region
        $region37: #{tpu_custom_call.1} parent=11 // pred_check
          %p907 = pneg %p281
        $region38: #{tpu_custom_call.1} parent=11 // pred_check_branch
          %909 = sbr.rel (%p907) target = $region40
        $region39: #{tpu_custom_call.1} parent=11 // pred_region
          _
        $region40: #{tpu_custom_call.1} parent=11 // pred_fallthru
          _
        // Predicated region
        $region41: #{tpu_custom_call.1} parent=11 // pred_check
          %p910 = pneg %p302
        $region42: #{tpu_custom_call.1} parent=11 // pred_check_branch
          %912 = sbr.rel (%p910) target = $region44
        $region43: #{tpu_custom_call.1} parent=11 // pred_region
          _
        $region44: #{tpu_custom_call.1} parent=11 // pred_fallthru
          _
        // Predicated region
        $region45: #{tpu_custom_call.1} parent=11 // pred_check
          %p913 = pneg %p323
        $region46: #{tpu_custom_call.1} parent=11 // pred_check_branch
          %915 = sbr.rel (%p913) target = $region48
        $region47: #{tpu_custom_call.1} parent=11 // pred_region
          _
        $region48: #{tpu_custom_call.1} parent=11 // pred_fallthru
          _
        // Predicated region
        $region49: #{tpu_custom_call.1} parent=11 // pred_check
          %p916 = pneg %p344
        $region50: #{tpu_custom_call.1} parent=11 // pred_check_branch
          %918 = sbr.rel (%p916) target = $region52
        $region51: #{tpu_custom_call.1} parent=11 // pred_region
          _
        $region52: #{tpu_custom_call.1} parent=11 // pred_fallthru
          _
        // Predicated region
        $region53: #{tpu_custom_call.1} parent=11 // pred_check
          %p919 = pneg %p365
        $region54: #{tpu_custom_call.1} parent=11 // pred_check_branch
          %921 = sbr.rel (%p919) target = $region56
        $region55: #{tpu_custom_call.1} parent=11 // pred_region
          _
        $region56: #{tpu_custom_call.1} parent=11 // pred_fallthru
          _
        // Predicated region
        $region57: #{tpu_custom_call.1} parent=11 // pred_check
          %p922 = pneg %p386
        $region58: #{tpu_custom_call.1} parent=11 // pred_check_branch
          %924 = sbr.rel (%p922) target = $region60
        $region59: #{tpu_custom_call.1} parent=11 // pred_region
          _
        $region60: #{tpu_custom_call.1} parent=11 // pred_fallthru
          _
        // Predicated region
        $region61: #{tpu_custom_call.1} parent=11 // pred_check
          %p925 = pneg %p407
        $region62: #{tpu_custom_call.1} parent=11 // pred_check_branch
          %927 = sbr.rel (%p925) target = $region64
        $region63: #{tpu_custom_call.1} parent=11 // pred_region
          _
        $region64: #{tpu_custom_call.1} parent=11 // pred_fallthru
          _
        // Predicated region
        $region65: #{tpu_custom_call.1} parent=11 // pred_check
          %p928 = pneg %p428
        $region66: #{tpu_custom_call.1} parent=11 // pred_check_branch
          %930 = sbr.rel (%p928) target = $region68
        $region67: #{tpu_custom_call.1} parent=11 // pred_region
          _
        $region68: #{tpu_custom_call.1} parent=11 // pred_fallthru
          _
        // Predicated region
        $region69: #{tpu_custom_call.1} parent=11 // pred_check
          %p931 = pneg %p449
        $region70: #{tpu_custom_call.1} parent=11 // pred_check_branch
          %933 = sbr.rel (%p931) target = $region72
        $region71: #{tpu_custom_call.1} parent=11 // pred_region
          _
        $region72: #{tpu_custom_call.1} parent=11 // pred_fallthru
          _
        // Predicated region
        $region73: #{tpu_custom_call.1} parent=11 // pred_check
          %p934 = pneg %p470
        $region74: #{tpu_custom_call.1} parent=11 // pred_check_branch
          %936 = sbr.rel (%p934) target = $region76
        $region75: #{tpu_custom_call.1} parent=11 // pred_region
          _
        $region76: #{tpu_custom_call.1} parent=11 // pred_fallthru
          _
        // Predicated region
        $region77: #{tpu_custom_call.1} parent=11 // pred_check
          %p937 = pneg %p491
        $region78: #{tpu_custom_call.1} parent=11 // pred_check_branch
          %939 = sbr.rel (%p937) target = $region80
        $region79: #{tpu_custom_call.1} parent=11 // pred_region
          _
        $region80: #{tpu_custom_call.1} parent=11 // pred_fallthru
          _
        // Predicated region
        $region81: #{tpu_custom_call.1} parent=11 // pred_check
          %p940 = pneg %p512
        $region82: #{tpu_custom_call.1} parent=11 // pred_check_branch
          %942 = sbr.rel (%p940) target = $region84
        $region83: #{tpu_custom_call.1} parent=11 // pred_region
          _
        $region84: #{tpu_custom_call.1} parent=11 // pred_fallthru
          _
        // Predicated region
        $region85: #{tpu_custom_call.1} parent=11 // pred_check
          %p943 = pneg %p533
        $region86: #{tpu_custom_call.1} parent=11 // pred_check_branch
          %945 = sbr.rel (%p943) target = $region88
        $region87: #{tpu_custom_call.1} parent=11 // pred_region
          _
        $region88: #{tpu_custom_call.1} parent=11 // pred_fallthru
          _
        // Predicated region
        $region89: #{tpu_custom_call.1} parent=11 // pred_check
          %p946 = pneg %p554
        $region90: #{tpu_custom_call.1} parent=11 // pred_check_branch
          %948 = sbr.rel (%p946) target = $region92
        $region91: #{tpu_custom_call.1} parent=11 // pred_region
          _
        $region92: #{tpu_custom_call.1} parent=11 // pred_fallthru
          _
        // Predicated region
        $region93: #{tpu_custom_call.1} parent=11 // pred_check
          %p949 = pneg %p575
        $region94: #{tpu_custom_call.1} parent=11 // pred_check_branch
          %951 = sbr.rel (%p949) target = $region96
        $region95: #{tpu_custom_call.1} parent=11 // pred_region
          _
        $region96: #{tpu_custom_call.1} parent=11 // pred_fallthru
          _
        // Predicated region
        $region97: #{tpu_custom_call.1} parent=11 // pred_check
          %p952 = pneg %p596
        $region98: #{tpu_custom_call.1} parent=11 // pred_check_branch
          %954 = sbr.rel (%p952) target = $region100
        $region99: #{tpu_custom_call.1} parent=11 // pred_region
          _
        $region100: #{tpu_custom_call.1} parent=11 // pred_fallthru
          _
        // Predicated region
        $region101: #{tpu_custom_call.1} parent=11 // pred_check
          %p955 = pneg %p617
        $region102: #{tpu_custom_call.1} parent=11 // pred_check_branch
          %957 = sbr.rel (%p955) target = $region104
        $region103: #{tpu_custom_call.1} parent=11 // pred_region
          _
        $region104: #{tpu_custom_call.1} parent=11 // pred_fallthru
          _
        // Predicated region
        $region105: #{tpu_custom_call.1} parent=11 // pred_check
          %p958 = pneg %p638
        $region106: #{tpu_custom_call.1} parent=11 // pred_check_branch
          %960 = sbr.rel (%p958) target = $region108
        $region107: #{tpu_custom_call.1} parent=11 // pred_region
          _
        $region108: #{tpu_custom_call.1} parent=11 // pred_fallthru
          _
        // Predicated region
        $region109: #{tpu_custom_call.1} parent=11 // pred_check
          %p961 = pneg %p659
        $region110: #{tpu_custom_call.1} parent=11 // pred_check_branch
          %963 = sbr.rel (%p961) target = $region112
        $region111: #{tpu_custom_call.1} parent=11 // pred_region
          _
        $region112: #{tpu_custom_call.1} parent=11 // pred_fallthru
          _
        // Predicated region
        $region113: #{tpu_custom_call.1} parent=11 // pred_check
          %p964 = pneg %p680
        $region114: #{tpu_custom_call.1} parent=11 // pred_check_branch
          %966 = sbr.rel (%p964) target = $region116
        $region115: #{tpu_custom_call.1} parent=11 // pred_region
          _
        $region116: #{tpu_custom_call.1} parent=11 // pred_fallthru
          _
        // Predicated region
        $region117: #{tpu_custom_call.1} parent=11 // pred_check
          %p967 = pneg %p701
        $region118: #{tpu_custom_call.1} parent=11 // pred_check_branch
          %969 = sbr.rel (%p967) target = $region120
        $region119: #{tpu_custom_call.1} parent=11 // pred_region
          _
        $region120: #{tpu_custom_call.1} parent=11 // pred_fallthru
          _
        // Predicated region
        $region121: #{tpu_custom_call.1} parent=11 // pred_check
          %p970 = pneg %p722
        $region122: #{tpu_custom_call.1} parent=11 // pred_check_branch
          %972 = sbr.rel (%p970) target = $region124
        $region123: #{tpu_custom_call.1} parent=11 // pred_region
          _
        $region124: #{tpu_custom_call.1} parent=11 // pred_fallthru
          _
        // Predicated region
        $region125: #{tpu_custom_call.1} parent=11 // pred_check
          %p973 = pneg %p743
        $region126: #{tpu_custom_call.1} parent=11 // pred_check_branch
          %975 = sbr.rel (%p973) target = $region128
        $region127: #{tpu_custom_call.1} parent=11 // pred_region
          _
        $region128: #{tpu_custom_call.1} parent=11 // pred_fallthru
          _
        // Predicated region
        $region129: #{tpu_custom_call.1} parent=11 // pred_check
          %p976 = pneg %p764
        $region130: #{tpu_custom_call.1} parent=11 // pred_check_branch
          %978 = sbr.rel (%p976) target = $region132
        $region131: #{tpu_custom_call.1} parent=11 // pred_region
          _
        $region132: #{tpu_custom_call.1} parent=11 // pred_fallthru
          _
        // Predicated region
        $region133: #{tpu_custom_call.1} parent=11 // pred_check
          %p979 = pneg %p785
        $region134: #{tpu_custom_call.1} parent=11 // pred_check_branch
          %981 = sbr.rel (%p979) target = $region136
        $region135: #{tpu_custom_call.1} parent=11 // pred_region
          _
        $region136: #{tpu_custom_call.1} parent=11 // pred_fallthru
          _
        // Predicated region
        $region137: #{tpu_custom_call.1} parent=11 // pred_check
          %p982 = pneg %p806
        $region138: #{tpu_custom_call.1} parent=11 // pred_check_branch
          %984 = sbr.rel (%p982) target = $region140
        $region139: #{tpu_custom_call.1} parent=11 // pred_region
          _
        $region140: #{tpu_custom_call.1} parent=11 // pred_fallthru
          _
        // Predicated region
        $region141: #{tpu_custom_call.1} parent=11 // pred_check
          %p985 = pneg %p827
        $region142: #{tpu_custom_call.1} parent=11 // pred_check_branch
          %987 = sbr.rel (%p985) target = $region144
        $region143: #{tpu_custom_call.1} parent=11 // pred_region
          _
        $region144: #{tpu_custom_call.1} parent=11 // pred_fallthru
          _
        // Predicated region
        $region145: #{tpu_custom_call.1} parent=11 // pred_check
          %p988 = pneg %p848
        $region146: #{tpu_custom_call.1} parent=11 // pred_check_branch
          %990 = sbr.rel (%p988) target = $region148
        $region147: #{tpu_custom_call.1} parent=11 // pred_region
          _
        $region148: #{tpu_custom_call.1} parent=11 // pred_fallthru
          _
      $region12: #{tpu_custom_call.1} parent=5 // pred_fallthru
        _
      %p991 = scmp.lt.s32.totalorder %s82, 2
      // Predicated region
      $region149: #{tpu_custom_call.1} parent=5 // pred_check
        %p992 = pneg %p991
      $region150: #{tpu_custom_call.1} parent=5 // pred_check_branch
        %994 = sbr.rel (%p992) target = $region152
      $region151: #{tpu_custom_call.1} parent=5 // pred_region
        // Predicated region
        $region153: #{tpu_custom_call.1} parent=151 // pred_check
          %p995 = pneg %p102
        $region154: #{tpu_custom_call.1} parent=151 // pred_check_branch
          %997 = sbr.rel (%p995) target = $region156
        $region155: #{tpu_custom_call.1} parent=151 // pred_region
          %p998 = scmp.lt.s32.totalorder %s82, 1
          %s999 = scalar_select %p998, %s82, 1
          %s1000 = smul.addr %s999, 8
          %s1001 = scalar_lea.vmem %s1, %s1000
        $region156: #{tpu_custom_call.1} parent=151 // pred_fallthru
          _
        // Predicated region
        $region157: #{tpu_custom_call.1} parent=151 // pred_check
          %p1002 = pneg %p128
        $region158: #{tpu_custom_call.1} parent=151 // pred_check_branch
          %1004 = sbr.rel (%p1002) target = $region160
        $region159: #{tpu_custom_call.1} parent=151 // pred_region
          %p1005 = scmp.lt.s32.totalorder %s82, 1
          %s1006 = scalar_select %p1005, %s82, 1
          %s1007 = scalar_lea.vmem %s3, %s1006
        $region160: #{tpu_custom_call.1} parent=151 // pred_fallthru
          _
      $region152: #{tpu_custom_call.1} parent=5 // pred_fallthru
        _
      %p1008 = scmp.le.s32.totalorder 1, %s82
      %p1009 = scmp.lt.s32.totalorder %s82, 3
      %p1010 = pnand %p1008, %p1009
      %p1011 = pneg %p1010
      // Predicated region
      $region161: #{tpu_custom_call.1} parent=5 // pred_check
        _
      $region162: #{tpu_custom_call.1} parent=5 // pred_check_branch
        %1013 = sbr.rel (%p1010) target = $region164
      $region163: #{tpu_custom_call.1} parent=5 // pred_region
        %s1014 = ssub.s32 %s82, 1
        %p1015 = scmp.lt.s32.totalorder %s87, 1
        %s1016 = scalar_select %p1015, %s87, 1
        %s1017 = smul.addr %s1016, 8
        %s1018 = scalar_lea.vmem %s1, %s1017
        %p1019 = pneg %p108
        %p1020 = pneg %p105
        %p1021 = scmp.lt.s32.totalorder %s87, 1
        %s1022 = scalar_select %p1021, %s87, 1
        %s1023 = scalar_lea.vmem %s3, %s1022
        %p1024 = pneg %p134
        %p1025 = pneg %p131
        %p1026 = pneg %p155
        %p1027 = pneg %p152
        %p1028 = pneg %p176
        %p1029 = pneg %p173
        %p1030 = pneg %p197
        %p1031 = pneg %p194
        %p1032 = pneg %p218
        %p1033 = pneg %p215
        %p1034 = pneg %p239
        %p1035 = pneg %p236
        %p1036 = pneg %p260
        %p1037 = pneg %p257
        %p1038 = pneg %p281
        %p1039 = pneg %p278
        %p1040 = pneg %p302
        %p1041 = pneg %p299
        %p1042 = pneg %p323
        %p1043 = pneg %p320
        %p1044 = pneg %p344
        %p1045 = pneg %p341
        %p1046 = pneg %p365
        %p1047 = pneg %p362
        %p1048 = pneg %p386
        %p1049 = pneg %p383
        %p1050 = pneg %p407
        %p1051 = pneg %p404
        %p1052 = pneg %p428
        %p1053 = pneg %p425
        %p1054 = pneg %p449
        %p1055 = pneg %p446
        %p1056 = pneg %p470
        %p1057 = pneg %p467
        %p1058 = pneg %p491
        %p1059 = pneg %p488
        %p1060 = pneg %p512
        %p1061 = pneg %p509
        %p1062 = pneg %p533
        %p1063 = pneg %p530
        %p1064 = pneg %p554
        %p1065 = pneg %p551
        %p1066 = pneg %p575
        %p1067 = pneg %p572
        %p1068 = pneg %p596
        %p1069 = pneg %p593
        %p1070 = pneg %p617
        %p1071 = pneg %p614
        %p1072 = pneg %p638
        %p1073 = pneg %p635
        %p1074 = pneg %p659
        %p1075 = pneg %p656
        %p1076 = pneg %p680
        %p1077 = pneg %p677
        %p1078 = pneg %p701
        %p1079 = pneg %p698
        %p1080 = pneg %p722
        %p1081 = pneg %p719
        %p1082 = pneg %p743
        %p1083 = pneg %p740
        %p1084 = pneg %p764
        %p1085 = pneg %p761
        %p1086 = pneg %p785
        %p1087 = pneg %p782
        %p1088 = pneg %p806
        %p1089 = pneg %p803
        %p1090 = pneg %p827
        %p1091 = pneg %p824
        %p1092 = pneg %p848
        %p1093 = pneg %p845
        %p1094 = pneg %p874
        %p1095 = pneg %p871
        %s1096 = sand.u32 %s861, 1
        %s1097 = scalar_lea.sflag [#allocation3], %s1096
        %s1098 = sand.u32 %s861, 1
        %s1099 = smul.addr %s1098, 8
        %s1100 = scalar_lea.vmem [#allocation2], %s1099
        %p1101 = scmp.lt.s32.totalorder %s87, 1
        %s1102 = scalar_select %p1101, %s87, 1
        %s1103 = smul.addr %s1102, 8
        %s1104 = scalar_lea.vmem %s1, %s1103
        %p1105 = scmp.lt.s32.totalorder %s87, 1
        %s1106 = scalar_select %p1105, %s87, 1
        %s1107 = scalar_lea.vmem %s3, %s1106
        %v1109 = vld [vmem:[%s1104] sm:$0xff]
        %v1110 = vlaneseq
        %v1111 = vshrl.u32 %v1110, 7
        %v1112 = vlaneseq
        %v1113 = vand.u32 %v1112, 127
        %v1114 = vld [vmem:[%s1107] sm:$0x1]
        %vm1115 = vcmp.gt.f32.partialorder %v1114, 0.5
        %vm1116 = vcmp.le.s32.totalorder %v1113, %v1111
        %v1117 = vsel %vm1115, 1, 0
        %v1118 = vlaneseq
        %v1119 = vshrl.u32 %v1118, 7
        %v1120 = vsub.s32 0, %v1119
        %v1121 = vrot.slane %v1117, %v1120
        %vm1122 = vcmp.eq.s32.totalorder %v1121, 1
        %vm1123 = vmand %vm1116, %vm1122
        %v1124 = vsel %vm1123, 0.0, -1e+30
        %v1125 = vld [vmem:[%s5] sm:$0xf]
        %v1126 = vld [vmem:[%s5 + $0x4] sm:$0xf]
        %v1127 = vld [vmem:[%s5 + $0x8] sm:$0xf]
        %v1128 = vld [vmem:[%s5 + $0xc] sm:$0xf]
        %v1129 = vld [vmem:[%s5 + $0x10] sm:$0xf]
        %v1130 = vld [vmem:[%s5 + $0x14] sm:$0xf]
        %v1131 = vld [vmem:[%s5 + $0x18] sm:$0xf]
        %v1132 = vld [vmem:[%s5 + $0x1c] sm:$0xf]
        %v1133 = vld [vmem:[%s5 + $0x20] sm:$0xf]
        %v1134 = vld [vmem:[%s5 + $0x24] sm:$0xf]
        %v1135 = vld [vmem:[%s5 + $0x28] sm:$0xf]
        %v1136 = vld [vmem:[%s5 + $0x2c] sm:$0xf]
        %v1137 = vld [vmem:[%s5 + $0x30] sm:$0xf]
        %v1138 = vld [vmem:[%s5 + $0x34] sm:$0xf]
        %v1139 = vld [vmem:[%s5 + $0x38] sm:$0xf]
        %v1140 = vld [vmem:[%s5 + $0x3c] sm:$0xf]
        %v1141 = vpack.c.bf16 %v1109, %v1109
        %v1142 = vld [vmem:[%s11] sm:$0x1]
        %v1143 = vld [vmem:[%s11 + $0x1] sm:$0x1]
        %v1144 = vld [vmem:[%s11 + $0x2] sm:$0x1]
        %v1145 = vld [vmem:[%s11 + $0x3] sm:$0x1]
        %v1150 = vlaneseq
        %v1151 = vshrl.u32 %v1150, 7
        %v1152 = vsub.s32 0, %v1151
        %v1153 = vrot.slane %v1142, %v1152
        %v1154 = vlaneseq
        %v1155 = vshrl.u32 %v1154, 7
        %v1156 = vsub.s32 0, %v1155
        %v1157 = vrot.slane %v1143, %v1156
        %v1158 = vlaneseq
        %v1159 = vshrl.u32 %v1158, 7
        %v1160 = vsub.s32 0, %v1159
        %v1161 = vrot.slane %v1144, %v1160
        %v1162 = vlaneseq
        %v1163 = vshrl.u32 %v1162, 7
        %v1164 = vsub.s32 0, %v1163
        %v1165 = vrot.slane %v1145, %v1164
        %v1174 = vunpack.c.l.b16 %v1125
        %v1175 = vunpack.c.l.b16 %v1126
        %v1176 = vunpack.c.l.b16 %v1127
        %v1177 = vunpack.c.l.b16 %v1128
        %v1178 = vpack.c.b16 %v1175, %v1174
        %v1179 = vpack.c.b16 %v1177, %v1176
        %vm1182 = vcmask 261120
        %v1184 = vsel %vm1182, %v1141, 0
        %1186 = vmatprep.subr.bf16.mxu0 0
        %1187 = vmatpush1.bf16.msra.mxu0 %v1178
        %1188 = vmatprep.subr.bf16.mxu0 0
        %1189 = vmatpush1.bf16.msra.mxu0 %v1179
        %1190 = vmatprep.subr.bf16.mxu0 0
        %1191 = vmatpush1.bf16.msra.mxu0 0
        %1192 = vmatprep.subr.bf16.mxu0 0
        %1193 = vmatpush1.bf16.msra.mxu0 0
        %1194 = vmatprep.subr.bf16.mxu0 0
        %1195 = vmatpush1.bf16.msra.mxu0 0
        %1196 = vmatprep.subr.bf16.mxu0 0
        %1197 = vmatpush1.bf16.msra.mxu0 0
        %1198 = vmatprep.subr.bf16.mxu0 0
        %1199 = vmatpush1.bf16.msra.mxu0 0
        %1200 = vmatprep.subr.bf16.mxu0 0
        %1201 = vmatpush1.bf16.msra.mxu0 0
        %1202 = vmatprep.subr.bf16.mxu0 0
        %1203 = vmatpush1.bf16.msra.mxu0 0
        %1204 = vmatprep.subr.bf16.mxu0 0
        %1205 = vmatpush1.bf16.msra.mxu0 0
        %1206 = vmatprep.subr.bf16.mxu0 0
        %1207 = vmatpush1.bf16.msra.mxu0 0
        %1208 = vmatprep.subr.bf16.mxu0 0
        %1209 = vmatpush1.bf16.msra.mxu0 0
        %1210 = vmatprep.subr.bf16.mxu0 0
        %1211 = vmatpush1.bf16.msra.mxu0 0
        %1212 = vmatprep.subr.bf16.mxu0 0
        %1213 = vmatpush1.bf16.msra.mxu0 0
        %1214 = vmatprep.subr.bf16.mxu0 0
        %1215 = vmatpush1.bf16.msra.mxu0 0
        %1216 = vmatprep.subr.bf16.mxu0 0
        %1217 = vmatpush1.bf16.msra.mxu0 0
        %1218 = vmatprep.mubr.bf16.mxu0 0
        %1219 = vmatmul.mubr.bf16.gmra.mrb[0].mxu0 %v1184
        %v1220 = vpop.f32.mrb[0].mxu0
        %v1221 = vadd.f32 %v1153, %v1220
        %v1222 = vpop.f32.mrb[0].mxu0
        %v1223 = vpop.f32.mrb[0].mxu0
        %v1224 = vpop.f32.mrb[0].mxu0
        %1225 = vdwg.mxu0
        %v1230 = vunpack.c.l.b16 %v1129
        %v1231 = vunpack.c.l.b16 %v1130
        %v1232 = vunpack.c.l.b16 %v1131
        %v1233 = vunpack.c.l.b16 %v1132
        %v1234 = vpack.c.b16 %v1231, %v1230
        %v1235 = vpack.c.b16 %v1233, %v1232
        %1238 = vmatprep.subr.bf16.mxu0 0
        %1239 = vmatpush1.bf16.msra.mxu0 %v1234
        %1240 = vmatprep.subr.bf16.mxu0 0
        %1241 = vmatpush1.bf16.msra.mxu0 %v1235
        %1242 = vmatprep.subr.bf16.mxu0 0
        %1243 = vmatpush1.bf16.msra.mxu0 0
        %1244 = vmatprep.subr.bf16.mxu0 0
        %1245 = vmatpush1.bf16.msra.mxu0 0
        %1246 = vmatprep.subr.bf16.mxu0 0
        %1247 = vmatpush1.bf16.msra.mxu0 0
        %1248 = vmatprep.subr.bf16.mxu0 0
        %1249 = vmatpush1.bf16.msra.mxu0 0
        %1250 = vmatprep.subr.bf16.mxu0 0
        %1251 = vmatpush1.bf16.msra.mxu0 0
        %1252 = vmatprep.subr.bf16.mxu0 0
        %1253 = vmatpush1.bf16.msra.mxu0 0
        %1254 = vmatprep.subr.bf16.mxu0 0
        %1255 = vmatpush1.bf16.msra.mxu0 0
        %1256 = vmatprep.subr.bf16.mxu0 0
        %1257 = vmatpush1.bf16.msra.mxu0 0
        %1258 = vmatprep.subr.bf16.mxu0 0
        %1259 = vmatpush1.bf16.msra.mxu0 0
        %1260 = vmatprep.subr.bf16.mxu0 0
        %1261 = vmatpush1.bf16.msra.mxu0 0
        %1262 = vmatprep.subr.bf16.mxu0 0
        %1263 = vmatpush1.bf16.msra.mxu0 0
        %1264 = vmatprep.subr.bf16.mxu0 0
        %1265 = vmatpush1.bf16.msra.mxu0 0
        %1266 = vmatprep.subr.bf16.mxu0 0
        %1267 = vmatpush1.bf16.msra.mxu0 0
        %1268 = vmatprep.subr.bf16.mxu0 0
        %1269 = vmatpush1.bf16.msra.mxu0 0
        %1270 = vmatprep.mubr.bf16.mxu0 0
        %1271 = vmatmul.mubr.bf16.gmra.mrb[0].mxu0 %v1184
        %v1272 = vpop.f32.mrb[0].mxu0
        %v1273 = vadd.f32 %v1157, %v1272
        %v1274 = vpop.f32.mrb[0].mxu0
        %v1275 = vpop.f32.mrb[0].mxu0
        %v1276 = vpop.f32.mrb[0].mxu0
        %1277 = vdwg.mxu0
        %v1282 = vunpack.c.l.b16 %v1133
        %v1283 = vunpack.c.l.b16 %v1134
        %v1284 = vunpack.c.l.b16 %v1135
        %v1285 = vunpack.c.l.b16 %v1136
        %v1286 = vpack.c.b16 %v1283, %v1282
        %v1287 = vpack.c.b16 %v1285, %v1284
        %1290 = vmatprep.subr.bf16.mxu0 0
        %1291 = vmatpush1.bf16.msra.mxu0 %v1286
        %1292 = vmatprep.subr.bf16.mxu0 0
        %1293 = vmatpush1.bf16.msra.mxu0 %v1287
        %1294 = vmatprep.subr.bf16.mxu0 0
        %1295 = vmatpush1.bf16.msra.mxu0 0
        %1296 = vmatprep.subr.bf16.mxu0 0
        %1297 = vmatpush1.bf16.msra.mxu0 0
        %1298 = vmatprep.subr.bf16.mxu0 0
        %1299 = vmatpush1.bf16.msra.mxu0 0
        %1300 = vmatprep.subr.bf16.mxu0 0
        %1301 = vmatpush1.bf16.msra.mxu0 0
        %1302 = vmatprep.subr.bf16.mxu0 0
        %1303 = vmatpush1.bf16.msra.mxu0 0
        %1304 = vmatprep.subr.bf16.mxu0 0
        %1305 = vmatpush1.bf16.msra.mxu0 0
        %1306 = vmatprep.subr.bf16.mxu0 0
        %1307 = vmatpush1.bf16.msra.mxu0 0
        %1308 = vmatprep.subr.bf16.mxu0 0
        %1309 = vmatpush1.bf16.msra.mxu0 0
        %1310 = vmatprep.subr.bf16.mxu0 0
        %1311 = vmatpush1.bf16.msra.mxu0 0
        %1312 = vmatprep.subr.bf16.mxu0 0
        %1313 = vmatpush1.bf16.msra.mxu0 0
        %1314 = vmatprep.subr.bf16.mxu0 0
        %1315 = vmatpush1.bf16.msra.mxu0 0
        %1316 = vmatprep.subr.bf16.mxu0 0
        %1317 = vmatpush1.bf16.msra.mxu0 0
        %1318 = vmatprep.subr.bf16.mxu0 0
        %1319 = vmatpush1.bf16.msra.mxu0 0
        %1320 = vmatprep.subr.bf16.mxu0 0
        %1321 = vmatpush1.bf16.msra.mxu0 0
        %1322 = vmatprep.mubr.bf16.mxu0 0
        %1323 = vmatmul.mubr.bf16.gmra.mrb[0].mxu0 %v1184
        %v1324 = vpop.f32.mrb[0].mxu0
        %v1325 = vadd.f32 %v1161, %v1324
        %v1326 = vpop.f32.mrb[0].mxu0
        %v1327 = vpop.f32.mrb[0].mxu0
        %v1328 = vpop.f32.mrb[0].mxu0
        %1329 = vdwg.mxu0
        %v1334 = vunpack.c.l.b16 %v1137
        %v1335 = vunpack.c.l.b16 %v1138
        %v1336 = vunpack.c.l.b16 %v1139
        %v1337 = vunpack.c.l.b16 %v1140
        %v1338 = vpack.c.b16 %v1335, %v1334
        %v1339 = vpack.c.b16 %v1337, %v1336
        %1342 = vmatprep.subr.bf16.mxu0 0
        %1343 = vmatpush1.bf16.msra.mxu0 %v1338
        %1344 = vmatprep.subr.bf16.mxu0 0
        %1345 = vmatpush1.bf16.msra.mxu0 %v1339
        %1346 = vmatprep.subr.bf16.mxu0 0
        %1347 = vmatpush1.bf16.msra.mxu0 0
        %1348 = vmatprep.subr.bf16.mxu0 0
        %1349 = vmatpush1.bf16.msra.mxu0 0
        %1350 = vmatprep.subr.bf16.mxu0 0
        %1351 = vmatpush1.bf16.msra.mxu0 0
        %1352 = vmatprep.subr.bf16.mxu0 0
        %1353 = vmatpush1.bf16.msra.mxu0 0
        %1354 = vmatprep.subr.bf16.mxu0 0
        %1355 = vmatpush1.bf16.msra.mxu0 0
        %1356 = vmatprep.subr.bf16.mxu0 0
        %1357 = vmatpush1.bf16.msra.mxu0 0
        %1358 = vmatprep.subr.bf16.mxu0 0
        %1359 = vmatpush1.bf16.msra.mxu0 0
        %1360 = vmatprep.subr.bf16.mxu0 0
        %1361 = vmatpush1.bf16.msra.mxu0 0
        %1362 = vmatprep.subr.bf16.mxu0 0
        %1363 = vmatpush1.bf16.msra.mxu0 0
        %1364 = vmatprep.subr.bf16.mxu0 0
        %1365 = vmatpush1.bf16.msra.mxu0 0
        %1366 = vmatprep.subr.bf16.mxu0 0
        %1367 = vmatpush1.bf16.msra.mxu0 0
        %1368 = vmatprep.subr.bf16.mxu0 0
        %1369 = vmatpush1.bf16.msra.mxu0 0
        %1370 = vmatprep.subr.bf16.mxu0 0
        %1371 = vmatpush1.bf16.msra.mxu0 0
        %1372 = vmatprep.subr.bf16.mxu0 0
        %1373 = vmatpush1.bf16.msra.mxu0 0
        %1374 = vmatprep.mubr.bf16.mxu0 0
        %1375 = vmatmul.mubr.bf16.gmra.mrb[0].mxu0 %v1184
        %v1376 = vpop.f32.mrb[0].mxu0
        %v1377 = vadd.f32 %v1165, %v1376
        %v1378 = vpop.f32.mrb[0].mxu0
        %v1379 = vpop.f32.mrb[0].mxu0
        %v1380 = vpop.f32.mrb[0].mxu0
        %1381 = vdwg.mxu0
        %v1382 = vld [vmem:[%s7] sm:$0xf]
        %v1383 = vld [vmem:[%s7 + $0x4] sm:$0xf]
        %v1384 = vld [vmem:[%s7 + $0x8] sm:$0xf]
        %v1385 = vld [vmem:[%s7 + $0xc] sm:$0xf]
        %v1386 = vld [vmem:[%s7 + $0x10] sm:$0xf]
        %v1387 = vld [vmem:[%s7 + $0x14] sm:$0xf]
        %v1388 = vld [vmem:[%s7 + $0x18] sm:$0xf]
        %v1389 = vld [vmem:[%s7 + $0x1c] sm:$0xf]
        %v1390 = vld [vmem:[%s7 + $0x20] sm:$0xf]
        %v1391 = vld [vmem:[%s7 + $0x24] sm:$0xf]
        %v1392 = vld [vmem:[%s7 + $0x28] sm:$0xf]
        %v1393 = vld [vmem:[%s7 + $0x2c] sm:$0xf]
        %v1394 = vld [vmem:[%s7 + $0x30] sm:$0xf]
        %v1395 = vld [vmem:[%s7 + $0x34] sm:$0xf]
        %v1396 = vld [vmem:[%s7 + $0x38] sm:$0xf]
        %v1397 = vld [vmem:[%s7 + $0x3c] sm:$0xf]
        %v1398 = vld [vmem:[%s13] sm:$0x1]
        %v1399 = vld [vmem:[%s13 + $0x1] sm:$0x1]
        %v1400 = vld [vmem:[%s13 + $0x2] sm:$0x1]
        %v1401 = vld [vmem:[%s13 + $0x3] sm:$0x1]
        %v1406 = vlaneseq
        %v1407 = vshrl.u32 %v1406, 7
        %v1408 = vsub.s32 0, %v1407
        %v1409 = vrot.slane %v1398, %v1408
        %v1410 = vlaneseq
        %v1411 = vshrl.u32 %v1410, 7
        %v1412 = vsub.s32 0, %v1411
        %v1413 = vrot.slane %v1399, %v1412
        %v1414 = vlaneseq
        %v1415 = vshrl.u32 %v1414, 7
        %v1416 = vsub.s32 0, %v1415
        %v1417 = vrot.slane %v1400, %v1416
        %v1418 = vlaneseq
        %v1419 = vshrl.u32 %v1418, 7
        %v1420 = vsub.s32 0, %v1419
        %v1421 = vrot.slane %v1401, %v1420
        %v1430 = vunpack.c.l.b16 %v1382
        %v1431 = vunpack.c.l.b16 %v1383
        %v1432 = vunpack.c.l.b16 %v1384
        %v1433 = vunpack.c.l.b16 %v1385
        %v1434 = vpack.c.b16 %v1431, %v1430
        %v1435 = vpack.c.b16 %v1433, %v1432
        %1438 = vmatprep.subr.bf16.mxu0 0
        %1439 = vmatpush1.bf16.msra.mxu0 %v1434
        %1440 = vmatprep.subr.bf16.mxu0 0
        %1441 = vmatpush1.bf16.msra.mxu0 %v1435
        %1442 = vmatprep.subr.bf16.mxu0 0
        %1443 = vmatpush1.bf16.msra.mxu0 0
        %1444 = vmatprep.subr.bf16.mxu0 0
        %1445 = vmatpush1.bf16.msra.mxu0 0
        %1446 = vmatprep.subr.bf16.mxu0 0
        %1447 = vmatpush1.bf16.msra.mxu0 0
        %1448 = vmatprep.subr.bf16.mxu0 0
        %1449 = vmatpush1.bf16.msra.mxu0 0
        %1450 = vmatprep.subr.bf16.mxu0 0
        %1451 = vmatpush1.bf16.msra.mxu0 0
        %1452 = vmatprep.subr.bf16.mxu0 0
        %1453 = vmatpush1.bf16.msra.mxu0 0
        %1454 = vmatprep.subr.bf16.mxu0 0
        %1455 = vmatpush1.bf16.msra.mxu0 0
        %1456 = vmatprep.subr.bf16.mxu0 0
        %1457 = vmatpush1.bf16.msra.mxu0 0
        %1458 = vmatprep.subr.bf16.mxu0 0
        %1459 = vmatpush1.bf16.msra.mxu0 0
        %1460 = vmatprep.subr.bf16.mxu0 0
        %1461 = vmatpush1.bf16.msra.mxu0 0
        %1462 = vmatprep.subr.bf16.mxu0 0
        %1463 = vmatpush1.bf16.msra.mxu0 0
        %1464 = vmatprep.subr.bf16.mxu0 0
        %1465 = vmatpush1.bf16.msra.mxu0 0
        %1466 = vmatprep.subr.bf16.mxu0 0
        %1467 = vmatpush1.bf16.msra.mxu0 0
        %1468 = vmatprep.subr.bf16.mxu0 0
        %1469 = vmatpush1.bf16.msra.mxu0 0
        %1470 = vmatprep.mubr.bf16.mxu0 0
        %1471 = vmatmul.mubr.bf16.gmra.mrb[0].mxu0 %v1184
        %v1472 = vpop.f32.mrb[0].mxu0
        %v1473 = vadd.f32 %v1409, %v1472
        %v1474 = vpop.f32.mrb[0].mxu0
        %v1475 = vpop.f32.mrb[0].mxu0
        %v1476 = vpop.f32.mrb[0].mxu0
        %1477 = vdwg.mxu0
        %v1482 = vunpack.c.l.b16 %v1386
        %v1483 = vunpack.c.l.b16 %v1387
        %v1484 = vunpack.c.l.b16 %v1388
        %v1485 = vunpack.c.l.b16 %v1389
        %v1486 = vpack.c.b16 %v1483, %v1482
        %v1487 = vpack.c.b16 %v1485, %v1484
        %1490 = vmatprep.subr.bf16.mxu0 0
        %1491 = vmatpush1.bf16.msra.mxu0 %v1486
        %1492 = vmatprep.subr.bf16.mxu0 0
        %1493 = vmatpush1.bf16.msra.mxu0 %v1487
        %1494 = vmatprep.subr.bf16.mxu0 0
        %1495 = vmatpush1.bf16.msra.mxu0 0
        %1496 = vmatprep.subr.bf16.mxu0 0
        %1497 = vmatpush1.bf16.msra.mxu0 0
        %1498 = vmatprep.subr.bf16.mxu0 0
        %1499 = vmatpush1.bf16.msra.mxu0 0
        %1500 = vmatprep.subr.bf16.mxu0 0
        %1501 = vmatpush1.bf16.msra.mxu0 0
        %1502 = vmatprep.subr.bf16.mxu0 0
        %1503 = vmatpush1.bf16.msra.mxu0 0
        %1504 = vmatprep.subr.bf16.mxu0 0
        %1505 = vmatpush1.bf16.msra.mxu0 0
        %1506 = vmatprep.subr.bf16.mxu0 0
        %1507 = vmatpush1.bf16.msra.mxu0 0
        %1508 = vmatprep.subr.bf16.mxu0 0
        %1509 = vmatpush1.bf16.msra.mxu0 0
        %1510 = vmatprep.subr.bf16.mxu0 0
        %1511 = vmatpush1.bf16.msra.mxu0 0
        %1512 = vmatprep.subr.bf16.mxu0 0
        %1513 = vmatpush1.bf16.msra.mxu0 0
        %1514 = vmatprep.subr.bf16.mxu0 0
        %1515 = vmatpush1.bf16.msra.mxu0 0
        %1516 = vmatprep.subr.bf16.mxu0 0
        %1517 = vmatpush1.bf16.msra.mxu0 0
        %1518 = vmatprep.subr.bf16.mxu0 0
        %1519 = vmatpush1.bf16.msra.mxu0 0
        %1520 = vmatprep.subr.bf16.mxu0 0
        %1521 = vmatpush1.bf16.msra.mxu0 0
        %1522 = vmatprep.mubr.bf16.mxu0 0
        %1523 = vmatmul.mubr.bf16.gmra.mrb[0].mxu0 %v1184
        %v1524 = vpop.f32.mrb[0].mxu0
        %v1525 = vadd.f32 %v1413, %v1524
        %v1526 = vpop.f32.mrb[0].mxu0
        %v1527 = vpop.f32.mrb[0].mxu0
        %v1528 = vpop.f32.mrb[0].mxu0
        %1529 = vdwg.mxu0
        %v1534 = vunpack.c.l.b16 %v1390
        %v1535 = vunpack.c.l.b16 %v1391
        %v1536 = vunpack.c.l.b16 %v1392
        %v1537 = vunpack.c.l.b16 %v1393
        %v1538 = vpack.c.b16 %v1535, %v1534
        %v1539 = vpack.c.b16 %v1537, %v1536
        %1542 = vmatprep.subr.bf16.mxu0 0
        %1543 = vmatpush1.bf16.msra.mxu0 %v1538
        %1544 = vmatprep.subr.bf16.mxu0 0
        %1545 = vmatpush1.bf16.msra.mxu0 %v1539
        %1546 = vmatprep.subr.bf16.mxu0 0
        %1547 = vmatpush1.bf16.msra.mxu0 0
        %1548 = vmatprep.subr.bf16.mxu0 0
        %1549 = vmatpush1.bf16.msra.mxu0 0
        %1550 = vmatprep.subr.bf16.mxu0 0
        %1551 = vmatpush1.bf16.msra.mxu0 0
        %1552 = vmatprep.subr.bf16.mxu0 0
        %1553 = vmatpush1.bf16.msra.mxu0 0
        %1554 = vmatprep.subr.bf16.mxu0 0
        %1555 = vmatpush1.bf16.msra.mxu0 0
        %1556 = vmatprep.subr.bf16.mxu0 0
        %1557 = vmatpush1.bf16.msra.mxu0 0
        %1558 = vmatprep.subr.bf16.mxu0 0
        %1559 = vmatpush1.bf16.msra.mxu0 0
        %1560 = vmatprep.subr.bf16.mxu0 0
        %1561 = vmatpush1.bf16.msra.mxu0 0
        %1562 = vmatprep.subr.bf16.mxu0 0
        %1563 = vmatpush1.bf16.msra.mxu0 0
        %1564 = vmatprep.subr.bf16.mxu0 0
        %1565 = vmatpush1.bf16.msra.mxu0 0
        %1566 = vmatprep.subr.bf16.mxu0 0
        %1567 = vmatpush1.bf16.msra.mxu0 0
        %1568 = vmatprep.subr.bf16.mxu0 0
        %1569 = vmatpush1.bf16.msra.mxu0 0
        %1570 = vmatprep.subr.bf16.mxu0 0
        %1571 = vmatpush1.bf16.msra.mxu0 0
        %1572 = vmatprep.subr.bf16.mxu0 0
        %1573 = vmatpush1.bf16.msra.mxu0 0
        %1574 = vmatprep.mubr.bf16.mxu0 0
        %1575 = vmatmul.mubr.bf16.gmra.mrb[0].mxu0 %v1184
        %v1576 = vpop.f32.mrb[0].mxu0
        %v1577 = vadd.f32 %v1417, %v1576
        %v1578 = vpop.f32.mrb[0].mxu0
        %v1579 = vpop.f32.mrb[0].mxu0
        %v1580 = vpop.f32.mrb[0].mxu0
        %1581 = vdwg.mxu0
        %v1586 = vunpack.c.l.b16 %v1394
        %v1587 = vunpack.c.l.b16 %v1395
        %v1588 = vunpack.c.l.b16 %v1396
        %v1589 = vunpack.c.l.b16 %v1397
        %v1590 = vpack.c.b16 %v1587, %v1586
        %v1591 = vpack.c.b16 %v1589, %v1588
        %1594 = vmatprep.subr.bf16.mxu0 0
        %1595 = vmatpush1.bf16.msra.mxu0 %v1590
        %1596 = vmatprep.subr.bf16.mxu0 0
        %1597 = vmatpush1.bf16.msra.mxu0 %v1591
        %1598 = vmatprep.subr.bf16.mxu0 0
        %1599 = vmatpush1.bf16.msra.mxu0 0
        %1600 = vmatprep.subr.bf16.mxu0 0
        %1601 = vmatpush1.bf16.msra.mxu0 0
        %1602 = vmatprep.subr.bf16.mxu0 0
        %1603 = vmatpush1.bf16.msra.mxu0 0
        %1604 = vmatprep.subr.bf16.mxu0 0
        %1605 = vmatpush1.bf16.msra.mxu0 0
        %1606 = vmatprep.subr.bf16.mxu0 0
        %1607 = vmatpush1.bf16.msra.mxu0 0
        %1608 = vmatprep.subr.bf16.mxu0 0
        %1609 = vmatpush1.bf16.msra.mxu0 0
        %1610 = vmatprep.subr.bf16.mxu0 0
        %1611 = vmatpush1.bf16.msra.mxu0 0
        %1612 = vmatprep.subr.bf16.mxu0 0
        %1613 = vmatpush1.bf16.msra.mxu0 0
        %1614 = vmatprep.subr.bf16.mxu0 0
        %1615 = vmatpush1.bf16.msra.mxu0 0
        %1616 = vmatprep.subr.bf16.mxu0 0
        %1617 = vmatpush1.bf16.msra.mxu0 0
        %1618 = vmatprep.subr.bf16.mxu0 0
        %1619 = vmatpush1.bf16.msra.mxu0 0
        %1620 = vmatprep.subr.bf16.mxu0 0
        %1621 = vmatpush1.bf16.msra.mxu0 0
        %1622 = vmatprep.subr.bf16.mxu0 0
        %1623 = vmatpush1.bf16.msra.mxu0 0
        %1624 = vmatprep.subr.bf16.mxu0 0
        %1625 = vmatpush1.bf16.msra.mxu0 0
        %1626 = vmatprep.mubr.bf16.mxu0 0
        %1627 = vmatmul.mubr.bf16.gmra.mrb[0].mxu0 %v1184
        %v1628 = vpop.f32.mrb[0].mxu0
        %v1629 = vadd.f32 %v1421, %v1628
        %v1630 = vpop.f32.mrb[0].mxu0
        %v1631 = vpop.f32.mrb[0].mxu0
        %v1632 = vpop.f32.mrb[0].mxu0
        %1633 = vdwg.mxu0
        %v1634 = vld [vmem:[%s9] sm:$0xf]
        %v1635 = vld [vmem:[%s9 + $0x4] sm:$0xf]
        %v1636 = vld [vmem:[%s9 + $0x8] sm:$0xf]
        %v1637 = vld [vmem:[%s9 + $0xc] sm:$0xf]
        %v1638 = vld [vmem:[%s9 + $0x10] sm:$0xf]
        %v1639 = vld [vmem:[%s9 + $0x14] sm:$0xf]
        %v1640 = vld [vmem:[%s9 + $0x18] sm:$0xf]
        %v1641 = vld [vmem:[%s9 + $0x1c] sm:$0xf]
        %v1642 = vld [vmem:[%s9 + $0x20] sm:$0xf]
        %v1643 = vld [vmem:[%s9 + $0x24] sm:$0xf]
        %v1644 = vld [vmem:[%s9 + $0x28] sm:$0xf]
        %v1645 = vld [vmem:[%s9 + $0x2c] sm:$0xf]
        %v1646 = vld [vmem:[%s9 + $0x30] sm:$0xf]
        %v1647 = vld [vmem:[%s9 + $0x34] sm:$0xf]
        %v1648 = vld [vmem:[%s9 + $0x38] sm:$0xf]
        %v1649 = vld [vmem:[%s9 + $0x3c] sm:$0xf]
        %v1650 = vld [vmem:[%s15] sm:$0x1]
        %v1651 = vld [vmem:[%s15 + $0x1] sm:$0x1]
        %v1652 = vld [vmem:[%s15 + $0x2] sm:$0x1]
        %v1653 = vld [vmem:[%s15 + $0x3] sm:$0x1]
        %v1658 = vlaneseq
        %v1659 = vshrl.u32 %v1658, 7
        %v1660 = vsub.s32 0, %v1659
        %v1661 = vrot.slane %v1650, %v1660
        %v1662 = vlaneseq
        %v1663 = vshrl.u32 %v1662, 7
        %v1664 = vsub.s32 0, %v1663
        %v1665 = vrot.slane %v1651, %v1664
        %v1666 = vlaneseq
        %v1667 = vshrl.u32 %v1666, 7
        %v1668 = vsub.s32 0, %v1667
        %v1669 = vrot.slane %v1652, %v1668
        %v1670 = vlaneseq
        %v1671 = vshrl.u32 %v1670, 7
        %v1672 = vsub.s32 0, %v1671
        %v1673 = vrot.slane %v1653, %v1672
        %v1682 = vunpack.c.l.b16 %v1634
        %v1683 = vunpack.c.l.b16 %v1635
        %v1684 = vunpack.c.l.b16 %v1636
        %v1685 = vunpack.c.l.b16 %v1637
        %v1686 = vpack.c.b16 %v1683, %v1682
        %v1687 = vpack.c.b16 %v1685, %v1684
        %1690 = vmatprep.subr.bf16.mxu0 0
        %1691 = vmatpush1.bf16.msra.mxu0 %v1686
        %1692 = vmatprep.subr.bf16.mxu0 0
        %1693 = vmatpush1.bf16.msra.mxu0 %v1687
        %1694 = vmatprep.subr.bf16.mxu0 0
        %1695 = vmatpush1.bf16.msra.mxu0 0
        %1696 = vmatprep.subr.bf16.mxu0 0
        %1697 = vmatpush1.bf16.msra.mxu0 0
        %1698 = vmatprep.subr.bf16.mxu0 0
        %1699 = vmatpush1.bf16.msra.mxu0 0
        %1700 = vmatprep.subr.bf16.mxu0 0
        %1701 = vmatpush1.bf16.msra.mxu0 0
        %1702 = vmatprep.subr.bf16.mxu0 0
        %1703 = vmatpush1.bf16.msra.mxu0 0
        %1704 = vmatprep.subr.bf16.mxu0 0
        %1705 = vmatpush1.bf16.msra.mxu0 0
        %1706 = vmatprep.subr.bf16.mxu0 0
        %1707 = vmatpush1.bf16.msra.mxu0 0
        %1708 = vmatprep.subr.bf16.mxu0 0
        %1709 = vmatpush1.bf16.msra.mxu0 0
        %1710 = vmatprep.subr.bf16.mxu0 0
        %1711 = vmatpush1.bf16.msra.mxu0 0
        %1712 = vmatprep.subr.bf16.mxu0 0
        %1713 = vmatpush1.bf16.msra.mxu0 0
        %1714 = vmatprep.subr.bf16.mxu0 0
        %1715 = vmatpush1.bf16.msra.mxu0 0
        %1716 = vmatprep.subr.bf16.mxu0 0
        %1717 = vmatpush1.bf16.msra.mxu0 0
        %1718 = vmatprep.subr.bf16.mxu0 0
        %1719 = vmatpush1.bf16.msra.mxu0 0
        %1720 = vmatprep.subr.bf16.mxu0 0
        %1721 = vmatpush1.bf16.msra.mxu0 0
        %1722 = vmatprep.mubr.bf16.mxu0 0
        %1723 = vmatmul.mubr.bf16.gmra.mrb[0].mxu0 %v1184
        %v1724 = vpop.f32.mrb[0].mxu0
        %v1725 = vadd.f32 %v1661, %v1724
        %v1726 = vpop.f32.mrb[0].mxu0
        %v1727 = vpop.f32.mrb[0].mxu0
        %v1728 = vpop.f32.mrb[0].mxu0
        %1729 = vdwg.mxu0
        %v1734 = vunpack.c.l.b16 %v1638
        %v1735 = vunpack.c.l.b16 %v1639
        %v1736 = vunpack.c.l.b16 %v1640
        %v1737 = vunpack.c.l.b16 %v1641
        %v1738 = vpack.c.b16 %v1735, %v1734
        %v1739 = vpack.c.b16 %v1737, %v1736
        %1742 = vmatprep.subr.bf16.mxu0 0
        %1743 = vmatpush1.bf16.msra.mxu0 %v1738
        %1744 = vmatprep.subr.bf16.mxu0 0
        %1745 = vmatpush1.bf16.msra.mxu0 %v1739
        %1746 = vmatprep.subr.bf16.mxu0 0
        %1747 = vmatpush1.bf16.msra.mxu0 0
        %1748 = vmatprep.subr.bf16.mxu0 0
        %1749 = vmatpush1.bf16.msra.mxu0 0
        %1750 = vmatprep.subr.bf16.mxu0 0
        %1751 = vmatpush1.bf16.msra.mxu0 0
        %1752 = vmatprep.subr.bf16.mxu0 0
        %1753 = vmatpush1.bf16.msra.mxu0 0
        %1754 = vmatprep.subr.bf16.mxu0 0
        %1755 = vmatpush1.bf16.msra.mxu0 0
        %1756 = vmatprep.subr.bf16.mxu0 0
        %1757 = vmatpush1.bf16.msra.mxu0 0
        %1758 = vmatprep.subr.bf16.mxu0 0
        %1759 = vmatpush1.bf16.msra.mxu0 0
        %1760 = vmatprep.subr.bf16.mxu0 0
        %1761 = vmatpush1.bf16.msra.mxu0 0
        %1762 = vmatprep.subr.bf16.mxu0 0
        %1763 = vmatpush1.bf16.msra.mxu0 0
        %1764 = vmatprep.subr.bf16.mxu0 0
        %1765 = vmatpush1.bf16.msra.mxu0 0
        %1766 = vmatprep.subr.bf16.mxu0 0
        %1767 = vmatpush1.bf16.msra.mxu0 0
        %1768 = vmatprep.subr.bf16.mxu0 0
        %1769 = vmatpush1.bf16.msra.mxu0 0
        %1770 = vmatprep.subr.bf16.mxu0 0
        %1771 = vmatpush1.bf16.msra.mxu0 0
        %1772 = vmatprep.subr.bf16.mxu0 0
        %1773 = vmatpush1.bf16.msra.mxu0 0
        %1774 = vmatprep.mubr.bf16.mxu0 0
        %1775 = vmatmul.mubr.bf16.gmra.mrb[0].mxu0 %v1184
        %v1776 = vpop.f32.mrb[0].mxu0
        %v1777 = vadd.f32 %v1665, %v1776
        %v1778 = vpop.f32.mrb[0].mxu0
        %v1779 = vpop.f32.mrb[0].mxu0
        %v1780 = vpop.f32.mrb[0].mxu0
        %1781 = vdwg.mxu0
        %v1786 = vunpack.c.l.b16 %v1642
        %v1787 = vunpack.c.l.b16 %v1643
        %v1788 = vunpack.c.l.b16 %v1644
        %v1789 = vunpack.c.l.b16 %v1645
        %v1790 = vpack.c.b16 %v1787, %v1786
        %v1791 = vpack.c.b16 %v1789, %v1788
        %1794 = vmatprep.subr.bf16.mxu0 0
        %1795 = vmatpush1.bf16.msra.mxu0 %v1790
        %1796 = vmatprep.subr.bf16.mxu0 0
        %1797 = vmatpush1.bf16.msra.mxu0 %v1791
        %1798 = vmatprep.subr.bf16.mxu0 0
        %1799 = vmatpush1.bf16.msra.mxu0 0
        %1800 = vmatprep.subr.bf16.mxu0 0
        %1801 = vmatpush1.bf16.msra.mxu0 0
        %1802 = vmatprep.subr.bf16.mxu0 0
        %1803 = vmatpush1.bf16.msra.mxu0 0
        %1804 = vmatprep.subr.bf16.mxu0 0
        %1805 = vmatpush1.bf16.msra.mxu0 0
        %1806 = vmatprep.subr.bf16.mxu0 0
        %1807 = vmatpush1.bf16.msra.mxu0 0
        %1808 = vmatprep.subr.bf16.mxu0 0
        %1809 = vmatpush1.bf16.msra.mxu0 0
        %1810 = vmatprep.subr.bf16.mxu0 0
        %1811 = vmatpush1.bf16.msra.mxu0 0
        %1812 = vmatprep.subr.bf16.mxu0 0
        %1813 = vmatpush1.bf16.msra.mxu0 0
        %1814 = vmatprep.subr.bf16.mxu0 0
        %1815 = vmatpush1.bf16.msra.mxu0 0
        %1816 = vmatprep.subr.bf16.mxu0 0
        %1817 = vmatpush1.bf16.msra.mxu0 0
        %1818 = vmatprep.subr.bf16.mxu0 0
        %1819 = vmatpush1.bf16.msra.mxu0 0
        %1820 = vmatprep.subr.bf16.mxu0 0
        %1821 = vmatpush1.bf16.msra.mxu0 0
        %1822 = vmatprep.subr.bf16.mxu0 0
        %1823 = vmatpush1.bf16.msra.mxu0 0
        %1824 = vmatprep.subr.bf16.mxu0 0
        %1825 = vmatpush1.bf16.msra.mxu0 0
        %1826 = vmatprep.mubr.bf16.mxu0 0
        %1827 = vmatmul.mubr.bf16.gmra.mrb[0].mxu0 %v1184
        %v1828 = vpop.f32.mrb[0].mxu0
        %v1829 = vadd.f32 %v1669, %v1828
        %v1830 = vpop.f32.mrb[0].mxu0
        %v1831 = vpop.f32.mrb[0].mxu0
        %v1832 = vpop.f32.mrb[0].mxu0
        %1833 = vdwg.mxu0
        %v1838 = vunpack.c.l.b16 %v1646
        %v1839 = vunpack.c.l.b16 %v1647
        %v1840 = vunpack.c.l.b16 %v1648
        %v1841 = vunpack.c.l.b16 %v1649
        %v1842 = vpack.c.b16 %v1839, %v1838
        %v1843 = vpack.c.b16 %v1841, %v1840
        %1846 = vmatprep.subr.bf16.mxu0 0
        %1847 = vmatpush1.bf16.msra.mxu0 %v1842
        %1848 = vmatprep.subr.bf16.mxu0 0
        %1849 = vmatpush1.bf16.msra.mxu0 %v1843
        %1850 = vmatprep.subr.bf16.mxu0 0
        %1851 = vmatpush1.bf16.msra.mxu0 0
        %1852 = vmatprep.subr.bf16.mxu0 0
        %1853 = vmatpush1.bf16.msra.mxu0 0
        %1854 = vmatprep.subr.bf16.mxu0 0
        %1855 = vmatpush1.bf16.msra.mxu0 0
        %1856 = vmatprep.subr.bf16.mxu0 0
        %1857 = vmatpush1.bf16.msra.mxu0 0
        %1858 = vmatprep.subr.bf16.mxu0 0
        %1859 = vmatpush1.bf16.msra.mxu0 0
        %1860 = vmatprep.subr.bf16.mxu0 0
        %1861 = vmatpush1.bf16.msra.mxu0 0
        %1862 = vmatprep.subr.bf16.mxu0 0
        %1863 = vmatpush1.bf16.msra.mxu0 0
        %1864 = vmatprep.subr.bf16.mxu0 0
        %1865 = vmatpush1.bf16.msra.mxu0 0
        %1866 = vmatprep.subr.bf16.mxu0 0
        %1867 = vmatpush1.bf16.msra.mxu0 0
        %1868 = vmatprep.subr.bf16.mxu0 0
        %1869 = vmatpush1.bf16.msra.mxu0 0
        %1870 = vmatprep.subr.bf16.mxu0 0
        %1871 = vmatpush1.bf16.msra.mxu0 0
        %1872 = vmatprep.subr.bf16.mxu0 0
        %1873 = vmatpush1.bf16.msra.mxu0 0
        %1874 = vmatprep.subr.bf16.mxu0 0
        %1875 = vmatpush1.bf16.msra.mxu0 0
        %1876 = vmatprep.subr.bf16.mxu0 0
        %1877 = vmatpush1.bf16.msra.mxu0 0
        %1878 = vmatprep.mubr.bf16.mxu0 0
        %1879 = vmatmul.mubr.bf16.gmra.mrb[0].mxu0 %v1184
        %v1880 = vpop.f32.mrb[0].mxu0
        %v1881 = vadd.f32 %v1673, %v1880
        %v1882 = vpop.f32.mrb[0].mxu0
        %v1883 = vpop.f32.mrb[0].mxu0
        %v1884 = vpop.f32.mrb[0].mxu0
        %1885 = vdwg.mxu0
        %v1886 = vpack.c.bf16 %v1221, %v1221
        %v1887 = vpack.c.bf16 %v1273, %v1273
        %v1888 = vpack.c.bf16 %v1325, %v1325
        %v1889 = vpack.c.bf16 %v1377, %v1377
        %v1890 = vpack.c.bf16 %v1473, %v1473
        %v1891 = vpack.c.bf16 %v1525, %v1525
        %v1892 = vpack.c.bf16 %v1577, %v1577
        %v1893 = vpack.c.bf16 %v1629, %v1629
        %vm1894 = vcmask 64512
        %v1896 = vsel %vm1894, %v1886, 0
        %v1899 = vsel %vm1894, %v1890, 0
        %1901 = vmatprep.subr.bf16.mxu0 0
        %1902 = vmatpush1.bf16.xpose.msra.mxu0 %v1899
        %1903 = vmatprep.subr.bf16.mxu0 0
        %1904 = vmatpush1.bf16.xpose.msra.mxu0 0
        %1905 = vmatprep.subr.bf16.mxu0 0
        %1906 = vmatpush1.bf16.xpose.msra.mxu0 0
        %1907 = vmatprep.subr.bf16.mxu0 0
        %1908 = vmatpush1.bf16.xpose.msra.mxu0 0
        %1909 = vmatprep.subr.bf16.mxu0 0
        %1910 = vmatpush1.bf16.xpose.msra.mxu0 0
        %1911 = vmatprep.subr.bf16.mxu0 0
        %1912 = vmatpush1.bf16.xpose.msra.mxu0 0
        %1913 = vmatprep.subr.bf16.mxu0 0
        %1914 = vmatpush1.bf16.xpose.msra.mxu0 0
        %1915 = vmatprep.subr.bf16.mxu0 0
        %1916 = vmatpush1.bf16.xpose.msra.mxu0 0
        %1917 = vmatprep.subr.bf16.mxu0 0
        %1918 = vmatpush1.bf16.xpose.msra.mxu0 0
        %1919 = vmatprep.subr.bf16.mxu0 0
        %1920 = vmatpush1.bf16.xpose.msra.mxu0 0
        %1921 = vmatprep.subr.bf16.mxu0 0
        %1922 = vmatpush1.bf16.xpose.msra.mxu0 0
        %1923 = vmatprep.subr.bf16.mxu0 0
        %1924 = vmatpush1.bf16.xpose.msra.mxu0 0
        %1925 = vmatprep.subr.bf16.mxu0 0
        %1926 = vmatpush1.bf16.xpose.msra.mxu0 0
        %1927 = vmatprep.subr.bf16.mxu0 0
        %1928 = vmatpush1.bf16.xpose.msra.mxu0 0
        %1929 = vmatprep.subr.bf16.mxu0 0
        %1930 = vmatpush1.bf16.xpose.msra.mxu0 0
        %1931 = vmatprep.subr.bf16.mxu0 0
        %1932 = vmatpush1.bf16.xpose.msra.mxu0 0
        %1933 = vmatprep.mubr.bf16.mxu0 0
        %1934 = vmatmul.mubr.bf16.gmra.mrb[0].mxu0 %v1896
        %v1935 = vpop.f32.mrb[0].mxu0
        %v1936 = vadd.f32 0.0, %v1935
        %v1937 = vpop.f32.mrb[0].mxu0
        %v1938 = vpop.f32.mrb[0].mxu0
        %v1939 = vpop.f32.mrb[0].mxu0
        %1940 = vdwg.mxu0
        %v1942 = vsel %vm1894, %v1887, 0
        %v1945 = vsel %vm1894, %v1891, 0
        %1947 = vmatprep.subr.bf16.mxu0 0
        %1948 = vmatpush1.bf16.xpose.msra.mxu0 %v1945
        %1949 = vmatprep.subr.bf16.mxu0 0
        %1950 = vmatpush1.bf16.xpose.msra.mxu0 0
        %1951 = vmatprep.subr.bf16.mxu0 0
        %1952 = vmatpush1.bf16.xpose.msra.mxu0 0
        %1953 = vmatprep.subr.bf16.mxu0 0
        %1954 = vmatpush1.bf16.xpose.msra.mxu0 0
        %1955 = vmatprep.subr.bf16.mxu0 0
        %1956 = vmatpush1.bf16.xpose.msra.mxu0 0
        %1957 = vmatprep.subr.bf16.mxu0 0
        %1958 = vmatpush1.bf16.xpose.msra.mxu0 0
        %1959 = vmatprep.subr.bf16.mxu0 0
        %1960 = vmatpush1.bf16.xpose.msra.mxu0 0
        %1961 = vmatprep.subr.bf16.mxu0 0
        %1962 = vmatpush1.bf16.xpose.msra.mxu0 0
        %1963 = vmatprep.subr.bf16.mxu0 0
        %1964 = vmatpush1.bf16.xpose.msra.mxu0 0
        %1965 = vmatprep.subr.bf16.mxu0 0
        %1966 = vmatpush1.bf16.xpose.msra.mxu0 0
        %1967 = vmatprep.subr.bf16.mxu0 0
        %1968 = vmatpush1.bf16.xpose.msra.mxu0 0
        %1969 = vmatprep.subr.bf16.mxu0 0
        %1970 = vmatpush1.bf16.xpose.msra.mxu0 0
        %1971 = vmatprep.subr.bf16.mxu0 0
        %1972 = vmatpush1.bf16.xpose.msra.mxu0 0
        %1973 = vmatprep.subr.bf16.mxu0 0
        %1974 = vmatpush1.bf16.xpose.msra.mxu0 0
        %1975 = vmatprep.subr.bf16.mxu0 0
        %1976 = vmatpush1.bf16.xpose.msra.mxu0 0
        %1977 = vmatprep.subr.bf16.mxu0 0
        %1978 = vmatpush1.bf16.xpose.msra.mxu0 0
        %1979 = vmatprep.mubr.bf16.mxu0 0
        %1980 = vmatmul.mubr.bf16.gmra.mrb[0].mxu0 %v1942
        %v1981 = vpop.f32.mrb[0].mxu0
        %v1982 = vadd.f32 0.0, %v1981
        %v1983 = vpop.f32.mrb[0].mxu0
        %v1984 = vpop.f32.mrb[0].mxu0
        %v1985 = vpop.f32.mrb[0].mxu0
        %1986 = vdwg.mxu0
        %v1988 = vsel %vm1894, %v1888, 0
        %v1991 = vsel %vm1894, %v1892, 0
        %1993 = vmatprep.subr.bf16.mxu0 0
        %1994 = vmatpush1.bf16.xpose.msra.mxu0 %v1991
        %1995 = vmatprep.subr.bf16.mxu0 0
        %1996 = vmatpush1.bf16.xpose.msra.mxu0 0
        %1997 = vmatprep.subr.bf16.mxu0 0
        %1998 = vmatpush1.bf16.xpose.msra.mxu0 0
        %1999 = vmatprep.subr.bf16.mxu0 0
        %2000 = vmatpush1.bf16.xpose.msra.mxu0 0
        %2001 = vmatprep.subr.bf16.mxu0 0
        %2002 = vmatpush1.bf16.xpose.msra.mxu0 0
        %2003 = vmatprep.subr.bf16.mxu0 0
        %2004 = vmatpush1.bf16.xpose.msra.mxu0 0
        %2005 = vmatprep.subr.bf16.mxu0 0
        %2006 = vmatpush1.bf16.xpose.msra.mxu0 0
        %2007 = vmatprep.subr.bf16.mxu0 0
        %2008 = vmatpush1.bf16.xpose.msra.mxu0 0
        %2009 = vmatprep.subr.bf16.mxu0 0
        %2010 = vmatpush1.bf16.xpose.msra.mxu0 0
        %2011 = vmatprep.subr.bf16.mxu0 0
        %2012 = vmatpush1.bf16.xpose.msra.mxu0 0
        %2013 = vmatprep.subr.bf16.mxu0 0
        %2014 = vmatpush1.bf16.xpose.msra.mxu0 0
        %2015 = vmatprep.subr.bf16.mxu0 0
        %2016 = vmatpush1.bf16.xpose.msra.mxu0 0
        %2017 = vmatprep.subr.bf16.mxu0 0
        %2018 = vmatpush1.bf16.xpose.msra.mxu0 0
        %2019 = vmatprep.subr.bf16.mxu0 0
        %2020 = vmatpush1.bf16.xpose.msra.mxu0 0
        %2021 = vmatprep.subr.bf16.mxu0 0
        %2022 = vmatpush1.bf16.xpose.msra.mxu0 0
        %2023 = vmatprep.subr.bf16.mxu0 0
        %2024 = vmatpush1.bf16.xpose.msra.mxu0 0
        %2025 = vmatprep.mubr.bf16.mxu0 0
        %2026 = vmatmul.mubr.bf16.gmra.mrb[0].mxu0 %v1988
        %v2027 = vpop.f32.mrb[0].mxu0
        %v2028 = vadd.f32 0.0, %v2027
        %v2029 = vpop.f32.mrb[0].mxu0
        %v2030 = vpop.f32.mrb[0].mxu0
        %v2031 = vpop.f32.mrb[0].mxu0
        %2032 = vdwg.mxu0
        %v2034 = vsel %vm1894, %v1889, 0
        %v2037 = vsel %vm1894, %v1893, 0
        %2039 = vmatprep.subr.bf16.mxu0 0
        %2040 = vmatpush1.bf16.xpose.msra.mxu0 %v2037
        %2041 = vmatprep.subr.bf16.mxu0 0
        %2042 = vmatpush1.bf16.xpose.msra.mxu0 0
        %2043 = vmatprep.subr.bf16.mxu0 0
        %2044 = vmatpush1.bf16.xpose.msra.mxu0 0
        %2045 = vmatprep.subr.bf16.mxu0 0
        %2046 = vmatpush1.bf16.xpose.msra.mxu0 0
        %2047 = vmatprep.subr.bf16.mxu0 0
        %2048 = vmatpush1.bf16.xpose.msra.mxu0 0
        %2049 = vmatprep.subr.bf16.mxu0 0
        %2050 = vmatpush1.bf16.xpose.msra.mxu0 0
        %2051 = vmatprep.subr.bf16.mxu0 0
        %2052 = vmatpush1.bf16.xpose.msra.mxu0 0
        %2053 = vmatprep.subr.bf16.mxu0 0
        %2054 = vmatpush1.bf16.xpose.msra.mxu0 0
        %2055 = vmatprep.subr.bf16.mxu0 0
        %2056 = vmatpush1.bf16.xpose.msra.mxu0 0
        %2057 = vmatprep.subr.bf16.mxu0 0
        %2058 = vmatpush1.bf16.xpose.msra.mxu0 0
        %2059 = vmatprep.subr.bf16.mxu0 0
        %2060 = vmatpush1.bf16.xpose.msra.mxu0 0
        %2061 = vmatprep.subr.bf16.mxu0 0
        %2062 = vmatpush1.bf16.xpose.msra.mxu0 0
        %2063 = vmatprep.subr.bf16.mxu0 0
        %2064 = vmatpush1.bf16.xpose.msra.mxu0 0
        %2065 = vmatprep.subr.bf16.mxu0 0
        %2066 = vmatpush1.bf16.xpose.msra.mxu0 0
        %2067 = vmatprep.subr.bf16.mxu0 0
        %2068 = vmatpush1.bf16.xpose.msra.mxu0 0
        %2069 = vmatprep.subr.bf16.mxu0 0
        %2070 = vmatpush1.bf16.xpose.msra.mxu0 0
        %2071 = vmatprep.mubr.bf16.mxu0 0
        %2072 = vmatmul.mubr.bf16.gmra.mrb[0].mxu0 %v2034
        %v2073 = vpop.f32.mrb[0].mxu0
        %v2074 = vadd.f32 0.0, %v2073
        %v2075 = vpop.f32.mrb[0].mxu0
        %v2076 = vpop.f32.mrb[0].mxu0
        %v2077 = vpop.f32.mrb[0].mxu0
        %2078 = vdwg.mxu0
        %v2079 = vmul.f32 %v1936, 0.35355338
        %v2080 = vmul.f32 %v1982, 0.35355338
        %v2081 = vmul.f32 %v2028, 0.35355338
        %v2082 = vmul.f32 %v2074, 0.35355338
        %v2083 = vadd.f32 %v2079, %v1124
        %v2084 = vadd.f32 %v2080, %v1124
        %v2085 = vadd.f32 %v2081, %v1124
        %v2086 = vadd.f32 %v2082, %v1124
        %v2087 = vsel %vm1894, %v2083, -inf
        %2088 = vmax.xlane.f32.xlu0 %v2087
        %v2089 = vpop.xlane.xlu0 %2088
        %v2090 = vsel %vm1894, %v2084, -inf
        %2091 = vmax.xlane.f32.xlu0 %v2090
        %v2092 = vpop.xlane.xlu0 %2091
        %v2093 = vsel %vm1894, %v2085, -inf
        %2094 = vmax.xlane.f32.xlu0 %v2093
        %v2095 = vpop.xlane.xlu0 %2094
        %v2096 = vsel %vm1894, %v2086, -inf
        %2097 = vmax.xlane.f32.xlu0 %v2096
        %v2098 = vpop.xlane.xlu0 %2097
        %v2099 = vsub.f32 %v2083, %v2089
        %v2100 = vsub.f32 %v2084, %v2092
        %v2101 = vsub.f32 %v2085, %v2095
        %v2102 = vsub.f32 %v2086, %v2098
        %v2103 = vmul.f32 %v2099, 1.442695
        %v2104 = vpow.pop %v2103
        %v2105 = vmul.f32 %v2100, 1.442695
        %v2106 = vpow.pop %v2105
        %v2107 = vmul.f32 %v2101, 1.442695
        %v2108 = vpow.pop %v2107
        %v2109 = vmul.f32 %v2102, 1.442695
        %v2110 = vpow.pop %v2109
        %v2111 = vsel %vm1894, %v2104, 0.0
        %2112 = vadd.xlane.f32.xlu0 %v2111
        %v2113 = vpop.xlane.xlu0 %2112
        %v2114 = vsel %vm1894, %v2106, 0.0
        %2115 = vadd.xlane.f32.xlu0 %v2114
        %v2116 = vpop.xlane.xlu0 %2115
        %v2117 = vsel %vm1894, %v2108, 0.0
        %2118 = vadd.xlane.f32.xlu0 %v2117
        %v2119 = vpop.xlane.xlu0 %2118
        %v2120 = vsel %vm1894, %v2110, 0.0
        %2121 = vadd.xlane.f32.xlu0 %v2120
        %v2122 = vpop.xlane.xlu0 %2121
        %v2123 = vrcp.pop %v2113
        %v2124 = vrcp.pop %v2116
        %v2125 = vrcp.pop %v2119
        %v2126 = vrcp.pop %v2122
        %v2127 = vmul.f32 %v2104, %v2123
        %v2128 = vmul.f32 %v2106, %v2124
        %v2129 = vmul.f32 %v2108, %v2125
        %v2130 = vmul.f32 %v2110, %v2126
        %v2131 = vpack.c.bf16 %v2127, %v2127
        %v2132 = vpack.c.bf16 %v2128, %v2128
        %v2133 = vpack.c.bf16 %v2129, %v2129
        %v2134 = vpack.c.bf16 %v2130, %v2130
        %v2135 = vpack.c.bf16 %v1725, %v1725
        %v2136 = vpack.c.bf16 %v1777, %v1777
        %v2137 = vpack.c.bf16 %v1829, %v1829
        %v2138 = vpack.c.bf16 %v1881, %v1881
        %v2140 = vsel %vm1894, %v2131, 0
        %vm2142 = vcmask 1043456
        %v2144 = vsel %vm2142, %v2135, 0
        %2146 = vmatprep.subr.bf16.mxu0 0
        %2147 = vmatpush1.bf16.msra.mxu0 %v2144
        %2148 = vmatprep.subr.bf16.mxu0 0
        %2149 = vmatpush1.bf16.msra.mxu0 0
        %2150 = vmatprep.subr.bf16.mxu0 0
        %2151 = vmatpush1.bf16.msra.mxu0 0
        %2152 = vmatprep.subr.bf16.mxu0 0
        %2153 = vmatpush1.bf16.msra.mxu0 0
        %2154 = vmatprep.subr.bf16.mxu0 0
        %2155 = vmatpush1.bf16.msra.mxu0 0
        %2156 = vmatprep.subr.bf16.mxu0 0
        %2157 = vmatpush1.bf16.msra.mxu0 0
        %2158 = vmatprep.subr.bf16.mxu0 0
        %2159 = vmatpush1.bf16.msra.mxu0 0
        %2160 = vmatprep.subr.bf16.mxu0 0
        %2161 = vmatpush1.bf16.msra.mxu0 0
        %2162 = vmatprep.subr.bf16.mxu0 0
        %2163 = vmatpush1.bf16.msra.mxu0 0
        %2164 = vmatprep.subr.bf16.mxu0 0
        %2165 = vmatpush1.bf16.msra.mxu0 0
        %2166 = vmatprep.subr.bf16.mxu0 0
        %2167 = vmatpush1.bf16.msra.mxu0 0
        %2168 = vmatprep.subr.bf16.mxu0 0
        %2169 = vmatpush1.bf16.msra.mxu0 0
        %2170 = vmatprep.subr.bf16.mxu0 0
        %2171 = vmatpush1.bf16.msra.mxu0 0
        %2172 = vmatprep.subr.bf16.mxu0 0
        %2173 = vmatpush1.bf16.msra.mxu0 0
        %2174 = vmatprep.subr.bf16.mxu0 0
        %2175 = vmatpush1.bf16.msra.mxu0 0
        %2176 = vmatprep.subr.bf16.mxu0 0
        %2177 = vmatpush1.bf16.msra.mxu0 0
        %2178 = vmatprep.mubr.bf16.mxu0 0
        %2179 = vmatmul.mubr.bf16.gmra.mrb[0].mxu0 %v2140
        %v2180 = vpop.f32.mrb[0].mxu0
        %v2181 = vadd.f32 0.0, %v2180
        %v2182 = vpop.f32.mrb[0].mxu0
        %v2183 = vpop.f32.mrb[0].mxu0
        %v2184 = vpop.f32.mrb[0].mxu0
        %2185 = vdwg.mxu0
        %v2187 = vsel %vm1894, %v2132, 0
        %v2190 = vsel %vm2142, %v2136, 0
        %2192 = vmatprep.subr.bf16.mxu0 0
        %2193 = vmatpush1.bf16.msra.mxu0 %v2190
        %2194 = vmatprep.subr.bf16.mxu0 0
        %2195 = vmatpush1.bf16.msra.mxu0 0
        %2196 = vmatprep.subr.bf16.mxu0 0
        %2197 = vmatpush1.bf16.msra.mxu0 0
        %2198 = vmatprep.subr.bf16.mxu0 0
        %2199 = vmatpush1.bf16.msra.mxu0 0
        %2200 = vmatprep.subr.bf16.mxu0 0
        %2201 = vmatpush1.bf16.msra.mxu0 0
        %2202 = vmatprep.subr.bf16.mxu0 0
        %2203 = vmatpush1.bf16.msra.mxu0 0
        %2204 = vmatprep.subr.bf16.mxu0 0
        %2205 = vmatpush1.bf16.msra.mxu0 0
        %2206 = vmatprep.subr.bf16.mxu0 0
        %2207 = vmatpush1.bf16.msra.mxu0 0
        %2208 = vmatprep.subr.bf16.mxu0 0
        %2209 = vmatpush1.bf16.msra.mxu0 0
        %2210 = vmatprep.subr.bf16.mxu0 0
        %2211 = vmatpush1.bf16.msra.mxu0 0
        %2212 = vmatprep.subr.bf16.mxu0 0
        %2213 = vmatpush1.bf16.msra.mxu0 0
        %2214 = vmatprep.subr.bf16.mxu0 0
        %2215 = vmatpush1.bf16.msra.mxu0 0
        %2216 = vmatprep.subr.bf16.mxu0 0
        %2217 = vmatpush1.bf16.msra.mxu0 0
        %2218 = vmatprep.subr.bf16.mxu0 0
        %2219 = vmatpush1.bf16.msra.mxu0 0
        %2220 = vmatprep.subr.bf16.mxu0 0
        %2221 = vmatpush1.bf16.msra.mxu0 0
        %2222 = vmatprep.subr.bf16.mxu0 0
        %2223 = vmatpush1.bf16.msra.mxu0 0
        %2224 = vmatprep.mubr.bf16.mxu0 0
        %2225 = vmatmul.mubr.bf16.gmra.mrb[0].mxu0 %v2187
        %v2226 = vpop.f32.mrb[0].mxu0
        %v2227 = vadd.f32 0.0, %v2226
        %v2228 = vpop.f32.mrb[0].mxu0
        %v2229 = vpop.f32.mrb[0].mxu0
        %v2230 = vpop.f32.mrb[0].mxu0
        %2231 = vdwg.mxu0
        %v2233 = vsel %vm1894, %v2133, 0
        %v2236 = vsel %vm2142, %v2137, 0
        %2238 = vmatprep.subr.bf16.mxu0 0
        %2239 = vmatpush1.bf16.msra.mxu0 %v2236
        %2240 = vmatprep.subr.bf16.mxu0 0
        %2241 = vmatpush1.bf16.msra.mxu0 0
        %2242 = vmatprep.subr.bf16.mxu0 0
        %2243 = vmatpush1.bf16.msra.mxu0 0
        %2244 = vmatprep.subr.bf16.mxu0 0
        %2245 = vmatpush1.bf16.msra.mxu0 0
        %2246 = vmatprep.subr.bf16.mxu0 0
        %2247 = vmatpush1.bf16.msra.mxu0 0
        %2248 = vmatprep.subr.bf16.mxu0 0
        %2249 = vmatpush1.bf16.msra.mxu0 0
        %2250 = vmatprep.subr.bf16.mxu0 0
        %2251 = vmatpush1.bf16.msra.mxu0 0
        %2252 = vmatprep.subr.bf16.mxu0 0
        %2253 = vmatpush1.bf16.msra.mxu0 0
        %2254 = vmatprep.subr.bf16.mxu0 0
        %2255 = vmatpush1.bf16.msra.mxu0 0
        %2256 = vmatprep.subr.bf16.mxu0 0
        %2257 = vmatpush1.bf16.msra.mxu0 0
        %2258 = vmatprep.subr.bf16.mxu0 0
        %2259 = vmatpush1.bf16.msra.mxu0 0
        %2260 = vmatprep.subr.bf16.mxu0 0
        %2261 = vmatpush1.bf16.msra.mxu0 0
        %2262 = vmatprep.subr.bf16.mxu0 0
        %2263 = vmatpush1.bf16.msra.mxu0 0
        %2264 = vmatprep.subr.bf16.mxu0 0
        %2265 = vmatpush1.bf16.msra.mxu0 0
        %2266 = vmatprep.subr.bf16.mxu0 0
        %2267 = vmatpush1.bf16.msra.mxu0 0
        %2268 = vmatprep.subr.bf16.mxu0 0
        %2269 = vmatpush1.bf16.msra.mxu0 0
        %2270 = vmatprep.mubr.bf16.mxu0 0
        %2271 = vmatmul.mubr.bf16.gmra.mrb[0].mxu0 %v2233
        %v2272 = vpop.f32.mrb[0].mxu0
        %v2273 = vadd.f32 0.0, %v2272
        %v2274 = vpop.f32.mrb[0].mxu0
        %v2275 = vpop.f32.mrb[0].mxu0
        %v2276 = vpop.f32.mrb[0].mxu0
        %2277 = vdwg.mxu0
        %v2279 = vsel %vm1894, %v2134, 0
        %v2282 = vsel %vm2142, %v2138, 0
        %2284 = vmatprep.subr.bf16.mxu0 0
        %2285 = vmatpush1.bf16.msra.mxu0 %v2282
        %2286 = vmatprep.subr.bf16.mxu0 0
        %2287 = vmatpush1.bf16.msra.mxu0 0
        %2288 = vmatprep.subr.bf16.mxu0 0
        %2289 = vmatpush1.bf16.msra.mxu0 0
        %2290 = vmatprep.subr.bf16.mxu0 0
        %2291 = vmatpush1.bf16.msra.mxu0 0
        %2292 = vmatprep.subr.bf16.mxu0 0
        %2293 = vmatpush1.bf16.msra.mxu0 0
        %2294 = vmatprep.subr.bf16.mxu0 0
        %2295 = vmatpush1.bf16.msra.mxu0 0
        %2296 = vmatprep.subr.bf16.mxu0 0
        %2297 = vmatpush1.bf16.msra.mxu0 0
        %2298 = vmatprep.subr.bf16.mxu0 0
        %2299 = vmatpush1.bf16.msra.mxu0 0
        %2300 = vmatprep.subr.bf16.mxu0 0
        %2301 = vmatpush1.bf16.msra.mxu0 0
        %2302 = vmatprep.subr.bf16.mxu0 0
        %2303 = vmatpush1.bf16.msra.mxu0 0
        %2304 = vmatprep.subr.bf16.mxu0 0
        %2305 = vmatpush1.bf16.msra.mxu0 0
        %2306 = vmatprep.subr.bf16.mxu0 0
        %2307 = vmatpush1.bf16.msra.mxu0 0
        %2308 = vmatprep.subr.bf16.mxu0 0
        %2309 = vmatpush1.bf16.msra.mxu0 0
        %2310 = vmatprep.subr.bf16.mxu0 0
        %2311 = vmatpush1.bf16.msra.mxu0 0
        %2312 = vmatprep.subr.bf16.mxu0 0
        %2313 = vmatpush1.bf16.msra.mxu0 0
        %2314 = vmatprep.subr.bf16.mxu0 0
        %2315 = vmatpush1.bf16.msra.mxu0 0
        %2316 = vmatprep.mubr.bf16.mxu0 0
        %2317 = vmatmul.mubr.bf16.gmra.mrb[0].mxu0 %v2279
        %v2318 = vpop.f32.mrb[0].mxu0
        %v2319 = vadd.f32 0.0, %v2318
        %v2320 = vpop.f32.mrb[0].mxu0
        %v2321 = vpop.f32.mrb[0].mxu0
        %v2322 = vpop.f32.mrb[0].mxu0
        %2323 = vdwg.mxu0
        %v2324 = vld [vmem:[%s17] sm:$0xf]
        %v2325 = vld [vmem:[%s17 + $0x4] sm:$0xf]
        %v2326 = vld [vmem:[%s17 + $0x8] sm:$0xf]
        %v2327 = vld [vmem:[%s17 + $0xc] sm:$0xf]
        %v2328 = vpack.c.bf16 %v2181, %v2181
        %v2329 = vpack.c.bf16 %v2227, %v2227
        %v2330 = vpack.c.bf16 %v2273, %v2273
        %v2331 = vpack.c.bf16 %v2319, %v2319
        %v2333 = vsel %vm1894, %v2328, 0
        %v2336 = vsel %vm2142, %v2324, 0
        %2338 = vmatprep.subr.bf16.mxu0 0
        %2339 = vmatpush1.bf16.msra.mxu0 %v2336
        %2340 = vmatprep.subr.bf16.mxu0 0
        %2341 = vmatpush1.bf16.msra.mxu0 0
        %2342 = vmatprep.subr.bf16.mxu0 0
        %2343 = vmatpush1.bf16.msra.mxu0 0
        %2344 = vmatprep.subr.bf16.mxu0 0
        %2345 = vmatpush1.bf16.msra.mxu0 0
        %2346 = vmatprep.subr.bf16.mxu0 0
        %2347 = vmatpush1.bf16.msra.mxu0 0
        %2348 = vmatprep.subr.bf16.mxu0 0
        %2349 = vmatpush1.bf16.msra.mxu0 0
        %2350 = vmatprep.subr.bf16.mxu0 0
        %2351 = vmatpush1.bf16.msra.mxu0 0
        %2352 = vmatprep.subr.bf16.mxu0 0
        %2353 = vmatpush1.bf16.msra.mxu0 0
        %2354 = vmatprep.subr.bf16.mxu0 0
        %2355 = vmatpush1.bf16.msra.mxu0 0
        %2356 = vmatprep.subr.bf16.mxu0 0
        %2357 = vmatpush1.bf16.msra.mxu0 0
        %2358 = vmatprep.subr.bf16.mxu0 0
        %2359 = vmatpush1.bf16.msra.mxu0 0
        %2360 = vmatprep.subr.bf16.mxu0 0
        %2361 = vmatpush1.bf16.msra.mxu0 0
        %2362 = vmatprep.subr.bf16.mxu0 0
        %2363 = vmatpush1.bf16.msra.mxu0 0
        %2364 = vmatprep.subr.bf16.mxu0 0
        %2365 = vmatpush1.bf16.msra.mxu0 0
        %2366 = vmatprep.subr.bf16.mxu0 0
        %2367 = vmatpush1.bf16.msra.mxu0 0
        %2368 = vmatprep.subr.bf16.mxu0 0
        %2369 = vmatpush1.bf16.msra.mxu0 0
        %2370 = vmatprep.mubr.bf16.mxu0 0
        %2371 = vmatmul.mubr.bf16.gmra.mrb[0].mxu0 %v2333
        %v2372 = vpop.f32.mrb[0].mxu0
        %v2373 = vadd.f32 0.0, %v2372
        %v2374 = vpop.f32.mrb[0].mxu0
        %v2375 = vpop.f32.mrb[0].mxu0
        %v2376 = vpop.f32.mrb[0].mxu0
        %2377 = vdwg.mxu0
        %v2379 = vsel %vm1894, %v2329, 0
        %v2382 = vsel %vm2142, %v2325, 0
        %2384 = vmatprep.subr.bf16.mxu0 0
        %2385 = vmatpush1.bf16.msra.mxu0 %v2382
        %2386 = vmatprep.subr.bf16.mxu0 0
        %2387 = vmatpush1.bf16.msra.mxu0 0
        %2388 = vmatprep.subr.bf16.mxu0 0
        %2389 = vmatpush1.bf16.msra.mxu0 0
        %2390 = vmatprep.subr.bf16.mxu0 0
        %2391 = vmatpush1.bf16.msra.mxu0 0
        %2392 = vmatprep.subr.bf16.mxu0 0
        %2393 = vmatpush1.bf16.msra.mxu0 0
        %2394 = vmatprep.subr.bf16.mxu0 0
        %2395 = vmatpush1.bf16.msra.mxu0 0
        %2396 = vmatprep.subr.bf16.mxu0 0
        %2397 = vmatpush1.bf16.msra.mxu0 0
        %2398 = vmatprep.subr.bf16.mxu0 0
        %2399 = vmatpush1.bf16.msra.mxu0 0
        %2400 = vmatprep.subr.bf16.mxu0 0
        %2401 = vmatpush1.bf16.msra.mxu0 0
        %2402 = vmatprep.subr.bf16.mxu0 0
        %2403 = vmatpush1.bf16.msra.mxu0 0
        %2404 = vmatprep.subr.bf16.mxu0 0
        %2405 = vmatpush1.bf16.msra.mxu0 0
        %2406 = vmatprep.subr.bf16.mxu0 0
        %2407 = vmatpush1.bf16.msra.mxu0 0
        %2408 = vmatprep.subr.bf16.mxu0 0
        %2409 = vmatpush1.bf16.msra.mxu0 0
        %2410 = vmatprep.subr.bf16.mxu0 0
        %2411 = vmatpush1.bf16.msra.mxu0 0
        %2412 = vmatprep.subr.bf16.mxu0 0
        %2413 = vmatpush1.bf16.msra.mxu0 0
        %2414 = vmatprep.subr.bf16.mxu0 0
        %2415 = vmatpush1.bf16.msra.mxu0 0
        %2416 = vmatprep.mubr.bf16.mxu0 0
        %2417 = vmatmul.mubr.bf16.gmra.mrb[0].mxu0 %v2379
        %v2418 = vpop.f32.mrb[0].mxu0
        %v2419 = vadd.f32 0.0, %v2418
        %v2420 = vpop.f32.mrb[0].mxu0
        %v2421 = vpop.f32.mrb[0].mxu0
        %v2422 = vpop.f32.mrb[0].mxu0
        %2423 = vdwg.mxu0
        %v2425 = vsel %vm1894, %v2330, 0
        %v2428 = vsel %vm2142, %v2326, 0
        %2430 = vmatprep.subr.bf16.mxu0 0
        %2431 = vmatpush1.bf16.msra.mxu0 %v2428
        %2432 = vmatprep.subr.bf16.mxu0 0
        %2433 = vmatpush1.bf16.msra.mxu0 0
        %2434 = vmatprep.subr.bf16.mxu0 0
        %2435 = vmatpush1.bf16.msra.mxu0 0
        %2436 = vmatprep.subr.bf16.mxu0 0
        %2437 = vmatpush1.bf16.msra.mxu0 0
        %2438 = vmatprep.subr.bf16.mxu0 0
        %2439 = vmatpush1.bf16.msra.mxu0 0
        %2440 = vmatprep.subr.bf16.mxu0 0
        %2441 = vmatpush1.bf16.msra.mxu0 0
        %2442 = vmatprep.subr.bf16.mxu0 0
        %2443 = vmatpush1.bf16.msra.mxu0 0
        %2444 = vmatprep.subr.bf16.mxu0 0
        %2445 = vmatpush1.bf16.msra.mxu0 0
        %2446 = vmatprep.subr.bf16.mxu0 0
        %2447 = vmatpush1.bf16.msra.mxu0 0
        %2448 = vmatprep.subr.bf16.mxu0 0
        %2449 = vmatpush1.bf16.msra.mxu0 0
        %2450 = vmatprep.subr.bf16.mxu0 0
        %2451 = vmatpush1.bf16.msra.mxu0 0
        %2452 = vmatprep.subr.bf16.mxu0 0
        %2453 = vmatpush1.bf16.msra.mxu0 0
        %2454 = vmatprep.subr.bf16.mxu0 0
        %2455 = vmatpush1.bf16.msra.mxu0 0
        %2456 = vmatprep.subr.bf16.mxu0 0
        %2457 = vmatpush1.bf16.msra.mxu0 0
        %2458 = vmatprep.subr.bf16.mxu0 0
        %2459 = vmatpush1.bf16.msra.mxu0 0
        %2460 = vmatprep.subr.bf16.mxu0 0
        %2461 = vmatpush1.bf16.msra.mxu0 0
        %2462 = vmatprep.mubr.bf16.mxu0 0
        %2463 = vmatmul.mubr.bf16.gmra.mrb[0].mxu0 %v2425
        %v2464 = vpop.f32.mrb[0].mxu0
        %v2465 = vadd.f32 0.0, %v2464
        %v2466 = vpop.f32.mrb[0].mxu0
        %v2467 = vpop.f32.mrb[0].mxu0
        %v2468 = vpop.f32.mrb[0].mxu0
        %2469 = vdwg.mxu0
        %v2471 = vsel %vm1894, %v2331, 0
        %v2474 = vsel %vm2142, %v2327, 0
        %2476 = vmatprep.subr.bf16.mxu0 0
        %2477 = vmatpush1.bf16.msra.mxu0 %v2474
        %2478 = vmatprep.subr.bf16.mxu0 0
        %2479 = vmatpush1.bf16.msra.mxu0 0
        %2480 = vmatprep.subr.bf16.mxu0 0
        %2481 = vmatpush1.bf16.msra.mxu0 0
        %2482 = vmatprep.subr.bf16.mxu0 0
        %2483 = vmatpush1.bf16.msra.mxu0 0
        %2484 = vmatprep.subr.bf16.mxu0 0
        %2485 = vmatpush1.bf16.msra.mxu0 0
        %2486 = vmatprep.subr.bf16.mxu0 0
        %2487 = vmatpush1.bf16.msra.mxu0 0
        %2488 = vmatprep.subr.bf16.mxu0 0
        %2489 = vmatpush1.bf16.msra.mxu0 0
        %2490 = vmatprep.subr.bf16.mxu0 0
        %2491 = vmatpush1.bf16.msra.mxu0 0
        %2492 = vmatprep.subr.bf16.mxu0 0
        %2493 = vmatpush1.bf16.msra.mxu0 0
        %2494 = vmatprep.subr.bf16.mxu0 0
        %2495 = vmatpush1.bf16.msra.mxu0 0
        %2496 = vmatprep.subr.bf16.mxu0 0
        %2497 = vmatpush1.bf16.msra.mxu0 0
        %2498 = vmatprep.subr.bf16.mxu0 0
        %2499 = vmatpush1.bf16.msra.mxu0 0
        %2500 = vmatprep.subr.bf16.mxu0 0
        %2501 = vmatpush1.bf16.msra.mxu0 0
        %2502 = vmatprep.subr.bf16.mxu0 0
        %2503 = vmatpush1.bf16.msra.mxu0 0
        %2504 = vmatprep.subr.bf16.mxu0 0
        %2505 = vmatpush1.bf16.msra.mxu0 0
        %2506 = vmatprep.subr.bf16.mxu0 0
        %2507 = vmatpush1.bf16.msra.mxu0 0
        %2508 = vmatprep.mubr.bf16.mxu0 0
        %2509 = vmatmul.mubr.bf16.gmra.mrb[0].mxu0 %v2471
        %v2510 = vpop.f32.mrb[0].mxu0
        %v2511 = vadd.f32 0.0, %v2510
        %v2512 = vpop.f32.mrb[0].mxu0
        %v2513 = vpop.f32.mrb[0].mxu0
        %v2514 = vpop.f32.mrb[0].mxu0
        %2515 = vdwg.mxu0
        %v2516 = vsel %vm1182, %v2373, 0.0
        %v2517 = vsel %vm1182, %v2419, 0.0
        %v2518 = vadd.f32 %v2516, %v2517
        %v2519 = vsel %vm1182, %v2465, 0.0
        %v2520 = vadd.f32 %v2518, %v2519
        %v2521 = vsel %vm1182, %v2511, 0.0
        %v2522 = vadd.f32 %v2520, %v2521
        %v2523 = vld [vmem:[%s19] sm:$0x1]
        %v2525 = vlaneseq
        %v2526 = vshrl.u32 %v2525, 7
        %v2527 = vsub.s32 0, %v2526
        %v2528 = vrot.slane %v2523, %v2527
        %v2530 = vadd.f32 %v2522, %v2528
        %v2531 = vadd.f32 %v1109, %v2530
        %v2532 = vld [vmem:[%s55] sm:$0x1]
        %v2533 = vld [vmem:[%s57] sm:$0x1]
        %v2534 = vsel %vm1182, %v2531, 0.0
        %2535 = vadd.xlane.f32.xlu0 %v2534
        %v2536 = vpop.xlane.xlu0 %2535
        %v2537 = vrcp.pop 32.0
        %v2538 = vmul.f32 %v2536, %v2537
        %v2539 = vsub.f32 %v2531, %v2538
        %v2540 = vmul.f32 %v2539, %v2539
        %v2541 = vsel %vm1182, %v2540, 0.0
        %2542 = vadd.xlane.f32.xlu0 %v2541
        %v2543 = vpop.xlane.xlu0 %2542
        %v2544 = vmul.f32 %v2543, %v2537
        %v2545 = vadd.f32 %v2544, 1e-05
        %v2546 = vrsqrt.pop %v2545
        %v2547 = vmul.f32 %v2539, %v2546
        %v2549 = vlaneseq
        %v2550 = vshrl.u32 %v2549, 7
        %v2551 = vsub.s32 0, %v2550
        %v2552 = vrot.slane %v2532, %v2551
        %v2554 = vmul.f32 %v2547, %v2552
        %v2556 = vlaneseq
        %v2557 = vshrl.u32 %v2556, 7
        %v2558 = vsub.s32 0, %v2557
        %v2559 = vrot.slane %v2533, %v2558
        %v2561 = vadd.f32 %v2554, %v2559
        %v2562 = vld [vmem:[%s27] sm:$0xf]
        %v2563 = vld [vmem:[%s27 + $0x4] sm:$0xf]
        %v2564 = vld [vmem:[%s27 + $0x8] sm:$0xf]
        %v2565 = vld [vmem:[%s27 + $0xc] sm:$0xf]
        %v2566 = vpack.c.bf16 %v2561, %v2561
        %v2567 = vld [vmem:[%s29] sm:$0x1]
        %v2569 = vlaneseq
        %v2570 = vshrl.u32 %v2569, 7
        %v2571 = vsub.s32 0, %v2570
        %v2572 = vrot.slane %v2567, %v2571
        %v2578 = vunpack.c.l.b16 %v2562
        %v2579 = vunpack.c.l.b16 %v2563
        %v2580 = vunpack.c.l.b16 %v2564
        %v2581 = vunpack.c.l.b16 %v2565
        %v2582 = vpack.c.b16 %v2579, %v2578
        %v2583 = vpack.c.b16 %v2581, %v2580
        %v2587 = vsel %vm1182, %v2566, 0
        %2589 = vmatprep.subr.bf16.mxu0 0
        %2590 = vmatpush1.bf16.msra.mxu0 %v2582
        %2591 = vmatprep.subr.bf16.mxu0 0
        %2592 = vmatpush1.bf16.msra.mxu0 %v2583
        %2593 = vmatprep.subr.bf16.mxu0 0
        %2594 = vmatpush1.bf16.msra.mxu0 0
        %2595 = vmatprep.subr.bf16.mxu0 0
        %2596 = vmatpush1.bf16.msra.mxu0 0
        %2597 = vmatprep.subr.bf16.mxu0 0
        %2598 = vmatpush1.bf16.msra.mxu0 0
        %2599 = vmatprep.subr.bf16.mxu0 0
        %2600 = vmatpush1.bf16.msra.mxu0 0
        %2601 = vmatprep.subr.bf16.mxu0 0
        %2602 = vmatpush1.bf16.msra.mxu0 0
        %2603 = vmatprep.subr.bf16.mxu0 0
        %2604 = vmatpush1.bf16.msra.mxu0 0
        %2605 = vmatprep.subr.bf16.mxu0 0
        %2606 = vmatpush1.bf16.msra.mxu0 0
        %2607 = vmatprep.subr.bf16.mxu0 0
        %2608 = vmatpush1.bf16.msra.mxu0 0
        %2609 = vmatprep.subr.bf16.mxu0 0
        %2610 = vmatpush1.bf16.msra.mxu0 0
        %2611 = vmatprep.subr.bf16.mxu0 0
        %2612 = vmatpush1.bf16.msra.mxu0 0
        %2613 = vmatprep.subr.bf16.mxu0 0
        %2614 = vmatpush1.bf16.msra.mxu0 0
        %2615 = vmatprep.subr.bf16.mxu0 0
        %2616 = vmatpush1.bf16.msra.mxu0 0
        %2617 = vmatprep.subr.bf16.mxu0 0
        %2618 = vmatpush1.bf16.msra.mxu0 0
        %2619 = vmatprep.subr.bf16.mxu0 0
        %2620 = vmatpush1.bf16.msra.mxu0 0
        %2621 = vmatprep.mubr.bf16.mxu0 0
        %2622 = vmatmul.mubr.bf16.gmra.mrb[0].mxu0 %v2587
        %v2623 = vpop.f32.mrb[0].mxu0
        %v2624 = vadd.f32 %v2572, %v2623
        %v2625 = vpop.f32.mrb[0].mxu0
        %v2626 = vpop.f32.mrb[0].mxu0
        %v2627 = vpop.f32.mrb[0].mxu0
        %2628 = vdwg.mxu0
        %v2629 = vld [vmem:[%s31] sm:$0xf]
        %v2630 = vld [vmem:[%s31 + $0x4] sm:$0xf]
        %v2631 = vld [vmem:[%s31 + $0x8] sm:$0xf]
        %v2632 = vld [vmem:[%s31 + $0xc] sm:$0xf]
        %v2633 = vld [vmem:[%s33] sm:$0x1]
        %v2635 = vlaneseq
        %v2636 = vshrl.u32 %v2635, 7
        %v2637 = vsub.s32 0, %v2636
        %v2638 = vrot.slane %v2633, %v2637
        %v2644 = vunpack.c.l.b16 %v2629
        %v2645 = vunpack.c.l.b16 %v2630
        %v2646 = vunpack.c.l.b16 %v2631
        %v2647 = vunpack.c.l.b16 %v2632
        %v2648 = vpack.c.b16 %v2645, %v2644
        %v2649 = vpack.c.b16 %v2647, %v2646
        %2652 = vmatprep.subr.bf16.mxu0 0
        %2653 = vmatpush1.bf16.msra.mxu0 %v2648
        %2654 = vmatprep.subr.bf16.mxu0 0
        %2655 = vmatpush1.bf16.msra.mxu0 %v2649
        %2656 = vmatprep.subr.bf16.mxu0 0
        %2657 = vmatpush1.bf16.msra.mxu0 0
        %2658 = vmatprep.subr.bf16.mxu0 0
        %2659 = vmatpush1.bf16.msra.mxu0 0
        %2660 = vmatprep.subr.bf16.mxu0 0
        %2661 = vmatpush1.bf16.msra.mxu0 0
        %2662 = vmatprep.subr.bf16.mxu0 0
        %2663 = vmatpush1.bf16.msra.mxu0 0
        %2664 = vmatprep.subr.bf16.mxu0 0
        %2665 = vmatpush1.bf16.msra.mxu0 0
        %2666 = vmatprep.subr.bf16.mxu0 0
        %2667 = vmatpush1.bf16.msra.mxu0 0
        %2668 = vmatprep.subr.bf16.mxu0 0
        %2669 = vmatpush1.bf16.msra.mxu0 0
        %2670 = vmatprep.subr.bf16.mxu0 0
        %2671 = vmatpush1.bf16.msra.mxu0 0
        %2672 = vmatprep.subr.bf16.mxu0 0
        %2673 = vmatpush1.bf16.msra.mxu0 0
        %2674 = vmatprep.subr.bf16.mxu0 0
        %2675 = vmatpush1.bf16.msra.mxu0 0
        %2676 = vmatprep.subr.bf16.mxu0 0
        %2677 = vmatpush1.bf16.msra.mxu0 0
        %2678 = vmatprep.subr.bf16.mxu0 0
        %2679 = vmatpush1.bf16.msra.mxu0 0
        %2680 = vmatprep.subr.bf16.mxu0 0
        %2681 = vmatpush1.bf16.msra.mxu0 0
        %2682 = vmatprep.subr.bf16.mxu0 0
        %2683 = vmatpush1.bf16.msra.mxu0 0
        %2684 = vmatprep.mubr.bf16.mxu0 0
        %2685 = vmatmul.mubr.bf16.gmra.mrb[0].mxu0 %v2587
        %v2686 = vpop.f32.mrb[0].mxu0
        %v2687 = vadd.f32 %v2638, %v2686
        %v2688 = vpop.f32.mrb[0].mxu0
        %v2689 = vpop.f32.mrb[0].mxu0
        %v2690 = vpop.f32.mrb[0].mxu0
        %2691 = vdwg.mxu0
        %v2692 = vld [vmem:[%s21] sm:$0xf]
        %v2693 = vld [vmem:[%s23] sm:$0xf]
        %v2694 = vld [vmem:[%s23 + $0x4] sm:$0xf]
        %v2695 = vpack.c.bf16 %v2692, %v2692
        %v2696 = vld [vmem:[%s25] sm:$0x1]
        %v2698 = vlaneseq
        %v2699 = vshrl.u32 %v2698, 7
        %v2700 = vsub.s32 0, %v2699
        %v2701 = vrot.slane %v2696, %v2700
        %v2705 = vunpack.c.l.b16 %v2693
        %v2706 = vunpack.c.l.b16 %v2694
        %v2707 = vpack.c.b16 %v2706, %v2705
        %vm2709 = vcmask 130048
        %v2711 = vsel %vm2709, %v2695, 0
        %2713 = vmatprep.subr.bf16.mxu0 0
        %2714 = vmatpush1.bf16.msra.mxu0 %v2707
        %2715 = vmatprep.subr.bf16.mxu0 0
        %2716 = vmatpush1.bf16.msra.mxu0 0
        %2717 = vmatprep.subr.bf16.mxu0 0
        %2718 = vmatpush1.bf16.msra.mxu0 0
        %2719 = vmatprep.subr.bf16.mxu0 0
        %2720 = vmatpush1.bf16.msra.mxu0 0
        %2721 = vmatprep.subr.bf16.mxu0 0
        %2722 = vmatpush1.bf16.msra.mxu0 0
        %2723 = vmatprep.subr.bf16.mxu0 0
        %2724 = vmatpush1.bf16.msra.mxu0 0
        %2725 = vmatprep.subr.bf16.mxu0 0
        %2726 = vmatpush1.bf16.msra.mxu0 0
        %2727 = vmatprep.subr.bf16.mxu0 0
        %2728 = vmatpush1.bf16.msra.mxu0 0
        %2729 = vmatprep.subr.bf16.mxu0 0
        %2730 = vmatpush1.bf16.msra.mxu0 0
        %2731 = vmatprep.subr.bf16.mxu0 0
        %2732 = vmatpush1.bf16.msra.mxu0 0
        %2733 = vmatprep.subr.bf16.mxu0 0
        %2734 = vmatpush1.bf16.msra.mxu0 0
        %2735 = vmatprep.subr.bf16.mxu0 0
        %2736 = vmatpush1.bf16.msra.mxu0 0
        %2737 = vmatprep.subr.bf16.mxu0 0
        %2738 = vmatpush1.bf16.msra.mxu0 0
        %2739 = vmatprep.subr.bf16.mxu0 0
        %2740 = vmatpush1.bf16.msra.mxu0 0
        %2741 = vmatprep.subr.bf16.mxu0 0
        %2742 = vmatpush1.bf16.msra.mxu0 0
        %2743 = vmatprep.subr.bf16.mxu0 0
        %2744 = vmatpush1.bf16.msra.mxu0 0
        %2745 = vmatprep.mubr.bf16.mxu0 0
        %2746 = vmatmul.mubr.bf16.gmra.mrb[0].mxu0 %v2711
        %v2747 = vpop.f32.mrb[0].mxu0
        %v2748 = vadd.f32 %v2701, %v2747
        %v2749 = vpop.f32.mrb[0].mxu0
        %v2750 = vpop.f32.mrb[0].mxu0
        %v2751 = vpop.f32.mrb[0].mxu0
        %2752 = vdwg.mxu0
        %v2753 = vpack.c.bf16 %v2748, %v2748
        %2754 = vxpose.xlu0.b32.start [1/16] %v2624, 128
        %2755 = vxpose.xlu0.b32.cont [2/16] 0.0, 128
        %2756 = vxpose.xlu0.b32.cont [3/16] 0.0, 128
        %2757 = vxpose.xlu0.b32.cont [4/16] 0.0, 128
        %2758 = vxpose.xlu0.b32.cont [5/16] 0.0, 128
        %2759 = vxpose.xlu0.b32.cont [6/16] 0.0, 128
        %2760 = vxpose.xlu0.b32.cont [7/16] 0.0, 128
        %2761 = vxpose.xlu0.b32.cont [8/16] 0.0, 128
        %2762 = vxpose.xlu0.b32.cont [9/16] 0.0, 128
        %2763 = vxpose.xlu0.b32.cont [10/16] 0.0, 128
        %2764 = vxpose.xlu0.b32.cont [11/16] 0.0, 128
        %2765 = vxpose.xlu0.b32.cont [12/16] 0.0, 128
        %2766 = vxpose.xlu0.b32.cont [13/16] 0.0, 128
        %2767 = vxpose.xlu0.b32.cont [14/16] 0.0, 128
        %2768 = vxpose.xlu0.b32.cont [15/16] 0.0, 128
        %2769 = vxpose.xlu0.b32.end [16/16] 0.0, 128
        %v2770 = vpop.trf.xlu0
        %v2771 = vpop.trf.xlu0
        %v2772 = vpop.trf.xlu0
        %v2773 = vpop.trf.xlu0
        %v2774 = vpop.trf.xlu0
        %v2775 = vpop.trf.xlu0
        %v2776 = vpop.trf.xlu0
        %v2777 = vpop.trf.xlu0
        %v2778 = vpop.trf.xlu0
        %v2779 = vpop.trf.xlu0
        %v2780 = vpop.trf.xlu0
        %v2781 = vpop.trf.xlu0
        %v2782 = vpop.trf.xlu0
        %v2783 = vpop.trf.xlu0
        %v2784 = vpop.trf.xlu0
        %v2785 = vpop.trf.xlu0
        %v2786 = vpack.c.bf16 %v2771, %v2770
        %v2788 = vsel %vm2709, %v2753, 0
        %2790 = vmatprep.subr.bf16.mxu0 0
        %2791 = vmatpush1.bf16.msra.mxu0 %v2786
        %2792 = vmatprep.subr.bf16.mxu0 0
        %2793 = vmatpush1.bf16.msra.mxu0 0
        %2794 = vmatprep.subr.bf16.mxu0 0
        %2795 = vmatpush1.bf16.msra.mxu0 0
        %2796 = vmatprep.subr.bf16.mxu0 0
        %2797 = vmatpush1.bf16.msra.mxu0 0
        %2798 = vmatprep.subr.bf16.mxu0 0
        %2799 = vmatpush1.bf16.msra.mxu0 0
        %2800 = vmatprep.subr.bf16.mxu0 0
        %2801 = vmatpush1.bf16.msra.mxu0 0
        %2802 = vmatprep.subr.bf16.mxu0 0
        %2803 = vmatpush1.bf16.msra.mxu0 0
        %2804 = vmatprep.subr.bf16.mxu0 0
        %2805 = vmatpush1.bf16.msra.mxu0 0
        %2806 = vmatprep.subr.bf16.mxu0 0
        %2807 = vmatpush1.bf16.msra.mxu0 0
        %2808 = vmatprep.subr.bf16.mxu0 0
        %2809 = vmatpush1.bf16.msra.mxu0 0
        %2810 = vmatprep.subr.bf16.mxu0 0
        %2811 = vmatpush1.bf16.msra.mxu0 0
        %2812 = vmatprep.subr.bf16.mxu0 0
        %2813 = vmatpush1.bf16.msra.mxu0 0
        %2814 = vmatprep.subr.bf16.mxu0 0
        %2815 = vmatpush1.bf16.msra.mxu0 0
        %2816 = vmatprep.subr.bf16.mxu0 0
        %2817 = vmatpush1.bf16.msra.mxu0 0
        %2818 = vmatprep.subr.bf16.mxu0 0
        %2819 = vmatpush1.bf16.msra.mxu0 0
        %2820 = vmatprep.subr.bf16.mxu0 0
        %2821 = vmatpush1.bf16.msra.mxu0 0
        %2822 = vmatprep.mubr.bf16.mxu0 0
        %2823 = vmatmul.mubr.bf16.gmra.mrb[0].mxu0 %v2788
        %v2824 = vpop.f32.mrb[0].mxu0
        %v2825 = vadd.f32 0.0, %v2824
        %v2826 = vpop.f32.mrb[0].mxu0
        %v2827 = vpop.f32.mrb[0].mxu0
        %v2828 = vpop.f32.mrb[0].mxu0
        %2829 = vdwg.mxu0
        %v2830 = vmul.f32 %v2825, 0.25
        %vm2831 = vcmask 60416
        %v2832 = vsel %vm2831, %v2830, -inf
        %2833 = vmax.xlane.f32.xlu0 %v2832
        %v2834 = vpop.xlane.xlu0 %2833
        %v2835 = vsub.f32 %v2830, %v2834
        %v2836 = vmul.f32 %v2835, 1.442695
        %v2837 = vpow.pop %v2836
        %v2838 = vsel %vm2831, %v2837, 0.0
        %2839 = vadd.xlane.f32.xlu0 %v2838
        %v2840 = vpop.xlane.xlu0 %2839
        %v2841 = vrcp.pop %v2840
        %v2842 = vmul.f32 %v2837, %v2841
        %v2843 = vpack.c.bf16 %v2842, %v2842
        %v2844 = vpack.c.bf16 %v2687, %v2687
        %v2846 = vsel %vm1894, %v2843, 0
        %v2849 = vsel %vm2142, %v2844, 0
        %2851 = vmatprep.subr.bf16.mxu0 0
        %2852 = vmatpush1.bf16.msra.mxu0 %v2849
        %2853 = vmatprep.subr.bf16.mxu0 0
        %2854 = vmatpush1.bf16.msra.mxu0 0
        %2855 = vmatprep.subr.bf16.mxu0 0
        %2856 = vmatpush1.bf16.msra.mxu0 0
        %2857 = vmatprep.subr.bf16.mxu0 0
        %2858 = vmatpush1.bf16.msra.mxu0 0
        %2859 = vmatprep.subr.bf16.mxu0 0
        %2860 = vmatpush1.bf16.msra.mxu0 0
        %2861 = vmatprep.subr.bf16.mxu0 0
        %2862 = vmatpush1.bf16.msra.mxu0 0
        %2863 = vmatprep.subr.bf16.mxu0 0
        %2864 = vmatpush1.bf16.msra.mxu0 0
        %2865 = vmatprep.subr.bf16.mxu0 0
        %2866 = vmatpush1.bf16.msra.mxu0 0
        %2867 = vmatprep.subr.bf16.mxu0 0
        %2868 = vmatpush1.bf16.msra.mxu0 0
        %2869 = vmatprep.subr.bf16.mxu0 0
        %2870 = vmatpush1.bf16.msra.mxu0 0
        %2871 = vmatprep.subr.bf16.mxu0 0
        %2872 = vmatpush1.bf16.msra.mxu0 0
        %2873 = vmatprep.subr.bf16.mxu0 0
        %2874 = vmatpush1.bf16.msra.mxu0 0
        %2875 = vmatprep.subr.bf16.mxu0 0
        %2876 = vmatpush1.bf16.msra.mxu0 0
        %2877 = vmatprep.subr.bf16.mxu0 0
        %2878 = vmatpush1.bf16.msra.mxu0 0
        %2879 = vmatprep.subr.bf16.mxu0 0
        %2880 = vmatpush1.bf16.msra.mxu0 0
        %2881 = vmatprep.subr.bf16.mxu0 0
        %2882 = vmatpush1.bf16.msra.mxu0 0
        %2883 = vmatprep.mubr.bf16.mxu0 0
        %2884 = vmatmul.mubr.bf16.gmra.mrb[0].mxu0 %v2846
        %v2885 = vpop.f32.mrb[0].mxu0
        %v2886 = vadd.f32 0.0, %v2885
        %v2887 = vpop.f32.mrb[0].mxu0
        %v2888 = vpop.f32.mrb[0].mxu0
        %v2889 = vpop.f32.mrb[0].mxu0
        %2890 = vdwg.mxu0
        %v2891 = vld [vmem:[%s35] sm:$0xf]
        %v2892 = vld [vmem:[%s35 + $0x4] sm:$0xf]
        %v2893 = vld [vmem:[%s35 + $0x8] sm:$0xf]
        %v2894 = vld [vmem:[%s35 + $0xc] sm:$0xf]
        %v2895 = vld [vmem:[%s37] sm:$0x1]
        %v2897 = vlaneseq
        %v2898 = vshrl.u32 %v2897, 7
        %v2899 = vsub.s32 0, %v2898
        %v2900 = vrot.slane %v2895, %v2899
        %v2906 = vunpack.c.l.b16 %v2891
        %v2907 = vunpack.c.l.b16 %v2892
        %v2908 = vunpack.c.l.b16 %v2893
        %v2909 = vunpack.c.l.b16 %v2894
        %v2910 = vpack.c.b16 %v2907, %v2906
        %v2911 = vpack.c.b16 %v2909, %v2908
        %2914 = vmatprep.subr.bf16.mxu0 0
        %2915 = vmatpush1.bf16.msra.mxu0 %v2910
        %2916 = vmatprep.subr.bf16.mxu0 0
        %2917 = vmatpush1.bf16.msra.mxu0 %v2911
        %2918 = vmatprep.subr.bf16.mxu0 0
        %2919 = vmatpush1.bf16.msra.mxu0 0
        %2920 = vmatprep.subr.bf16.mxu0 0
        %2921 = vmatpush1.bf16.msra.mxu0 0
        %2922 = vmatprep.subr.bf16.mxu0 0
        %2923 = vmatpush1.bf16.msra.mxu0 0
        %2924 = vmatprep.subr.bf16.mxu0 0
        %2925 = vmatpush1.bf16.msra.mxu0 0
        %2926 = vmatprep.subr.bf16.mxu0 0
        %2927 = vmatpush1.bf16.msra.mxu0 0
        %2928 = vmatprep.subr.bf16.mxu0 0
        %2929 = vmatpush1.bf16.msra.mxu0 0
        %2930 = vmatprep.subr.bf16.mxu0 0
        %2931 = vmatpush1.bf16.msra.mxu0 0
        %2932 = vmatprep.subr.bf16.mxu0 0
        %2933 = vmatpush1.bf16.msra.mxu0 0
        %2934 = vmatprep.subr.bf16.mxu0 0
        %2935 = vmatpush1.bf16.msra.mxu0 0
        %2936 = vmatprep.subr.bf16.mxu0 0
        %2937 = vmatpush1.bf16.msra.mxu0 0
        %2938 = vmatprep.subr.bf16.mxu0 0
        %2939 = vmatpush1.bf16.msra.mxu0 0
        %2940 = vmatprep.subr.bf16.mxu0 0
        %2941 = vmatpush1.bf16.msra.mxu0 0
        %2942 = vmatprep.subr.bf16.mxu0 0
        %2943 = vmatpush1.bf16.msra.mxu0 0
        %2944 = vmatprep.subr.bf16.mxu0 0
        %2945 = vmatpush1.bf16.msra.mxu0 0
        %2946 = vmatprep.mubr.bf16.mxu0 0
        %2947 = vmatmul.mubr.bf16.gmra.mrb[0].mxu0 %v2587
        %v2948 = vpop.f32.mrb[0].mxu0
        %v2949 = vadd.f32 %v2900, %v2948
        %v2950 = vpop.f32.mrb[0].mxu0
        %v2951 = vpop.f32.mrb[0].mxu0
        %v2952 = vpop.f32.mrb[0].mxu0
        %2953 = vdwg.mxu0
        %v2954 = vld [vmem:[%s39] sm:$0xf]
        %v2955 = vld [vmem:[%s39 + $0x4] sm:$0xf]
        %v2956 = vpack.c.bf16 %v2886, %v2886
        %v2957 = vld [vmem:[%s41] sm:$0x1]
        %v2959 = vlaneseq
        %v2960 = vshrl.u32 %v2959, 7
        %v2961 = vsub.s32 0, %v2960
        %v2962 = vrot.slane %v2957, %v2961
        %v2966 = vunpack.c.l.b16 %v2954
        %v2967 = vunpack.c.l.b16 %v2955
        %v2968 = vpack.c.b16 %v2967, %v2966
        %v2971 = vsel %vm2709, %v2956, 0
        %2973 = vmatprep.subr.bf16.mxu0 0
        %2974 = vmatpush1.bf16.msra.mxu0 %v2968
        %2975 = vmatprep.subr.bf16.mxu0 0
        %2976 = vmatpush1.bf16.msra.mxu0 0
        %2977 = vmatprep.subr.bf16.mxu0 0
        %2978 = vmatpush1.bf16.msra.mxu0 0
        %2979 = vmatprep.subr.bf16.mxu0 0
        %2980 = vmatpush1.bf16.msra.mxu0 0
        %2981 = vmatprep.subr.bf16.mxu0 0
        %2982 = vmatpush1.bf16.msra.mxu0 0
        %2983 = vmatprep.subr.bf16.mxu0 0
        %2984 = vmatpush1.bf16.msra.mxu0 0
        %2985 = vmatprep.subr.bf16.mxu0 0
        %2986 = vmatpush1.bf16.msra.mxu0 0
        %2987 = vmatprep.subr.bf16.mxu0 0
        %2988 = vmatpush1.bf16.msra.mxu0 0
        %2989 = vmatprep.subr.bf16.mxu0 0
        %2990 = vmatpush1.bf16.msra.mxu0 0
        %2991 = vmatprep.subr.bf16.mxu0 0
        %2992 = vmatpush1.bf16.msra.mxu0 0
        %2993 = vmatprep.subr.bf16.mxu0 0
        %2994 = vmatpush1.bf16.msra.mxu0 0
        %2995 = vmatprep.subr.bf16.mxu0 0
        %2996 = vmatpush1.bf16.msra.mxu0 0
        %2997 = vmatprep.subr.bf16.mxu0 0
        %2998 = vmatpush1.bf16.msra.mxu0 0
        %2999 = vmatprep.subr.bf16.mxu0 0
        %3000 = vmatpush1.bf16.msra.mxu0 0
        %3001 = vmatprep.subr.bf16.mxu0 0
        %3002 = vmatpush1.bf16.msra.mxu0 0
        %3003 = vmatprep.subr.bf16.mxu0 0
        %3004 = vmatpush1.bf16.msra.mxu0 0
        %3005 = vmatprep.mubr.bf16.mxu0 0
        %3006 = vmatmul.mubr.bf16.gmra.mrb[0].mxu0 %v2971
        %v3007 = vpop.f32.mrb[0].mxu0
        %v3008 = vadd.f32 %v2962, %v3007
        %v3009 = vpop.f32.mrb[0].mxu0
        %v3010 = vpop.f32.mrb[0].mxu0
        %v3011 = vpop.f32.mrb[0].mxu0
        %3012 = vdwg.mxu0
        %v3013 = vld [vmem:[%s43] sm:$0xf]
        %v3014 = vld [vmem:[%s43 + $0x4] sm:$0xf]
        %v3015 = vld [vmem:[%s45] sm:$0x1]
        %v3017 = vlaneseq
        %v3018 = vshrl.u32 %v3017, 7
        %v3019 = vsub.s32 0, %v3018
        %v3020 = vrot.slane %v3015, %v3019
        %v3024 = vunpack.c.l.b16 %v3013
        %v3025 = vunpack.c.l.b16 %v3014
        %v3026 = vpack.c.b16 %v3025, %v3024
        %3028 = vmatprep.subr.bf16.mxu0 0
        %3029 = vmatpush1.bf16.msra.mxu0 %v3026
        %3030 = vmatprep.subr.bf16.mxu0 0
        %3031 = vmatpush1.bf16.msra.mxu0 0
        %3032 = vmatprep.subr.bf16.mxu0 0
        %3033 = vmatpush1.bf16.msra.mxu0 0
        %3034 = vmatprep.subr.bf16.mxu0 0
        %3035 = vmatpush1.bf16.msra.mxu0 0
        %3036 = vmatprep.subr.bf16.mxu0 0
        %3037 = vmatpush1.bf16.msra.mxu0 0
        %3038 = vmatprep.subr.bf16.mxu0 0
        %3039 = vmatpush1.bf16.msra.mxu0 0
        %3040 = vmatprep.subr.bf16.mxu0 0
        %3041 = vmatpush1.bf16.msra.mxu0 0
        %3042 = vmatprep.subr.bf16.mxu0 0
        %3043 = vmatpush1.bf16.msra.mxu0 0
        %3044 = vmatprep.subr.bf16.mxu0 0
        %3045 = vmatpush1.bf16.msra.mxu0 0
        %3046 = vmatprep.subr.bf16.mxu0 0
        %3047 = vmatpush1.bf16.msra.mxu0 0
        %3048 = vmatprep.subr.bf16.mxu0 0
        %3049 = vmatpush1.bf16.msra.mxu0 0
        %3050 = vmatprep.subr.bf16.mxu0 0
        %3051 = vmatpush1.bf16.msra.mxu0 0
        %3052 = vmatprep.subr.bf16.mxu0 0
        %3053 = vmatpush1.bf16.msra.mxu0 0
        %3054 = vmatprep.subr.bf16.mxu0 0
        %3055 = vmatpush1.bf16.msra.mxu0 0
        %3056 = vmatprep.subr.bf16.mxu0 0
        %3057 = vmatpush1.bf16.msra.mxu0 0
        %3058 = vmatprep.subr.bf16.mxu0 0
        %3059 = vmatpush1.bf16.msra.mxu0 0
        %3060 = vmatprep.mubr.bf16.mxu0 0
        %3061 = vmatmul.mubr.bf16.gmra.mrb[0].mxu0 %v2971
        %v3062 = vpop.f32.mrb[0].mxu0
        %v3063 = vadd.f32 %v3020, %v3062
        %v3064 = vpop.f32.mrb[0].mxu0
        %v3065 = vpop.f32.mrb[0].mxu0
        %v3066 = vpop.f32.mrb[0].mxu0
        %3067 = vdwg.mxu0
        %v3068 = vpack.c.bf16 %v2949, %v2949
        %3069 = vxpose.xlu0.b32.start [1/16] %v3008, 128
        %3070 = vxpose.xlu0.b32.cont [2/16] 0.0, 128
        %3071 = vxpose.xlu0.b32.cont [3/16] 0.0, 128
        %3072 = vxpose.xlu0.b32.cont [4/16] 0.0, 128
        %3073 = vxpose.xlu0.b32.cont [5/16] 0.0, 128
        %3074 = vxpose.xlu0.b32.cont [6/16] 0.0, 128
        %3075 = vxpose.xlu0.b32.cont [7/16] 0.0, 128
        %3076 = vxpose.xlu0.b32.cont [8/16] 0.0, 128
        %3077 = vxpose.xlu0.b32.cont [9/16] 0.0, 128
        %3078 = vxpose.xlu0.b32.cont [10/16] 0.0, 128
        %3079 = vxpose.xlu0.b32.cont [11/16] 0.0, 128
        %3080 = vxpose.xlu0.b32.cont [12/16] 0.0, 128
        %3081 = vxpose.xlu0.b32.cont [13/16] 0.0, 128
        %3082 = vxpose.xlu0.b32.cont [14/16] 0.0, 128
        %3083 = vxpose.xlu0.b32.cont [15/16] 0.0, 128
        %3084 = vxpose.xlu0.b32.end [16/16] 0.0, 128
        %v3085 = vpop.trf.xlu0
        %v3086 = vpop.trf.xlu0
        %v3087 = vpop.trf.xlu0
        %v3088 = vpop.trf.xlu0
        %v3089 = vpop.trf.xlu0
        %v3090 = vpop.trf.xlu0
        %v3091 = vpop.trf.xlu0
        %v3092 = vpop.trf.xlu0
        %v3093 = vpop.trf.xlu0
        %v3094 = vpop.trf.xlu0
        %v3095 = vpop.trf.xlu0
        %v3096 = vpop.trf.xlu0
        %v3097 = vpop.trf.xlu0
        %v3098 = vpop.trf.xlu0
        %v3099 = vpop.trf.xlu0
        %v3100 = vpop.trf.xlu0
        %v3101 = vpack.c.bf16 %v3086, %v3085
        %v3102 = vpack.c.bf16 %v3088, %v3087
        %v3104 = vsel %vm1182, %v3068, 0
        %3106 = vmatprep.subr.bf16.mxu0 0
        %3107 = vmatpush1.bf16.msra.mxu0 %v3101
        %3108 = vmatprep.subr.bf16.mxu0 0
        %3109 = vmatpush1.bf16.msra.mxu0 %v3102
        %3110 = vmatprep.subr.bf16.mxu0 0
        %3111 = vmatpush1.bf16.msra.mxu0 0
        %3112 = vmatprep.subr.bf16.mxu0 0
        %3113 = vmatpush1.bf16.msra.mxu0 0
        %3114 = vmatprep.subr.bf16.mxu0 0
        %3115 = vmatpush1.bf16.msra.mxu0 0
        %3116 = vmatprep.subr.bf16.mxu0 0
        %3117 = vmatpush1.bf16.msra.mxu0 0
        %3118 = vmatprep.subr.bf16.mxu0 0
        %3119 = vmatpush1.bf16.msra.mxu0 0
        %3120 = vmatprep.subr.bf16.mxu0 0
        %3121 = vmatpush1.bf16.msra.mxu0 0
        %3122 = vmatprep.subr.bf16.mxu0 0
        %3123 = vmatpush1.bf16.msra.mxu0 0
        %3124 = vmatprep.subr.bf16.mxu0 0
        %3125 = vmatpush1.bf16.msra.mxu0 0
        %3126 = vmatprep.subr.bf16.mxu0 0
        %3127 = vmatpush1.bf16.msra.mxu0 0
        %3128 = vmatprep.subr.bf16.mxu0 0
        %3129 = vmatpush1.bf16.msra.mxu0 0
        %3130 = vmatprep.subr.bf16.mxu0 0
        %3131 = vmatpush1.bf16.msra.mxu0 0
        %3132 = vmatprep.subr.bf16.mxu0 0
        %3133 = vmatpush1.bf16.msra.mxu0 0
        %3134 = vmatprep.subr.bf16.mxu0 0
        %3135 = vmatpush1.bf16.msra.mxu0 0
        %3136 = vmatprep.subr.bf16.mxu0 0
        %3137 = vmatpush1.bf16.msra.mxu0 0
        %3138 = vmatprep.mubr.bf16.mxu0 0
        %3139 = vmatmul.mubr.bf16.gmra.mrb[0].mxu0 %v3104
        %v3140 = vpop.f32.mrb[0].mxu0
        %v3141 = vadd.f32 0.0, %v3140
        %v3142 = vpop.f32.mrb[0].mxu0
        %v3143 = vpop.f32.mrb[0].mxu0
        %v3144 = vpop.f32.mrb[0].mxu0
        %3145 = vdwg.mxu0
        %v3146 = vmul.f32 %v3141, 0.17677669
        %vm3147 = vcmask 31744
        %v3148 = vsel %vm3147, %v3146, -inf
        %3149 = vmax.xlane.f32.xlu0 %v3148
        %v3150 = vpop.xlane.xlu0 %3149
        %v3151 = vsub.f32 %v3146, %v3150
        %v3152 = vmul.f32 %v3151, 1.442695
        %v3153 = vpow.pop %v3152
        %v3154 = vsel %vm3147, %v3153, 0.0
        %3155 = vadd.xlane.f32.xlu0 %v3154
        %v3156 = vpop.xlane.xlu0 %3155
        %v3157 = vrcp.pop %v3156
        %v3158 = vmul.f32 %v3153, %v3157
        %v3159 = vpack.c.bf16 %v3158, %v3158
        %v3160 = vpack.c.bf16 %v3063, %v3063
        %v3162 = vsel %vm3147, %v3159, 0
        %vm3164 = vcmask 1041408
        %v3166 = vsel %vm3164, %v3160, 0
        %3168 = vmatprep.subr.bf16.mxu0 0
        %3169 = vmatpush1.bf16.msra.mxu0 %v3166
        %3170 = vmatprep.subr.bf16.mxu0 0
        %3171 = vmatpush1.bf16.msra.mxu0 0
        %3172 = vmatprep.subr.bf16.mxu0 0
        %3173 = vmatpush1.bf16.msra.mxu0 0
        %3174 = vmatprep.subr.bf16.mxu0 0
        %3175 = vmatpush1.bf16.msra.mxu0 0
        %3176 = vmatprep.subr.bf16.mxu0 0
        %3177 = vmatpush1.bf16.msra.mxu0 0
        %3178 = vmatprep.subr.bf16.mxu0 0
        %3179 = vmatpush1.bf16.msra.mxu0 0
        %3180 = vmatprep.subr.bf16.mxu0 0
        %3181 = vmatpush1.bf16.msra.mxu0 0
        %3182 = vmatprep.subr.bf16.mxu0 0
        %3183 = vmatpush1.bf16.msra.mxu0 0
        %3184 = vmatprep.subr.bf16.mxu0 0
        %3185 = vmatpush1.bf16.msra.mxu0 0
        %3186 = vmatprep.subr.bf16.mxu0 0
        %3187 = vmatpush1.bf16.msra.mxu0 0
        %3188 = vmatprep.subr.bf16.mxu0 0
        %3189 = vmatpush1.bf16.msra.mxu0 0
        %3190 = vmatprep.subr.bf16.mxu0 0
        %3191 = vmatpush1.bf16.msra.mxu0 0
        %3192 = vmatprep.subr.bf16.mxu0 0
        %3193 = vmatpush1.bf16.msra.mxu0 0
        %3194 = vmatprep.subr.bf16.mxu0 0
        %3195 = vmatpush1.bf16.msra.mxu0 0
        %3196 = vmatprep.subr.bf16.mxu0 0
        %3197 = vmatpush1.bf16.msra.mxu0 0
        %3198 = vmatprep.subr.bf16.mxu0 0
        %3199 = vmatpush1.bf16.msra.mxu0 0
        %3200 = vmatprep.mubr.bf16.mxu0 0
        %3201 = vmatmul.mubr.bf16.gmra.mrb[0].mxu0 %v3162
        %v3202 = vpop.f32.mrb[0].mxu0
        %v3203 = vadd.f32 0.0, %v3202
        %v3204 = vpop.f32.mrb[0].mxu0
        %v3205 = vpop.f32.mrb[0].mxu0
        %v3206 = vpop.f32.mrb[0].mxu0
        %3207 = vdwg.mxu0
        %v3208 = vadd.f32 %v2561, %v3203
        %v3209 = vld [vmem:[%s59] sm:$0x1]
        %v3210 = vld [vmem:[%s61] sm:$0x1]
        %v3211 = vsel %vm1182, %v3208, 0.0
        %3212 = vadd.xlane.f32.xlu0 %v3211
        %v3213 = vpop.xlane.xlu0 %3212
        %v3214 = vmul.f32 %v3213, %v2537
        %v3215 = vsub.f32 %v3208, %v3214
        %v3216 = vmul.f32 %v3215, %v3215
        %v3217 = vsel %vm1182, %v3216, 0.0
        %3218 = vadd.xlane.f32.xlu0 %v3217
        %v3219 = vpop.xlane.xlu0 %3218
        %v3220 = vmul.f32 %v3219, %v2537
        %v3221 = vadd.f32 %v3220, 1e-05
        %v3222 = vrsqrt.pop %v3221
        %v3223 = vmul.f32 %v3215, %v3222
        %v3225 = vlaneseq
        %v3226 = vshrl.u32 %v3225, 7
        %v3227 = vsub.s32 0, %v3226
        %v3228 = vrot.slane %v3209, %v3227
        %v3230 = vmul.f32 %v3223, %v3228
        %v3232 = vlaneseq
        %v3233 = vshrl.u32 %v3232, 7
        %v3234 = vsub.s32 0, %v3233
        %v3235 = vrot.slane %v3210, %v3234
        %v3237 = vadd.f32 %v3230, %v3235
        %v3238 = vld [vmem:[%s47] sm:$0xf]
        %v3239 = vld [vmem:[%s47 + $0x4] sm:$0xf]
        %v3240 = vld [vmem:[%s47 + $0x8] sm:$0xf]
        %v3241 = vld [vmem:[%s47 + $0xc] sm:$0xf]
        %v3242 = vpack.c.bf16 %v3237, %v3237
        %v3243 = vld [vmem:[%s49] sm:$0x1]
        %v3245 = vlaneseq
        %v3246 = vshrl.u32 %v3245, 7
        %v3247 = vsub.s32 0, %v3246
        %v3248 = vrot.slane %v3243, %v3247
        %v3254 = vunpack.c.l.b16 %v3238
        %v3255 = vunpack.c.l.b16 %v3239
        %v3256 = vunpack.c.l.b16 %v3240
        %v3257 = vunpack.c.l.b16 %v3241
        %v3258 = vpack.c.b16 %v3255, %v3254
        %v3259 = vpack.c.b16 %v3257, %v3256
        %v3263 = vsel %vm1182, %v3242, 0
        %3265 = vmatprep.subr.bf16.mxu0 0
        %3266 = vmatpush1.bf16.msra.mxu0 %v3258
        %3267 = vmatprep.subr.bf16.mxu0 0
        %3268 = vmatpush1.bf16.msra.mxu0 %v3259
        %3269 = vmatprep.subr.bf16.mxu0 0
        %3270 = vmatpush1.bf16.msra.mxu0 0
        %3271 = vmatprep.subr.bf16.mxu0 0
        %3272 = vmatpush1.bf16.msra.mxu0 0
        %3273 = vmatprep.subr.bf16.mxu0 0
        %3274 = vmatpush1.bf16.msra.mxu0 0
        %3275 = vmatprep.subr.bf16.mxu0 0
        %3276 = vmatpush1.bf16.msra.mxu0 0
        %3277 = vmatprep.subr.bf16.mxu0 0
        %3278 = vmatpush1.bf16.msra.mxu0 0
        %3279 = vmatprep.subr.bf16.mxu0 0
        %3280 = vmatpush1.bf16.msra.mxu0 0
        %3281 = vmatprep.subr.bf16.mxu0 0
        %3282 = vmatpush1.bf16.msra.mxu0 0
        %3283 = vmatprep.subr.bf16.mxu0 0
        %3284 = vmatpush1.bf16.msra.mxu0 0
        %3285 = vmatprep.subr.bf16.mxu0 0
        %3286 = vmatpush1.bf16.msra.mxu0 0
        %3287 = vmatprep.subr.bf16.mxu0 0
        %3288 = vmatpush1.bf16.msra.mxu0 0
        %3289 = vmatprep.subr.bf16.mxu0 0
        %3290 = vmatpush1.bf16.msra.mxu0 0
        %3291 = vmatprep.subr.bf16.mxu0 0
        %3292 = vmatpush1.bf16.msra.mxu0 0
        %3293 = vmatprep.subr.bf16.mxu0 0
        %3294 = vmatpush1.bf16.msra.mxu0 0
        %3295 = vmatprep.subr.bf16.mxu0 0
        %3296 = vmatpush1.bf16.msra.mxu0 0
        %3297 = vmatprep.mubr.bf16.mxu0 0
        %3298 = vmatmul.mubr.bf16.gmra.mrb[0].mxu0 %v3263
        %v3299 = vpop.f32.mrb[0].mxu0
        %v3300 = vadd.f32 %v3248, %v3299
        %v3301 = vpop.f32.mrb[0].mxu0
        %v3302 = vpop.f32.mrb[0].mxu0
        %v3303 = vpop.f32.mrb[0].mxu0
        %3304 = vdwg.mxu0
        %v3305 = vmul.f32 %v3300, 0.5
        %v3306 = vmul.f32 %v3300, 0.70710677
        %v3307 = verf.f32.pop %v3306
        %v3308 = vadd.f32 %v3307, 1.0
        %v3309 = vmul.f32 %v3305, %v3308
        %v3310 = vld [vmem:[%s51] sm:$0xf]
        %v3311 = vld [vmem:[%s51 + $0x4] sm:$0xf]
        %v3312 = vld [vmem:[%s51 + $0x8] sm:$0xf]
        %v3313 = vld [vmem:[%s51 + $0xc] sm:$0xf]
        %v3314 = vld [vmem:[%s51 + $0x10] sm:$0xf]
        %v3315 = vld [vmem:[%s51 + $0x14] sm:$0xf]
        %v3316 = vld [vmem:[%s51 + $0x18] sm:$0xf]
        %v3317 = vld [vmem:[%s51 + $0x1c] sm:$0xf]
        %v3318 = vpack.c.bf16 %v3309, %v3309
        %v3319 = vld [vmem:[%s53] sm:$0x1]
        %v3321 = vlaneseq
        %v3322 = vshrl.u32 %v3321, 7
        %v3323 = vsub.s32 0, %v3322
        %v3324 = vrot.slane %v3319, %v3323
        %v3334 = vunpack.c.l.b16 %v3310
        %v3335 = vunpack.c.l.b16 %v3311
        %v3336 = vunpack.c.l.b16 %v3312
        %v3337 = vunpack.c.l.b16 %v3313
        %v3338 = vunpack.c.l.b16 %v3314
        %v3339 = vunpack.c.l.b16 %v3315
        %v3340 = vunpack.c.l.b16 %v3316
        %v3341 = vunpack.c.l.b16 %v3317
        %v3342 = vpack.c.b16 %v3335, %v3334
        %v3343 = vpack.c.b16 %v3337, %v3336
        %v3344 = vpack.c.b16 %v3339, %v3338
        %v3345 = vpack.c.b16 %v3341, %v3340
        %vm3350 = vcmask 523264
        %v3352 = vsel %vm3350, %v3318, 0
        %3354 = vmatprep.subr.bf16.mxu0 0
        %3355 = vmatpush1.bf16.msra.mxu0 %v3342
        %3356 = vmatprep.subr.bf16.mxu0 0
        %3357 = vmatpush1.bf16.msra.mxu0 %v3343
        %3358 = vmatprep.subr.bf16.mxu0 0
        %3359 = vmatpush1.bf16.msra.mxu0 %v3344
        %3360 = vmatprep.subr.bf16.mxu0 0
        %3361 = vmatpush1.bf16.msra.mxu0 %v3345
        %3362 = vmatprep.subr.bf16.mxu0 0
        %3363 = vmatpush1.bf16.msra.mxu0 0
        %3364 = vmatprep.subr.bf16.mxu0 0
        %3365 = vmatpush1.bf16.msra.mxu0 0
        %3366 = vmatprep.subr.bf16.mxu0 0
        %3367 = vmatpush1.bf16.msra.mxu0 0
        %3368 = vmatprep.subr.bf16.mxu0 0
        %3369 = vmatpush1.bf16.msra.mxu0 0
        %3370 = vmatprep.subr.bf16.mxu0 0
        %3371 = vmatpush1.bf16.msra.mxu0 0
        %3372 = vmatprep.subr.bf16.mxu0 0
        %3373 = vmatpush1.bf16.msra.mxu0 0
        %3374 = vmatprep.subr.bf16.mxu0 0
        %3375 = vmatpush1.bf16.msra.mxu0 0
        %3376 = vmatprep.subr.bf16.mxu0 0
        %3377 = vmatpush1.bf16.msra.mxu0 0
        %3378 = vmatprep.subr.bf16.mxu0 0
        %3379 = vmatpush1.bf16.msra.mxu0 0
        %3380 = vmatprep.subr.bf16.mxu0 0
        %3381 = vmatpush1.bf16.msra.mxu0 0
        %3382 = vmatprep.subr.bf16.mxu0 0
        %3383 = vmatpush1.bf16.msra.mxu0 0
        %3384 = vmatprep.subr.bf16.mxu0 0
        %3385 = vmatpush1.bf16.msra.mxu0 0
        %3386 = vmatprep.mubr.bf16.mxu0 0
        %3387 = vmatmul.mubr.bf16.gmra.mrb[0].mxu0 %v3352
        %v3388 = vpop.f32.mrb[0].mxu0
        %v3389 = vadd.f32 %v3324, %v3388
        %v3390 = vpop.f32.mrb[0].mxu0
        %v3391 = vpop.f32.mrb[0].mxu0
        %v3392 = vpop.f32.mrb[0].mxu0
        %3393 = vdwg.mxu0
        %v3394 = vadd.f32 %v3237, %v3389
        %v3395 = vld [vmem:[%s63] sm:$0x1]
        %v3396 = vld [vmem:[%s65] sm:$0x1]
        %v3397 = vsel %vm1182, %v3394, 0.0
        %3398 = vadd.xlane.f32.xlu0 %v3397
        %v3399 = vpop.xlane.xlu0 %3398
        %v3400 = vmul.f32 %v3399, %v2537
        %v3401 = vsub.f32 %v3394, %v3400
        %v3402 = vmul.f32 %v3401, %v3401
        %v3403 = vsel %vm1182, %v3402, 0.0
        %3404 = vadd.xlane.f32.xlu0 %v3403
        %v3405 = vpop.xlane.xlu0 %3404
        %v3406 = vmul.f32 %v3405, %v2537
        %v3407 = vadd.f32 %v3406, 1e-05
        %v3408 = vrsqrt.pop %v3407
        %v3409 = vmul.f32 %v3401, %v3408
        %v3411 = vlaneseq
        %v3412 = vshrl.u32 %v3411, 7
        %v3413 = vsub.s32 0, %v3412
        %v3414 = vrot.slane %v3395, %v3413
        %v3416 = vmul.f32 %v3409, %v3414
        %v3418 = vlaneseq
        %v3419 = vshrl.u32 %v3418, 7
        %v3420 = vsub.s32 0, %v3419
        %v3421 = vrot.slane %v3396, %v3420
        %v3423 = vadd.f32 %v3416, %v3421
        %s3424 = scalar_lea.vmem %s5, 64
        %v3425 = vld [vmem:[%s3424] sm:$0xf]
        %v3426 = vld [vmem:[%s3424 + $0x4] sm:$0xf]
        %v3427 = vld [vmem:[%s3424 + $0x8] sm:$0xf]
        %v3428 = vld [vmem:[%s3424 + $0xc] sm:$0xf]
        %v3429 = vld [vmem:[%s3424 + $0x10] sm:$0xf]
        %v3430 = vld [vmem:[%s3424 + $0x14] sm:$0xf]
        %v3431 = vld [vmem:[%s3424 + $0x18] sm:$0xf]
        %v3432 = vld [vmem:[%s3424 + $0x1c] sm:$0xf]
        %v3433 = vld [vmem:[%s3424 + $0x20] sm:$0xf]
        %v3434 = vld [vmem:[%s3424 + $0x24] sm:$0xf]
        %v3435 = vld [vmem:[%s3424 + $0x28] sm:$0xf]
        %v3436 = vld [vmem:[%s3424 + $0x2c] sm:$0xf]
        %v3437 = vld [vmem:[%s3424 + $0x30] sm:$0xf]
        %v3438 = vld [vmem:[%s3424 + $0x34] sm:$0xf]
        %v3439 = vld [vmem:[%s3424 + $0x38] sm:$0xf]
        %v3440 = vld [vmem:[%s3424 + $0x3c] sm:$0xf]
        %v3441 = vpack.c.bf16 %v3423, %v3423
        %s3442 = scalar_lea.vmem %s11, 4
        %v3443 = vld [vmem:[%s3442] sm:$0x1]
        %v3444 = vld [vmem:[%s3442 + $0x1] sm:$0x1]
        %v3445 = vld [vmem:[%s3442 + $0x2] sm:$0x1]
        %v3446 = vld [vmem:[%s3442 + $0x3] sm:$0x1]
        %v3451 = vlaneseq
        %v3452 = vshrl.u32 %v3451, 7
        %v3453 = vsub.s32 0, %v3452
        %v3454 = vrot.slane %v3443, %v3453
        %v3455 = vlaneseq
        %v3456 = vshrl.u32 %v3455, 7
        %v3457 = vsub.s32 0, %v3456
        %v3458 = vrot.slane %v3444, %v3457
        %v3459 = vlaneseq
        %v3460 = vshrl.u32 %v3459, 7
        %v3461 = vsub.s32 0, %v3460
        %v3462 = vrot.slane %v3445, %v3461
        %v3463 = vlaneseq
        %v3464 = vshrl.u32 %v3463, 7
        %v3465 = vsub.s32 0, %v3464
        %v3466 = vrot.slane %v3446, %v3465
        %v3475 = vunpack.c.l.b16 %v3425
        %v3476 = vunpack.c.l.b16 %v3426
        %v3477 = vunpack.c.l.b16 %v3427
        %v3478 = vunpack.c.l.b16 %v3428
        %v3479 = vpack.c.b16 %v3476, %v3475
        %v3480 = vpack.c.b16 %v3478, %v3477
        %v3484 = vsel %vm1182, %v3441, 0
        %3486 = vmatprep.subr.bf16.mxu0 0
        %3487 = vmatpush1.bf16.msra.mxu0 %v3479
        %3488 = vmatprep.subr.bf16.mxu0 0
        %3489 = vmatpush1.bf16.msra.mxu0 %v3480
        %3490 = vmatprep.subr.bf16.mxu0 0
        %3491 = vmatpush1.bf16.msra.mxu0 0
        %3492 = vmatprep.subr.bf16.mxu0 0
        %3493 = vmatpush1.bf16.msra.mxu0 0
        %3494 = vmatprep.subr.bf16.mxu0 0
        %3495 = vmatpush1.bf16.msra.mxu0 0
        %3496 = vmatprep.subr.bf16.mxu0 0
        %3497 = vmatpush1.bf16.msra.mxu0 0
        %3498 = vmatprep.subr.bf16.mxu0 0
        %3499 = vmatpush1.bf16.msra.mxu0 0
        %3500 = vmatprep.subr.bf16.mxu0 0
        %3501 = vmatpush1.bf16.msra.mxu0 0
        %3502 = vmatprep.subr.bf16.mxu0 0
        %3503 = vmatpush1.bf16.msra.mxu0 0
        %3504 = vmatprep.subr.bf16.mxu0 0
        %3505 = vmatpush1.bf16.msra.mxu0 0
        %3506 = vmatprep.subr.bf16.mxu0 0
        %3507 = vmatpush1.bf16.msra.mxu0 0
        %3508 = vmatprep.subr.bf16.mxu0 0
        %3509 = vmatpush1.bf16.msra.mxu0 0
        %3510 = vmatprep.subr.bf16.mxu0 0
        %3511 = vmatpush1.bf16.msra.mxu0 0
        %3512 = vmatprep.subr.bf16.mxu0 0
        %3513 = vmatpush1.bf16.msra.mxu0 0
        %3514 = vmatprep.subr.bf16.mxu0 0
        %3515 = vmatpush1.bf16.msra.mxu0 0
        %3516 = vmatprep.subr.bf16.mxu0 0
        %3517 = vmatpush1.bf16.msra.mxu0 0
        %3518 = vmatprep.mubr.bf16.mxu0 0
        %3519 = vmatmul.mubr.bf16.gmra.mrb[0].mxu0 %v3484
        %v3520 = vpop.f32.mrb[0].mxu0
        %v3521 = vadd.f32 %v3454, %v3520
        %v3522 = vpop.f32.mrb[0].mxu0
        %v3523 = vpop.f32.mrb[0].mxu0
        %v3524 = vpop.f32.mrb[0].mxu0
        %3525 = vdwg.mxu0
        %v3530 = vunpack.c.l.b16 %v3429
        %v3531 = vunpack.c.l.b16 %v3430
        %v3532 = vunpack.c.l.b16 %v3431
        %v3533 = vunpack.c.l.b16 %v3432
        %v3534 = vpack.c.b16 %v3531, %v3530
        %v3535 = vpack.c.b16 %v3533, %v3532
        %3538 = vmatprep.subr.bf16.mxu0 0
        %3539 = vmatpush1.bf16.msra.mxu0 %v3534
        %3540 = vmatprep.subr.bf16.mxu0 0
        %3541 = vmatpush1.bf16.msra.mxu0 %v3535
        %3542 = vmatprep.subr.bf16.mxu0 0
        %3543 = vmatpush1.bf16.msra.mxu0 0
        %3544 = vmatprep.subr.bf16.mxu0 0
        %3545 = vmatpush1.bf16.msra.mxu0 0
        %3546 = vmatprep.subr.bf16.mxu0 0
        %3547 = vmatpush1.bf16.msra.mxu0 0
        %3548 = vmatprep.subr.bf16.mxu0 0
        %3549 = vmatpush1.bf16.msra.mxu0 0
        %3550 = vmatprep.subr.bf16.mxu0 0
        %3551 = vmatpush1.bf16.msra.mxu0 0
        %3552 = vmatprep.subr.bf16.mxu0 0
        %3553 = vmatpush1.bf16.msra.mxu0 0
        %3554 = vmatprep.subr.bf16.mxu0 0
        %3555 = vmatpush1.bf16.msra.mxu0 0
        %3556 = vmatprep.subr.bf16.mxu0 0
        %3557 = vmatpush1.bf16.msra.mxu0 0
        %3558 = vmatprep.subr.bf16.mxu0 0
        %3559 = vmatpush1.bf16.msra.mxu0 0
        %3560 = vmatprep.subr.bf16.mxu0 0
        %3561 = vmatpush1.bf16.msra.mxu0 0
        %3562 = vmatprep.subr.bf16.mxu0 0
        %3563 = vmatpush1.bf16.msra.mxu0 0
        %3564 = vmatprep.subr.bf16.mxu0 0
        %3565 = vmatpush1.bf16.msra.mxu0 0
        %3566 = vmatprep.subr.bf16.mxu0 0
        %3567 = vmatpush1.bf16.msra.mxu0 0
        %3568 = vmatprep.subr.bf16.mxu0 0
        %3569 = vmatpush1.bf16.msra.mxu0 0
        %3570 = vmatprep.mubr.bf16.mxu0 0
        %3571 = vmatmul.mubr.bf16.gmra.mrb[0].mxu0 %v3484
        %v3572 = vpop.f32.mrb[0].mxu0
        %v3573 = vadd.f32 %v3458, %v3572
        %v3574 = vpop.f32.mrb[0].mxu0
        %v3575 = vpop.f32.mrb[0].mxu0
        %v3576 = vpop.f32.mrb[0].mxu0
        %3577 = vdwg.mxu0
        %v3582 = vunpack.c.l.b16 %v3433
        %v3583 = vunpack.c.l.b16 %v3434
        %v3584 = vunpack.c.l.b16 %v3435
        %v3585 = vunpack.c.l.b16 %v3436
        %v3586 = vpack.c.b16 %v3583, %v3582
        %v3587 = vpack.c.b16 %v3585, %v3584
        %3590 = vmatprep.subr.bf16.mxu0 0
        %3591 = vmatpush1.bf16.msra.mxu0 %v3586
        %3592 = vmatprep.subr.bf16.mxu0 0
        %3593 = vmatpush1.bf16.msra.mxu0 %v3587
        %3594 = vmatprep.subr.bf16.mxu0 0
        %3595 = vmatpush1.bf16.msra.mxu0 0
        %3596 = vmatprep.subr.bf16.mxu0 0
        %3597 = vmatpush1.bf16.msra.mxu0 0
        %3598 = vmatprep.subr.bf16.mxu0 0
        %3599 = vmatpush1.bf16.msra.mxu0 0
        %3600 = vmatprep.subr.bf16.mxu0 0
        %3601 = vmatpush1.bf16.msra.mxu0 0
        %3602 = vmatprep.subr.bf16.mxu0 0
        %3603 = vmatpush1.bf16.msra.mxu0 0
        %3604 = vmatprep.subr.bf16.mxu0 0
        %3605 = vmatpush1.bf16.msra.mxu0 0
        %3606 = vmatprep.subr.bf16.mxu0 0
        %3607 = vmatpush1.bf16.msra.mxu0 0
        %3608 = vmatprep.subr.bf16.mxu0 0
        %3609 = vmatpush1.bf16.msra.mxu0 0
        %3610 = vmatprep.subr.bf16.mxu0 0
        %3611 = vmatpush1.bf16.msra.mxu0 0
        %3612 = vmatprep.subr.bf16.mxu0 0
        %3613 = vmatpush1.bf16.msra.mxu0 0
        %3614 = vmatprep.subr.bf16.mxu0 0
        %3615 = vmatpush1.bf16.msra.mxu0 0
        %3616 = vmatprep.subr.bf16.mxu0 0
        %3617 = vmatpush1.bf16.msra.mxu0 0
        %3618 = vmatprep.subr.bf16.mxu0 0
        %3619 = vmatpush1.bf16.msra.mxu0 0
        %3620 = vmatprep.subr.bf16.mxu0 0
        %3621 = vmatpush1.bf16.msra.mxu0 0
        %3622 = vmatprep.mubr.bf16.mxu0 0
        %3623 = vmatmul.mubr.bf16.gmra.mrb[0].mxu0 %v3484
        %v3624 = vpop.f32.mrb[0].mxu0
        %v3625 = vadd.f32 %v3462, %v3624
        %v3626 = vpop.f32.mrb[0].mxu0
        %v3627 = vpop.f32.mrb[0].mxu0
        %v3628 = vpop.f32.mrb[0].mxu0
        %3629 = vdwg.mxu0
        %v3634 = vunpack.c.l.b16 %v3437
        %v3635 = vunpack.c.l.b16 %v3438
        %v3636 = vunpack.c.l.b16 %v3439
        %v3637 = vunpack.c.l.b16 %v3440
        %v3638 = vpack.c.b16 %v3635, %v3634
        %v3639 = vpack.c.b16 %v3637, %v3636
        %3642 = vmatprep.subr.bf16.mxu0 0
        %3643 = vmatpush1.bf16.msra.mxu0 %v3638
        %3644 = vmatprep.subr.bf16.mxu0 0
        %3645 = vmatpush1.bf16.msra.mxu0 %v3639
        %3646 = vmatprep.subr.bf16.mxu0 0
        %3647 = vmatpush1.bf16.msra.mxu0 0
        %3648 = vmatprep.subr.bf16.mxu0 0
        %3649 = vmatpush1.bf16.msra.mxu0 0
        %3650 = vmatprep.subr.bf16.mxu0 0
        %3651 = vmatpush1.bf16.msra.mxu0 0
        %3652 = vmatprep.subr.bf16.mxu0 0
        %3653 = vmatpush1.bf16.msra.mxu0 0
        %3654 = vmatprep.subr.bf16.mxu0 0
        %3655 = vmatpush1.bf16.msra.mxu0 0
        %3656 = vmatprep.subr.bf16.mxu0 0
        %3657 = vmatpush1.bf16.msra.mxu0 0
        %3658 = vmatprep.subr.bf16.mxu0 0
        %3659 = vmatpush1.bf16.msra.mxu0 0
        %3660 = vmatprep.subr.bf16.mxu0 0
        %3661 = vmatpush1.bf16.msra.mxu0 0
        %3662 = vmatprep.subr.bf16.mxu0 0
        %3663 = vmatpush1.bf16.msra.mxu0 0
        %3664 = vmatprep.subr.bf16.mxu0 0
        %3665 = vmatpush1.bf16.msra.mxu0 0
        %3666 = vmatprep.subr.bf16.mxu0 0
        %3667 = vmatpush1.bf16.msra.mxu0 0
        %3668 = vmatprep.subr.bf16.mxu0 0
        %3669 = vmatpush1.bf16.msra.mxu0 0
        %3670 = vmatprep.subr.bf16.mxu0 0
        %3671 = vmatpush1.bf16.msra.mxu0 0
        %3672 = vmatprep.subr.bf16.mxu0 0
        %3673 = vmatpush1.bf16.msra.mxu0 0
        %3674 = vmatprep.mubr.bf16.mxu0 0
        %3675 = vmatmul.mubr.bf16.gmra.mrb[0].mxu0 %v3484
        %v3676 = vpop.f32.mrb[0].mxu0
        %v3677 = vadd.f32 %v3466, %v3676
        %v3678 = vpop.f32.mrb[0].mxu0
        %v3679 = vpop.f32.mrb[0].mxu0
        %v3680 = vpop.f32.mrb[0].mxu0
        %3681 = vdwg.mxu0
        %s3682 = scalar_lea.vmem %s7, 64
        %v3683 = vld [vmem:[%s3682] sm:$0xf]
        %v3684 = vld [vmem:[%s3682 + $0x4] sm:$0xf]
        %v3685 = vld [vmem:[%s3682 + $0x8] sm:$0xf]
        %v3686 = vld [vmem:[%s3682 + $0xc] sm:$0xf]
        %v3687 = vld [vmem:[%s3682 + $0x10] sm:$0xf]
        %v3688 = vld [vmem:[%s3682 + $0x14] sm:$0xf]
        %v3689 = vld [vmem:[%s3682 + $0x18] sm:$0xf]
        %v3690 = vld [vmem:[%s3682 + $0x1c] sm:$0xf]
        %v3691 = vld [vmem:[%s3682 + $0x20] sm:$0xf]
        %v3692 = vld [vmem:[%s3682 + $0x24] sm:$0xf]
        %v3693 = vld [vmem:[%s3682 + $0x28] sm:$0xf]
        %v3694 = vld [vmem:[%s3682 + $0x2c] sm:$0xf]
        %v3695 = vld [vmem:[%s3682 + $0x30] sm:$0xf]
        %v3696 = vld [vmem:[%s3682 + $0x34] sm:$0xf]
        %v3697 = vld [vmem:[%s3682 + $0x38] sm:$0xf]
        %v3698 = vld [vmem:[%s3682 + $0x3c] sm:$0xf]
        %s3699 = scalar_lea.vmem %s13, 4
        %v3700 = vld [vmem:[%s3699] sm:$0x1]
        %v3701 = vld [vmem:[%s3699 + $0x1] sm:$0x1]
        %v3702 = vld [vmem:[%s3699 + $0x2] sm:$0x1]
        %v3703 = vld [vmem:[%s3699 + $0x3] sm:$0x1]
        %v3708 = vlaneseq
        %v3709 = vshrl.u32 %v3708, 7
        %v3710 = vsub.s32 0, %v3709
        %v3711 = vrot.slane %v3700, %v3710
        %v3712 = vlaneseq
        %v3713 = vshrl.u32 %v3712, 7
        %v3714 = vsub.s32 0, %v3713
        %v3715 = vrot.slane %v3701, %v3714
        %v3716 = vlaneseq
        %v3717 = vshrl.u32 %v3716, 7
        %v3718 = vsub.s32 0, %v3717
        %v3719 = vrot.slane %v3702, %v3718
        %v3720 = vlaneseq
        %v3721 = vshrl.u32 %v3720, 7
        %v3722 = vsub.s32 0, %v3721
        %v3723 = vrot.slane %v3703, %v3722
        %v3732 = vunpack.c.l.b16 %v3683
        %v3733 = vunpack.c.l.b16 %v3684
        %v3734 = vunpack.c.l.b16 %v3685
        %v3735 = vunpack.c.l.b16 %v3686
        %v3736 = vpack.c.b16 %v3733, %v3732
        %v3737 = vpack.c.b16 %v3735, %v3734
        %3740 = vmatprep.subr.bf16.mxu0 0
        %3741 = vmatpush1.bf16.msra.mxu0 %v3736
        %3742 = vmatprep.subr.bf16.mxu0 0
        %3743 = vmatpush1.bf16.msra.mxu0 %v3737
        %3744 = vmatprep.subr.bf16.mxu0 0
        %3745 = vmatpush1.bf16.msra.mxu0 0
        %3746 = vmatprep.subr.bf16.mxu0 0
        %3747 = vmatpush1.bf16.msra.mxu0 0
        %3748 = vmatprep.subr.bf16.mxu0 0
        %3749 = vmatpush1.bf16.msra.mxu0 0
        %3750 = vmatprep.subr.bf16.mxu0 0
        %3751 = vmatpush1.bf16.msra.mxu0 0
        %3752 = vmatprep.subr.bf16.mxu0 0
        %3753 = vmatpush1.bf16.msra.mxu0 0
        %3754 = vmatprep.subr.bf16.mxu0 0
        %3755 = vmatpush1.bf16.msra.mxu0 0
        %3756 = vmatprep.subr.bf16.mxu0 0
        %3757 = vmatpush1.bf16.msra.mxu0 0
        %3758 = vmatprep.subr.bf16.mxu0 0
        %3759 = vmatpush1.bf16.msra.mxu0 0
        %3760 = vmatprep.subr.bf16.mxu0 0
        %3761 = vmatpush1.bf16.msra.mxu0 0
        %3762 = vmatprep.subr.bf16.mxu0 0
        %3763 = vmatpush1.bf16.msra.mxu0 0
        %3764 = vmatprep.subr.bf16.mxu0 0
        %3765 = vmatpush1.bf16.msra.mxu0 0
        %3766 = vmatprep.subr.bf16.mxu0 0
        %3767 = vmatpush1.bf16.msra.mxu0 0
        %3768 = vmatprep.subr.bf16.mxu0 0
        %3769 = vmatpush1.bf16.msra.mxu0 0
        %3770 = vmatprep.subr.bf16.mxu0 0
        %3771 = vmatpush1.bf16.msra.mxu0 0
        %3772 = vmatprep.mubr.bf16.mxu0 0
        %3773 = vmatmul.mubr.bf16.gmra.mrb[0].mxu0 %v3484
        %v3774 = vpop.f32.mrb[0].mxu0
        %v3775 = vadd.f32 %v3711, %v3774
        %v3776 = vpop.f32.mrb[0].mxu0
        %v3777 = vpop.f32.mrb[0].mxu0
        %v3778 = vpop.f32.mrb[0].mxu0
        %3779 = vdwg.mxu0
        %v3784 = vunpack.c.l.b16 %v3687
        %v3785 = vunpack.c.l.b16 %v3688
        %v3786 = vunpack.c.l.b16 %v3689
        %v3787 = vunpack.c.l.b16 %v3690
        %v3788 = vpack.c.b16 %v3785, %v3784
        %v3789 = vpack.c.b16 %v3787, %v3786
        %3792 = vmatprep.subr.bf16.mxu0 0
        %3793 = vmatpush1.bf16.msra.mxu0 %v3788
        %3794 = vmatprep.subr.bf16.mxu0 0
        %3795 = vmatpush1.bf16.msra.mxu0 %v3789
        %3796 = vmatprep.subr.bf16.mxu0 0
        %3797 = vmatpush1.bf16.msra.mxu0 0
        %3798 = vmatprep.subr.bf16.mxu0 0
        %3799 = vmatpush1.bf16.msra.mxu0 0
        %3800 = vmatprep.subr.bf16.mxu0 0
        %3801 = vmatpush1.bf16.msra.mxu0 0
        %3802 = vmatprep.subr.bf16.mxu0 0
        %3803 = vmatpush1.bf16.msra.mxu0 0
        %3804 = vmatprep.subr.bf16.mxu0 0
        %3805 = vmatpush1.bf16.msra.mxu0 0
        %3806 = vmatprep.subr.bf16.mxu0 0
        %3807 = vmatpush1.bf16.msra.mxu0 0
        %3808 = vmatprep.subr.bf16.mxu0 0
        %3809 = vmatpush1.bf16.msra.mxu0 0
        %3810 = vmatprep.subr.bf16.mxu0 0
        %3811 = vmatpush1.bf16.msra.mxu0 0
        %3812 = vmatprep.subr.bf16.mxu0 0
        %3813 = vmatpush1.bf16.msra.mxu0 0
        %3814 = vmatprep.subr.bf16.mxu0 0
        %3815 = vmatpush1.bf16.msra.mxu0 0
        %3816 = vmatprep.subr.bf16.mxu0 0
        %3817 = vmatpush1.bf16.msra.mxu0 0
        %3818 = vmatprep.subr.bf16.mxu0 0
        %3819 = vmatpush1.bf16.msra.mxu0 0
        %3820 = vmatprep.subr.bf16.mxu0 0
        %3821 = vmatpush1.bf16.msra.mxu0 0
        %3822 = vmatprep.subr.bf16.mxu0 0
        %3823 = vmatpush1.bf16.msra.mxu0 0
        %3824 = vmatprep.mubr.bf16.mxu0 0
        %3825 = vmatmul.mubr.bf16.gmra.mrb[0].mxu0 %v3484
        %v3826 = vpop.f32.mrb[0].mxu0
        %v3827 = vadd.f32 %v3715, %v3826
        %v3828 = vpop.f32.mrb[0].mxu0
        %v3829 = vpop.f32.mrb[0].mxu0
        %v3830 = vpop.f32.mrb[0].mxu0
        %3831 = vdwg.mxu0
        %v3836 = vunpack.c.l.b16 %v3691
        %v3837 = vunpack.c.l.b16 %v3692
        %v3838 = vunpack.c.l.b16 %v3693
        %v3839 = vunpack.c.l.b16 %v3694
        %v3840 = vpack.c.b16 %v3837, %v3836
        %v3841 = vpack.c.b16 %v3839, %v3838
        %3844 = vmatprep.subr.bf16.mxu0 0
        %3845 = vmatpush1.bf16.msra.mxu0 %v3840
        %3846 = vmatprep.subr.bf16.mxu0 0
        %3847 = vmatpush1.bf16.msra.mxu0 %v3841
        %3848 = vmatprep.subr.bf16.mxu0 0
        %3849 = vmatpush1.bf16.msra.mxu0 0
        %3850 = vmatprep.subr.bf16.mxu0 0
        %3851 = vmatpush1.bf16.msra.mxu0 0
        %3852 = vmatprep.subr.bf16.mxu0 0
        %3853 = vmatpush1.bf16.msra.mxu0 0
        %3854 = vmatprep.subr.bf16.mxu0 0
        %3855 = vmatpush1.bf16.msra.mxu0 0
        %3856 = vmatprep.subr.bf16.mxu0 0
        %3857 = vmatpush1.bf16.msra.mxu0 0
        %3858 = vmatprep.subr.bf16.mxu0 0
        %3859 = vmatpush1.bf16.msra.mxu0 0
        %3860 = vmatprep.subr.bf16.mxu0 0
        %3861 = vmatpush1.bf16.msra.mxu0 0
        %3862 = vmatprep.subr.bf16.mxu0 0
        %3863 = vmatpush1.bf16.msra.mxu0 0
        %3864 = vmatprep.subr.bf16.mxu0 0
        %3865 = vmatpush1.bf16.msra.mxu0 0
        %3866 = vmatprep.subr.bf16.mxu0 0
        %3867 = vmatpush1.bf16.msra.mxu0 0
        %3868 = vmatprep.subr.bf16.mxu0 0
        %3869 = vmatpush1.bf16.msra.mxu0 0
        %3870 = vmatprep.subr.bf16.mxu0 0
        %3871 = vmatpush1.bf16.msra.mxu0 0
        %3872 = vmatprep.subr.bf16.mxu0 0
        %3873 = vmatpush1.bf16.msra.mxu0 0
        %3874 = vmatprep.subr.bf16.mxu0 0
        %3875 = vmatpush1.bf16.msra.mxu0 0
        %3876 = vmatprep.mubr.bf16.mxu0 0
        %3877 = vmatmul.mubr.bf16.gmra.mrb[0].mxu0 %v3484
        %v3878 = vpop.f32.mrb[0].mxu0
        %v3879 = vadd.f32 %v3719, %v3878
        %v3880 = vpop.f32.mrb[0].mxu0
        %v3881 = vpop.f32.mrb[0].mxu0
        %v3882 = vpop.f32.mrb[0].mxu0
        %3883 = vdwg.mxu0
        %v3888 = vunpack.c.l.b16 %v3695
        %v3889 = vunpack.c.l.b16 %v3696
        %v3890 = vunpack.c.l.b16 %v3697
        %v3891 = vunpack.c.l.b16 %v3698
        %v3892 = vpack.c.b16 %v3889, %v3888
        %v3893 = vpack.c.b16 %v3891, %v3890
        %3896 = vmatprep.subr.bf16.mxu0 0
        %3897 = vmatpush1.bf16.msra.mxu0 %v3892
        %3898 = vmatprep.subr.bf16.mxu0 0
        %3899 = vmatpush1.bf16.msra.mxu0 %v3893
        %3900 = vmatprep.subr.bf16.mxu0 0
        %3901 = vmatpush1.bf16.msra.mxu0 0
        %3902 = vmatprep.subr.bf16.mxu0 0
        %3903 = vmatpush1.bf16.msra.mxu0 0
        %3904 = vmatprep.subr.bf16.mxu0 0
        %3905 = vmatpush1.bf16.msra.mxu0 0
        %3906 = vmatprep.subr.bf16.mxu0 0
        %3907 = vmatpush1.bf16.msra.mxu0 0
        %3908 = vmatprep.subr.bf16.mxu0 0
        %3909 = vmatpush1.bf16.msra.mxu0 0
        %3910 = vmatprep.subr.bf16.mxu0 0
        %3911 = vmatpush1.bf16.msra.mxu0 0
        %3912 = vmatprep.subr.bf16.mxu0 0
        %3913 = vmatpush1.bf16.msra.mxu0 0
        %3914 = vmatprep.subr.bf16.mxu0 0
        %3915 = vmatpush1.bf16.msra.mxu0 0
        %3916 = vmatprep.subr.bf16.mxu0 0
        %3917 = vmatpush1.bf16.msra.mxu0 0
        %3918 = vmatprep.subr.bf16.mxu0 0
        %3919 = vmatpush1.bf16.msra.mxu0 0
        %3920 = vmatprep.subr.bf16.mxu0 0
        %3921 = vmatpush1.bf16.msra.mxu0 0
        %3922 = vmatprep.subr.bf16.mxu0 0
        %3923 = vmatpush1.bf16.msra.mxu0 0
        %3924 = vmatprep.subr.bf16.mxu0 0
        %3925 = vmatpush1.bf16.msra.mxu0 0
        %3926 = vmatprep.subr.bf16.mxu0 0
        %3927 = vmatpush1.bf16.msra.mxu0 0
        %3928 = vmatprep.mubr.bf16.mxu0 0
        %3929 = vmatmul.mubr.bf16.gmra.mrb[0].mxu0 %v3484
        %v3930 = vpop.f32.mrb[0].mxu0
        %v3931 = vadd.f32 %v3723, %v3930
        %v3932 = vpop.f32.mrb[0].mxu0
        %v3933 = vpop.f32.mrb[0].mxu0
        %v3934 = vpop.f32.mrb[0].mxu0
        %3935 = vdwg.mxu0
        %s3936 = scalar_lea.vmem %s9, 64
        %v3937 = vld [vmem:[%s3936] sm:$0xf]
        %v3938 = vld [vmem:[%s3936 + $0x4] sm:$0xf]
        %v3939 = vld [vmem:[%s3936 + $0x8] sm:$0xf]
        %v3940 = vld [vmem:[%s3936 + $0xc] sm:$0xf]
        %v3941 = vld [vmem:[%s3936 + $0x10] sm:$0xf]
        %v3942 = vld [vmem:[%s3936 + $0x14] sm:$0xf]
        %v3943 = vld [vmem:[%s3936 + $0x18] sm:$0xf]
        %v3944 = vld [vmem:[%s3936 + $0x1c] sm:$0xf]
        %v3945 = vld [vmem:[%s3936 + $0x20] sm:$0xf]
        %v3946 = vld [vmem:[%s3936 + $0x24] sm:$0xf]
        %v3947 = vld [vmem:[%s3936 + $0x28] sm:$0xf]
        %v3948 = vld [vmem:[%s3936 + $0x2c] sm:$0xf]
        %v3949 = vld [vmem:[%s3936 + $0x30] sm:$0xf]
        %v3950 = vld [vmem:[%s3936 + $0x34] sm:$0xf]
        %v3951 = vld [vmem:[%s3936 + $0x38] sm:$0xf]
        %v3952 = vld [vmem:[%s3936 + $0x3c] sm:$0xf]
        %s3953 = scalar_lea.vmem %s15, 4
        %v3954 = vld [vmem:[%s3953] sm:$0x1]
        %v3955 = vld [vmem:[%s3953 + $0x1] sm:$0x1]
        %v3956 = vld [vmem:[%s3953 + $0x2] sm:$0x1]
        %v3957 = vld [vmem:[%s3953 + $0x3] sm:$0x1]
        %v3962 = vlaneseq
        %v3963 = vshrl.u32 %v3962, 7
        %v3964 = vsub.s32 0, %v3963
        %v3965 = vrot.slane %v3954, %v3964
        %v3966 = vlaneseq
        %v3967 = vshrl.u32 %v3966, 7
        %v3968 = vsub.s32 0, %v3967
        %v3969 = vrot.slane %v3955, %v3968
        %v3970 = vlaneseq
        %v3971 = vshrl.u32 %v3970, 7
        %v3972 = vsub.s32 0, %v3971
        %v3973 = vrot.slane %v3956, %v3972
        %v3974 = vlaneseq
        %v3975 = vshrl.u32 %v3974, 7
        %v3976 = vsub.s32 0, %v3975
        %v3977 = vrot.slane %v3957, %v3976
        %v3986 = vunpack.c.l.b16 %v3937
        %v3987 = vunpack.c.l.b16 %v3938
        %v3988 = vunpack.c.l.b16 %v3939
        %v3989 = vunpack.c.l.b16 %v3940
        %v3990 = vpack.c.b16 %v3987, %v3986
        %v3991 = vpack.c.b16 %v3989, %v3988
        %3994 = vmatprep.subr.bf16.mxu0 0
        %3995 = vmatpush1.bf16.msra.mxu0 %v3990
        %3996 = vmatprep.subr.bf16.mxu0 0
        %3997 = vmatpush1.bf16.msra.mxu0 %v3991
        %3998 = vmatprep.subr.bf16.mxu0 0
        %3999 = vmatpush1.bf16.msra.mxu0 0
        %4000 = vmatprep.subr.bf16.mxu0 0
        %4001 = vmatpush1.bf16.msra.mxu0 0
        %4002 = vmatprep.subr.bf16.mxu0 0
        %4003 = vmatpush1.bf16.msra.mxu0 0
        %4004 = vmatprep.subr.bf16.mxu0 0
        %4005 = vmatpush1.bf16.msra.mxu0 0
        %4006 = vmatprep.subr.bf16.mxu0 0
        %4007 = vmatpush1.bf16.msra.mxu0 0
        %4008 = vmatprep.subr.bf16.mxu0 0
        %4009 = vmatpush1.bf16.msra.mxu0 0
        %4010 = vmatprep.subr.bf16.mxu0 0
        %4011 = vmatpush1.bf16.msra.mxu0 0
        %4012 = vmatprep.subr.bf16.mxu0 0
        %4013 = vmatpush1.bf16.msra.mxu0 0
        %4014 = vmatprep.subr.bf16.mxu0 0
        %4015 = vmatpush1.bf16.msra.mxu0 0
        %4016 = vmatprep.subr.bf16.mxu0 0
        %4017 = vmatpush1.bf16.msra.mxu0 0
        %4018 = vmatprep.subr.bf16.mxu0 0
        %4019 = vmatpush1.bf16.msra.mxu0 0
        %4020 = vmatprep.subr.bf16.mxu0 0
        %4021 = vmatpush1.bf16.msra.mxu0 0
        %4022 = vmatprep.subr.bf16.mxu0 0
        %4023 = vmatpush1.bf16.msra.mxu0 0
        %4024 = vmatprep.subr.bf16.mxu0 0
        %4025 = vmatpush1.bf16.msra.mxu0 0
        %4026 = vmatprep.mubr.bf16.mxu0 0
        %4027 = vmatmul.mubr.bf16.gmra.mrb[0].mxu0 %v3484
        %v4028 = vpop.f32.mrb[0].mxu0
        %v4029 = vadd.f32 %v3965, %v4028
        %v4030 = vpop.f32.mrb[0].mxu0
        %v4031 = vpop.f32.mrb[0].mxu0
        %v4032 = vpop.f32.mrb[0].mxu0
        %4033 = vdwg.mxu0
        %v4038 = vunpack.c.l.b16 %v3941
        %v4039 = vunpack.c.l.b16 %v3942
        %v4040 = vunpack.c.l.b16 %v3943
        %v4041 = vunpack.c.l.b16 %v3944
        %v4042 = vpack.c.b16 %v4039, %v4038
        %v4043 = vpack.c.b16 %v4041, %v4040
        %4046 = vmatprep.subr.bf16.mxu0 0
        %4047 = vmatpush1.bf16.msra.mxu0 %v4042
        %4048 = vmatprep.subr.bf16.mxu0 0
        %4049 = vmatpush1.bf16.msra.mxu0 %v4043
        %4050 = vmatprep.subr.bf16.mxu0 0
        %4051 = vmatpush1.bf16.msra.mxu0 0
        %4052 = vmatprep.subr.bf16.mxu0 0
        %4053 = vmatpush1.bf16.msra.mxu0 0
        %4054 = vmatprep.subr.bf16.mxu0 0
        %4055 = vmatpush1.bf16.msra.mxu0 0
        %4056 = vmatprep.subr.bf16.mxu0 0
        %4057 = vmatpush1.bf16.msra.mxu0 0
        %4058 = vmatprep.subr.bf16.mxu0 0
        %4059 = vmatpush1.bf16.msra.mxu0 0
        %4060 = vmatprep.subr.bf16.mxu0 0
        %4061 = vmatpush1.bf16.msra.mxu0 0
        %4062 = vmatprep.subr.bf16.mxu0 0
        %4063 = vmatpush1.bf16.msra.mxu0 0
        %4064 = vmatprep.subr.bf16.mxu0 0
        %4065 = vmatpush1.bf16.msra.mxu0 0
        %4066 = vmatprep.subr.bf16.mxu0 0
        %4067 = vmatpush1.bf16.msra.mxu0 0
        %4068 = vmatprep.subr.bf16.mxu0 0
        %4069 = vmatpush1.bf16.msra.mxu0 0
        %4070 = vmatprep.subr.bf16.mxu0 0
        %4071 = vmatpush1.bf16.msra.mxu0 0
        %4072 = vmatprep.subr.bf16.mxu0 0
        %4073 = vmatpush1.bf16.msra.mxu0 0
        %4074 = vmatprep.subr.bf16.mxu0 0
        %4075 = vmatpush1.bf16.msra.mxu0 0
        %4076 = vmatprep.subr.bf16.mxu0 0
        %4077 = vmatpush1.bf16.msra.mxu0 0
        %4078 = vmatprep.mubr.bf16.mxu0 0
        %4079 = vmatmul.mubr.bf16.gmra.mrb[0].mxu0 %v3484
        %v4080 = vpop.f32.mrb[0].mxu0
        %v4081 = vadd.f32 %v3969, %v4080
        %v4082 = vpop.f32.mrb[0].mxu0
        %v4083 = vpop.f32.mrb[0].mxu0
        %v4084 = vpop.f32.mrb[0].mxu0
        %4085 = vdwg.mxu0
        %v4090 = vunpack.c.l.b16 %v3945
        %v4091 = vunpack.c.l.b16 %v3946
        %v4092 = vunpack.c.l.b16 %v3947
        %v4093 = vunpack.c.l.b16 %v3948
        %v4094 = vpack.c.b16 %v4091, %v4090
        %v4095 = vpack.c.b16 %v4093, %v4092
        %4098 = vmatprep.subr.bf16.mxu0 0
        %4099 = vmatpush1.bf16.msra.mxu0 %v4094
        %4100 = vmatprep.subr.bf16.mxu0 0
        %4101 = vmatpush1.bf16.msra.mxu0 %v4095
        %4102 = vmatprep.subr.bf16.mxu0 0
        %4103 = vmatpush1.bf16.msra.mxu0 0
        %4104 = vmatprep.subr.bf16.mxu0 0
        %4105 = vmatpush1.bf16.msra.mxu0 0
        %4106 = vmatprep.subr.bf16.mxu0 0
        %4107 = vmatpush1.bf16.msra.mxu0 0
        %4108 = vmatprep.subr.bf16.mxu0 0
        %4109 = vmatpush1.bf16.msra.mxu0 0
        %4110 = vmatprep.subr.bf16.mxu0 0
        %4111 = vmatpush1.bf16.msra.mxu0 0
        %4112 = vmatprep.subr.bf16.mxu0 0
        %4113 = vmatpush1.bf16.msra.mxu0 0
        %4114 = vmatprep.subr.bf16.mxu0 0
        %4115 = vmatpush1.bf16.msra.mxu0 0
        %4116 = vmatprep.subr.bf16.mxu0 0
        %4117 = vmatpush1.bf16.msra.mxu0 0
        %4118 = vmatprep.subr.bf16.mxu0 0
        %4119 = vmatpush1.bf16.msra.mxu0 0
        %4120 = vmatprep.subr.bf16.mxu0 0
        %4121 = vmatpush1.bf16.msra.mxu0 0
        %4122 = vmatprep.subr.bf16.mxu0 0
        %4123 = vmatpush1.bf16.msra.mxu0 0
        %4124 = vmatprep.subr.bf16.mxu0 0
        %4125 = vmatpush1.bf16.msra.mxu0 0
        %4126 = vmatprep.subr.bf16.mxu0 0
        %4127 = vmatpush1.bf16.msra.mxu0 0
        %4128 = vmatprep.subr.bf16.mxu0 0
        %4129 = vmatpush1.bf16.msra.mxu0 0
        %4130 = vmatprep.mubr.bf16.mxu0 0
        %4131 = vmatmul.mubr.bf16.gmra.mrb[0].mxu0 %v3484
        %v4132 = vpop.f32.mrb[0].mxu0
        %v4133 = vadd.f32 %v3973, %v4132
        %v4134 = vpop.f32.mrb[0].mxu0
        %v4135 = vpop.f32.mrb[0].mxu0
        %v4136 = vpop.f32.mrb[0].mxu0
        %4137 = vdwg.mxu0
        %v4142 = vunpack.c.l.b16 %v3949
        %v4143 = vunpack.c.l.b16 %v3950
        %v4144 = vunpack.c.l.b16 %v3951
        %v4145 = vunpack.c.l.b16 %v3952
        %v4146 = vpack.c.b16 %v4143, %v4142
        %v4147 = vpack.c.b16 %v4145, %v4144
        %4150 = vmatprep.subr.bf16.mxu0 0
        %4151 = vmatpush1.bf16.msra.mxu0 %v4146
        %4152 = vmatprep.subr.bf16.mxu0 0
        %4153 = vmatpush1.bf16.msra.mxu0 %v4147
        %4154 = vmatprep.subr.bf16.mxu0 0
        %4155 = vmatpush1.bf16.msra.mxu0 0
        %4156 = vmatprep.subr.bf16.mxu0 0
        %4157 = vmatpush1.bf16.msra.mxu0 0
        %4158 = vmatprep.subr.bf16.mxu0 0
        %4159 = vmatpush1.bf16.msra.mxu0 0
        %4160 = vmatprep.subr.bf16.mxu0 0
        %4161 = vmatpush1.bf16.msra.mxu0 0
        %4162 = vmatprep.subr.bf16.mxu0 0
        %4163 = vmatpush1.bf16.msra.mxu0 0
        %4164 = vmatprep.subr.bf16.mxu0 0
        %4165 = vmatpush1.bf16.msra.mxu0 0
        %4166 = vmatprep.subr.bf16.mxu0 0
        %4167 = vmatpush1.bf16.msra.mxu0 0
        %4168 = vmatprep.subr.bf16.mxu0 0
        %4169 = vmatpush1.bf16.msra.mxu0 0
        %4170 = vmatprep.subr.bf16.mxu0 0
        %4171 = vmatpush1.bf16.msra.mxu0 0
        %4172 = vmatprep.subr.bf16.mxu0 0
        %4173 = vmatpush1.bf16.msra.mxu0 0
        %4174 = vmatprep.subr.bf16.mxu0 0
        %4175 = vmatpush1.bf16.msra.mxu0 0
        %4176 = vmatprep.subr.bf16.mxu0 0
        %4177 = vmatpush1.bf16.msra.mxu0 0
        %4178 = vmatprep.subr.bf16.mxu0 0
        %4179 = vmatpush1.bf16.msra.mxu0 0
        %4180 = vmatprep.subr.bf16.mxu0 0
        %4181 = vmatpush1.bf16.msra.mxu0 0
        %4182 = vmatprep.mubr.bf16.mxu0 0
        %4183 = vmatmul.mubr.bf16.gmra.mrb[0].mxu0 %v3484
        %v4184 = vpop.f32.mrb[0].mxu0
        %v4185 = vadd.f32 %v3977, %v4184
        %v4186 = vpop.f32.mrb[0].mxu0
        %v4187 = vpop.f32.mrb[0].mxu0
        %v4188 = vpop.f32.mrb[0].mxu0
        %4189 = vdwg.mxu0
        %v4190 = vpack.c.bf16 %v3521, %v3521
        %v4191 = vpack.c.bf16 %v3573, %v3573
        %v4192 = vpack.c.bf16 %v3625, %v3625
        %v4193 = vpack.c.bf16 %v3677, %v3677
        %v4194 = vpack.c.bf16 %v3775, %v3775
        %v4195 = vpack.c.bf16 %v3827, %v3827
        %v4196 = vpack.c.bf16 %v3879, %v3879
        %v4197 = vpack.c.bf16 %v3931, %v3931
        %v4199 = vsel %vm1894, %v4190, 0
        %v4202 = vsel %vm1894, %v4194, 0
        %4204 = vmatprep.subr.bf16.mxu0 0
        %4205 = vmatpush1.bf16.xpose.msra.mxu0 %v4202
        %4206 = vmatprep.subr.bf16.mxu0 0
        %4207 = vmatpush1.bf16.xpose.msra.mxu0 0
        %4208 = vmatprep.subr.bf16.mxu0 0
        %4209 = vmatpush1.bf16.xpose.msra.mxu0 0
        %4210 = vmatprep.subr.bf16.mxu0 0
        %4211 = vmatpush1.bf16.xpose.msra.mxu0 0
        %4212 = vmatprep.subr.bf16.mxu0 0
        %4213 = vmatpush1.bf16.xpose.msra.mxu0 0
        %4214 = vmatprep.subr.bf16.mxu0 0
        %4215 = vmatpush1.bf16.xpose.msra.mxu0 0
        %4216 = vmatprep.subr.bf16.mxu0 0
        %4217 = vmatpush1.bf16.xpose.msra.mxu0 0
        %4218 = vmatprep.subr.bf16.mxu0 0
        %4219 = vmatpush1.bf16.xpose.msra.mxu0 0
        %4220 = vmatprep.subr.bf16.mxu0 0
        %4221 = vmatpush1.bf16.xpose.msra.mxu0 0
        %4222 = vmatprep.subr.bf16.mxu0 0
        %4223 = vmatpush1.bf16.xpose.msra.mxu0 0
        %4224 = vmatprep.subr.bf16.mxu0 0
        %4225 = vmatpush1.bf16.xpose.msra.mxu0 0
        %4226 = vmatprep.subr.bf16.mxu0 0
        %4227 = vmatpush1.bf16.xpose.msra.mxu0 0
        %4228 = vmatprep.subr.bf16.mxu0 0
        %4229 = vmatpush1.bf16.xpose.msra.mxu0 0
        %4230 = vmatprep.subr.bf16.mxu0 0
        %4231 = vmatpush1.bf16.xpose.msra.mxu0 0
        %4232 = vmatprep.subr.bf16.mxu0 0
        %4233 = vmatpush1.bf16.xpose.msra.mxu0 0
        %4234 = vmatprep.subr.bf16.mxu0 0
        %4235 = vmatpush1.bf16.xpose.msra.mxu0 0
        %4236 = vmatprep.mubr.bf16.mxu0 0
        %4237 = vmatmul.mubr.bf16.gmra.mrb[0].mxu0 %v4199
        %v4238 = vpop.f32.mrb[0].mxu0
        %v4239 = vadd.f32 0.0, %v4238
        %v4240 = vpop.f32.mrb[0].mxu0
        %v4241 = vpop.f32.mrb[0].mxu0
        %v4242 = vpop.f32.mrb[0].mxu0
        %4243 = vdwg.mxu0
        %v4245 = vsel %vm1894, %v4191, 0
        %v4248 = vsel %vm1894, %v4195, 0
        %4250 = vmatprep.subr.bf16.mxu0 0
        %4251 = vmatpush1.bf16.xpose.msra.mxu0 %v4248
        %4252 = vmatprep.subr.bf16.mxu0 0
        %4253 = vmatpush1.bf16.xpose.msra.mxu0 0
        %4254 = vmatprep.subr.bf16.mxu0 0
        %4255 = vmatpush1.bf16.xpose.msra.mxu0 0
        %4256 = vmatprep.subr.bf16.mxu0 0
        %4257 = vmatpush1.bf16.xpose.msra.mxu0 0
        %4258 = vmatprep.subr.bf16.mxu0 0
        %4259 = vmatpush1.bf16.xpose.msra.mxu0 0
        %4260 = vmatprep.subr.bf16.mxu0 0
        %4261 = vmatpush1.bf16.xpose.msra.mxu0 0
        %4262 = vmatprep.subr.bf16.mxu0 0
        %4263 = vmatpush1.bf16.xpose.msra.mxu0 0
        %4264 = vmatprep.subr.bf16.mxu0 0
        %4265 = vmatpush1.bf16.xpose.msra.mxu0 0
        %4266 = vmatprep.subr.bf16.mxu0 0
        %4267 = vmatpush1.bf16.xpose.msra.mxu0 0
        %4268 = vmatprep.subr.bf16.mxu0 0
        %4269 = vmatpush1.bf16.xpose.msra.mxu0 0
        %4270 = vmatprep.subr.bf16.mxu0 0
        %4271 = vmatpush1.bf16.xpose.msra.mxu0 0
        %4272 = vmatprep.subr.bf16.mxu0 0
        %4273 = vmatpush1.bf16.xpose.msra.mxu0 0
        %4274 = vmatprep.subr.bf16.mxu0 0
        %4275 = vmatpush1.bf16.xpose.msra.mxu0 0
        %4276 = vmatprep.subr.bf16.mxu0 0
        %4277 = vmatpush1.bf16.xpose.msra.mxu0 0
        %4278 = vmatprep.subr.bf16.mxu0 0
        %4279 = vmatpush1.bf16.xpose.msra.mxu0 0
        %4280 = vmatprep.subr.bf16.mxu0 0
        %4281 = vmatpush1.bf16.xpose.msra.mxu0 0
        %4282 = vmatprep.mubr.bf16.mxu0 0
        %4283 = vmatmul.mubr.bf16.gmra.mrb[0].mxu0 %v4245
        %v4284 = vpop.f32.mrb[0].mxu0
        %v4285 = vadd.f32 0.0, %v4284
        %v4286 = vpop.f32.mrb[0].mxu0
        %v4287 = vpop.f32.mrb[0].mxu0
        %v4288 = vpop.f32.mrb[0].mxu0
        %4289 = vdwg.mxu0
        %v4291 = vsel %vm1894, %v4192, 0
        %v4294 = vsel %vm1894, %v4196, 0
        %4296 = vmatprep.subr.bf16.mxu0 0
        %4297 = vmatpush1.bf16.xpose.msra.mxu0 %v4294
        %4298 = vmatprep.subr.bf16.mxu0 0
        %4299 = vmatpush1.bf16.xpose.msra.mxu0 0
        %4300 = vmatprep.subr.bf16.mxu0 0
        %4301 = vmatpush1.bf16.xpose.msra.mxu0 0
        %4302 = vmatprep.subr.bf16.mxu0 0
        %4303 = vmatpush1.bf16.xpose.msra.mxu0 0
        %4304 = vmatprep.subr.bf16.mxu0 0
        %4305 = vmatpush1.bf16.xpose.msra.mxu0 0
        %4306 = vmatprep.subr.bf16.mxu0 0
        %4307 = vmatpush1.bf16.xpose.msra.mxu0 0
        %4308 = vmatprep.subr.bf16.mxu0 0
        %4309 = vmatpush1.bf16.xpose.msra.mxu0 0
        %4310 = vmatprep.subr.bf16.mxu0 0
        %4311 = vmatpush1.bf16.xpose.msra.mxu0 0
        %4312 = vmatprep.subr.bf16.mxu0 0
        %4313 = vmatpush1.bf16.xpose.msra.mxu0 0
        %4314 = vmatprep.subr.bf16.mxu0 0
        %4315 = vmatpush1.bf16.xpose.msra.mxu0 0
        %4316 = vmatprep.subr.bf16.mxu0 0
        %4317 = vmatpush1.bf16.xpose.msra.mxu0 0
        %4318 = vmatprep.subr.bf16.mxu0 0
        %4319 = vmatpush1.bf16.xpose.msra.mxu0 0
        %4320 = vmatprep.subr.bf16.mxu0 0
        %4321 = vmatpush1.bf16.xpose.msra.mxu0 0
        %4322 = vmatprep.subr.bf16.mxu0 0
        %4323 = vmatpush1.bf16.xpose.msra.mxu0 0
        %4324 = vmatprep.subr.bf16.mxu0 0
        %4325 = vmatpush1.bf16.xpose.msra.mxu0 0
        %4326 = vmatprep.subr.bf16.mxu0 0
        %4327 = vmatpush1.bf16.xpose.msra.mxu0 0
        %4328 = vmatprep.mubr.bf16.mxu0 0
        %4329 = vmatmul.mubr.bf16.gmra.mrb[0].mxu0 %v4291
        %v4330 = vpop.f32.mrb[0].mxu0
        %v4331 = vadd.f32 0.0, %v4330
        %v4332 = vpop.f32.mrb[0].mxu0
        %v4333 = vpop.f32.mrb[0].mxu0
        %v4334 = vpop.f32.mrb[0].mxu0
        %4335 = vdwg.mxu0
        %v4337 = vsel %vm1894, %v4193, 0
        %v4340 = vsel %vm1894, %v4197, 0
        %4342 = vmatprep.subr.bf16.mxu0 0
        %4343 = vmatpush1.bf16.xpose.msra.mxu0 %v4340
        %4344 = vmatprep.subr.bf16.mxu0 0
        %4345 = vmatpush1.bf16.xpose.msra.mxu0 0
        %4346 = vmatprep.subr.bf16.mxu0 0
        %4347 = vmatpush1.bf16.xpose.msra.mxu0 0
        %4348 = vmatprep.subr.bf16.mxu0 0
        %4349 = vmatpush1.bf16.xpose.msra.mxu0 0
        %4350 = vmatprep.subr.bf16.mxu0 0
        %4351 = vmatpush1.bf16.xpose.msra.mxu0 0
        %4352 = vmatprep.subr.bf16.mxu0 0
        %4353 = vmatpush1.bf16.xpose.msra.mxu0 0
        %4354 = vmatprep.subr.bf16.mxu0 0
        %4355 = vmatpush1.bf16.xpose.msra.mxu0 0
        %4356 = vmatprep.subr.bf16.mxu0 0
        %4357 = vmatpush1.bf16.xpose.msra.mxu0 0
        %4358 = vmatprep.subr.bf16.mxu0 0
        %4359 = vmatpush1.bf16.xpose.msra.mxu0 0
        %4360 = vmatprep.subr.bf16.mxu0 0
        %4361 = vmatpush1.bf16.xpose.msra.mxu0 0
        %4362 = vmatprep.subr.bf16.mxu0 0
        %4363 = vmatpush1.bf16.xpose.msra.mxu0 0
        %4364 = vmatprep.subr.bf16.mxu0 0
        %4365 = vmatpush1.bf16.xpose.msra.mxu0 0
        %4366 = vmatprep.subr.bf16.mxu0 0
        %4367 = vmatpush1.bf16.xpose.msra.mxu0 0
        %4368 = vmatprep.subr.bf16.mxu0 0
        %4369 = vmatpush1.bf16.xpose.msra.mxu0 0
        %4370 = vmatprep.subr.bf16.mxu0 0
        %4371 = vmatpush1.bf16.xpose.msra.mxu0 0
        %4372 = vmatprep.subr.bf16.mxu0 0
        %4373 = vmatpush1.bf16.xpose.msra.mxu0 0
        %4374 = vmatprep.mubr.bf16.mxu0 0
        %4375 = vmatmul.mubr.bf16.gmra.mrb[0].mxu0 %v4337
        %v4376 = vpop.f32.mrb[0].mxu0
        %v4377 = vadd.f32 0.0, %v4376
        %v4378 = vpop.f32.mrb[0].mxu0
        %v4379 = vpop.f32.mrb[0].mxu0
        %v4380 = vpop.f32.mrb[0].mxu0
        %4381 = vdwg.mxu0
        %v4382 = vmul.f32 %v4239, 0.35355338
        %v4383 = vmul.f32 %v4285, 0.35355338
        %v4384 = vmul.f32 %v4331, 0.35355338
        %v4385 = vmul.f32 %v4377, 0.35355338
        %v4386 = vadd.f32 %v4382, %v1124
        %v4387 = vadd.f32 %v4383, %v1124
        %v4388 = vadd.f32 %v4384, %v1124
        %v4389 = vadd.f32 %v4385, %v1124
        %v4390 = vsel %vm1894, %v4386, -inf
        %4391 = vmax.xlane.f32.xlu0 %v4390
        %v4392 = vpop.xlane.xlu0 %4391
        %v4393 = vsel %vm1894, %v4387, -inf
        %4394 = vmax.xlane.f32.xlu0 %v4393
        %v4395 = vpop.xlane.xlu0 %4394
        %v4396 = vsel %vm1894, %v4388, -inf
        %4397 = vmax.xlane.f32.xlu0 %v4396
        %v4398 = vpop.xlane.xlu0 %4397
        %v4399 = vsel %vm1894, %v4389, -inf
        %4400 = vmax.xlane.f32.xlu0 %v4399
        %v4401 = vpop.xlane.xlu0 %4400
        %v4402 = vsub.f32 %v4386, %v4392
        %v4403 = vsub.f32 %v4387, %v4395
        %v4404 = vsub.f32 %v4388, %v4398
        %v4405 = vsub.f32 %v4389, %v4401
        %v4406 = vmul.f32 %v4402, 1.442695
        %v4407 = vpow.pop %v4406
        %v4408 = vmul.f32 %v4403, 1.442695
        %v4409 = vpow.pop %v4408
        %v4410 = vmul.f32 %v4404, 1.442695
        %v4411 = vpow.pop %v4410
        %v4412 = vmul.f32 %v4405, 1.442695
        %v4413 = vpow.pop %v4412
        %v4414 = vsel %vm1894, %v4407, 0.0
        %4415 = vadd.xlane.f32.xlu0 %v4414
        %v4416 = vpop.xlane.xlu0 %4415
        %v4417 = vsel %vm1894, %v4409, 0.0
        %4418 = vadd.xlane.f32.xlu0 %v4417
        %v4419 = vpop.xlane.xlu0 %4418
        %v4420 = vsel %vm1894, %v4411, 0.0
        %4421 = vadd.xlane.f32.xlu0 %v4420
        %v4422 = vpop.xlane.xlu0 %4421
        %v4423 = vsel %vm1894, %v4413, 0.0
        %4424 = vadd.xlane.f32.xlu0 %v4423
        %v4425 = vpop.xlane.xlu0 %4424
        %v4426 = vrcp.pop %v4416
        %v4427 = vrcp.pop %v4419
        %v4428 = vrcp.pop %v4422
        %v4429 = vrcp.pop %v4425
        %v4430 = vmul.f32 %v4407, %v4426
        %v4431 = vmul.f32 %v4409, %v4427
        %v4432 = vmul.f32 %v4411, %v4428
        %v4433 = vmul.f32 %v4413, %v4429
        %v4434 = vpack.c.bf16 %v4430, %v4430
        %v4435 = vpack.c.bf16 %v4431, %v4431
        %v4436 = vpack.c.bf16 %v4432, %v4432
        %v4437 = vpack.c.bf16 %v4433, %v4433
        %v4438 = vpack.c.bf16 %v4029, %v4029
        %v4439 = vpack.c.bf16 %v4081, %v4081
        %v4440 = vpack.c.bf16 %v4133, %v4133
        %v4441 = vpack.c.bf16 %v4185, %v4185
        %v4443 = vsel %vm1894, %v4434, 0
        %v4446 = vsel %vm2142, %v4438, 0
        %4448 = vmatprep.subr.bf16.mxu0 0
        %4449 = vmatpush1.bf16.msra.mxu0 %v4446
        %4450 = vmatprep.subr.bf16.mxu0 0
        %4451 = vmatpush1.bf16.msra.mxu0 0
        %4452 = vmatprep.subr.bf16.mxu0 0
        %4453 = vmatpush1.bf16.msra.mxu0 0
        %4454 = vmatprep.subr.bf16.mxu0 0
        %4455 = vmatpush1.bf16.msra.mxu0 0
        %4456 = vmatprep.subr.bf16.mxu0 0
        %4457 = vmatpush1.bf16.msra.mxu0 0
        %4458 = vmatprep.subr.bf16.mxu0 0
        %4459 = vmatpush1.bf16.msra.mxu0 0
        %4460 = vmatprep.subr.bf16.mxu0 0
        %4461 = vmatpush1.bf16.msra.mxu0 0
        %4462 = vmatprep.subr.bf16.mxu0 0
        %4463 = vmatpush1.bf16.msra.mxu0 0
        %4464 = vmatprep.subr.bf16.mxu0 0
        %4465 = vmatpush1.bf16.msra.mxu0 0
        %4466 = vmatprep.subr.bf16.mxu0 0
        %4467 = vmatpush1.bf16.msra.mxu0 0
        %4468 = vmatprep.subr.bf16.mxu0 0
        %4469 = vmatpush1.bf16.msra.mxu0 0
        %4470 = vmatprep.subr.bf16.mxu0 0
        %4471 = vmatpush1.bf16.msra.mxu0 0
        %4472 = vmatprep.subr.bf16.mxu0 0
        %4473 = vmatpush1.bf16.msra.mxu0 0
        %4474 = vmatprep.subr.bf16.mxu0 0
        %4475 = vmatpush1.bf16.msra.mxu0 0
        %4476 = vmatprep.subr.bf16.mxu0 0
        %4477 = vmatpush1.bf16.msra.mxu0 0
        %4478 = vmatprep.subr.bf16.mxu0 0
        %4479 = vmatpush1.bf16.msra.mxu0 0
        %4480 = vmatprep.mubr.bf16.mxu0 0
        %4481 = vmatmul.mubr.bf16.gmra.mrb[0].mxu0 %v4443
        %v4482 = vpop.f32.mrb[0].mxu0
        %v4483 = vadd.f32 0.0, %v4482
        %v4484 = vpop.f32.mrb[0].mxu0
        %v4485 = vpop.f32.mrb[0].mxu0
        %v4486 = vpop.f32.mrb[0].mxu0
        %4487 = vdwg.mxu0
        %v4489 = vsel %vm1894, %v4435, 0
        %v4492 = vsel %vm2142, %v4439, 0
        %4494 = vmatprep.subr.bf16.mxu0 0
        %4495 = vmatpush1.bf16.msra.mxu0 %v4492
        %4496 = vmatprep.subr.bf16.mxu0 0
        %4497 = vmatpush1.bf16.msra.mxu0 0
        %4498 = vmatprep.subr.bf16.mxu0 0
        %4499 = vmatpush1.bf16.msra.mxu0 0
        %4500 = vmatprep.subr.bf16.mxu0 0
        %4501 = vmatpush1.bf16.msra.mxu0 0
        %4502 = vmatprep.subr.bf16.mxu0 0
        %4503 = vmatpush1.bf16.msra.mxu0 0
        %4504 = vmatprep.subr.bf16.mxu0 0
        %4505 = vmatpush1.bf16.msra.mxu0 0
        %4506 = vmatprep.subr.bf16.mxu0 0
        %4507 = vmatpush1.bf16.msra.mxu0 0
        %4508 = vmatprep.subr.bf16.mxu0 0
        %4509 = vmatpush1.bf16.msra.mxu0 0
        %4510 = vmatprep.subr.bf16.mxu0 0
        %4511 = vmatpush1.bf16.msra.mxu0 0
        %4512 = vmatprep.subr.bf16.mxu0 0
        %4513 = vmatpush1.bf16.msra.mxu0 0
        %4514 = vmatprep.subr.bf16.mxu0 0
        %4515 = vmatpush1.bf16.msra.mxu0 0
        %4516 = vmatprep.subr.bf16.mxu0 0
        %4517 = vmatpush1.bf16.msra.mxu0 0
        %4518 = vmatprep.subr.bf16.mxu0 0
        %4519 = vmatpush1.bf16.msra.mxu0 0
        %4520 = vmatprep.subr.bf16.mxu0 0
        %4521 = vmatpush1.bf16.msra.mxu0 0
        %4522 = vmatprep.subr.bf16.mxu0 0
        %4523 = vmatpush1.bf16.msra.mxu0 0
        %4524 = vmatprep.subr.bf16.mxu0 0
        %4525 = vmatpush1.bf16.msra.mxu0 0
        %4526 = vmatprep.mubr.bf16.mxu0 0
        %4527 = vmatmul.mubr.bf16.gmra.mrb[0].mxu0 %v4489
        %v4528 = vpop.f32.mrb[0].mxu0
        %v4529 = vadd.f32 0.0, %v4528
        %v4530 = vpop.f32.mrb[0].mxu0
        %v4531 = vpop.f32.mrb[0].mxu0
        %v4532 = vpop.f32.mrb[0].mxu0
        %4533 = vdwg.mxu0
        %v4535 = vsel %vm1894, %v4436, 0
        %v4538 = vsel %vm2142, %v4440, 0
        %4540 = vmatprep.subr.bf16.mxu0 0
        %4541 = vmatpush1.bf16.msra.mxu0 %v4538
        %4542 = vmatprep.subr.bf16.mxu0 0
        %4543 = vmatpush1.bf16.msra.mxu0 0
        %4544 = vmatprep.subr.bf16.mxu0 0
        %4545 = vmatpush1.bf16.msra.mxu0 0
        %4546 = vmatprep.subr.bf16.mxu0 0
        %4547 = vmatpush1.bf16.msra.mxu0 0
        %4548 = vmatprep.subr.bf16.mxu0 0
        %4549 = vmatpush1.bf16.msra.mxu0 0
        %4550 = vmatprep.subr.bf16.mxu0 0
        %4551 = vmatpush1.bf16.msra.mxu0 0
        %4552 = vmatprep.subr.bf16.mxu0 0
        %4553 = vmatpush1.bf16.msra.mxu0 0
        %4554 = vmatprep.subr.bf16.mxu0 0
        %4555 = vmatpush1.bf16.msra.mxu0 0
        %4556 = vmatprep.subr.bf16.mxu0 0
        %4557 = vmatpush1.bf16.msra.mxu0 0
        %4558 = vmatprep.subr.bf16.mxu0 0
        %4559 = vmatpush1.bf16.msra.mxu0 0
        %4560 = vmatprep.subr.bf16.mxu0 0
        %4561 = vmatpush1.bf16.msra.mxu0 0
        %4562 = vmatprep.subr.bf16.mxu0 0
        %4563 = vmatpush1.bf16.msra.mxu0 0
        %4564 = vmatprep.subr.bf16.mxu0 0
        %4565 = vmatpush1.bf16.msra.mxu0 0
        %4566 = vmatprep.subr.bf16.mxu0 0
        %4567 = vmatpush1.bf16.msra.mxu0 0
        %4568 = vmatprep.subr.bf16.mxu0 0
        %4569 = vmatpush1.bf16.msra.mxu0 0
        %4570 = vmatprep.subr.bf16.mxu0 0
        %4571 = vmatpush1.bf16.msra.mxu0 0
        %4572 = vmatprep.mubr.bf16.mxu0 0
        %4573 = vmatmul.mubr.bf16.gmra.mrb[0].mxu0 %v4535
        %v4574 = vpop.f32.mrb[0].mxu0
        %v4575 = vadd.f32 0.0, %v4574
        %v4576 = vpop.f32.mrb[0].mxu0
        %v4577 = vpop.f32.mrb[0].mxu0
        %v4578 = vpop.f32.mrb[0].mxu0
        %4579 = vdwg.mxu0
        %v4581 = vsel %vm1894, %v4437, 0
        %v4584 = vsel %vm2142, %v4441, 0
        %4586 = vmatprep.subr.bf16.mxu0 0
        %4587 = vmatpush1.bf16.msra.mxu0 %v4584
        %4588 = vmatprep.subr.bf16.mxu0 0
        %4589 = vmatpush1.bf16.msra.mxu0 0
        %4590 = vmatprep.subr.bf16.mxu0 0
        %4591 = vmatpush1.bf16.msra.mxu0 0
        %4592 = vmatprep.subr.bf16.mxu0 0
        %4593 = vmatpush1.bf16.msra.mxu0 0
        %4594 = vmatprep.subr.bf16.mxu0 0
        %4595 = vmatpush1.bf16.msra.mxu0 0
        %4596 = vmatprep.subr.bf16.mxu0 0
        %4597 = vmatpush1.bf16.msra.mxu0 0
        %4598 = vmatprep.subr.bf16.mxu0 0
        %4599 = vmatpush1.bf16.msra.mxu0 0
        %4600 = vmatprep.subr.bf16.mxu0 0
        %4601 = vmatpush1.bf16.msra.mxu0 0
        %4602 = vmatprep.subr.bf16.mxu0 0
        %4603 = vmatpush1.bf16.msra.mxu0 0
        %4604 = vmatprep.subr.bf16.mxu0 0
        %4605 = vmatpush1.bf16.msra.mxu0 0
        %4606 = vmatprep.subr.bf16.mxu0 0
        %4607 = vmatpush1.bf16.msra.mxu0 0
        %4608 = vmatprep.subr.bf16.mxu0 0
        %4609 = vmatpush1.bf16.msra.mxu0 0
        %4610 = vmatprep.subr.bf16.mxu0 0
        %4611 = vmatpush1.bf16.msra.mxu0 0
        %4612 = vmatprep.subr.bf16.mxu0 0
        %4613 = vmatpush1.bf16.msra.mxu0 0
        %4614 = vmatprep.subr.bf16.mxu0 0
        %4615 = vmatpush1.bf16.msra.mxu0 0
        %4616 = vmatprep.subr.bf16.mxu0 0
        %4617 = vmatpush1.bf16.msra.mxu0 0
        %4618 = vmatprep.mubr.bf16.mxu0 0
        %4619 = vmatmul.mubr.bf16.gmra.mrb[0].mxu0 %v4581
        %v4620 = vpop.f32.mrb[0].mxu0
        %v4621 = vadd.f32 0.0, %v4620
        %v4622 = vpop.f32.mrb[0].mxu0
        %v4623 = vpop.f32.mrb[0].mxu0
        %v4624 = vpop.f32.mrb[0].mxu0
        %4625 = vdwg.mxu0
        %s4626 = scalar_lea.vmem %s17, 16
        %v4627 = vld [vmem:[%s4626] sm:$0xf]
        %v4628 = vld [vmem:[%s4626 + $0x4] sm:$0xf]
        %v4629 = vld [vmem:[%s4626 + $0x8] sm:$0xf]
        %v4630 = vld [vmem:[%s4626 + $0xc] sm:$0xf]
        %v4631 = vpack.c.bf16 %v4483, %v4483
        %v4632 = vpack.c.bf16 %v4529, %v4529
        %v4633 = vpack.c.bf16 %v4575, %v4575
        %v4634 = vpack.c.bf16 %v4621, %v4621
        %v4636 = vsel %vm1894, %v4631, 0
        %v4639 = vsel %vm2142, %v4627, 0
        %4641 = vmatprep.subr.bf16.mxu0 0
        %4642 = vmatpush1.bf16.msra.mxu0 %v4639
        %4643 = vmatprep.subr.bf16.mxu0 0
        %4644 = vmatpush1.bf16.msra.mxu0 0
        %4645 = vmatprep.subr.bf16.mxu0 0
        %4646 = vmatpush1.bf16.msra.mxu0 0
        %4647 = vmatprep.subr.bf16.mxu0 0
        %4648 = vmatpush1.bf16.msra.mxu0 0
        %4649 = vmatprep.subr.bf16.mxu0 0
        %4650 = vmatpush1.bf16.msra.mxu0 0
        %4651 = vmatprep.subr.bf16.mxu0 0
        %4652 = vmatpush1.bf16.msra.mxu0 0
        %4653 = vmatprep.subr.bf16.mxu0 0
        %4654 = vmatpush1.bf16.msra.mxu0 0
        %4655 = vmatprep.subr.bf16.mxu0 0
        %4656 = vmatpush1.bf16.msra.mxu0 0
        %4657 = vmatprep.subr.bf16.mxu0 0
        %4658 = vmatpush1.bf16.msra.mxu0 0
        %4659 = vmatprep.subr.bf16.mxu0 0
        %4660 = vmatpush1.bf16.msra.mxu0 0
        %4661 = vmatprep.subr.bf16.mxu0 0
        %4662 = vmatpush1.bf16.msra.mxu0 0
        %4663 = vmatprep.subr.bf16.mxu0 0
        %4664 = vmatpush1.bf16.msra.mxu0 0
        %4665 = vmatprep.subr.bf16.mxu0 0
        %4666 = vmatpush1.bf16.msra.mxu0 0
        %4667 = vmatprep.subr.bf16.mxu0 0
        %4668 = vmatpush1.bf16.msra.mxu0 0
        %4669 = vmatprep.subr.bf16.mxu0 0
        %4670 = vmatpush1.bf16.msra.mxu0 0
        %4671 = vmatprep.subr.bf16.mxu0 0
        %4672 = vmatpush1.bf16.msra.mxu0 0
        %4673 = vmatprep.mubr.bf16.mxu0 0
        %4674 = vmatmul.mubr.bf16.gmra.mrb[0].mxu0 %v4636
        %v4675 = vpop.f32.mrb[0].mxu0
        %v4676 = vadd.f32 0.0, %v4675
        %v4677 = vpop.f32.mrb[0].mxu0
        %v4678 = vpop.f32.mrb[0].mxu0
        %v4679 = vpop.f32.mrb[0].mxu0
        %4680 = vdwg.mxu0
        %v4682 = vsel %vm1894, %v4632, 0
        %v4685 = vsel %vm2142, %v4628, 0
        %4687 = vmatprep.subr.bf16.mxu0 0
        %4688 = vmatpush1.bf16.msra.mxu0 %v4685
        %4689 = vmatprep.subr.bf16.mxu0 0
        %4690 = vmatpush1.bf16.msra.mxu0 0
        %4691 = vmatprep.subr.bf16.mxu0 0
        %4692 = vmatpush1.bf16.msra.mxu0 0
        %4693 = vmatprep.subr.bf16.mxu0 0
        %4694 = vmatpush1.bf16.msra.mxu0 0
        %4695 = vmatprep.subr.bf16.mxu0 0
        %4696 = vmatpush1.bf16.msra.mxu0 0
        %4697 = vmatprep.subr.bf16.mxu0 0
        %4698 = vmatpush1.bf16.msra.mxu0 0
        %4699 = vmatprep.subr.bf16.mxu0 0
        %4700 = vmatpush1.bf16.msra.mxu0 0
        %4701 = vmatprep.subr.bf16.mxu0 0
        %4702 = vmatpush1.bf16.msra.mxu0 0
        %4703 = vmatprep.subr.bf16.mxu0 0
        %4704 = vmatpush1.bf16.msra.mxu0 0
        %4705 = vmatprep.subr.bf16.mxu0 0
        %4706 = vmatpush1.bf16.msra.mxu0 0
        %4707 = vmatprep.subr.bf16.mxu0 0
        %4708 = vmatpush1.bf16.msra.mxu0 0
        %4709 = vmatprep.subr.bf16.mxu0 0
        %4710 = vmatpush1.bf16.msra.mxu0 0
        %4711 = vmatprep.subr.bf16.mxu0 0
        %4712 = vmatpush1.bf16.msra.mxu0 0
        %4713 = vmatprep.subr.bf16.mxu0 0
        %4714 = vmatpush1.bf16.msra.mxu0 0
        %4715 = vmatprep.subr.bf16.mxu0 0
        %4716 = vmatpush1.bf16.msra.mxu0 0
        %4717 = vmatprep.subr.bf16.mxu0 0
        %4718 = vmatpush1.bf16.msra.mxu0 0
        %4719 = vmatprep.mubr.bf16.mxu0 0
        %4720 = vmatmul.mubr.bf16.gmra.mrb[0].mxu0 %v4682
        %v4721 = vpop.f32.mrb[0].mxu0
        %v4722 = vadd.f32 0.0, %v4721
        %v4723 = vpop.f32.mrb[0].mxu0
        %v4724 = vpop.f32.mrb[0].mxu0
        %v4725 = vpop.f32.mrb[0].mxu0
        %4726 = vdwg.mxu0
        %v4728 = vsel %vm1894, %v4633, 0
        %v4731 = vsel %vm2142, %v4629, 0
        %4733 = vmatprep.subr.bf16.mxu0 0
        %4734 = vmatpush1.bf16.msra.mxu0 %v4731
        %4735 = vmatprep.subr.bf16.mxu0 0
        %4736 = vmatpush1.bf16.msra.mxu0 0
        %4737 = vmatprep.subr.bf16.mxu0 0
        %4738 = vmatpush1.bf16.msra.mxu0 0
        %4739 = vmatprep.subr.bf16.mxu0 0
        %4740 = vmatpush1.bf16.msra.mxu0 0
        %4741 = vmatprep.subr.bf16.mxu0 0
        %4742 = vmatpush1.bf16.msra.mxu0 0
        %4743 = vmatprep.subr.bf16.mxu0 0
        %4744 = vmatpush1.bf16.msra.mxu0 0
        %4745 = vmatprep.subr.bf16.mxu0 0
        %4746 = vmatpush1.bf16.msra.mxu0 0
        %4747 = vmatprep.subr.bf16.mxu0 0
        %4748 = vmatpush1.bf16.msra.mxu0 0
        %4749 = vmatprep.subr.bf16.mxu0 0
        %4750 = vmatpush1.bf16.msra.mxu0 0
        %4751 = vmatprep.subr.bf16.mxu0 0
        %4752 = vmatpush1.bf16.msra.mxu0 0
        %4753 = vmatprep.subr.bf16.mxu0 0
        %4754 = vmatpush1.bf16.msra.mxu0 0
        %4755 = vmatprep.subr.bf16.mxu0 0
        %4756 = vmatpush1.bf16.msra.mxu0 0
        %4757 = vmatprep.subr.bf16.mxu0 0
        %4758 = vmatpush1.bf16.msra.mxu0 0
        %4759 = vmatprep.subr.bf16.mxu0 0
        %4760 = vmatpush1.bf16.msra.mxu0 0
        %4761 = vmatprep.subr.bf16.mxu0 0
        %4762 = vmatpush1.bf16.msra.mxu0 0
        %4763 = vmatprep.subr.bf16.mxu0 0
        %4764 = vmatpush1.bf16.msra.mxu0 0
        %4765 = vmatprep.mubr.bf16.mxu0 0
        %4766 = vmatmul.mubr.bf16.gmra.mrb[0].mxu0 %v4728
        %v4767 = vpop.f32.mrb[0].mxu0
        %v4768 = vadd.f32 0.0, %v4767
        %v4769 = vpop.f32.mrb[0].mxu0
        %v4770 = vpop.f32.mrb[0].mxu0
        %v4771 = vpop.f32.mrb[0].mxu0
        %4772 = vdwg.mxu0
        %v4774 = vsel %vm1894, %v4634, 0
        %v4777 = vsel %vm2142, %v4630, 0
        %4779 = vmatprep.subr.bf16.mxu0 0
        %4780 = vmatpush1.bf16.msra.mxu0 %v4777
        %4781 = vmatprep.subr.bf16.mxu0 0
        %4782 = vmatpush1.bf16.msra.mxu0 0
        %4783 = vmatprep.subr.bf16.mxu0 0
        %4784 = vmatpush1.bf16.msra.mxu0 0
        %4785 = vmatprep.subr.bf16.mxu0 0
        %4786 = vmatpush1.bf16.msra.mxu0 0
        %4787 = vmatprep.subr.bf16.mxu0 0
        %4788 = vmatpush1.bf16.msra.mxu0 0
        %4789 = vmatprep.subr.bf16.mxu0 0
        %4790 = vmatpush1.bf16.msra.mxu0 0
        %4791 = vmatprep.subr.bf16.mxu0 0
        %4792 = vmatpush1.bf16.msra.mxu0 0
        %4793 = vmatprep.subr.bf16.mxu0 0
        %4794 = vmatpush1.bf16.msra.mxu0 0
        %4795 = vmatprep.subr.bf16.mxu0 0
        %4796 = vmatpush1.bf16.msra.mxu0 0
        %4797 = vmatprep.subr.bf16.mxu0 0
        %4798 = vmatpush1.bf16.msra.mxu0 0
        %4799 = vmatprep.subr.bf16.mxu0 0
        %4800 = vmatpush1.bf16.msra.mxu0 0
        %4801 = vmatprep.subr.bf16.mxu0 0
        %4802 = vmatpush1.bf16.msra.mxu0 0
        %4803 = vmatprep.subr.bf16.mxu0 0
        %4804 = vmatpush1.bf16.msra.mxu0 0
        %4805 = vmatprep.subr.bf16.mxu0 0
        %4806 = vmatpush1.bf16.msra.mxu0 0
        %4807 = vmatprep.subr.bf16.mxu0 0
        %4808 = vmatpush1.bf16.msra.mxu0 0
        %4809 = vmatprep.subr.bf16.mxu0 0
        %4810 = vmatpush1.bf16.msra.mxu0 0
        %4811 = vmatprep.mubr.bf16.mxu0 0
        %4812 = vmatmul.mubr.bf16.gmra.mrb[0].mxu0 %v4774
        %v4813 = vpop.f32.mrb[0].mxu0
        %v4814 = vadd.f32 0.0, %v4813
        %v4815 = vpop.f32.mrb[0].mxu0
        %v4816 = vpop.f32.mrb[0].mxu0
        %v4817 = vpop.f32.mrb[0].mxu0
        %4818 = vdwg.mxu0
        %v4819 = vsel %vm1182, %v4676, 0.0
        %v4820 = vsel %vm1182, %v4722, 0.0
        %v4821 = vadd.f32 %v4819, %v4820
        %v4822 = vsel %vm1182, %v4768, 0.0
        %v4823 = vadd.f32 %v4821, %v4822
        %v4824 = vsel %vm1182, %v4814, 0.0
        %v4825 = vadd.f32 %v4823, %v4824
        %s4826 = scalar_lea.vmem %s19, 1
        %v4827 = vld [vmem:[%s4826] sm:$0x1]
        %v4829 = vlaneseq
        %v4830 = vshrl.u32 %v4829, 7
        %v4831 = vsub.s32 0, %v4830
        %v4832 = vrot.slane %v4827, %v4831
        %v4834 = vadd.f32 %v4825, %v4832
        %v4835 = vadd.f32 %v3423, %v4834
        %s4836 = scalar_lea.vmem %s55, 1
        %v4837 = vld [vmem:[%s4836] sm:$0x1]
        %s4838 = scalar_lea.vmem %s57, 1
        %v4839 = vld [vmem:[%s4838] sm:$0x1]
        %v4840 = vsel %vm1182, %v4835, 0.0
        %4841 = vadd.xlane.f32.xlu0 %v4840
        %v4842 = vpop.xlane.xlu0 %4841
        %v4843 = vmul.f32 %v4842, %v2537
        %v4844 = vsub.f32 %v4835, %v4843
        %v4845 = vmul.f32 %v4844, %v4844
        %v4846 = vsel %vm1182, %v4845, 0.0
        %4847 = vadd.xlane.f32.xlu0 %v4846
        %v4848 = vpop.xlane.xlu0 %4847
        %v4849 = vmul.f32 %v4848, %v2537
        %v4850 = vadd.f32 %v4849, 1e-05
        %v4851 = vrsqrt.pop %v4850
        %v4852 = vmul.f32 %v4844, %v4851
        %v4854 = vlaneseq
        %v4855 = vshrl.u32 %v4854, 7
        %v4856 = vsub.s32 0, %v4855
        %v4857 = vrot.slane %v4837, %v4856
        %v4859 = vmul.f32 %v4852, %v4857
        %v4861 = vlaneseq
        %v4862 = vshrl.u32 %v4861, 7
        %v4863 = vsub.s32 0, %v4862
        %v4864 = vrot.slane %v4839, %v4863
        %v4866 = vadd.f32 %v4859, %v4864
        %s4867 = scalar_lea.vmem %s27, 16
        %v4868 = vld [vmem:[%s4867] sm:$0xf]
        %v4869 = vld [vmem:[%s4867 + $0x4] sm:$0xf]
        %v4870 = vld [vmem:[%s4867 + $0x8] sm:$0xf]
        %v4871 = vld [vmem:[%s4867 + $0xc] sm:$0xf]
        %v4872 = vpack.c.bf16 %v4866, %v4866
        %s4873 = scalar_lea.vmem %s29, 1
        %v4874 = vld [vmem:[%s4873] sm:$0x1]
        %v4876 = vlaneseq
        %v4877 = vshrl.u32 %v4876, 7
        %v4878 = vsub.s32 0, %v4877
        %v4879 = vrot.slane %v4874, %v4878
        %v4885 = vunpack.c.l.b16 %v4868
        %v4886 = vunpack.c.l.b16 %v4869
        %v4887 = vunpack.c.l.b16 %v4870
        %v4888 = vunpack.c.l.b16 %v4871
        %v4889 = vpack.c.b16 %v4886, %v4885
        %v4890 = vpack.c.b16 %v4888, %v4887
        %v4894 = vsel %vm1182, %v4872, 0
        %4896 = vmatprep.subr.bf16.mxu0 0
        %4897 = vmatpush1.bf16.msra.mxu0 %v4889
        %4898 = vmatprep.subr.bf16.mxu0 0
        %4899 = vmatpush1.bf16.msra.mxu0 %v4890
        %4900 = vmatprep.subr.bf16.mxu0 0
        %4901 = vmatpush1.bf16.msra.mxu0 0
        %4902 = vmatprep.subr.bf16.mxu0 0
        %4903 = vmatpush1.bf16.msra.mxu0 0
        %4904 = vmatprep.subr.bf16.mxu0 0
        %4905 = vmatpush1.bf16.msra.mxu0 0
        %4906 = vmatprep.subr.bf16.mxu0 0
        %4907 = vmatpush1.bf16.msra.mxu0 0
        %4908 = vmatprep.subr.bf16.mxu0 0
        %4909 = vmatpush1.bf16.msra.mxu0 0
        %4910 = vmatprep.subr.bf16.mxu0 0
        %4911 = vmatpush1.bf16.msra.mxu0 0
        %4912 = vmatprep.subr.bf16.mxu0 0
        %4913 = vmatpush1.bf16.msra.mxu0 0
        %4914 = vmatprep.subr.bf16.mxu0 0
        %4915 = vmatpush1.bf16.msra.mxu0 0
        %4916 = vmatprep.subr.bf16.mxu0 0
        %4917 = vmatpush1.bf16.msra.mxu0 0
        %4918 = vmatprep.subr.bf16.mxu0 0
        %4919 = vmatpush1.bf16.msra.mxu0 0
        %4920 = vmatprep.subr.bf16.mxu0 0
        %4921 = vmatpush1.bf16.msra.mxu0 0
        %4922 = vmatprep.subr.bf16.mxu0 0
        %4923 = vmatpush1.bf16.msra.mxu0 0
        %4924 = vmatprep.subr.bf16.mxu0 0
        %4925 = vmatpush1.bf16.msra.mxu0 0
        %4926 = vmatprep.subr.bf16.mxu0 0
        %4927 = vmatpush1.bf16.msra.mxu0 0
        %4928 = vmatprep.mubr.bf16.mxu0 0
        %4929 = vmatmul.mubr.bf16.gmra.mrb[0].mxu0 %v4894
        %v4930 = vpop.f32.mrb[0].mxu0
        %v4931 = vadd.f32 %v4879, %v4930
        %v4932 = vpop.f32.mrb[0].mxu0
        %v4933 = vpop.f32.mrb[0].mxu0
        %v4934 = vpop.f32.mrb[0].mxu0
        %4935 = vdwg.mxu0
        %s4936 = scalar_lea.vmem %s31, 16
        %v4937 = vld [vmem:[%s4936] sm:$0xf]
        %v4938 = vld [vmem:[%s4936 + $0x4] sm:$0xf]
        %v4939 = vld [vmem:[%s4936 + $0x8] sm:$0xf]
        %v4940 = vld [vmem:[%s4936 + $0xc] sm:$0xf]
        %s4941 = scalar_lea.vmem %s33, 1
        %v4942 = vld [vmem:[%s4941] sm:$0x1]
        %v4944 = vlaneseq
        %v4945 = vshrl.u32 %v4944, 7
        %v4946 = vsub.s32 0, %v4945
        %v4947 = vrot.slane %v4942, %v4946
        %v4953 = vunpack.c.l.b16 %v4937
        %v4954 = vunpack.c.l.b16 %v4938
        %v4955 = vunpack.c.l.b16 %v4939
        %v4956 = vunpack.c.l.b16 %v4940
        %v4957 = vpack.c.b16 %v4954, %v4953
        %v4958 = vpack.c.b16 %v4956, %v4955
        %4961 = vmatprep.subr.bf16.mxu0 0
        %4962 = vmatpush1.bf16.msra.mxu0 %v4957
        %4963 = vmatprep.subr.bf16.mxu0 0
        %4964 = vmatpush1.bf16.msra.mxu0 %v4958
        %4965 = vmatprep.subr.bf16.mxu0 0
        %4966 = vmatpush1.bf16.msra.mxu0 0
        %4967 = vmatprep.subr.bf16.mxu0 0
        %4968 = vmatpush1.bf16.msra.mxu0 0
        %4969 = vmatprep.subr.bf16.mxu0 0
        %4970 = vmatpush1.bf16.msra.mxu0 0
        %4971 = vmatprep.subr.bf16.mxu0 0
        %4972 = vmatpush1.bf16.msra.mxu0 0
        %4973 = vmatprep.subr.bf16.mxu0 0
        %4974 = vmatpush1.bf16.msra.mxu0 0
        %4975 = vmatprep.subr.bf16.mxu0 0
        %4976 = vmatpush1.bf16.msra.mxu0 0
        %4977 = vmatprep.subr.bf16.mxu0 0
        %4978 = vmatpush1.bf16.msra.mxu0 0
        %4979 = vmatprep.subr.bf16.mxu0 0
        %4980 = vmatpush1.bf16.msra.mxu0 0
        %4981 = vmatprep.subr.bf16.mxu0 0
        %4982 = vmatpush1.bf16.msra.mxu0 0
        %4983 = vmatprep.subr.bf16.mxu0 0
        %4984 = vmatpush1.bf16.msra.mxu0 0
        %4985 = vmatprep.subr.bf16.mxu0 0
        %4986 = vmatpush1.bf16.msra.mxu0 0
        %4987 = vmatprep.subr.bf16.mxu0 0
        %4988 = vmatpush1.bf16.msra.mxu0 0
        %4989 = vmatprep.subr.bf16.mxu0 0
        %4990 = vmatpush1.bf16.msra.mxu0 0
        %4991 = vmatprep.subr.bf16.mxu0 0
        %4992 = vmatpush1.bf16.msra.mxu0 0
        %4993 = vmatprep.mubr.bf16.mxu0 0
        %4994 = vmatmul.mubr.bf16.gmra.mrb[0].mxu0 %v4894
        %v4995 = vpop.f32.mrb[0].mxu0
        %v4996 = vadd.f32 %v4947, %v4995
        %v4997 = vpop.f32.mrb[0].mxu0
        %v4998 = vpop.f32.mrb[0].mxu0
        %v4999 = vpop.f32.mrb[0].mxu0
        %5000 = vdwg.mxu0
        %s5001 = scalar_lea.vmem %s21, 4
        %v5002 = vld [vmem:[%s5001] sm:$0xf]
        %s5003 = scalar_lea.vmem %s23, 8
        %v5004 = vld [vmem:[%s5003] sm:$0xf]
        %v5005 = vld [vmem:[%s5003 + $0x4] sm:$0xf]
        %v5006 = vpack.c.bf16 %v5002, %v5002
        %s5007 = scalar_lea.vmem %s25, 1
        %v5008 = vld [vmem:[%s5007] sm:$0x1]
        %v5010 = vlaneseq
        %v5011 = vshrl.u32 %v5010, 7
        %v5012 = vsub.s32 0, %v5011
        %v5013 = vrot.slane %v5008, %v5012
        %v5017 = vunpack.c.l.b16 %v5004
        %v5018 = vunpack.c.l.b16 %v5005
        %v5019 = vpack.c.b16 %v5018, %v5017
        %v5022 = vsel %vm2709, %v5006, 0
        %5024 = vmatprep.subr.bf16.mxu0 0
        %5025 = vmatpush1.bf16.msra.mxu0 %v5019
        %5026 = vmatprep.subr.bf16.mxu0 0
        %5027 = vmatpush1.bf16.msra.mxu0 0
        %5028 = vmatprep.subr.bf16.mxu0 0
        %5029 = vmatpush1.bf16.msra.mxu0 0
        %5030 = vmatprep.subr.bf16.mxu0 0
        %5031 = vmatpush1.bf16.msra.mxu0 0
        %5032 = vmatprep.subr.bf16.mxu0 0
        %5033 = vmatpush1.bf16.msra.mxu0 0
        %5034 = vmatprep.subr.bf16.mxu0 0
        %5035 = vmatpush1.bf16.msra.mxu0 0
        %5036 = vmatprep.subr.bf16.mxu0 0
        %5037 = vmatpush1.bf16.msra.mxu0 0
        %5038 = vmatprep.subr.bf16.mxu0 0
        %5039 = vmatpush1.bf16.msra.mxu0 0
        %5040 = vmatprep.subr.bf16.mxu0 0
        %5041 = vmatpush1.bf16.msra.mxu0 0
        %5042 = vmatprep.subr.bf16.mxu0 0
        %5043 = vmatpush1.bf16.msra.mxu0 0
        %5044 = vmatprep.subr.bf16.mxu0 0
        %5045 = vmatpush1.bf16.msra.mxu0 0
        %5046 = vmatprep.subr.bf16.mxu0 0
        %5047 = vmatpush1.bf16.msra.mxu0 0
        %5048 = vmatprep.subr.bf16.mxu0 0
        %5049 = vmatpush1.bf16.msra.mxu0 0
        %5050 = vmatprep.subr.bf16.mxu0 0
        %5051 = vmatpush1.bf16.msra.mxu0 0
        %5052 = vmatprep.subr.bf16.mxu0 0
        %5053 = vmatpush1.bf16.msra.mxu0 0
        %5054 = vmatprep.subr.bf16.mxu0 0
        %5055 = vmatpush1.bf16.msra.mxu0 0
        %5056 = vmatprep.mubr.bf16.mxu0 0
        %5057 = vmatmul.mubr.bf16.gmra.mrb[0].mxu0 %v5022
        %v5058 = vpop.f32.mrb[0].mxu0
        %v5059 = vadd.f32 %v5013, %v5058
        %v5060 = vpop.f32.mrb[0].mxu0
        %v5061 = vpop.f32.mrb[0].mxu0
        %v5062 = vpop.f32.mrb[0].mxu0
        %5063 = vdwg.mxu0
        %v5064 = vpack.c.bf16 %v5059, %v5059
        %5065 = vxpose.xlu0.b32.start [1/16] %v4931, 128
        %5066 = vxpose.xlu0.b32.cont [2/16] 0.0, 128
        %5067 = vxpose.xlu0.b32.cont [3/16] 0.0, 128
        %5068 = vxpose.xlu0.b32.cont [4/16] 0.0, 128
        %5069 = vxpose.xlu0.b32.cont [5/16] 0.0, 128
        %5070 = vxpose.xlu0.b32.cont [6/16] 0.0, 128
        %5071 = vxpose.xlu0.b32.cont [7/16] 0.0, 128
        %5072 = vxpose.xlu0.b32.cont [8/16] 0.0, 128
        %5073 = vxpose.xlu0.b32.cont [9/16] 0.0, 128
        %5074 = vxpose.xlu0.b32.cont [10/16] 0.0, 128
        %5075 = vxpose.xlu0.b32.cont [11/16] 0.0, 128
        %5076 = vxpose.xlu0.b32.cont [12/16] 0.0, 128
        %5077 = vxpose.xlu0.b32.cont [13/16] 0.0, 128
        %5078 = vxpose.xlu0.b32.cont [14/16] 0.0, 128
        %5079 = vxpose.xlu0.b32.cont [15/16] 0.0, 128
        %5080 = vxpose.xlu0.b32.end [16/16] 0.0, 128
        %v5081 = vpop.trf.xlu0
        %v5082 = vpop.trf.xlu0
        %v5083 = vpop.trf.xlu0
        %v5084 = vpop.trf.xlu0
        %v5085 = vpop.trf.xlu0
        %v5086 = vpop.trf.xlu0
        %v5087 = vpop.trf.xlu0
        %v5088 = vpop.trf.xlu0
        %v5089 = vpop.trf.xlu0
        %v5090 = vpop.trf.xlu0
        %v5091 = vpop.trf.xlu0
        %v5092 = vpop.trf.xlu0
        %v5093 = vpop.trf.xlu0
        %v5094 = vpop.trf.xlu0
        %v5095 = vpop.trf.xlu0
        %v5096 = vpop.trf.xlu0
        %v5097 = vpack.c.bf16 %v5082, %v5081
        %v5099 = vsel %vm2709, %v5064, 0
        %5101 = vmatprep.subr.bf16.mxu0 0
        %5102 = vmatpush1.bf16.msra.mxu0 %v5097
        %5103 = vmatprep.subr.bf16.mxu0 0
        %5104 = vmatpush1.bf16.msra.mxu0 0
        %5105 = vmatprep.subr.bf16.mxu0 0
        %5106 = vmatpush1.bf16.msra.mxu0 0
        %5107 = vmatprep.subr.bf16.mxu0 0
        %5108 = vmatpush1.bf16.msra.mxu0 0
        %5109 = vmatprep.subr.bf16.mxu0 0
        %5110 = vmatpush1.bf16.msra.mxu0 0
        %5111 = vmatprep.subr.bf16.mxu0 0
        %5112 = vmatpush1.bf16.msra.mxu0 0
        %5113 = vmatprep.subr.bf16.mxu0 0
        %5114 = vmatpush1.bf16.msra.mxu0 0
        %5115 = vmatprep.subr.bf16.mxu0 0
        %5116 = vmatpush1.bf16.msra.mxu0 0
        %5117 = vmatprep.subr.bf16.mxu0 0
        %5118 = vmatpush1.bf16.msra.mxu0 0
        %5119 = vmatprep.subr.bf16.mxu0 0
        %5120 = vmatpush1.bf16.msra.mxu0 0
        %5121 = vmatprep.subr.bf16.mxu0 0
        %5122 = vmatpush1.bf16.msra.mxu0 0
        %5123 = vmatprep.subr.bf16.mxu0 0
        %5124 = vmatpush1.bf16.msra.mxu0 0
        %5125 = vmatprep.subr.bf16.mxu0 0
        %5126 = vmatpush1.bf16.msra.mxu0 0
        %5127 = vmatprep.subr.bf16.mxu0 0
        %5128 = vmatpush1.bf16.msra.mxu0 0
        %5129 = vmatprep.subr.bf16.mxu0 0
        %5130 = vmatpush1.bf16.msra.mxu0 0
        %5131 = vmatprep.subr.bf16.mxu0 0
        %5132 = vmatpush1.bf16.msra.mxu0 0
        %5133 = vmatprep.mubr.bf16.mxu0 0
        %5134 = vmatmul.mubr.bf16.gmra.mrb[0].mxu0 %v5099
        %v5135 = vpop.f32.mrb[0].mxu0
        %v5136 = vadd.f32 0.0, %v5135
        %v5137 = vpop.f32.mrb[0].mxu0
        %v5138 = vpop.f32.mrb[0].mxu0
        %v5139 = vpop.f32.mrb[0].mxu0
        %5140 = vdwg.mxu0
        %v5141 = vmul.f32 %v5136, 0.25
        %v5142 = vsel %vm2831, %v5141, -inf
        %5143 = vmax.xlane.f32.xlu0 %v5142
        %v5144 = vpop.xlane.xlu0 %5143
        %v5145 = vsub.f32 %v5141, %v5144
        %v5146 = vmul.f32 %v5145, 1.442695
        %v5147 = vpow.pop %v5146
        %v5148 = vsel %vm2831, %v5147, 0.0
        %5149 = vadd.xlane.f32.xlu0 %v5148
        %v5150 = vpop.xlane.xlu0 %5149
        %v5151 = vrcp.pop %v5150
        %v5152 = vmul.f32 %v5147, %v5151
        %v5153 = vpack.c.bf16 %v5152, %v5152
        %v5154 = vpack.c.bf16 %v4996, %v4996
        %v5156 = vsel %vm1894, %v5153, 0
        %v5159 = vsel %vm2142, %v5154, 0
        %5161 = vmatprep.subr.bf16.mxu0 0
        %5162 = vmatpush1.bf16.msra.mxu0 %v5159
        %5163 = vmatprep.subr.bf16.mxu0 0
        %5164 = vmatpush1.bf16.msra.mxu0 0
        %5165 = vmatprep.subr.bf16.mxu0 0
        %5166 = vmatpush1.bf16.msra.mxu0 0
        %5167 = vmatprep.subr.bf16.mxu0 0
        %5168 = vmatpush1.bf16.msra.mxu0 0
        %5169 = vmatprep.subr.bf16.mxu0 0
        %5170 = vmatpush1.bf16.msra.mxu0 0
        %5171 = vmatprep.subr.bf16.mxu0 0
        %5172 = vmatpush1.bf16.msra.mxu0 0
        %5173 = vmatprep.subr.bf16.mxu0 0
        %5174 = vmatpush1.bf16.msra.mxu0 0
        %5175 = vmatprep.subr.bf16.mxu0 0
        %5176 = vmatpush1.bf16.msra.mxu0 0
        %5177 = vmatprep.subr.bf16.mxu0 0
        %5178 = vmatpush1.bf16.msra.mxu0 0
        %5179 = vmatprep.subr.bf16.mxu0 0
        %5180 = vmatpush1.bf16.msra.mxu0 0
        %5181 = vmatprep.subr.bf16.mxu0 0
        %5182 = vmatpush1.bf16.msra.mxu0 0
        %5183 = vmatprep.subr.bf16.mxu0 0
        %5184 = vmatpush1.bf16.msra.mxu0 0
        %5185 = vmatprep.subr.bf16.mxu0 0
        %5186 = vmatpush1.bf16.msra.mxu0 0
        %5187 = vmatprep.subr.bf16.mxu0 0
        %5188 = vmatpush1.bf16.msra.mxu0 0
        %5189 = vmatprep.subr.bf16.mxu0 0
        %5190 = vmatpush1.bf16.msra.mxu0 0
        %5191 = vmatprep.subr.bf16.mxu0 0
        %5192 = vmatpush1.bf16.msra.mxu0 0
        %5193 = vmatprep.mubr.bf16.mxu0 0
        %5194 = vmatmul.mubr.bf16.gmra.mrb[0].mxu0 %v5156
        %v5195 = vpop.f32.mrb[0].mxu0
        %v5196 = vadd.f32 0.0, %v5195
        %v5197 = vpop.f32.mrb[0].mxu0
        %v5198 = vpop.f32.mrb[0].mxu0
        %v5199 = vpop.f32.mrb[0].mxu0
        %5200 = vdwg.mxu0
        %s5201 = scalar_lea.vmem %s35, 16
        %v5202 = vld [vmem:[%s5201] sm:$0xf]
        %v5203 = vld [vmem:[%s5201 + $0x4] sm:$0xf]
        %v5204 = vld [vmem:[%s5201 + $0x8] sm:$0xf]
        %v5205 = vld [vmem:[%s5201 + $0xc] sm:$0xf]
        %s5206 = scalar_lea.vmem %s37, 1
        %v5207 = vld [vmem:[%s5206] sm:$0x1]
        %v5209 = vlaneseq
        %v5210 = vshrl.u32 %v5209, 7
        %v5211 = vsub.s32 0, %v5210
        %v5212 = vrot.slane %v5207, %v5211
        %v5218 = vunpack.c.l.b16 %v5202
        %v5219 = vunpack.c.l.b16 %v5203
        %v5220 = vunpack.c.l.b16 %v5204
        %v5221 = vunpack.c.l.b16 %v5205
        %v5222 = vpack.c.b16 %v5219, %v5218
        %v5223 = vpack.c.b16 %v5221, %v5220
        %5226 = vmatprep.subr.bf16.mxu0 0
        %5227 = vmatpush1.bf16.msra.mxu0 %v5222
        %5228 = vmatprep.subr.bf16.mxu0 0
        %5229 = vmatpush1.bf16.msra.mxu0 %v5223
        %5230 = vmatprep.subr.bf16.mxu0 0
        %5231 = vmatpush1.bf16.msra.mxu0 0
        %5232 = vmatprep.subr.bf16.mxu0 0
        %5233 = vmatpush1.bf16.msra.mxu0 0
        %5234 = vmatprep.subr.bf16.mxu0 0
        %5235 = vmatpush1.bf16.msra.mxu0 0
        %5236 = vmatprep.subr.bf16.mxu0 0
        %5237 = vmatpush1.bf16.msra.mxu0 0
        %5238 = vmatprep.subr.bf16.mxu0 0
        %5239 = vmatpush1.bf16.msra.mxu0 0
        %5240 = vmatprep.subr.bf16.mxu0 0
        %5241 = vmatpush1.bf16.msra.mxu0 0
        %5242 = vmatprep.subr.bf16.mxu0 0
        %5243 = vmatpush1.bf16.msra.mxu0 0
        %5244 = vmatprep.subr.bf16.mxu0 0
        %5245 = vmatpush1.bf16.msra.mxu0 0
        %5246 = vmatprep.subr.bf16.mxu0 0
        %5247 = vmatpush1.bf16.msra.mxu0 0
        %5248 = vmatprep.subr.bf16.mxu0 0
        %5249 = vmatpush1.bf16.msra.mxu0 0
        %5250 = vmatprep.subr.bf16.mxu0 0
        %5251 = vmatpush1.bf16.msra.mxu0 0
        %5252 = vmatprep.subr.bf16.mxu0 0
        %5253 = vmatpush1.bf16.msra.mxu0 0
        %5254 = vmatprep.subr.bf16.mxu0 0
        %5255 = vmatpush1.bf16.msra.mxu0 0
        %5256 = vmatprep.subr.bf16.mxu0 0
        %5257 = vmatpush1.bf16.msra.mxu0 0
        %5258 = vmatprep.mubr.bf16.mxu0 0
        %5259 = vmatmul.mubr.bf16.gmra.mrb[0].mxu0 %v4894
        %v5260 = vpop.f32.mrb[0].mxu0
        %v5261 = vadd.f32 %v5212, %v5260
        %v5262 = vpop.f32.mrb[0].mxu0
        %v5263 = vpop.f32.mrb[0].mxu0
        %v5264 = vpop.f32.mrb[0].mxu0
        %5265 = vdwg.mxu0
        %s5266 = scalar_lea.vmem %s39, 8
        %v5267 = vld [vmem:[%s5266] sm:$0xf]
        %v5268 = vld [vmem:[%s5266 + $0x4] sm:$0xf]
        %v5269 = vpack.c.bf16 %v5196, %v5196
        %s5270 = scalar_lea.vmem %s41, 1
        %v5271 = vld [vmem:[%s5270] sm:$0x1]
        %v5273 = vlaneseq
        %v5274 = vshrl.u32 %v5273, 7
        %v5275 = vsub.s32 0, %v5274
        %v5276 = vrot.slane %v5271, %v5275
        %v5280 = vunpack.c.l.b16 %v5267
        %v5281 = vunpack.c.l.b16 %v5268
        %v5282 = vpack.c.b16 %v5281, %v5280
        %v5285 = vsel %vm2709, %v5269, 0
        %5287 = vmatprep.subr.bf16.mxu0 0
        %5288 = vmatpush1.bf16.msra.mxu0 %v5282
        %5289 = vmatprep.subr.bf16.mxu0 0
        %5290 = vmatpush1.bf16.msra.mxu0 0
        %5291 = vmatprep.subr.bf16.mxu0 0
        %5292 = vmatpush1.bf16.msra.mxu0 0
        %5293 = vmatprep.subr.bf16.mxu0 0
        %5294 = vmatpush1.bf16.msra.mxu0 0
        %5295 = vmatprep.subr.bf16.mxu0 0
        %5296 = vmatpush1.bf16.msra.mxu0 0
        %5297 = vmatprep.subr.bf16.mxu0 0
        %5298 = vmatpush1.bf16.msra.mxu0 0
        %5299 = vmatprep.subr.bf16.mxu0 0
        %5300 = vmatpush1.bf16.msra.mxu0 0
        %5301 = vmatprep.subr.bf16.mxu0 0
        %5302 = vmatpush1.bf16.msra.mxu0 0
        %5303 = vmatprep.subr.bf16.mxu0 0
        %5304 = vmatpush1.bf16.msra.mxu0 0
        %5305 = vmatprep.subr.bf16.mxu0 0
        %5306 = vmatpush1.bf16.msra.mxu0 0
        %5307 = vmatprep.subr.bf16.mxu0 0
        %5308 = vmatpush1.bf16.msra.mxu0 0
        %5309 = vmatprep.subr.bf16.mxu0 0
        %5310 = vmatpush1.bf16.msra.mxu0 0
        %5311 = vmatprep.subr.bf16.mxu0 0
        %5312 = vmatpush1.bf16.msra.mxu0 0
        %5313 = vmatprep.subr.bf16.mxu0 0
        %5314 = vmatpush1.bf16.msra.mxu0 0
        %5315 = vmatprep.subr.bf16.mxu0 0
        %5316 = vmatpush1.bf16.msra.mxu0 0
        %5317 = vmatprep.subr.bf16.mxu0 0
        %5318 = vmatpush1.bf16.msra.mxu0 0
        %5319 = vmatprep.mubr.bf16.mxu0 0
        %5320 = vmatmul.mubr.bf16.gmra.mrb[0].mxu0 %v5285
        %v5321 = vpop.f32.mrb[0].mxu0
        %v5322 = vadd.f32 %v5276, %v5321
        %v5323 = vpop.f32.mrb[0].mxu0
        %v5324 = vpop.f32.mrb[0].mxu0
        %v5325 = vpop.f32.mrb[0].mxu0
        %5326 = vdwg.mxu0
        %s5327 = scalar_lea.vmem %s43, 8
        %v5328 = vld [vmem:[%s5327] sm:$0xf]
        %v5329 = vld [vmem:[%s5327 + $0x4] sm:$0xf]
        %s5330 = scalar_lea.vmem %s45, 1
        %v5331 = vld [vmem:[%s5330] sm:$0x1]
        %v5333 = vlaneseq
        %v5334 = vshrl.u32 %v5333, 7
        %v5335 = vsub.s32 0, %v5334
        %v5336 = vrot.slane %v5331, %v5335
        %v5340 = vunpack.c.l.b16 %v5328
        %v5341 = vunpack.c.l.b16 %v5329
        %v5342 = vpack.c.b16 %v5341, %v5340
        %5344 = vmatprep.subr.bf16.mxu0 0
        %5345 = vmatpush1.bf16.msra.mxu0 %v5342
        %5346 = vmatprep.subr.bf16.mxu0 0
        %5347 = vmatpush1.bf16.msra.mxu0 0
        %5348 = vmatprep.subr.bf16.mxu0 0
        %5349 = vmatpush1.bf16.msra.mxu0 0
        %5350 = vmatprep.subr.bf16.mxu0 0
        %5351 = vmatpush1.bf16.msra.mxu0 0
        %5352 = vmatprep.subr.bf16.mxu0 0
        %5353 = vmatpush1.bf16.msra.mxu0 0
        %5354 = vmatprep.subr.bf16.mxu0 0
        %5355 = vmatpush1.bf16.msra.mxu0 0
        %5356 = vmatprep.subr.bf16.mxu0 0
        %5357 = vmatpush1.bf16.msra.mxu0 0
        %5358 = vmatprep.subr.bf16.mxu0 0
        %5359 = vmatpush1.bf16.msra.mxu0 0
        %5360 = vmatprep.subr.bf16.mxu0 0
        %5361 = vmatpush1.bf16.msra.mxu0 0
        %5362 = vmatprep.subr.bf16.mxu0 0
        %5363 = vmatpush1.bf16.msra.mxu0 0
        %5364 = vmatprep.subr.bf16.mxu0 0
        %5365 = vmatpush1.bf16.msra.mxu0 0
        %5366 = vmatprep.subr.bf16.mxu0 0
        %5367 = vmatpush1.bf16.msra.mxu0 0
        %5368 = vmatprep.subr.bf16.mxu0 0
        %5369 = vmatpush1.bf16.msra.mxu0 0
        %5370 = vmatprep.subr.bf16.mxu0 0
        %5371 = vmatpush1.bf16.msra.mxu0 0
        %5372 = vmatprep.subr.bf16.mxu0 0
        %5373 = vmatpush1.bf16.msra.mxu0 0
        %5374 = vmatprep.subr.bf16.mxu0 0
        %5375 = vmatpush1.bf16.msra.mxu0 0
        %5376 = vmatprep.mubr.bf16.mxu0 0
        %5377 = vmatmul.mubr.bf16.gmra.mrb[0].mxu0 %v5285
        %v5378 = vpop.f32.mrb[0].mxu0
        %v5379 = vadd.f32 %v5336, %v5378
        %v5380 = vpop.f32.mrb[0].mxu0
        %v5381 = vpop.f32.mrb[0].mxu0
        %v5382 = vpop.f32.mrb[0].mxu0
        %5383 = vdwg.mxu0
        %v5384 = vpack.c.bf16 %v5261, %v5261
        %5385 = vxpose.xlu0.b32.start [1/16] %v5322, 128
        %5386 = vxpose.xlu0.b32.cont [2/16] 0.0, 128
        %5387 = vxpose.xlu0.b32.cont [3/16] 0.0, 128
        %5388 = vxpose.xlu0.b32.cont [4/16] 0.0, 128
        %5389 = vxpose.xlu0.b32.cont [5/16] 0.0, 128
        %5390 = vxpose.xlu0.b32.cont [6/16] 0.0, 128
        %5391 = vxpose.xlu0.b32.cont [7/16] 0.0, 128
        %5392 = vxpose.xlu0.b32.cont [8/16] 0.0, 128
        %5393 = vxpose.xlu0.b32.cont [9/16] 0.0, 128
        %5394 = vxpose.xlu0.b32.cont [10/16] 0.0, 128
        %5395 = vxpose.xlu0.b32.cont [11/16] 0.0, 128
        %5396 = vxpose.xlu0.b32.cont [12/16] 0.0, 128
        %5397 = vxpose.xlu0.b32.cont [13/16] 0.0, 128
        %5398 = vxpose.xlu0.b32.cont [14/16] 0.0, 128
        %5399 = vxpose.xlu0.b32.cont [15/16] 0.0, 128
        %5400 = vxpose.xlu0.b32.end [16/16] 0.0, 128
        %v5401 = vpop.trf.xlu0
        %v5402 = vpop.trf.xlu0
        %v5403 = vpop.trf.xlu0
        %v5404 = vpop.trf.xlu0
        %v5405 = vpop.trf.xlu0
        %v5406 = vpop.trf.xlu0
        %v5407 = vpop.trf.xlu0
        %v5408 = vpop.trf.xlu0
        %v5409 = vpop.trf.xlu0
        %v5410 = vpop.trf.xlu0
        %v5411 = vpop.trf.xlu0
        %v5412 = vpop.trf.xlu0
        %v5413 = vpop.trf.xlu0
        %v5414 = vpop.trf.xlu0
        %v5415 = vpop.trf.xlu0
        %v5416 = vpop.trf.xlu0
        %v5417 = vpack.c.bf16 %v5402, %v5401
        %v5418 = vpack.c.bf16 %v5404, %v5403
        %v5420 = vsel %vm1182, %v5384, 0
        %5422 = vmatprep.subr.bf16.mxu0 0
        %5423 = vmatpush1.bf16.msra.mxu0 %v5417
        %5424 = vmatprep.subr.bf16.mxu0 0
        %5425 = vmatpush1.bf16.msra.mxu0 %v5418
        %5426 = vmatprep.subr.bf16.mxu0 0
        %5427 = vmatpush1.bf16.msra.mxu0 0
        %5428 = vmatprep.subr.bf16.mxu0 0
        %5429 = vmatpush1.bf16.msra.mxu0 0
        %5430 = vmatprep.subr.bf16.mxu0 0
        %5431 = vmatpush1.bf16.msra.mxu0 0
        %5432 = vmatprep.subr.bf16.mxu0 0
        %5433 = vmatpush1.bf16.msra.mxu0 0
        %5434 = vmatprep.subr.bf16.mxu0 0
        %5435 = vmatpush1.bf16.msra.mxu0 0
        %5436 = vmatprep.subr.bf16.mxu0 0
        %5437 = vmatpush1.bf16.msra.mxu0 0
        %5438 = vmatprep.subr.bf16.mxu0 0
        %5439 = vmatpush1.bf16.msra.mxu0 0
        %5440 = vmatprep.subr.bf16.mxu0 0
        %5441 = vmatpush1.bf16.msra.mxu0 0
        %5442 = vmatprep.subr.bf16.mxu0 0
        %5443 = vmatpush1.bf16.msra.mxu0 0
        %5444 = vmatprep.subr.bf16.mxu0 0
        %5445 = vmatpush1.bf16.msra.mxu0 0
        %5446 = vmatprep.subr.bf16.mxu0 0
        %5447 = vmatpush1.bf16.msra.mxu0 0
        %5448 = vmatprep.subr.bf16.mxu0 0
        %5449 = vmatpush1.bf16.msra.mxu0 0
        %5450 = vmatprep.subr.bf16.mxu0 0
        %5451 = vmatpush1.bf16.msra.mxu0 0
        %5452 = vmatprep.subr.bf16.mxu0 0
        %5453 = vmatpush1.bf16.msra.mxu0 0
        %5454 = vmatprep.mubr.bf16.mxu0 0
        %5455 = vmatmul.mubr.bf16.gmra.mrb[0].mxu0 %v5420
        %v5456 = vpop.f32.mrb[0].mxu0
        %v5457 = vadd.f32 0.0, %v5456
        %v5458 = vpop.f32.mrb[0].mxu0
        %v5459 = vpop.f32.mrb[0].mxu0
        %v5460 = vpop.f32.mrb[0].mxu0
        %5461 = vdwg.mxu0
        %v5462 = vmul.f32 %v5457, 0.17677669
        %v5463 = vsel %vm3147, %v5462, -inf
        %5464 = vmax.xlane.f32.xlu0 %v5463
        %v5465 = vpop.xlane.xlu0 %5464
        %v5466 = vsub.f32 %v5462, %v5465
        %v5467 = vmul.f32 %v5466, 1.442695
        %v5468 = vpow.pop %v5467
        %v5469 = vsel %vm3147, %v5468, 0.0
        %5470 = vadd.xlane.f32.xlu0 %v5469
        %v5471 = vpop.xlane.xlu0 %5470
        %v5472 = vrcp.pop %v5471
        %v5473 = vmul.f32 %v5468, %v5472
        %v5474 = vpack.c.bf16 %v5473, %v5473
        %v5475 = vpack.c.bf16 %v5379, %v5379
        %v5477 = vsel %vm3147, %v5474, 0
        %v5480 = vsel %vm3164, %v5475, 0
        %5482 = vmatprep.subr.bf16.mxu0 0
        %5483 = vmatpush1.bf16.msra.mxu0 %v5480
        %5484 = vmatprep.subr.bf16.mxu0 0
        %5485 = vmatpush1.bf16.msra.mxu0 0
        %5486 = vmatprep.subr.bf16.mxu0 0
        %5487 = vmatpush1.bf16.msra.mxu0 0
        %5488 = vmatprep.subr.bf16.mxu0 0
        %5489 = vmatpush1.bf16.msra.mxu0 0
        %5490 = vmatprep.subr.bf16.mxu0 0
        %5491 = vmatpush1.bf16.msra.mxu0 0
        %5492 = vmatprep.subr.bf16.mxu0 0
        %5493 = vmatpush1.bf16.msra.mxu0 0
        %5494 = vmatprep.subr.bf16.mxu0 0
        %5495 = vmatpush1.bf16.msra.mxu0 0
        %5496 = vmatprep.subr.bf16.mxu0 0
        %5497 = vmatpush1.bf16.msra.mxu0 0
        %5498 = vmatprep.subr.bf16.mxu0 0
        %5499 = vmatpush1.bf16.msra.mxu0 0
        %5500 = vmatprep.subr.bf16.mxu0 0
        %5501 = vmatpush1.bf16.msra.mxu0 0
        %5502 = vmatprep.subr.bf16.mxu0 0
        %5503 = vmatpush1.bf16.msra.mxu0 0
        %5504 = vmatprep.subr.bf16.mxu0 0
        %5505 = vmatpush1.bf16.msra.mxu0 0
        %5506 = vmatprep.subr.bf16.mxu0 0
        %5507 = vmatpush1.bf16.msra.mxu0 0
        %5508 = vmatprep.subr.bf16.mxu0 0
        %5509 = vmatpush1.bf16.msra.mxu0 0
        %5510 = vmatprep.subr.bf16.mxu0 0
        %5511 = vmatpush1.bf16.msra.mxu0 0
        %5512 = vmatprep.subr.bf16.mxu0 0
        %5513 = vmatpush1.bf16.msra.mxu0 0
        %5514 = vmatprep.mubr.bf16.mxu0 0
        %5515 = vmatmul.mubr.bf16.gmra.mrb[0].mxu0 %v5477
        %v5516 = vpop.f32.mrb[0].mxu0
        %v5517 = vadd.f32 0.0, %v5516
        %v5518 = vpop.f32.mrb[0].mxu0
        %v5519 = vpop.f32.mrb[0].mxu0
        %v5520 = vpop.f32.mrb[0].mxu0
        %5521 = vdwg.mxu0
        %v5522 = vadd.f32 %v4866, %v5517
        %s5523 = scalar_lea.vmem %s59, 1
        %v5524 = vld [vmem:[%s5523] sm:$0x1]
        %s5525 = scalar_lea.vmem %s61, 1
        %v5526 = vld [vmem:[%s5525] sm:$0x1]
        %v5527 = vsel %vm1182, %v5522, 0.0
        %5528 = vadd.xlane.f32.xlu0 %v5527
        %v5529 = vpop.xlane.xlu0 %5528
        %v5530 = vmul.f32 %v5529, %v2537
        %v5531 = vsub.f32 %v5522, %v5530
        %v5532 = vmul.f32 %v5531, %v5531
        %v5533 = vsel %vm1182, %v5532, 0.0
        %5534 = vadd.xlane.f32.xlu0 %v5533
        %v5535 = vpop.xlane.xlu0 %5534
        %v5536 = vmul.f32 %v5535, %v2537
        %v5537 = vadd.f32 %v5536, 1e-05
        %v5538 = vrsqrt.pop %v5537
        %v5539 = vmul.f32 %v5531, %v5538
        %v5541 = vlaneseq
        %v5542 = vshrl.u32 %v5541, 7
        %v5543 = vsub.s32 0, %v5542
        %v5544 = vrot.slane %v5524, %v5543
        %v5546 = vmul.f32 %v5539, %v5544
        %v5548 = vlaneseq
        %v5549 = vshrl.u32 %v5548, 7
        %v5550 = vsub.s32 0, %v5549
        %v5551 = vrot.slane %v5526, %v5550
        %v5553 = vadd.f32 %v5546, %v5551
        %s5554 = scalar_lea.vmem %s47, 16
        %v5555 = vld [vmem:[%s5554] sm:$0xf]
        %v5556 = vld [vmem:[%s5554 + $0x4] sm:$0xf]
        %v5557 = vld [vmem:[%s5554 + $0x8] sm:$0xf]
        %v5558 = vld [vmem:[%s5554 + $0xc] sm:$0xf]
        %v5559 = vpack.c.bf16 %v5553, %v5553
        %s5560 = scalar_lea.vmem %s49, 1
        %v5561 = vld [vmem:[%s5560] sm:$0x1]
        %v5563 = vlaneseq
        %v5564 = vshrl.u32 %v5563, 7
        %v5565 = vsub.s32 0, %v5564
        %v5566 = vrot.slane %v5561, %v5565
        %v5572 = vunpack.c.l.b16 %v5555
        %v5573 = vunpack.c.l.b16 %v5556
        %v5574 = vunpack.c.l.b16 %v5557
        %v5575 = vunpack.c.l.b16 %v5558
        %v5576 = vpack.c.b16 %v5573, %v5572
        %v5577 = vpack.c.b16 %v5575, %v5574
        %v5581 = vsel %vm1182, %v5559, 0
        %5583 = vmatprep.subr.bf16.mxu0 0
        %5584 = vmatpush1.bf16.msra.mxu0 %v5576
        %5585 = vmatprep.subr.bf16.mxu0 0
        %5586 = vmatpush1.bf16.msra.mxu0 %v5577
        %5587 = vmatprep.subr.bf16.mxu0 0
        %5588 = vmatpush1.bf16.msra.mxu0 0
        %5589 = vmatprep.subr.bf16.mxu0 0
        %5590 = vmatpush1.bf16.msra.mxu0 0
        %5591 = vmatprep.subr.bf16.mxu0 0
        %5592 = vmatpush1.bf16.msra.mxu0 0
        %5593 = vmatprep.subr.bf16.mxu0 0
        %5594 = vmatpush1.bf16.msra.mxu0 0
        %5595 = vmatprep.subr.bf16.mxu0 0
        %5596 = vmatpush1.bf16.msra.mxu0 0
        %5597 = vmatprep.subr.bf16.mxu0 0
        %5598 = vmatpush1.bf16.msra.mxu0 0
        %5599 = vmatprep.subr.bf16.mxu0 0
        %5600 = vmatpush1.bf16.msra.mxu0 0
        %5601 = vmatprep.subr.bf16.mxu0 0
        %5602 = vmatpush1.bf16.msra.mxu0 0
        %5603 = vmatprep.subr.bf16.mxu0 0
        %5604 = vmatpush1.bf16.msra.mxu0 0
        %5605 = vmatprep.subr.bf16.mxu0 0
        %5606 = vmatpush1.bf16.msra.mxu0 0
        %5607 = vmatprep.subr.bf16.mxu0 0
        %5608 = vmatpush1.bf16.msra.mxu0 0
        %5609 = vmatprep.subr.bf16.mxu0 0
        %5610 = vmatpush1.bf16.msra.mxu0 0
        %5611 = vmatprep.subr.bf16.mxu0 0
        %5612 = vmatpush1.bf16.msra.mxu0 0
        %5613 = vmatprep.subr.bf16.mxu0 0
        %5614 = vmatpush1.bf16.msra.mxu0 0
        %5615 = vmatprep.mubr.bf16.mxu0 0
        %5616 = vmatmul.mubr.bf16.gmra.mrb[0].mxu0 %v5581
        %v5617 = vpop.f32.mrb[0].mxu0
        %v5618 = vadd.f32 %v5566, %v5617
        %v5619 = vpop.f32.mrb[0].mxu0
        %v5620 = vpop.f32.mrb[0].mxu0
        %v5621 = vpop.f32.mrb[0].mxu0
        %5622 = vdwg.mxu0
        %v5623 = vmul.f32 %v5618, 0.5
        %v5624 = vmul.f32 %v5618, 0.70710677
        %v5625 = verf.f32.pop %v5624
        %v5626 = vadd.f32 %v5625, 1.0
        %v5627 = vmul.f32 %v5623, %v5626
        %s5628 = scalar_lea.vmem %s51, 32
        %v5629 = vld [vmem:[%s5628] sm:$0xf]
        %v5630 = vld [vmem:[%s5628 + $0x4] sm:$0xf]
        %v5631 = vld [vmem:[%s5628 + $0x8] sm:$0xf]
        %v5632 = vld [vmem:[%s5628 + $0xc] sm:$0xf]
        %v5633 = vld [vmem:[%s5628 + $0x10] sm:$0xf]
        %v5634 = vld [vmem:[%s5628 + $0x14] sm:$0xf]
        %v5635 = vld [vmem:[%s5628 + $0x18] sm:$0xf]
        %v5636 = vld [vmem:[%s5628 + $0x1c] sm:$0xf]
        %v5637 = vpack.c.bf16 %v5627, %v5627
        %s5638 = scalar_lea.vmem %s53, 1
        %v5639 = vld [vmem:[%s5638] sm:$0x1]
        %v5641 = vlaneseq
        %v5642 = vshrl.u32 %v5641, 7
        %v5643 = vsub.s32 0, %v5642
        %v5644 = vrot.slane %v5639, %v5643
        %v5654 = vunpack.c.l.b16 %v5629
        %v5655 = vunpack.c.l.b16 %v5630
        %v5656 = vunpack.c.l.b16 %v5631
        %v5657 = vunpack.c.l.b16 %v5632
        %v5658 = vunpack.c.l.b16 %v5633
        %v5659 = vunpack.c.l.b16 %v5634
        %v5660 = vunpack.c.l.b16 %v5635
        %v5661 = vunpack.c.l.b16 %v5636
        %v5662 = vpack.c.b16 %v5655, %v5654
        %v5663 = vpack.c.b16 %v5657, %v5656
        %v5664 = vpack.c.b16 %v5659, %v5658
        %v5665 = vpack.c.b16 %v5661, %v5660
        %v5671 = vsel %vm3350, %v5637, 0
        %5673 = vmatprep.subr.bf16.mxu0 0
        %5674 = vmatpush1.bf16.msra.mxu0 %v5662
        %5675 = vmatprep.subr.bf16.mxu0 0
        %5676 = vmatpush1.bf16.msra.mxu0 %v5663
        %5677 = vmatprep.subr.bf16.mxu0 0
        %5678 = vmatpush1.bf16.msra.mxu0 %v5664
        %5679 = vmatprep.subr.bf16.mxu0 0
        %5680 = vmatpush1.bf16.msra.mxu0 %v5665
        %5681 = vmatprep.subr.bf16.mxu0 0
        %5682 = vmatpush1.bf16.msra.mxu0 0
        %5683 = vmatprep.subr.bf16.mxu0 0
        %5684 = vmatpush1.bf16.msra.mxu0 0
        %5685 = vmatprep.subr.bf16.mxu0 0
        %5686 = vmatpush1.bf16.msra.mxu0 0
        %5687 = vmatprep.subr.bf16.mxu0 0
        %5688 = vmatpush1.bf16.msra.mxu0 0
        %5689 = vmatprep.subr.bf16.mxu0 0
        %5690 = vmatpush1.bf16.msra.mxu0 0
        %5691 = vmatprep.subr.bf16.mxu0 0
        %5692 = vmatpush1.bf16.msra.mxu0 0
        %5693 = vmatprep.subr.bf16.mxu0 0
        %5694 = vmatpush1.bf16.msra.mxu0 0
        %5695 = vmatprep.subr.bf16.mxu0 0
        %5696 = vmatpush1.bf16.msra.mxu0 0
        %5697 = vmatprep.subr.bf16.mxu0 0
        %5698 = vmatpush1.bf16.msra.mxu0 0
        %5699 = vmatprep.subr.bf16.mxu0 0
        %5700 = vmatpush1.bf16.msra.mxu0 0
        %5701 = vmatprep.subr.bf16.mxu0 0
        %5702 = vmatpush1.bf16.msra.mxu0 0
        %5703 = vmatprep.subr.bf16.mxu0 0
        %5704 = vmatpush1.bf16.msra.mxu0 0
        %5705 = vmatprep.mubr.bf16.mxu0 0
        %5706 = vmatmul.mubr.bf16.gmra.mrb[0].mxu0 %v5671
        %v5707 = vpop.f32.mrb[0].mxu0
        %v5708 = vadd.f32 %v5644, %v5707
        %v5709 = vpop.f32.mrb[0].mxu0
        %v5710 = vpop.f32.mrb[0].mxu0
        %v5711 = vpop.f32.mrb[0].mxu0
        %5712 = vdwg.mxu0
        %v5713 = vadd.f32 %v5553, %v5708
        %s5714 = scalar_lea.vmem %s63, 1
        %v5715 = vld [vmem:[%s5714] sm:$0x1]
        %s5716 = scalar_lea.vmem %s65, 1
        %v5717 = vld [vmem:[%s5716] sm:$0x1]
        %v5718 = vsel %vm1182, %v5713, 0.0
        %5719 = vadd.xlane.f32.xlu0 %v5718
        %v5720 = vpop.xlane.xlu0 %5719
        %v5721 = vmul.f32 %v5720, %v2537
        %v5722 = vsub.f32 %v5713, %v5721
        %v5723 = vmul.f32 %v5722, %v5722
        %v5724 = vsel %vm1182, %v5723, 0.0
        %5725 = vadd.xlane.f32.xlu0 %v5724
        %v5726 = vpop.xlane.xlu0 %5725
        %v5727 = vmul.f32 %v5726, %v2537
        %v5728 = vadd.f32 %v5727, 1e-05
        %v5729 = vrsqrt.pop %v5728
        %v5730 = vmul.f32 %v5722, %v5729
        %v5732 = vlaneseq
        %v5733 = vshrl.u32 %v5732, 7
        %v5734 = vsub.s32 0, %v5733
        %v5735 = vrot.slane %v5715, %v5734
        %v5737 = vmul.f32 %v5730, %v5735
        %v5739 = vlaneseq
        %v5740 = vshrl.u32 %v5739, 7
        %v5741 = vsub.s32 0, %v5740
        %v5742 = vrot.slane %v5717, %v5741
        %v5744 = vadd.f32 %v5737, %v5742
        %v5745 = vld [vmem:[%s67] sm:$0x1]
        %v5746 = vld [vmem:[%s69] sm:$0x1]
        %v5747 = vsel %vm1182, %v5744, 0.0
        %5748 = vadd.xlane.f32.xlu0 %v5747
        %v5749 = vpop.xlane.xlu0 %5748
        %v5750 = vmul.f32 %v5749, %v2537
        %v5751 = vsub.f32 %v5744, %v5750
        %v5752 = vmul.f32 %v5751, %v5751
        %v5753 = vsel %vm1182, %v5752, 0.0
        %5754 = vadd.xlane.f32.xlu0 %v5753
        %v5755 = vpop.xlane.xlu0 %5754
        %v5756 = vmul.f32 %v5755, %v2537
        %v5757 = vadd.f32 %v5756, 1e-05
        %v5758 = vrsqrt.pop %v5757
        %v5759 = vmul.f32 %v5751, %v5758
        %v5761 = vlaneseq
        %v5762 = vshrl.u32 %v5761, 7
        %v5763 = vsub.s32 0, %v5762
        %v5764 = vrot.slane %v5745, %v5763
        %v5766 = vmul.f32 %v5759, %v5764
        %v5768 = vlaneseq
        %v5769 = vshrl.u32 %v5768, 7
        %v5770 = vsub.s32 0, %v5769
        %v5771 = vrot.slane %v5746, %v5770
        %v5773 = vadd.f32 %v5766, %v5771
        %v5774 = vld [vmem:[%s71] sm:$0xf]
        %v5775 = vld [vmem:[%s71 + $0x4] sm:$0xf]
        %v5776 = vld [vmem:[%s71 + $0x8] sm:$0xf]
        %v5777 = vld [vmem:[%s71 + $0xc] sm:$0xf]
        %v5778 = vpack.c.bf16 %v5773, %v5773
        %v5783 = vunpack.c.l.b16 %v5774
        %v5784 = vunpack.c.l.b16 %v5775
        %v5785 = vunpack.c.l.b16 %v5776
        %v5786 = vunpack.c.l.b16 %v5777
        %v5787 = vpack.c.b16 %v5784, %v5783
        %v5788 = vpack.c.b16 %v5786, %v5785
        %v5792 = vsel %vm1182, %v5778, 0
        %5794 = vmatprep.subr.bf16.mxu0 0
        %5795 = vmatpush1.bf16.msra.mxu0 %v5787
        %5796 = vmatprep.subr.bf16.mxu0 0
        %5797 = vmatpush1.bf16.msra.mxu0 %v5788
        %5798 = vmatprep.subr.bf16.mxu0 0
        %5799 = vmatpush1.bf16.msra.mxu0 0
        %5800 = vmatprep.subr.bf16.mxu0 0
        %5801 = vmatpush1.bf16.msra.mxu0 0
        %5802 = vmatprep.subr.bf16.mxu0 0
        %5803 = vmatpush1.bf16.msra.mxu0 0
        %5804 = vmatprep.subr.bf16.mxu0 0
        %5805 = vmatpush1.bf16.msra.mxu0 0
        %5806 = vmatprep.subr.bf16.mxu0 0
        %5807 = vmatpush1.bf16.msra.mxu0 0
        %5808 = vmatprep.subr.bf16.mxu0 0
        %5809 = vmatpush1.bf16.msra.mxu0 0
        %5810 = vmatprep.subr.bf16.mxu0 0
        %5811 = vmatpush1.bf16.msra.mxu0 0
        %5812 = vmatprep.subr.bf16.mxu0 0
        %5813 = vmatpush1.bf16.msra.mxu0 0
        %5814 = vmatprep.subr.bf16.mxu0 0
        %5815 = vmatpush1.bf16.msra.mxu0 0
        %5816 = vmatprep.subr.bf16.mxu0 0
        %5817 = vmatpush1.bf16.msra.mxu0 0
        %5818 = vmatprep.subr.bf16.mxu0 0
        %5819 = vmatpush1.bf16.msra.mxu0 0
        %5820 = vmatprep.subr.bf16.mxu0 0
        %5821 = vmatpush1.bf16.msra.mxu0 0
        %5822 = vmatprep.subr.bf16.mxu0 0
        %5823 = vmatpush1.bf16.msra.mxu0 0
        %5824 = vmatprep.subr.bf16.mxu0 0
        %5825 = vmatpush1.bf16.msra.mxu0 0
        %5826 = vmatprep.mubr.bf16.mxu0 0
        %5827 = vmatmul.mubr.bf16.gmra.mrb[0].mxu0 %v5792
        %v5828 = vpop.f32.mrb[0].mxu0
        %v5829 = vadd.f32 0.0, %v5828
        %v5830 = vpop.f32.mrb[0].mxu0
        %v5831 = vpop.f32.mrb[0].mxu0
        %v5832 = vpop.f32.mrb[0].mxu0
        %5833 = vdwg.mxu0
        %5834 = vst.msk [vmem:[%s1100] sm:$0xff] %vm3350, %v5829
        %s5835 = sand.u32 %s861, 1
        %s5836 = scalar_lea.sflag [#allocation3], %s5835
        %s5837 = sand.u32 %s861, 1
        %s5838 = smul.addr %s5837, 8
        %s5839 = scalar_lea.vmem [#allocation2], %s5838
        // Predicated region
        $region165: #{tpu_custom_call.1} parent=163 // pred_check
          %p5840 = pneg %p871
        $region166: #{tpu_custom_call.1} parent=163 // pred_check_branch
          %5842 = sbr.rel (%p5840) target = $region168
        $region167: #{tpu_custom_call.1} parent=163 // pred_region
          %s5844 = ssub.s32 128, 128
          %5845 = vsyncadd %s5836, %s5844
          %s5846 = smul.addr %s87, 128
          %s5847 = scalar_lea.hbm %s73, %s5846
          %s5849 = sshll.u32 %s5839, 4
          %s5850 = int_to_ptr.vmem [resolvable:$true] %s5849
          %5852 = dma.vmem_to_hbm [thread:$0]  %s5850, 128, %s5847, %s5836
        $region168: #{tpu_custom_call.1} parent=163 // pred_fallthru
          _
      $region164: #{tpu_custom_call.1} parent=5 // pred_fallthru
        _
      %p5853 = scmp.le.s32.totalorder 2, %s82
      // Predicated region
      $region169: #{tpu_custom_call.1} parent=5 // pred_check
        %p5854 = pneg %p5853
      $region170: #{tpu_custom_call.1} parent=5 // pred_check_branch
        %5856 = sbr.rel (%p5854) target = $region172
      $region171: #{tpu_custom_call.1} parent=5 // pred_region
        %s5857 = ssub.s32 %s82, 2
        // Predicated region
        $region173: #{tpu_custom_call.1} parent=171 // pred_check
          %p5858 = pneg %p877
        $region174: #{tpu_custom_call.1} parent=171 // pred_check_branch
          %5860 = sbr.rel (%p5858) target = $region176
        $region175: #{tpu_custom_call.1} parent=171 // pred_region
          %s5861 = sand.u32 %s862, 1
          %s5862 = scalar_lea.sflag [#allocation3], %s5861
          %s5863 = sand.u32 %s862, 1
          %s5864 = smul.addr %s5863, 8
          %s5865 = scalar_lea.vmem [#allocation2], %s5864
          %5866 = dma.done %s5862, 128
        $region176: #{tpu_custom_call.1} parent=171 // pred_fallthru
          _
      $region172: #{tpu_custom_call.1} parent=5 // pred_fallthru
        _
    $region6: #{tpu_custom_call.1} parent=1 // loop_footer
      %s86 = sadd.s32 1, %s82
    $region7: #{tpu_custom_call.1} parent=1 // loop_footer_branch
      %81 = sbr.rel target = $region3
    $region8: #{tpu_custom_call.1} parent=1 // loop_exit
      _
    %5867 = vsyncpa [#allocation3], 1
    %s5868 = scalar_lea.sflag [#allocation3], 1
    %5869 = vsyncpa %s5868, 1

</llo_original>
